<compile_context>
chip_gen: v7x
topology: tpu7x:2x2x1
jax: 0.10.0
libtpu: 0.0.40
codegen_flags: <defaults>
</compile_context>

<pallas_src>
import functools

import numpy as np
import jax
import jax.numpy as jnp
from jax.experimental import pallas as pl
from jax.experimental.pallas import tpu as pltpu

LANE = 128                 # lane-dense padding for the final (only) HBM output
C = 32                     # channel width of conv2/conv3/conv4
MM_DTYPE = jnp.float32     # set to jnp.bfloat16 for ~3x fewer MXU passes (looser numerics)


# ----------------------------------------------------------------------------
# Fused Pallas kernel: conv1 -> conv2(+BN) -> conv3(+BN) -> conv4(+BN, 1/T folded)
#                      -> masked SpatialSoftmax (matmul reductions) -> fc1..fc4
# ----------------------------------------------------------------------------
def _fused_forward_kernel(
    # inputs
    patch_ref,                    # (R, 7*7*3)  conv1 im2col patches (rows = n*H1*W1)
    w1_ref, b1_ref,               # (147, 64), (1, 64)
    w2_ref, sh2_ref,              # (64, C),  (1, C)     BN2 scale folded into W
    w3_ref, sh3_ref,              # (9*C, C), (1, C)     BN3 folded, rows packed per 3x3 tap
    w4_ref, sh4_ref,              # (9*C, C), (1, C)     BN4 + 1/temperature folded
    neg_ref,                      # (HW1, 1)  additive mask: 0 valid / -1e30 invalid
    red_ref,                      # (3, HW1)  rows = [mask, pos_x, pos_y] (zero outside window)
    w1x_ref, w1y_ref, bf1_ref,    # (C, 50), (C, 50), (1, 50)  fc1 split by ex/ey channel
    wf2_ref, bf2_ref,             # (50, 50), (1, 50)
    wf3_ref, bf3_ref,             # (50, 50), (1, 50)
    wf4_ref, bf4_ref,             # (50, LANE), (1, LANE)      fc4 lane-padded
    # outputs
    out_ref,                      # (N, LANE)
    # scratch
    x1_ref, x2_ref, z3_ref, z4_ref,
    *, n_batch, hw1, taps):
  R = n_batch * hw1
  pad = x2_ref.shape[0] - R
  f32 = jnp.float32

  def mm(a, b):
    return jnp.dot(a.astype(MM_DTYPE), b.astype(MM_DTYPE),
                   preferred_element_type=f32)

  # ---- conv1 (7x7, stride 2, valid) + ReLU  ->  explicit VMEM materialization
  x1_ref[...] = jnp.maximum(mm(patch_ref[...], w1_ref[...]) + b1_ref[...], 0.0)

  # ---- conv2 (1x1, same) + BN(eval, folded) + ReLU ------------------------
  x2 = jnp.maximum(mm(x1_ref[...], w2_ref[...]) + sh2_ref[...], 0.0)
  x2_ref[pl.ds(0, R), :] = x2
  x2_ref[pl.ds(R, pad), :] = jnp.zeros((pad, C), f32)

  # ---- conv3 (3x3 valid): ONE big-K matmul over lane-concatenated taps ----
  cat3 = jnp.concatenate([x2_ref[pl.ds(d, R), :] for d in taps], axis=1)   # (R, 9*C)
  z3 = jnp.maximum(mm(cat3, w3_ref[...]) + sh3_ref[...], 0.0)
  z3_ref[pl.ds(0, R), :] = z3
  z3_ref[pl.ds(R, pad), :] = jnp.zeros((pad, C), f32)

  # ---- conv4 (3x3 valid): same big-K structure (1/T already in the weights)
  cat4 = jnp.concatenate([z3_ref[pl.ds(d, R), :] for d in taps], axis=1)   # (R, 9*C)
  z4_ref[...] = jnp.maximum(mm(cat4, w4_ref[...]) + sh4_ref[...], 0.0)

  # ---- SpatialSoftmax: per-batch masked softmax, reductions on the MXU ----
  neg = neg_ref[...]                               # (HW1, 1)
  ex_rows, ey_rows = [], []
  for b in range(n_batch):
    fm = z4_ref[pl.ds(b * hw1, hw1), :] + neg      # masked logits (HW1, C)
    mx = jnp.max(fm, axis=0, keepdims=True)        # (1, C)
    e = jnp.exp(fm - mx)                           # exactly 0 on masked rows
    red = mm(red_ref[...], e)                      # (3, C): [sum e, sum px*e, sum py*e]
    inv = 1.0 / red[0:1, :]                        # exact division (numerical fidelity)
    ex_rows.append(red[1:2, :] * inv)
    ey_rows.append(red[2:3, :] * inv)
  ex = jnp.concatenate(ex_rows, axis=0)            # (N, C)
  ey = jnp.concatenate(ey_rows, axis=0)            # (N, C)

  # ---- fc head (keypoint interleave folded into split fc1 weights) --------
  h = jnp.maximum(mm(ex, w1x_ref[...]) + mm(ey, w1y_ref[...]) + bf1_ref[...], 0.0)
  h = jnp.maximum(mm(h, wf2_ref[...]) + bf2_ref[...], 0.0)
  h = jnp.maximum(mm(h, wf3_ref[...]) + bf3_ref[...], 0.0)
  out_ref[...] = mm(h, wf4_ref[...]) + bf4_ref[...]


# ----------------------------------------------------------------------------
# Plain-JAX glue (conv1's stride-2 im2col + trace-time weight folding)
# ----------------------------------------------------------------------------
def _im2col_stride(x_nhwc, kh, kw, stride):
  """x: (N, H, W, C) -> patches (N*Ho*Wo, kh*kw*C), 'valid' padding."""
  n, h, w, c = x_nhwc.shape
  ho = (h - kh) // stride + 1
  wo = (w - kw) // stride + 1
  cols = []
  for i in range(kh):
    for j in range(kw):
      cols.append(x_nhwc[:, i:i + (ho - 1) * stride + 1:stride,
                            j:j + (wo - 1) * stride + 1:stride, :])
  patches = jnp.concatenate(cols, axis=-1)          # (N, Ho, Wo, kh*kw*C)
  return patches.reshape(n * ho * wo, kh * kw * c), ho, wo


def custom_net_forward(params, rgb_nchw, pos_x, pos_y, fc4_out_dim=1,
                       temperature=1.0):
  n = rgb_nchw.shape[0]
  x = jnp.transpose(rgb_nchw, (0, 2, 3, 1))         # NCHW -> NHWC
  patches, H1, W1 = _im2col_stride(x, 7, 7, 2)      # conv1 im2col (wrapper-side glue)
  H4, W4 = H1 - 4, W1 - 4                           # after two valid 3x3 convs
  HW1 = H1 * W1
  R = n * HW1

  def bn_fold(bn, bias):
    gamma, beta, mean, var, eps = bn
    s = gamma / jnp.sqrt(var + eps)
    return s, (bias - mean) * s + beta

  # conv1
  w1m = params['conv1_w'].reshape(7 * 7 * 3, 64)
  b1r = params['conv1_b'].reshape(1, 64)
  # conv2 (1x1): fold BN scale into the weight matrix
  s2, sh2 = bn_fold(params['conv2_bn'], params['conv2_b'])
  w2m = params['conv2_w'].reshape(64, C) * s2[None, :]
  sh2r = sh2.reshape(1, C)
  # conv3: fold BN scale into the weights, pack the 9 taps as (9*C, C)
  s3, sh3 = bn_fold(params['conv3_bn'], params['conv3_b'])
  w3p = (params['conv3_w'] * s3[None, None, None, :]).reshape(9 * C, C)
  sh3r = sh3.reshape(1, C)
  # conv4: additionally fold 1/temperature (positive scale commutes with ReLU)
  assert temperature > 0.0
  inv_temp = 1.0 / temperature
  s4, sh4 = bn_fold(params['conv4_bn'], params['conv4_b'])
  w4p = (params['conv4_w'] * s4[None, None, None, :]).reshape(9 * C, C) * inv_temp
  sh4r = (sh4 * inv_temp).reshape(1, C)

  # SpatialSoftmax constants at full (H1, W1) resolution; rows outside the valid
  # H4 x W4 conv4 window are masked out of the softmax.
  valid_idx = np.asarray([h * W1 + w for h in range(H4) for w in range(W4)],
                         np.int32)
  mask = jnp.zeros((HW1,), jnp.float32).at[valid_idx].set(1.0)
  px_full = jnp.zeros((HW1,), jnp.float32).at[valid_idx].set(pos_x)
  py_full = jnp.zeros((HW1,), jnp.float32).at[valid_idx].set(pos_y)
  neg = ((1.0 - mask) * (-1e30)).reshape(HW1, 1)    # additive logit mask
  redmat = jnp.stack([mask, px_full, py_full], axis=0)   # (3, HW1) reduction matrix

  # fc1: undo the torch [ex0, ey0, ex1, ey1, ...] interleave by splitting rows.
  w1x = params['fc1_w'][0::2, :]
  w1y = params['fc1_w'][1::2, :]
  bf1 = params['fc1_b'].reshape(1, 50)
  wf2 = params['fc2_w']; bf2 = params['fc2_b'].reshape(1, 50)
  wf3 = params['fc3_w']; bf3 = params['fc3_b'].reshape(1, 50)
  # fc4: lane-pad to 128 so the only HBM store is lane-dense.
  wf4 = jnp.zeros((50, LANE), jnp.float32).at[:, :fc4_out_dim].set(params['fc4_w'])
  bf4 = jnp.zeros((1, LANE), jnp.float32).at[0, :fc4_out_dim].set(params['fc4_b'])

  taps = tuple(i * W1 + j for i in range(3) for j in range(3))
  pad = ((max(taps) + 7) // 8 + 1) * 8              # >= max row shift, 8-aligned

  kernel = functools.partial(_fused_forward_kernel, n_batch=n, hw1=HW1, taps=taps)

  inputs = (patches, w1m, b1r, w2m, sh2r, w3p, sh3r, w4p, sh4r,
            neg, redmat, w1x, w1y, bf1, wf2, bf2, wf3, bf3, wf4, bf4)

  out_padded = pl.pallas_call(
      kernel,
      out_shape=jax.ShapeDtypeStruct((n, LANE), jnp.float32),
      in_specs=[pl.BlockSpec(memory_space=pltpu.MemorySpace.VMEM)
                for _ in inputs],
      out_specs=pl.BlockSpec(memory_space=pltpu.MemorySpace.VMEM),
      scratch_shapes=[
          pltpu.VMEM((R, 64), jnp.float32),         # conv1 output (explicit materialization)
          pltpu.VMEM((R + pad, C), jnp.float32),    # conv2 output (+zero pad rows)
          pltpu.VMEM((R + pad, C), jnp.float32),    # conv3 output (+zero pad rows)
          pltpu.VMEM((R, C), jnp.float32),          # conv4 output
      ],
  )(*inputs)
  return out_padded[:, :fc4_out_dim]


# ----------------------------------------------------------------------------
# Parameters (deterministic init; BN in eval mode with default stats, eps=1e-3)
# ----------------------------------------------------------------------------
def init_params(key):
  ks = jax.random.split(key, 16)

  def u(k, shape, lo=-0.1, hi=0.1):
    return jax.random.uniform(k, shape, jnp.float32, lo, hi)

  p = {}
  # TODO(synk): reference loads GoogLeNet IMAGENET1K_V1 conv1 weights; use
  # deterministic uniform init instead (no file/network access allowed).
  p['conv1_w'] = u(ks[0], (7, 7, 3, 64));  p['conv1_b'] = u(ks[1], (64,), -0.01, 0.01)
  p['conv2_w'] = u(ks[2], (64, C));        p['conv2_b'] = u(ks[3], (C,), -0.01, 0.01)
  p['conv3_w'] = u(ks[4], (3, 3, C, C));   p['conv3_b'] = u(ks[5], (C,), -0.01, 0.01)
  p['conv4_w'] = u(ks[6], (3, 3, C, C));   p['conv4_b'] = u(ks[7], (C,), -0.01, 0.01)
  p['fc1_w'] = u(ks[8], (64, 50));  p['fc1_b'] = u(ks[9],  (50,), -0.01, 0.01)
  p['fc2_w'] = u(ks[10], (50, 50)); p['fc2_b'] = u(ks[11], (50,), -0.01, 0.01)
  p['fc3_w'] = u(ks[12], (50, 50)); p['fc3_b'] = u(ks[13], (50,), -0.01, 0.01)
  p['fc4_w'] = u(ks[14], (50, 1));  p['fc4_b'] = u(ks[15], (1,),  -0.01, 0.01)
  # BatchNorm2d eval defaults: gamma=1, beta=0, running_mean=0, running_var=1, eps=1e-3
  for name in ('conv2_bn', 'conv3_bn', 'conv4_bn'):
    p[name] = (jnp.ones((C,), jnp.float32), jnp.zeros((C,), jnp.float32),
               jnp.zeros((C,), jnp.float32), jnp.ones((C,), jnp.float32), 1e-3)
  return p


if __name__ == "__main__":
  key = jax.random.PRNGKey(0)
  pkey, xkey = jax.random.split(key)
  params = init_params(pkey)

  # Small input consistent with the module: N=2, C=3, 34x34 image.
  N, H_in, W_in = 2, 34, 34
  rgb = jax.random.normal(xkey, (N, 3, H_in, W_in), jnp.float32)

  # Conv chain output spatial size -> SpatialSoftmax(height, width) = (10, 10)
  H1 = (H_in - 7) // 2 + 1
  W1 = (W_in - 7) // 2 + 1
  H4, W4 = H1 - 4, W1 - 4

  # Position buffers built exactly like the torch SpatialSoftmax module.
  px_np, py_np = np.meshgrid(np.linspace(-1.0, 1.0, H4), np.linspace(-1.0, 1.0, W4))
  pos_x = jnp.asarray(px_np.reshape(H4 * W4), jnp.float32)
  pos_y = jnp.asarray(py_np.reshape(H4 * W4), jnp.float32)

  fwd = jax.jit(functools.partial(custom_net_forward, fc4_out_dim=1))
  out = fwd(params, rgb, pos_x, pos_y)
  out = jax.block_until_ready(out)
  assert out.shape == (N, 1) and out.dtype == jnp.float32
  assert bool(jnp.all(jnp.isfinite(out)))
  print("KERNEL_OK")
</pallas_src>

<mosaic_0001>
module attributes {stable_mosaic.version = 11 : i64} {
  func.func @_fused_forward_kernel(%arg0: memref<392x147xf32, #tpu.memory_space<vmem>>, %arg1: memref<147x64xf32, #tpu.memory_space<vmem>>, %arg2: memref<1x64xf32, #tpu.memory_space<vmem>>, %arg3: memref<64x32xf32, #tpu.memory_space<vmem>>, %arg4: memref<1x32xf32, #tpu.memory_space<vmem>>, %arg5: memref<288x32xf32, #tpu.memory_space<vmem>>, %arg6: memref<1x32xf32, #tpu.memory_space<vmem>>, %arg7: memref<288x32xf32, #tpu.memory_space<vmem>>, %arg8: memref<1x32xf32, #tpu.memory_space<vmem>>, %arg9: memref<196x1xf32, #tpu.memory_space<vmem>>, %arg10: memref<3x196xf32, #tpu.memory_space<vmem>>, %arg11: memref<32x50xf32, #tpu.memory_space<vmem>>, %arg12: memref<32x50xf32, #tpu.memory_space<vmem>>, %arg13: memref<1x50xf32, #tpu.memory_space<vmem>>, %arg14: memref<50x50xf32, #tpu.memory_space<vmem>>, %arg15: memref<1x50xf32, #tpu.memory_space<vmem>>, %arg16: memref<50x50xf32, #tpu.memory_space<vmem>>, %arg17: memref<1x50xf32, #tpu.memory_space<vmem>>, %arg18: memref<50x128xf32, #tpu.memory_space<vmem>>, %arg19: memref<1x128xf32, #tpu.memory_space<vmem>>, %arg20: memref<2x128xf32, #tpu.memory_space<vmem>>, %arg21: memref<392x64xf32, #tpu.memory_space<vmem>>, %arg22: memref<432x32xf32, #tpu.memory_space<vmem>>, %arg23: memref<432x32xf32, #tpu.memory_space<vmem>>, %arg24: memref<392x32xf32, #tpu.memory_space<vmem>>) attributes {dimension_semantics = [], scalar_prefetch = 0 : i64, scratch_operands = 4 : i64, tpu.core_type = #tpu.core_type<tc>} {
    %c0 = arith.constant 0 : index
    %c0_0 = arith.constant 0 : index
    %0 = vector.load %arg0[%c0, %c0_0] : memref<392x147xf32, #tpu.memory_space<vmem>>, vector<392x147xf32>
    %c0_1 = arith.constant 0 : index
    %c0_2 = arith.constant 0 : index
    %1 = vector.load %arg1[%c0_1, %c0_2] : memref<147x64xf32, #tpu.memory_space<vmem>>, vector<147x64xf32>
    %cst = arith.constant dense<0.000000e+00> : vector<392x64xf32>
    %2 = tpu.matmul %0, %1, %cst {dimension_numbers = #tpu.dot_dimension_numbers<[1], [0], [0], [1], [0, 0, 1, 1], [], []>} : vector<392x147xf32>, vector<147x64xf32>, vector<392x64xf32> -> vector<392x64xf32>
    %c0_3 = arith.constant 0 : index
    %c0_4 = arith.constant 0 : index
    %3 = vector.load %arg2[%c0_3, %c0_4] : memref<1x64xf32, #tpu.memory_space<vmem>>, vector<1x64xf32>
    %4 = vector.broadcast %3 : vector<1x64xf32> to vector<392x64xf32>
    %5 = arith.addf %2, %4 : vector<392x64xf32>
    %cst_5 = arith.constant 0.000000e+00 : f32
    %6 = vector.broadcast %cst_5 : f32 to vector<392x64xf32>
    %7 = arith.maximumf %5, %6 : vector<392x64xf32>
    %c0_6 = arith.constant 0 : index
    %c0_7 = arith.constant 0 : index
    %8 = vector.load %arg21[%c0_6, %c0_7] : memref<392x64xf32, #tpu.memory_space<vmem>>, vector<392x64xf32>
    tpu.vector_store %arg21[%c0_6, %c0_7], %7 {strides = array<i32>} : memref<392x64xf32, #tpu.memory_space<vmem>>, vector<392x64xf32>,
    %c0_8 = arith.constant 0 : index
    %c0_9 = arith.constant 0 : index
    %9 = vector.load %arg21[%c0_8, %c0_9] : memref<392x64xf32, #tpu.memory_space<vmem>>, vector<392x64xf32>
    %c0_10 = arith.constant 0 : index
    %c0_11 = arith.constant 0 : index
    %10 = vector.load %arg3[%c0_10, %c0_11] : memref<64x32xf32, #tpu.memory_space<vmem>>, vector<64x32xf32>
    %cst_12 = arith.constant dense<0.000000e+00> : vector<392x32xf32>
    %11 = tpu.matmul %9, %10, %cst_12 {dimension_numbers = #tpu.dot_dimension_numbers<[1], [0], [0], [1], [0, 0, 1, 1], [], []>} : vector<392x64xf32>, vector<64x32xf32>, vector<392x32xf32> -> vector<392x32xf32>
    %c0_13 = arith.constant 0 : index
    %c0_14 = arith.constant 0 : index
    %12 = vector.load %arg4[%c0_13, %c0_14] : memref<1x32xf32, #tpu.memory_space<vmem>>, vector<1x32xf32>
    %13 = vector.broadcast %12 : vector<1x32xf32> to vector<392x32xf32>
    %14 = arith.addf %11, %13 : vector<392x32xf32>
    %cst_15 = arith.constant 0.000000e+00 : f32
    %15 = vector.broadcast %cst_15 : f32 to vector<392x32xf32>
    %16 = arith.maximumf %14, %15 : vector<392x32xf32>
    %c0_16 = arith.constant 0 : index
    %c0_17 = arith.constant 0 : index
    %17 = vector.load %arg22[%c0_16, %c0_17] : memref<432x32xf32, #tpu.memory_space<vmem>>, vector<392x32xf32>
    tpu.vector_store %arg22[%c0_16, %c0_17], %16 {strides = array<i32>} : memref<432x32xf32, #tpu.memory_space<vmem>>, vector<392x32xf32>,
    %cst_18 = arith.constant 0.000000e+00 : f32
    %18 = vector.broadcast %cst_18 : f32 to vector<40x32xf32>
    %c392 = arith.constant 392 : index
    %c0_19 = arith.constant 0 : index
    %19 = vector.load %arg22[%c392, %c0_19] : memref<432x32xf32, #tpu.memory_space<vmem>>, vector<40x32xf32>
    tpu.vector_store %arg22[%c392, %c0_19], %18 {strides = array<i32>} : memref<432x32xf32, #tpu.memory_space<vmem>>, vector<40x32xf32>,
    %c0_20 = arith.constant 0 : index
    %c0_21 = arith.constant 0 : index
    %20 = vector.load %arg22[%c0_20, %c0_21] : memref<432x32xf32, #tpu.memory_space<vmem>>, vector<392x32xf32>
    %c1 = arith.constant 1 : index
    %c0_22 = arith.constant 0 : index
    %21 = vector.load %arg22[%c1, %c0_22] : memref<432x32xf32, #tpu.memory_space<vmem>>, vector<392x32xf32>
    %c2 = arith.constant 2 : index
    %c0_23 = arith.constant 0 : index
    %22 = vector.load %arg22[%c2, %c0_23] : memref<432x32xf32, #tpu.memory_space<vmem>>, vector<392x32xf32>
    %c14 = arith.constant 14 : index
    %c0_24 = arith.constant 0 : index
    %23 = vector.load %arg22[%c14, %c0_24] : memref<432x32xf32, #tpu.memory_space<vmem>>, vector<392x32xf32>
    %c15 = arith.constant 15 : index
    %c0_25 = arith.constant 0 : index
    %24 = vector.load %arg22[%c15, %c0_25] : memref<432x32xf32, #tpu.memory_space<vmem>>, vector<392x32xf32>
    %c16 = arith.constant 16 : index
    %c0_26 = arith.constant 0 : index
    %25 = vector.load %arg22[%c16, %c0_26] : memref<432x32xf32, #tpu.memory_space<vmem>>, vector<392x32xf32>
    %c28 = arith.constant 28 : index
    %c0_27 = arith.constant 0 : index
    %26 = vector.load %arg22[%c28, %c0_27] : memref<432x32xf32, #tpu.memory_space<vmem>>, vector<392x32xf32>
    %c29 = arith.constant 29 : index
    %c0_28 = arith.constant 0 : index
    %27 = vector.load %arg22[%c29, %c0_28] : memref<432x32xf32, #tpu.memory_space<vmem>>, vector<392x32xf32>
    %c30 = arith.constant 30 : index
    %c0_29 = arith.constant 0 : index
    %28 = vector.load %arg22[%c30, %c0_29] : memref<432x32xf32, #tpu.memory_space<vmem>>, vector<392x32xf32>
    %29 = tpu.concatenate %20, %21, %22, %23, %24, %25, %26, %27, %28 in 1 : vector<392x32xf32>, vector<392x32xf32>, vector<392x32xf32>, vector<392x32xf32>, vector<392x32xf32>, vector<392x32xf32>, vector<392x32xf32>, vector<392x32xf32>, vector<392x32xf32> -> vector<392x288xf32>
    %c0_30 = arith.constant 0 : index
    %c0_31 = arith.constant 0 : index
    %30 = vector.load %arg5[%c0_30, %c0_31] : memref<288x32xf32, #tpu.memory_space<vmem>>, vector<288x32xf32>
    %cst_32 = arith.constant dense<0.000000e+00> : vector<392x32xf32>
    %31 = tpu.matmul %29, %30, %cst_32 {dimension_numbers = #tpu.dot_dimension_numbers<[1], [0], [0], [1], [0, 0, 1, 1], [], []>} : vector<392x288xf32>, vector<288x32xf32>, vector<392x32xf32> -> vector<392x32xf32>
    %c0_33 = arith.constant 0 : index
    %c0_34 = arith.constant 0 : index
    %32 = vector.load %arg6[%c0_33, %c0_34] : memref<1x32xf32, #tpu.memory_space<vmem>>, vector<1x32xf32>
    %33 = vector.broadcast %32 : vector<1x32xf32> to vector<392x32xf32>
    %34 = arith.addf %31, %33 : vector<392x32xf32>
    %cst_35 = arith.constant 0.000000e+00 : f32
    %35 = vector.broadcast %cst_35 : f32 to vector<392x32xf32>
    %36 = arith.maximumf %34, %35 : vector<392x32xf32>
    %c0_36 = arith.constant 0 : index
    %c0_37 = arith.constant 0 : index
    %37 = vector.load %arg23[%c0_36, %c0_37] : memref<432x32xf32, #tpu.memory_space<vmem>>, vector<392x32xf32>
    tpu.vector_store %arg23[%c0_36, %c0_37], %36 {strides = array<i32>} : memref<432x32xf32, #tpu.memory_space<vmem>>, vector<392x32xf32>,
    %cst_38 = arith.constant 0.000000e+00 : f32
    %38 = vector.broadcast %cst_38 : f32 to vector<40x32xf32>
    %c392_39 = arith.constant 392 : index
    %c0_40 = arith.constant 0 : index
    %39 = vector.load %arg23[%c392_39, %c0_40] : memref<432x32xf32, #tpu.memory_space<vmem>>, vector<40x32xf32>
    tpu.vector_store %arg23[%c392_39, %c0_40], %38 {strides = array<i32>} : memref<432x32xf32, #tpu.memory_space<vmem>>, vector<40x32xf32>,
    %c0_41 = arith.constant 0 : index
    %c0_42 = arith.constant 0 : index
    %40 = vector.load %arg23[%c0_41, %c0_42] : memref<432x32xf32, #tpu.memory_space<vmem>>, vector<392x32xf32>
    %c1_43 = arith.constant 1 : index
    %c0_44 = arith.constant 0 : index
    %41 = vector.load %arg23[%c1_43, %c0_44] : memref<432x32xf32, #tpu.memory_space<vmem>>, vector<392x32xf32>
    %c2_45 = arith.constant 2 : index
    %c0_46 = arith.constant 0 : index
    %42 = vector.load %arg23[%c2_45, %c0_46] : memref<432x32xf32, #tpu.memory_space<vmem>>, vector<392x32xf32>
    %c14_47 = arith.constant 14 : index
    %c0_48 = arith.constant 0 : index
    %43 = vector.load %arg23[%c14_47, %c0_48] : memref<432x32xf32, #tpu.memory_space<vmem>>, vector<392x32xf32>
    %c15_49 = arith.constant 15 : index
    %c0_50 = arith.constant 0 : index
    %44 = vector.load %arg23[%c15_49, %c0_50] : memref<432x32xf32, #tpu.memory_space<vmem>>, vector<392x32xf32>
    %c16_51 = arith.constant 16 : index
    %c0_52 = arith.constant 0 : index
    %45 = vector.load %arg23[%c16_51, %c0_52] : memref<432x32xf32, #tpu.memory_space<vmem>>, vector<392x32xf32>
    %c28_53 = arith.constant 28 : index
    %c0_54 = arith.constant 0 : index
    %46 = vector.load %arg23[%c28_53, %c0_54] : memref<432x32xf32, #tpu.memory_space<vmem>>, vector<392x32xf32>
    %c29_55 = arith.constant 29 : index
    %c0_56 = arith.constant 0 : index
    %47 = vector.load %arg23[%c29_55, %c0_56] : memref<432x32xf32, #tpu.memory_space<vmem>>, vector<392x32xf32>
    %c30_57 = arith.constant 30 : index
    %c0_58 = arith.constant 0 : index
    %48 = vector.load %arg23[%c30_57, %c0_58] : memref<432x32xf32, #tpu.memory_space<vmem>>, vector<392x32xf32>
    %49 = tpu.concatenate %40, %41, %42, %43, %44, %45, %46, %47, %48 in 1 : vector<392x32xf32>, vector<392x32xf32>, vector<392x32xf32>, vector<392x32xf32>, vector<392x32xf32>, vector<392x32xf32>, vector<392x32xf32>, vector<392x32xf32>, vector<392x32xf32> -> vector<392x288xf32>
    %c0_59 = arith.constant 0 : index
    %c0_60 = arith.constant 0 : index
    %50 = vector.load %arg7[%c0_59, %c0_60] : memref<288x32xf32, #tpu.memory_space<vmem>>, vector<288x32xf32>
    %cst_61 = arith.constant dense<0.000000e+00> : vector<392x32xf32>
    %51 = tpu.matmul %49, %50, %cst_61 {dimension_numbers = #tpu.dot_dimension_numbers<[1], [0], [0], [1], [0, 0, 1, 1], [], []>} : vector<392x288xf32>, vector<288x32xf32>, vector<392x32xf32> -> vector<392x32xf32>
    %c0_62 = arith.constant 0 : index
    %c0_63 = arith.constant 0 : index
    %52 = vector.load %arg8[%c0_62, %c0_63] : memref<1x32xf32, #tpu.memory_space<vmem>>, vector<1x32xf32>
    %53 = vector.broadcast %52 : vector<1x32xf32> to vector<392x32xf32>
    %54 = arith.addf %51, %53 : vector<392x32xf32>
    %cst_64 = arith.constant 0.000000e+00 : f32
    %55 = vector.broadcast %cst_64 : f32 to vector<392x32xf32>
    %56 = arith.maximumf %54, %55 : vector<392x32xf32>
    %c0_65 = arith.constant 0 : index
    %c0_66 = arith.constant 0 : index
    %57 = vector.load %arg24[%c0_65, %c0_66] : memref<392x32xf32, #tpu.memory_space<vmem>>, vector<392x32xf32>
    tpu.vector_store %arg24[%c0_65, %c0_66], %56 {strides = array<i32>} : memref<392x32xf32, #tpu.memory_space<vmem>>, vector<392x32xf32>,
    %c0_67 = arith.constant 0 : index
    %c0_68 = arith.constant 0 : index
    %58 = vector.load %arg9[%c0_67, %c0_68] : memref<196x1xf32, #tpu.memory_space<vmem>>, vector<196x1xf32>
    %c0_69 = arith.constant 0 : index
    %c0_70 = arith.constant 0 : index
    %59 = vector.load %arg24[%c0_69, %c0_70] : memref<392x32xf32, #tpu.memory_space<vmem>>, vector<196x32xf32>
    %60 = vector.broadcast %58 : vector<196x1xf32> to vector<196x32xf32>
    %61 = arith.addf %59, %60 : vector<196x32xf32>
    %cst_71 = arith.constant dense<0xFF800000> : vector<32xf32>
    %62 = vector.multi_reduction <maximumf>, %61, %cst_71 [0] : vector<196x32xf32> to vector<32xf32>
    %63 = vector.shape_cast %62 : vector<32xf32> to vector<1x32xf32>
    %64 = vector.broadcast %63 : vector<1x32xf32> to vector<196x32xf32>
    %65 = arith.subf %61, %64 : vector<196x32xf32>
    %66 = math.exp %65 : vector<196x32xf32>
    %c0_72 = arith.constant 0 : index
    %c0_73 = arith.constant 0 : index
    %67 = vector.load %arg10[%c0_72, %c0_73] : memref<3x196xf32, #tpu.memory_space<vmem>>, vector<3x196xf32>
    %cst_74 = arith.constant dense<0.000000e+00> : vector<3x32xf32>
    %68 = tpu.matmul %67, %66, %cst_74 {dimension_numbers = #tpu.dot_dimension_numbers<[1], [0], [0], [1], [0, 0, 1, 1], [], []>} : vector<3x196xf32>, vector<196x32xf32>, vector<3x32xf32> -> vector<3x32xf32>
    %69 = vector.extract_strided_slice %68 {offsets = [0, 0], sizes = [1, 32], strides = [1, 1]} : vector<3x32xf32> to vector<1x32xf32>
    %cst_75 = arith.constant 1.000000e+00 : f32
    %70 = vector.broadcast %cst_75 : f32 to vector<1x32xf32>
    %71 = arith.divf %70, %69 : vector<1x32xf32>
    %72 = vector.extract_strided_slice %68 {offsets = [1, 0], sizes = [1, 32], strides = [1, 1]} : vector<3x32xf32> to vector<1x32xf32>
    %73 = arith.mulf %72, %71 : vector<1x32xf32>
    %74 = vector.extract_strided_slice %68 {offsets = [2, 0], sizes = [1, 32], strides = [1, 1]} : vector<3x32xf32> to vector<1x32xf32>
    %75 = arith.mulf %74, %71 : vector<1x32xf32>
    %c196 = arith.constant 196 : index
    %c0_76 = arith.constant 0 : index
    %76 = vector.load %arg24[%c196, %c0_76] : memref<392x32xf32, #tpu.memory_space<vmem>>, vector<196x32xf32>
    %77 = vector.broadcast %58 : vector<196x1xf32> to vector<196x32xf32>
    %78 = arith.addf %76, %77 : vector<196x32xf32>
    %cst_77 = arith.constant dense<0xFF800000> : vector<32xf32>
    %79 = vector.multi_reduction <maximumf>, %78, %cst_77 [0] : vector<196x32xf32> to vector<32xf32>
    %80 = vector.shape_cast %79 : vector<32xf32> to vector<1x32xf32>
    %81 = vector.broadcast %80 : vector<1x32xf32> to vector<196x32xf32>
    %82 = arith.subf %78, %81 : vector<196x32xf32>
    %83 = math.exp %82 : vector<196x32xf32>
    %c0_78 = arith.constant 0 : index
    %c0_79 = arith.constant 0 : index
    %84 = vector.load %arg10[%c0_78, %c0_79] : memref<3x196xf32, #tpu.memory_space<vmem>>, vector<3x196xf32>
    %cst_80 = arith.constant dense<0.000000e+00> : vector<3x32xf32>
    %85 = tpu.matmul %84, %83, %cst_80 {dimension_numbers = #tpu.dot_dimension_numbers<[1], [0], [0], [1], [0, 0, 1, 1], [], []>} : vector<3x196xf32>, vector<196x32xf32>, vector<3x32xf32> -> vector<3x32xf32>
    %86 = vector.extract_strided_slice %85 {offsets = [0, 0], sizes = [1, 32], strides = [1, 1]} : vector<3x32xf32> to vector<1x32xf32>
    %cst_81 = arith.constant 1.000000e+00 : f32
    %87 = vector.broadcast %cst_81 : f32 to vector<1x32xf32>
    %88 = arith.divf %87, %86 : vector<1x32xf32>
    %89 = vector.extract_strided_slice %85 {offsets = [1, 0], sizes = [1, 32], strides = [1, 1]} : vector<3x32xf32> to vector<1x32xf32>
    %90 = arith.mulf %89, %88 : vector<1x32xf32>
    %91 = vector.extract_strided_slice %85 {offsets = [2, 0], sizes = [1, 32], strides = [1, 1]} : vector<3x32xf32> to vector<1x32xf32>
    %92 = arith.mulf %91, %88 : vector<1x32xf32>
    %93 = tpu.concatenate %73, %90 in 0 : vector<1x32xf32>, vector<1x32xf32> -> vector<2x32xf32>
    %94 = tpu.concatenate %75, %92 in 0 : vector<1x32xf32>, vector<1x32xf32> -> vector<2x32xf32>
    %c0_82 = arith.constant 0 : index
    %c0_83 = arith.constant 0 : index
    %95 = vector.load %arg11[%c0_82, %c0_83] : memref<32x50xf32, #tpu.memory_space<vmem>>, vector<32x50xf32>
    %cst_84 = arith.constant dense<0.000000e+00> : vector<2x50xf32>
    %96 = tpu.matmul %93, %95, %cst_84 {dimension_numbers = #tpu.dot_dimension_numbers<[1], [0], [0], [1], [0, 0, 1, 1], [], []>} : vector<2x32xf32>, vector<32x50xf32>, vector<2x50xf32> -> vector<2x50xf32>
    %c0_85 = arith.constant 0 : index
    %c0_86 = arith.constant 0 : index
    %97 = vector.load %arg12[%c0_85, %c0_86] : memref<32x50xf32, #tpu.memory_space<vmem>>, vector<32x50xf32>
    %cst_87 = arith.constant dense<0.000000e+00> : vector<2x50xf32>
    %98 = tpu.matmul %94, %97, %cst_87 {dimension_numbers = #tpu.dot_dimension_numbers<[1], [0], [0], [1], [0, 0, 1, 1], [], []>} : vector<2x32xf32>, vector<32x50xf32>, vector<2x50xf32> -> vector<2x50xf32>
    %99 = arith.addf %96, %98 : vector<2x50xf32>
    %c0_88 = arith.constant 0 : index
    %c0_89 = arith.constant 0 : index
    %100 = vector.load %arg13[%c0_88, %c0_89] : memref<1x50xf32, #tpu.memory_space<vmem>>, vector<1x50xf32>
    %101 = vector.broadcast %100 : vector<1x50xf32> to vector<2x50xf32>
    %102 = arith.addf %99, %101 : vector<2x50xf32>
    %cst_90 = arith.constant 0.000000e+00 : f32
    %103 = vector.broadcast %cst_90 : f32 to vector<2x50xf32>
    %104 = arith.maximumf %102, %103 : vector<2x50xf32>
    %c0_91 = arith.constant 0 : index
    %c0_92 = arith.constant 0 : index
    %105 = vector.load %arg14[%c0_91, %c0_92] : memref<50x50xf32, #tpu.memory_space<vmem>>, vector<50x50xf32>
    %cst_93 = arith.constant dense<0.000000e+00> : vector<2x50xf32>
    %106 = tpu.matmul %104, %105, %cst_93 {dimension_numbers = #tpu.dot_dimension_numbers<[1], [0], [0], [1], [0, 0, 1, 1], [], []>} : vector<2x50xf32>, vector<50x50xf32>, vector<2x50xf32> -> vector<2x50xf32>
    %c0_94 = arith.constant 0 : index
    %c0_95 = arith.constant 0 : index
    %107 = vector.load %arg15[%c0_94, %c0_95] : memref<1x50xf32, #tpu.memory_space<vmem>>, vector<1x50xf32>
    %108 = vector.broadcast %107 : vector<1x50xf32> to vector<2x50xf32>
    %109 = arith.addf %106, %108 : vector<2x50xf32>
    %cst_96 = arith.constant 0.000000e+00 : f32
    %110 = vector.broadcast %cst_96 : f32 to vector<2x50xf32>
    %111 = arith.maximumf %109, %110 : vector<2x50xf32>
    %c0_97 = arith.constant 0 : index
    %c0_98 = arith.constant 0 : index
    %112 = vector.load %arg16[%c0_97, %c0_98] : memref<50x50xf32, #tpu.memory_space<vmem>>, vector<50x50xf32>
    %cst_99 = arith.constant dense<0.000000e+00> : vector<2x50xf32>
    %113 = tpu.matmul %111, %112, %cst_99 {dimension_numbers = #tpu.dot_dimension_numbers<[1], [0], [0], [1], [0, 0, 1, 1], [], []>} : vector<2x50xf32>, vector<50x50xf32>, vector<2x50xf32> -> vector<2x50xf32>
    %c0_100 = arith.constant 0 : index
    %c0_101 = arith.constant 0 : index
    %114 = vector.load %arg17[%c0_100, %c0_101] : memref<1x50xf32, #tpu.memory_space<vmem>>, vector<1x50xf32>
    %115 = vector.broadcast %114 : vector<1x50xf32> to vector<2x50xf32>
    %116 = arith.addf %113, %115 : vector<2x50xf32>
    %cst_102 = arith.constant 0.000000e+00 : f32
    %117 = vector.broadcast %cst_102 : f32 to vector<2x50xf32>
    %118 = arith.maximumf %116, %117 : vector<2x50xf32>
    %c0_103 = arith.constant 0 : index
    %c0_104 = arith.constant 0 : index
    %119 = vector.load %arg18[%c0_103, %c0_104] : memref<50x128xf32, #tpu.memory_space<vmem>>, vector<50x128xf32>
    %cst_105 = arith.constant dense<0.000000e+00> : vector<2x128xf32>
    %120 = tpu.matmul %118, %119, %cst_105 {dimension_numbers = #tpu.dot_dimension_numbers<[1], [0], [0], [1], [0, 0, 1, 1], [], []>} : vector<2x50xf32>, vector<50x128xf32>, vector<2x128xf32> -> vector<2x128xf32>
    %c0_106 = arith.constant 0 : index
    %c0_107 = arith.constant 0 : index
    %121 = vector.load %arg19[%c0_106, %c0_107] : memref<1x128xf32, #tpu.memory_space<vmem>>, vector<1x128xf32>
    %122 = vector.broadcast %121 : vector<1x128xf32> to vector<2x128xf32>
    %123 = arith.addf %120, %122 : vector<2x128xf32>
    %c0_108 = arith.constant 0 : index
    %c0_109 = arith.constant 0 : index
    %124 = vector.load %arg20[%c0_108, %c0_109] : memref<2x128xf32, #tpu.memory_space<vmem>>, vector<2x128xf32>
    tpu.vector_store %arg20[%c0_108, %c0_109], %123 {strides = array<i32>} : memref<2x128xf32, #tpu.memory_space<vmem>>, vector<2x128xf32>,
    return
  }
}

</mosaic_0001>

<llo_original>
// kernel: custom_net_forward.1
$region0: #{custom_net_forward.1}
  #allocation0 [shape = 'u32[]', space=smem, size = 0x4, offset = 0x4, fixed_abs, tag = 'smem constant byte address 0x4 - core index']
  #allocation1 [shape = 'u32[144,128]{1,0:T(1,128)}', space=vmem, size = 0x12000, scoped, tag = 'internal scratch']
  #allocation2 [shape = 'f32[392,64]{1,0:T(8,128)}', space=vmem, size = 0x31000, scoped, tag = 'scratch operand']
  #allocation3 [shape = 'f32[432,32]{1,0:T(8,128)}', space=vmem, size = 0x36000, scoped, tag = 'scratch operand']
  #allocation4 [shape = 'f32[432,32]{1,0:T(8,128)}', space=vmem, size = 0x36000, scoped, tag = 'scratch operand']
  #allocation5 [shape = 'f32[392,32]{1,0:T(8,128)}', space=vmem, size = 0x31000, scoped, tag = 'scratch operand']
  %s0 = inlined_call_operand.vmem [shape: f32[392,147], index: 0, kind: input, shape index: {}]
  %s1 = inlined_call_operand.vmem [shape: f32[147,64], index: 1, kind: input, shape index: {}]
  %s2 = inlined_call_operand.vmem [shape: f32[1,64], index: 2, kind: input, shape index: {}]
  %s3 = inlined_call_operand.vmem [shape: f32[64,32], index: 3, kind: input, shape index: {}]
  %s4 = inlined_call_operand.vmem [shape: f32[1,32], index: 4, kind: input, shape index: {}]
  %s5 = inlined_call_operand.vmem [shape: f32[288,32], index: 5, kind: input, shape index: {}]
  %s6 = inlined_call_operand.vmem [shape: f32[1,32], index: 6, kind: input, shape index: {}]
  %s7 = inlined_call_operand.vmem [shape: f32[288,32], index: 7, kind: input, shape index: {}]
  %s8 = inlined_call_operand.vmem [shape: f32[1,32], index: 8, kind: input, shape index: {}]
  %s9 = inlined_call_operand.vmem [shape: f32[196,1], index: 9, kind: input, shape index: {}]
  %s10 = inlined_call_operand.vmem [shape: f32[3,196], index: 10, kind: input, shape index: {}]
  %s11 = inlined_call_operand.vmem [shape: f32[32,50], index: 11, kind: input, shape index: {}]
  %s12 = inlined_call_operand.vmem [shape: f32[32,50], index: 12, kind: input, shape index: {}]
  %s13 = inlined_call_operand.vmem [shape: f32[1,50], index: 13, kind: input, shape index: {}]
  %s14 = inlined_call_operand.vmem [shape: f32[50,50], index: 14, kind: input, shape index: {}]
  %s15 = inlined_call_operand.vmem [shape: f32[1,50], index: 15, kind: input, shape index: {}]
  %s16 = inlined_call_operand.vmem [shape: f32[50,50], index: 16, kind: input, shape index: {}]
  %s17 = inlined_call_operand.vmem [shape: f32[1,50], index: 17, kind: input, shape index: {}]
  %s18 = inlined_call_operand.vmem [shape: f32[50,128], index: 18, kind: input, shape index: {}]
  %s19 = inlined_call_operand.vmem [shape: f32[1,128], index: 19, kind: input, shape index: {}]
  %s20 = inlined_call_operand.vmem [shape: f32[2,128], index: 20, kind: output, shape index: {}]
  %s21 = sld [smem:[#allocation0]]
  $region90: #{custom_net_forward.1} parent=0
    _
  %s23 = ssub.s32 1, %s21
  %s24 = scalar_select 0, %s23, %s21
  // Predicated region
  $region2: #{custom_net_forward.1} parent=0 // pred_check
    _
  $region3: #{custom_net_forward.1} parent=0 // pred_check_branch
    %26 = sbr.rel (0) target = $region5
  $region4: #{custom_net_forward.1} parent=0 // pred_region
    _
  $region5: #{custom_net_forward.1} parent=0 // pred_fallthru
    _
  // Predicated region
  $region6: #{custom_net_forward.1} parent=0 // pred_check
    _
  $region7: #{custom_net_forward.1} parent=0 // pred_check_branch
    %28 = sbr.rel (0) target = $region9
  $region8: #{custom_net_forward.1} parent=0 // pred_region
    _
  $region9: #{custom_net_forward.1} parent=0 // pred_fallthru
    _
  // Predicated region
  $region10: #{custom_net_forward.1} parent=0 // pred_check
    _
  $region11: #{custom_net_forward.1} parent=0 // pred_check_branch
    %30 = sbr.rel (0) target = $region13
  $region12: #{custom_net_forward.1} parent=0 // pred_region
    _
  $region13: #{custom_net_forward.1} parent=0 // pred_fallthru
    _
  // Predicated region
  $region14: #{custom_net_forward.1} parent=0 // pred_check
    _
  $region15: #{custom_net_forward.1} parent=0 // pred_check_branch
    %32 = sbr.rel (0) target = $region17
  $region16: #{custom_net_forward.1} parent=0 // pred_region
    _
  $region17: #{custom_net_forward.1} parent=0 // pred_fallthru
    _
  // Predicated region
  $region18: #{custom_net_forward.1} parent=0 // pred_check
    _
  $region19: #{custom_net_forward.1} parent=0 // pred_check_branch
    %34 = sbr.rel (0) target = $region21
  $region20: #{custom_net_forward.1} parent=0 // pred_region
    _
  $region21: #{custom_net_forward.1} parent=0 // pred_fallthru
    _
  // Predicated region
  $region22: #{custom_net_forward.1} parent=0 // pred_check
    _
  $region23: #{custom_net_forward.1} parent=0 // pred_check_branch
    %36 = sbr.rel (0) target = $region25
  $region24: #{custom_net_forward.1} parent=0 // pred_region
    _
  $region25: #{custom_net_forward.1} parent=0 // pred_fallthru
    _
  // Predicated region
  $region26: #{custom_net_forward.1} parent=0 // pred_check
    _
  $region27: #{custom_net_forward.1} parent=0 // pred_check_branch
    %38 = sbr.rel (0) target = $region29
  $region28: #{custom_net_forward.1} parent=0 // pred_region
    _
  $region29: #{custom_net_forward.1} parent=0 // pred_fallthru
    _
  // Predicated region
  $region30: #{custom_net_forward.1} parent=0 // pred_check
    _
  $region31: #{custom_net_forward.1} parent=0 // pred_check_branch
    %40 = sbr.rel (0) target = $region33
  $region32: #{custom_net_forward.1} parent=0 // pred_region
    _
  $region33: #{custom_net_forward.1} parent=0 // pred_fallthru
    _
  // Predicated region
  $region34: #{custom_net_forward.1} parent=0 // pred_check
    _
  $region35: #{custom_net_forward.1} parent=0 // pred_check_branch
    %42 = sbr.rel (0) target = $region37
  $region36: #{custom_net_forward.1} parent=0 // pred_region
    _
  $region37: #{custom_net_forward.1} parent=0 // pred_fallthru
    _
  // Predicated region
  $region38: #{custom_net_forward.1} parent=0 // pred_check
    _
  $region39: #{custom_net_forward.1} parent=0 // pred_check_branch
    %44 = sbr.rel (0) target = $region41
  $region40: #{custom_net_forward.1} parent=0 // pred_region
    _
  $region41: #{custom_net_forward.1} parent=0 // pred_fallthru
    _
  // Predicated region
  $region42: #{custom_net_forward.1} parent=0 // pred_check
    _
  $region43: #{custom_net_forward.1} parent=0 // pred_check_branch
    %46 = sbr.rel (0) target = $region45
  $region44: #{custom_net_forward.1} parent=0 // pred_region
    _
  $region45: #{custom_net_forward.1} parent=0 // pred_fallthru
    _
  // Predicated region
  $region46: #{custom_net_forward.1} parent=0 // pred_check
    _
  $region47: #{custom_net_forward.1} parent=0 // pred_check_branch
    %48 = sbr.rel (0) target = $region49
  $region48: #{custom_net_forward.1} parent=0 // pred_region
    _
  $region49: #{custom_net_forward.1} parent=0 // pred_fallthru
    _
  // Predicated region
  $region50: #{custom_net_forward.1} parent=0 // pred_check
    _
  $region51: #{custom_net_forward.1} parent=0 // pred_check_branch
    %50 = sbr.rel (0) target = $region53
  $region52: #{custom_net_forward.1} parent=0 // pred_region
    _
  $region53: #{custom_net_forward.1} parent=0 // pred_fallthru
    _
  // Predicated region
  $region54: #{custom_net_forward.1} parent=0 // pred_check
    _
  $region55: #{custom_net_forward.1} parent=0 // pred_check_branch
    %52 = sbr.rel (0) target = $region57
  $region56: #{custom_net_forward.1} parent=0 // pred_region
    _
  $region57: #{custom_net_forward.1} parent=0 // pred_fallthru
    _
  // Predicated region
  $region58: #{custom_net_forward.1} parent=0 // pred_check
    _
  $region59: #{custom_net_forward.1} parent=0 // pred_check_branch
    %54 = sbr.rel (0) target = $region61
  $region60: #{custom_net_forward.1} parent=0 // pred_region
    _
  $region61: #{custom_net_forward.1} parent=0 // pred_fallthru
    _
  // Predicated region
  $region62: #{custom_net_forward.1} parent=0 // pred_check
    _
  $region63: #{custom_net_forward.1} parent=0 // pred_check_branch
    %56 = sbr.rel (0) target = $region65
  $region64: #{custom_net_forward.1} parent=0 // pred_region
    _
  $region65: #{custom_net_forward.1} parent=0 // pred_fallthru
    _
  // Predicated region
  $region66: #{custom_net_forward.1} parent=0 // pred_check
    _
  $region67: #{custom_net_forward.1} parent=0 // pred_check_branch
    %58 = sbr.rel (0) target = $region69
  $region68: #{custom_net_forward.1} parent=0 // pred_region
    _
  $region69: #{custom_net_forward.1} parent=0 // pred_fallthru
    _
  // Predicated region
  $region70: #{custom_net_forward.1} parent=0 // pred_check
    _
  $region71: #{custom_net_forward.1} parent=0 // pred_check_branch
    %60 = sbr.rel (0) target = $region73
  $region72: #{custom_net_forward.1} parent=0 // pred_region
    _
  $region73: #{custom_net_forward.1} parent=0 // pred_fallthru
    _
  // Predicated region
  $region74: #{custom_net_forward.1} parent=0 // pred_check
    _
  $region75: #{custom_net_forward.1} parent=0 // pred_check_branch
    %62 = sbr.rel (0) target = $region77
  $region76: #{custom_net_forward.1} parent=0 // pred_region
    _
  $region77: #{custom_net_forward.1} parent=0 // pred_fallthru
    _
  // Predicated region
  $region78: #{custom_net_forward.1} parent=0 // pred_check
    _
  $region79: #{custom_net_forward.1} parent=0 // pred_check_branch
    %64 = sbr.rel (0) target = $region81
  $region80: #{custom_net_forward.1} parent=0 // pred_region
    _
  $region81: #{custom_net_forward.1} parent=0 // pred_fallthru
    _
  %v65 = vld [vmem:[%s0] sm:$0xff]
  %v66 = vld [vmem:[%s0 + $0x8] sm:$0xff]
  %v67 = vld [vmem:[%s0 + $0x10] sm:$0xff]
  %v68 = vld [vmem:[%s0 + $0x18] sm:$0xff]
  %v69 = vld [vmem:[%s0 + $0x20] sm:$0xff]
  %v70 = vld [vmem:[%s0 + $0x28] sm:$0xff]
  %v71 = vld [vmem:[%s0 + $0x30] sm:$0xff]
  %v72 = vld [vmem:[%s0 + $0x38] sm:$0xff]
  %v73 = vld [vmem:[%s0 + $0x40] sm:$0xff]
  %v74 = vld [vmem:[%s0 + $0x48] sm:$0xff]
  %v75 = vld [vmem:[%s0 + $0x50] sm:$0xff]
  %v76 = vld [vmem:[%s0 + $0x58] sm:$0xff]
  %v77 = vld [vmem:[%s0 + $0x60] sm:$0xff]
  %v78 = vld [vmem:[%s0 + $0x68] sm:$0xff]
  %v79 = vld [vmem:[%s0 + $0x70] sm:$0xff]
  %v80 = vld [vmem:[%s0 + $0x78] sm:$0xff]
  %v81 = vld [vmem:[%s0 + $0x80] sm:$0xff]
  %v82 = vld [vmem:[%s0 + $0x88] sm:$0xff]
  %v83 = vld [vmem:[%s0 + $0x90] sm:$0xff]
  %v84 = vld [vmem:[%s0 + $0x98] sm:$0xff]
  %v85 = vld [vmem:[%s0 + $0xa0] sm:$0xff]
  %v86 = vld [vmem:[%s0 + $0xa8] sm:$0xff]
  %v87 = vld [vmem:[%s0 + $0xb0] sm:$0xff]
  %v88 = vld [vmem:[%s0 + $0xb8] sm:$0xff]
  %v89 = vld [vmem:[%s0 + $0xc0] sm:$0xff]
  %v90 = vld [vmem:[%s0 + $0xc8] sm:$0xff]
  %v91 = vld [vmem:[%s0 + $0xd0] sm:$0xff]
  %v92 = vld [vmem:[%s0 + $0xd8] sm:$0xff]
  %v93 = vld [vmem:[%s0 + $0xe0] sm:$0xff]
  %v94 = vld [vmem:[%s0 + $0xe8] sm:$0xff]
  %v95 = vld [vmem:[%s0 + $0xf0] sm:$0xff]
  %v96 = vld [vmem:[%s0 + $0xf8] sm:$0xff]
  %v97 = vld [vmem:[%s0 + $0x100] sm:$0xff]
  %v98 = vld [vmem:[%s0 + $0x108] sm:$0xff]
  %v99 = vld [vmem:[%s0 + $0x110] sm:$0xff]
  %v100 = vld [vmem:[%s0 + $0x118] sm:$0xff]
  %v101 = vld [vmem:[%s0 + $0x120] sm:$0xff]
  %v102 = vld [vmem:[%s0 + $0x128] sm:$0xff]
  %v103 = vld [vmem:[%s0 + $0x130] sm:$0xff]
  %v104 = vld [vmem:[%s0 + $0x138] sm:$0xff]
  %v105 = vld [vmem:[%s0 + $0x140] sm:$0xff]
  %v106 = vld [vmem:[%s0 + $0x148] sm:$0xff]
  %v107 = vld [vmem:[%s0 + $0x150] sm:$0xff]
  %v108 = vld [vmem:[%s0 + $0x158] sm:$0xff]
  %v109 = vld [vmem:[%s0 + $0x160] sm:$0xff]
  %v110 = vld [vmem:[%s0 + $0x168] sm:$0xff]
  %v111 = vld [vmem:[%s0 + $0x170] sm:$0xff]
  %v112 = vld [vmem:[%s0 + $0x178] sm:$0xff]
  %v113 = vld [vmem:[%s0 + $0x180] sm:$0xff]
  %v114 = vld [vmem:[%s0 + $0x188] sm:$0xff]
  %v115 = vld [vmem:[%s0 + $0x190] sm:$0xff]
  %v116 = vld [vmem:[%s0 + $0x198] sm:$0xff]
  %v117 = vld [vmem:[%s0 + $0x1a0] sm:$0xff]
  %v118 = vld [vmem:[%s0 + $0x1a8] sm:$0xff]
  %v119 = vld [vmem:[%s0 + $0x1b0] sm:$0xff]
  %v120 = vld [vmem:[%s0 + $0x1b8] sm:$0xff]
  %v121 = vld [vmem:[%s0 + $0x1c0] sm:$0xff]
  %v122 = vld [vmem:[%s0 + $0x1c8] sm:$0xff]
  %v123 = vld [vmem:[%s0 + $0x1d0] sm:$0xff]
  %v124 = vld [vmem:[%s0 + $0x1d8] sm:$0xff]
  %v125 = vld [vmem:[%s0 + $0x1e0] sm:$0xff]
  %v126 = vld [vmem:[%s0 + $0x1e8] sm:$0xff]
  %v127 = vld [vmem:[%s0 + $0x1f0] sm:$0xff]
  %v128 = vld [vmem:[%s0 + $0x1f8] sm:$0xff]
  %v129 = vld [vmem:[%s0 + $0x200] sm:$0xff]
  %v130 = vld [vmem:[%s0 + $0x208] sm:$0xff]
  %v131 = vld [vmem:[%s0 + $0x210] sm:$0xff]
  %v132 = vld [vmem:[%s0 + $0x218] sm:$0xff]
  %v133 = vld [vmem:[%s0 + $0x220] sm:$0xff]
  %v134 = vld [vmem:[%s0 + $0x228] sm:$0xff]
  %v135 = vld [vmem:[%s0 + $0x230] sm:$0xff]
  %v136 = vld [vmem:[%s0 + $0x238] sm:$0xff]
  %v137 = vld [vmem:[%s0 + $0x240] sm:$0xff]
  %v138 = vld [vmem:[%s0 + $0x248] sm:$0xff]
  %v139 = vld [vmem:[%s0 + $0x250] sm:$0xff]
  %v140 = vld [vmem:[%s0 + $0x258] sm:$0xff]
  %v141 = vld [vmem:[%s0 + $0x260] sm:$0xff]
  %v142 = vld [vmem:[%s0 + $0x268] sm:$0xff]
  %v143 = vld [vmem:[%s0 + $0x270] sm:$0xff]
  %v144 = vld [vmem:[%s0 + $0x278] sm:$0xff]
  %v145 = vld [vmem:[%s0 + $0x280] sm:$0xff]
  %v146 = vld [vmem:[%s0 + $0x288] sm:$0xff]
  %v147 = vld [vmem:[%s0 + $0x290] sm:$0xff]
  %v148 = vld [vmem:[%s0 + $0x298] sm:$0xff]
  %v149 = vld [vmem:[%s0 + $0x2a0] sm:$0xff]
  %v150 = vld [vmem:[%s0 + $0x2a8] sm:$0xff]
  %v151 = vld [vmem:[%s0 + $0x2b0] sm:$0xff]
  %v152 = vld [vmem:[%s0 + $0x2b8] sm:$0xff]
  %v153 = vld [vmem:[%s0 + $0x2c0] sm:$0xff]
  %v154 = vld [vmem:[%s0 + $0x2c8] sm:$0xff]
  %v155 = vld [vmem:[%s0 + $0x2d0] sm:$0xff]
  %v156 = vld [vmem:[%s0 + $0x2d8] sm:$0xff]
  %v157 = vld [vmem:[%s0 + $0x2e0] sm:$0xff]
  %v158 = vld [vmem:[%s0 + $0x2e8] sm:$0xff]
  %v159 = vld [vmem:[%s0 + $0x2f0] sm:$0xff]
  %v160 = vld [vmem:[%s0 + $0x2f8] sm:$0xff]
  %v161 = vld [vmem:[%s0 + $0x300] sm:$0xff]
  %v162 = vld [vmem:[%s0 + $0x308] sm:$0xff]
  %v163 = vld [vmem:[%s1] sm:$0xff]
  %v164 = vld [vmem:[%s1 + $0x8] sm:$0xff]
  %v165 = vld [vmem:[%s1 + $0x10] sm:$0xff]
  %v166 = vld [vmem:[%s1 + $0x18] sm:$0xff]
  %v167 = vld [vmem:[%s1 + $0x20] sm:$0xff]
  %v168 = vld [vmem:[%s1 + $0x28] sm:$0xff]
  %v169 = vld [vmem:[%s1 + $0x30] sm:$0xff]
  %v170 = vld [vmem:[%s1 + $0x38] sm:$0xff]
  %v171 = vld [vmem:[%s1 + $0x40] sm:$0xff]
  %v172 = vld [vmem:[%s1 + $0x48] sm:$0xff]
  %v173 = vld [vmem:[%s1 + $0x50] sm:$0xff]
  %v174 = vld [vmem:[%s1 + $0x58] sm:$0xff]
  %v175 = vld [vmem:[%s1 + $0x60] sm:$0xff]
  %v176 = vld [vmem:[%s1 + $0x68] sm:$0xff]
  %v177 = vld [vmem:[%s1 + $0x70] sm:$0xff]
  %v178 = vld [vmem:[%s1 + $0x78] sm:$0xff]
  %v179 = vld [vmem:[%s1 + $0x80] sm:$0xff]
  %v180 = vld [vmem:[%s1 + $0x88] sm:$0xff]
  %v181 = vld [vmem:[%s1 + $0x90] sm:$0x7]
  %v182 = vld [vmem:[%s2] sm:$0x1]
  %v184 = vlaneseq
  %v185 = vshrl.u32 %v184, 7
  %v186 = vsub.s32 0, %v185
  %v187 = vrot.slane %v182, %v186
  %vm189 = vcmask 154624
  %v191 = vsel %vm189, %v66, 0
  %v194 = vsel %vm189, %v68, 0
  %v197 = vsel %vm189, %v70, 0
  %v200 = vsel %vm189, %v72, 0
  %v203 = vsel %vm189, %v74, 0
  %v206 = vsel %vm189, %v76, 0
  %v209 = vsel %vm189, %v78, 0
  %v212 = vsel %vm189, %v80, 0
  %v215 = vsel %vm189, %v82, 0
  %v218 = vsel %vm189, %v84, 0
  %v221 = vsel %vm189, %v86, 0
  %v224 = vsel %vm189, %v88, 0
  %v227 = vsel %vm189, %v90, 0
  %v230 = vsel %vm189, %v92, 0
  %v233 = vsel %vm189, %v94, 0
  %v236 = vsel %vm189, %v96, 0
  %v239 = vsel %vm189, %v98, 0
  %v242 = vsel %vm189, %v100, 0
  %v245 = vsel %vm189, %v102, 0
  %v248 = vsel %vm189, %v104, 0
  %v251 = vsel %vm189, %v106, 0
  %v254 = vsel %vm189, %v108, 0
  %v257 = vsel %vm189, %v110, 0
  %v260 = vsel %vm189, %v112, 0
  %v263 = vsel %vm189, %v114, 0
  %v266 = vsel %vm189, %v116, 0
  %v269 = vsel %vm189, %v118, 0
  %v272 = vsel %vm189, %v120, 0
  %v275 = vsel %vm189, %v122, 0
  %v278 = vsel %vm189, %v124, 0
  %v281 = vsel %vm189, %v126, 0
  %v284 = vsel %vm189, %v128, 0
  %v287 = vsel %vm189, %v130, 0
  %v290 = vsel %vm189, %v132, 0
  %v293 = vsel %vm189, %v134, 0
  %v296 = vsel %vm189, %v136, 0
  %v299 = vsel %vm189, %v138, 0
  %v302 = vsel %vm189, %v140, 0
  %v305 = vsel %vm189, %v142, 0
  %v308 = vsel %vm189, %v144, 0
  %v311 = vsel %vm189, %v146, 0
  %v314 = vsel %vm189, %v148, 0
  %v317 = vsel %vm189, %v150, 0
  %v320 = vsel %vm189, %v152, 0
  %v323 = vsel %vm189, %v154, 0
  %v326 = vsel %vm189, %v156, 0
  %v329 = vsel %vm189, %v158, 0
  %v332 = vsel %vm189, %v160, 0
  %v335 = vsel %vm189, %v162, 0
  %vm337 = vcmask 1042432
  %v339 = vsel %vm337, %v181, 0
  %341 = vmatprep.subr.mxu0 0.0
  %342 = vmatpush1.msra.mxu0 %v163
  %343 = vmatprep.subr.mxu0 0.0
  %344 = vmatpush1.msra.mxu0 %v164
  %345 = vmatprep.subr.mxu0 0.0
  %346 = vmatpush1.msra.mxu0 %v165
  %347 = vmatprep.subr.mxu0 0.0
  %348 = vmatpush1.msra.mxu0 %v166
  %349 = vmatprep.subr.mxu0 0.0
  %350 = vmatpush1.msra.mxu0 %v167
  %351 = vmatprep.subr.mxu0 0.0
  %352 = vmatpush1.msra.mxu0 %v168
  %353 = vmatprep.subr.mxu0 0.0
  %354 = vmatpush1.msra.mxu0 %v169
  %355 = vmatprep.subr.mxu0 0.0
  %356 = vmatpush1.msra.mxu0 %v170
  %357 = vmatprep.subr.mxu0 0.0
  %358 = vmatpush1.msra.mxu0 %v171
  %359 = vmatprep.subr.mxu0 0.0
  %360 = vmatpush1.msra.mxu0 %v172
  %361 = vmatprep.subr.mxu0 0.0
  %362 = vmatpush1.msra.mxu0 %v173
  %363 = vmatprep.subr.mxu0 0.0
  %364 = vmatpush1.msra.mxu0 %v174
  %365 = vmatprep.subr.mxu0 0.0
  %366 = vmatpush1.msra.mxu0 %v175
  %367 = vmatprep.subr.mxu0 0.0
  %368 = vmatpush1.msra.mxu0 %v176
  %369 = vmatprep.subr.mxu0 0.0
  %370 = vmatpush1.msra.mxu0 %v177
  %371 = vmatprep.subr.mxu0 0.0
  %372 = vmatpush1.msra.mxu0 %v178
  %373 = vmatprep.subr.mxu0 0.0
  %374 = vmatpush1.msra.mxu0 %v179
  %375 = vmatprep.subr.mxu0 0.0
  %376 = vmatpush1.msra.mxu0 %v180
  %377 = vmatprep.subr.mxu0 0.0
  %378 = vmatpush1.msra.mxu0 %v339
  %379 = vmatprep.subr.mxu0 0.0
  %380 = vmatpush1.msra.mxu0 0.0
  %381 = vmatprep.subr.mxu0 0.0
  %382 = vmatpush1.msra.mxu0 0.0
  %383 = vmatprep.subr.mxu0 0.0
  %384 = vmatpush1.msra.mxu0 0.0
  %385 = vmatprep.subr.mxu0 0.0
  %386 = vmatpush1.msra.mxu0 0.0
  %387 = vmatprep.subr.mxu0 0.0
  %388 = vmatpush1.msra.mxu0 0.0
  %389 = vmatprep.subr.mxu0 0.0
  %390 = vmatpush1.msra.mxu0 0.0
  %391 = vmatprep.subr.mxu0 0.0
  %392 = vmatpush1.msra.mxu0 0.0
  %393 = vmatprep.subr.mxu0 0.0
  %394 = vmatpush1.msra.mxu0 0.0
  %395 = vmatprep.subr.mxu0 0.0
  %396 = vmatpush1.msra.mxu0 0.0
  %397 = vmatprep.subr.mxu0 0.0
  %398 = vmatpush1.msra.mxu0 0.0
  %399 = vmatprep.subr.mxu0 0.0
  %400 = vmatpush1.msra.mxu0 0.0
  %401 = vmatprep.subr.mxu0 0.0
  %402 = vmatpush1.msra.mxu0 0.0
  %403 = vmatprep.subr.mxu0 0.0
  %404 = vmatpush1.msra.mxu0 0.0
  %405 = vmatprep.mubr.f32.mxu0 %v191
  %406 = vmatmul.mubr.f32.gmra.mrb[0].mxu0 %v65
  %v407 = vpop.f32.mrb[0].mxu0
  %v408 = vadd.f32 %v187, %v407
  %v409 = vpop.f32.mrb[0].mxu0
  %410 = vmatprep.mubr.f32.mxu0 %v194
  %411 = vmatmul.mubr.f32.gmra.mrb[0].mxu0 %v67
  %v412 = vpop.f32.mrb[0].mxu0
  %v413 = vadd.f32 %v187, %v412
  %v414 = vpop.f32.mrb[0].mxu0
  %415 = vmatprep.mubr.f32.mxu0 %v197
  %416 = vmatmul.mubr.f32.gmra.mrb[0].mxu0 %v69
  %v417 = vpop.f32.mrb[0].mxu0
  %v418 = vadd.f32 %v187, %v417
  %v419 = vpop.f32.mrb[0].mxu0
  %420 = vmatprep.mubr.f32.mxu0 %v200
  %421 = vmatmul.mubr.f32.gmra.mrb[0].mxu0 %v71
  %v422 = vpop.f32.mrb[0].mxu0
  %v423 = vadd.f32 %v187, %v422
  %v424 = vpop.f32.mrb[0].mxu0
  %425 = vmatprep.mubr.f32.mxu0 %v203
  %426 = vmatmul.mubr.f32.gmra.mrb[0].mxu0 %v73
  %v427 = vpop.f32.mrb[0].mxu0
  %v428 = vadd.f32 %v187, %v427
  %v429 = vpop.f32.mrb[0].mxu0
  %430 = vmatprep.mubr.f32.mxu0 %v206
  %431 = vmatmul.mubr.f32.gmra.mrb[0].mxu0 %v75
  %v432 = vpop.f32.mrb[0].mxu0
  %v433 = vadd.f32 %v187, %v432
  %v434 = vpop.f32.mrb[0].mxu0
  %435 = vmatprep.mubr.f32.mxu0 %v209
  %436 = vmatmul.mubr.f32.gmra.mrb[0].mxu0 %v77
  %v437 = vpop.f32.mrb[0].mxu0
  %v438 = vadd.f32 %v187, %v437
  %v439 = vpop.f32.mrb[0].mxu0
  %440 = vmatprep.mubr.f32.mxu0 %v212
  %441 = vmatmul.mubr.f32.gmra.mrb[0].mxu0 %v79
  %v442 = vpop.f32.mrb[0].mxu0
  %v443 = vadd.f32 %v187, %v442
  %v444 = vpop.f32.mrb[0].mxu0
  %445 = vmatprep.mubr.f32.mxu0 %v215
  %446 = vmatmul.mubr.f32.gmra.mrb[0].mxu0 %v81
  %v447 = vpop.f32.mrb[0].mxu0
  %v448 = vadd.f32 %v187, %v447
  %v449 = vpop.f32.mrb[0].mxu0
  %450 = vmatprep.mubr.f32.mxu0 %v218
  %451 = vmatmul.mubr.f32.gmra.mrb[0].mxu0 %v83
  %v452 = vpop.f32.mrb[0].mxu0
  %v453 = vadd.f32 %v187, %v452
  %v454 = vpop.f32.mrb[0].mxu0
  %455 = vmatprep.mubr.f32.mxu0 %v221
  %456 = vmatmul.mubr.f32.gmra.mrb[0].mxu0 %v85
  %v457 = vpop.f32.mrb[0].mxu0
  %v458 = vadd.f32 %v187, %v457
  %v459 = vpop.f32.mrb[0].mxu0
  %460 = vmatprep.mubr.f32.mxu0 %v224
  %461 = vmatmul.mubr.f32.gmra.mrb[0].mxu0 %v87
  %v462 = vpop.f32.mrb[0].mxu0
  %v463 = vadd.f32 %v187, %v462
  %v464 = vpop.f32.mrb[0].mxu0
  %465 = vmatprep.mubr.f32.mxu0 %v227
  %466 = vmatmul.mubr.f32.gmra.mrb[0].mxu0 %v89
  %v467 = vpop.f32.mrb[0].mxu0
  %v468 = vadd.f32 %v187, %v467
  %v469 = vpop.f32.mrb[0].mxu0
  %470 = vmatprep.mubr.f32.mxu0 %v230
  %471 = vmatmul.mubr.f32.gmra.mrb[0].mxu0 %v91
  %v472 = vpop.f32.mrb[0].mxu0
  %v473 = vadd.f32 %v187, %v472
  %v474 = vpop.f32.mrb[0].mxu0
  %475 = vmatprep.mubr.f32.mxu0 %v233
  %476 = vmatmul.mubr.f32.gmra.mrb[0].mxu0 %v93
  %v477 = vpop.f32.mrb[0].mxu0
  %v478 = vadd.f32 %v187, %v477
  %v479 = vpop.f32.mrb[0].mxu0
  %480 = vmatprep.mubr.f32.mxu0 %v236
  %481 = vmatmul.mubr.f32.gmra.mrb[0].mxu0 %v95
  %v482 = vpop.f32.mrb[0].mxu0
  %v483 = vadd.f32 %v187, %v482
  %v484 = vpop.f32.mrb[0].mxu0
  %485 = vmatprep.mubr.f32.mxu0 %v239
  %486 = vmatmul.mubr.f32.gmra.mrb[0].mxu0 %v97
  %v487 = vpop.f32.mrb[0].mxu0
  %v488 = vadd.f32 %v187, %v487
  %v489 = vpop.f32.mrb[0].mxu0
  %490 = vmatprep.mubr.f32.mxu0 %v242
  %491 = vmatmul.mubr.f32.gmra.mrb[0].mxu0 %v99
  %v492 = vpop.f32.mrb[0].mxu0
  %v493 = vadd.f32 %v187, %v492
  %v494 = vpop.f32.mrb[0].mxu0
  %495 = vmatprep.mubr.f32.mxu0 %v245
  %496 = vmatmul.mubr.f32.gmra.mrb[0].mxu0 %v101
  %v497 = vpop.f32.mrb[0].mxu0
  %v498 = vadd.f32 %v187, %v497
  %v499 = vpop.f32.mrb[0].mxu0
  %500 = vmatprep.mubr.f32.mxu0 %v248
  %501 = vmatmul.mubr.f32.gmra.mrb[0].mxu0 %v103
  %v502 = vpop.f32.mrb[0].mxu0
  %v503 = vadd.f32 %v187, %v502
  %v504 = vpop.f32.mrb[0].mxu0
  %505 = vmatprep.mubr.f32.mxu0 %v251
  %506 = vmatmul.mubr.f32.gmra.mrb[0].mxu0 %v105
  %v507 = vpop.f32.mrb[0].mxu0
  %v508 = vadd.f32 %v187, %v507
  %v509 = vpop.f32.mrb[0].mxu0
  %510 = vmatprep.mubr.f32.mxu0 %v254
  %511 = vmatmul.mubr.f32.gmra.mrb[0].mxu0 %v107
  %v512 = vpop.f32.mrb[0].mxu0
  %v513 = vadd.f32 %v187, %v512
  %v514 = vpop.f32.mrb[0].mxu0
  %515 = vmatprep.mubr.f32.mxu0 %v257
  %516 = vmatmul.mubr.f32.gmra.mrb[0].mxu0 %v109
  %v517 = vpop.f32.mrb[0].mxu0
  %v518 = vadd.f32 %v187, %v517
  %v519 = vpop.f32.mrb[0].mxu0
  %520 = vmatprep.mubr.f32.mxu0 %v260
  %521 = vmatmul.mubr.f32.gmra.mrb[0].mxu0 %v111
  %v522 = vpop.f32.mrb[0].mxu0
  %v523 = vadd.f32 %v187, %v522
  %v524 = vpop.f32.mrb[0].mxu0
  %525 = vmatprep.mubr.f32.mxu0 %v263
  %526 = vmatmul.mubr.f32.gmra.mrb[0].mxu0 %v113
  %v527 = vpop.f32.mrb[0].mxu0
  %v528 = vadd.f32 %v187, %v527
  %v529 = vpop.f32.mrb[0].mxu0
  %530 = vmatprep.mubr.f32.mxu0 %v266
  %531 = vmatmul.mubr.f32.gmra.mrb[0].mxu0 %v115
  %v532 = vpop.f32.mrb[0].mxu0
  %v533 = vadd.f32 %v187, %v532
  %v534 = vpop.f32.mrb[0].mxu0
  %535 = vmatprep.mubr.f32.mxu0 %v269
  %536 = vmatmul.mubr.f32.gmra.mrb[0].mxu0 %v117
  %v537 = vpop.f32.mrb[0].mxu0
  %v538 = vadd.f32 %v187, %v537
  %v539 = vpop.f32.mrb[0].mxu0
  %540 = vmatprep.mubr.f32.mxu0 %v272
  %541 = vmatmul.mubr.f32.gmra.mrb[0].mxu0 %v119
  %v542 = vpop.f32.mrb[0].mxu0
  %v543 = vadd.f32 %v187, %v542
  %v544 = vpop.f32.mrb[0].mxu0
  %545 = vmatprep.mubr.f32.mxu0 %v275
  %546 = vmatmul.mubr.f32.gmra.mrb[0].mxu0 %v121
  %v547 = vpop.f32.mrb[0].mxu0
  %v548 = vadd.f32 %v187, %v547
  %v549 = vpop.f32.mrb[0].mxu0
  %550 = vmatprep.mubr.f32.mxu0 %v278
  %551 = vmatmul.mubr.f32.gmra.mrb[0].mxu0 %v123
  %v552 = vpop.f32.mrb[0].mxu0
  %v553 = vadd.f32 %v187, %v552
  %v554 = vpop.f32.mrb[0].mxu0
  %555 = vmatprep.mubr.f32.mxu0 %v281
  %556 = vmatmul.mubr.f32.gmra.mrb[0].mxu0 %v125
  %v557 = vpop.f32.mrb[0].mxu0
  %v558 = vadd.f32 %v187, %v557
  %v559 = vpop.f32.mrb[0].mxu0
  %560 = vmatprep.mubr.f32.mxu0 %v284
  %561 = vmatmul.mubr.f32.gmra.mrb[0].mxu0 %v127
  %v562 = vpop.f32.mrb[0].mxu0
  %v563 = vadd.f32 %v187, %v562
  %v564 = vpop.f32.mrb[0].mxu0
  %565 = vmatprep.mubr.f32.mxu0 %v287
  %566 = vmatmul.mubr.f32.gmra.mrb[0].mxu0 %v129
  %v567 = vpop.f32.mrb[0].mxu0
  %v568 = vadd.f32 %v187, %v567
  %v569 = vpop.f32.mrb[0].mxu0
  %570 = vmatprep.mubr.f32.mxu0 %v290
  %571 = vmatmul.mubr.f32.gmra.mrb[0].mxu0 %v131
  %v572 = vpop.f32.mrb[0].mxu0
  %v573 = vadd.f32 %v187, %v572
  %v574 = vpop.f32.mrb[0].mxu0
  %575 = vmatprep.mubr.f32.mxu0 %v293
  %576 = vmatmul.mubr.f32.gmra.mrb[0].mxu0 %v133
  %v577 = vpop.f32.mrb[0].mxu0
  %v578 = vadd.f32 %v187, %v577
  %v579 = vpop.f32.mrb[0].mxu0
  %580 = vmatprep.mubr.f32.mxu0 %v296
  %581 = vmatmul.mubr.f32.gmra.mrb[0].mxu0 %v135
  %v582 = vpop.f32.mrb[0].mxu0
  %v583 = vadd.f32 %v187, %v582
  %v584 = vpop.f32.mrb[0].mxu0
  %585 = vmatprep.mubr.f32.mxu0 %v299
  %586 = vmatmul.mubr.f32.gmra.mrb[0].mxu0 %v137
  %v587 = vpop.f32.mrb[0].mxu0
  %v588 = vadd.f32 %v187, %v587
  %v589 = vpop.f32.mrb[0].mxu0
  %590 = vmatprep.mubr.f32.mxu0 %v302
  %591 = vmatmul.mubr.f32.gmra.mrb[0].mxu0 %v139
  %v592 = vpop.f32.mrb[0].mxu0
  %v593 = vadd.f32 %v187, %v592
  %v594 = vpop.f32.mrb[0].mxu0
  %595 = vmatprep.mubr.f32.mxu0 %v305
  %596 = vmatmul.mubr.f32.gmra.mrb[0].mxu0 %v141
  %v597 = vpop.f32.mrb[0].mxu0
  %v598 = vadd.f32 %v187, %v597
  %v599 = vpop.f32.mrb[0].mxu0
  %600 = vmatprep.mubr.f32.mxu0 %v308
  %601 = vmatmul.mubr.f32.gmra.mrb[0].mxu0 %v143
  %v602 = vpop.f32.mrb[0].mxu0
  %v603 = vadd.f32 %v187, %v602
  %v604 = vpop.f32.mrb[0].mxu0
  %605 = vmatprep.mubr.f32.mxu0 %v311
  %606 = vmatmul.mubr.f32.gmra.mrb[0].mxu0 %v145
  %v607 = vpop.f32.mrb[0].mxu0
  %v608 = vadd.f32 %v187, %v607
  %v609 = vpop.f32.mrb[0].mxu0
  %610 = vmatprep.mubr.f32.mxu0 %v314
  %611 = vmatmul.mubr.f32.gmra.mrb[0].mxu0 %v147
  %v612 = vpop.f32.mrb[0].mxu0
  %v613 = vadd.f32 %v187, %v612
  %v614 = vpop.f32.mrb[0].mxu0
  %615 = vmatprep.mubr.f32.mxu0 %v317
  %616 = vmatmul.mubr.f32.gmra.mrb[0].mxu0 %v149
  %v617 = vpop.f32.mrb[0].mxu0
  %v618 = vadd.f32 %v187, %v617
  %v619 = vpop.f32.mrb[0].mxu0
  %620 = vmatprep.mubr.f32.mxu0 %v320
  %621 = vmatmul.mubr.f32.gmra.mrb[0].mxu0 %v151
  %v622 = vpop.f32.mrb[0].mxu0
  %v623 = vadd.f32 %v187, %v622
  %v624 = vpop.f32.mrb[0].mxu0
  %625 = vmatprep.mubr.f32.mxu0 %v323
  %626 = vmatmul.mubr.f32.gmra.mrb[0].mxu0 %v153
  %v627 = vpop.f32.mrb[0].mxu0
  %v628 = vadd.f32 %v187, %v627
  %v629 = vpop.f32.mrb[0].mxu0
  %630 = vmatprep.mubr.f32.mxu0 %v326
  %631 = vmatmul.mubr.f32.gmra.mrb[0].mxu0 %v155
  %v632 = vpop.f32.mrb[0].mxu0
  %v633 = vadd.f32 %v187, %v632
  %v634 = vpop.f32.mrb[0].mxu0
  %635 = vmatprep.mubr.f32.mxu0 %v329
  %636 = vmatmul.mubr.f32.gmra.mrb[0].mxu0 %v157
  %v637 = vpop.f32.mrb[0].mxu0
  %v638 = vadd.f32 %v187, %v637
  %v639 = vpop.f32.mrb[0].mxu0
  %640 = vmatprep.mubr.f32.mxu0 %v332
  %641 = vmatmul.mubr.f32.gmra.mrb[0].mxu0 %v159
  %v642 = vpop.f32.mrb[0].mxu0
  %v643 = vadd.f32 %v187, %v642
  %v644 = vpop.f32.mrb[0].mxu0
  %645 = vmatprep.mubr.f32.mxu0 %v335
  %646 = vmatmul.mubr.f32.gmra.mrb[0].mxu0 %v161
  %v647 = vpop.f32.mrb[0].mxu0
  %v648 = vadd.f32 %v187, %v647
  %v649 = vpop.f32.mrb[0].mxu0
  %650 = vdwg.mxu0
  %v651 = vmax.f32 %v408, 0.0
  %v652 = vmax.f32 %v413, 0.0
  %v653 = vmax.f32 %v418, 0.0
  %v654 = vmax.f32 %v423, 0.0
  %v655 = vmax.f32 %v428, 0.0
  %v656 = vmax.f32 %v433, 0.0
  %v657 = vmax.f32 %v438, 0.0
  %v658 = vmax.f32 %v443, 0.0
  %v659 = vmax.f32 %v448, 0.0
  %v660 = vmax.f32 %v453, 0.0
  %v661 = vmax.f32 %v458, 0.0
  %v662 = vmax.f32 %v463, 0.0
  %v663 = vmax.f32 %v468, 0.0
  %v664 = vmax.f32 %v473, 0.0
  %v665 = vmax.f32 %v478, 0.0
  %v666 = vmax.f32 %v483, 0.0
  %v667 = vmax.f32 %v488, 0.0
  %v668 = vmax.f32 %v493, 0.0
  %v669 = vmax.f32 %v498, 0.0
  %v670 = vmax.f32 %v503, 0.0
  %v671 = vmax.f32 %v508, 0.0
  %v672 = vmax.f32 %v513, 0.0
  %v673 = vmax.f32 %v518, 0.0
  %v674 = vmax.f32 %v523, 0.0
  %v675 = vmax.f32 %v528, 0.0
  %v676 = vmax.f32 %v533, 0.0
  %v677 = vmax.f32 %v538, 0.0
  %v678 = vmax.f32 %v543, 0.0
  %v679 = vmax.f32 %v548, 0.0
  %v680 = vmax.f32 %v553, 0.0
  %v681 = vmax.f32 %v558, 0.0
  %v682 = vmax.f32 %v563, 0.0
  %v683 = vmax.f32 %v568, 0.0
  %v684 = vmax.f32 %v573, 0.0
  %v685 = vmax.f32 %v578, 0.0
  %v686 = vmax.f32 %v583, 0.0
  %v687 = vmax.f32 %v588, 0.0
  %v688 = vmax.f32 %v593, 0.0
  %v689 = vmax.f32 %v598, 0.0
  %v690 = vmax.f32 %v603, 0.0
  %v691 = vmax.f32 %v608, 0.0
  %v692 = vmax.f32 %v613, 0.0
  %v693 = vmax.f32 %v618, 0.0
  %v694 = vmax.f32 %v623, 0.0
  %v695 = vmax.f32 %v628, 0.0
  %v696 = vmax.f32 %v633, 0.0
  %v697 = vmax.f32 %v638, 0.0
  %v698 = vmax.f32 %v643, 0.0
  %v699 = vmax.f32 %v648, 0.0
  %vm700 = vcmask 523264
  %701 = vst.msk [vmem:[#allocation2] sm:$0xff] %vm700, %v651
  %702 = vst.msk [vmem:[#allocation2 + $0x8] sm:$0xff] %vm700, %v652
  %703 = vst.msk [vmem:[#allocation2 + $0x10] sm:$0xff] %vm700, %v653
  %704 = vst.msk [vmem:[#allocation2 + $0x18] sm:$0xff] %vm700, %v654
  %705 = vst.msk [vmem:[#allocation2 + $0x20] sm:$0xff] %vm700, %v655
  %706 = vst.msk [vmem:[#allocation2 + $0x28] sm:$0xff] %vm700, %v656
  %707 = vst.msk [vmem:[#allocation2 + $0x30] sm:$0xff] %vm700, %v657
  %708 = vst.msk [vmem:[#allocation2 + $0x38] sm:$0xff] %vm700, %v658
  %709 = vst.msk [vmem:[#allocation2 + $0x40] sm:$0xff] %vm700, %v659
  %710 = vst.msk [vmem:[#allocation2 + $0x48] sm:$0xff] %vm700, %v660
  %711 = vst.msk [vmem:[#allocation2 + $0x50] sm:$0xff] %vm700, %v661
  %712 = vst.msk [vmem:[#allocation2 + $0x58] sm:$0xff] %vm700, %v662
  %713 = vst.msk [vmem:[#allocation2 + $0x60] sm:$0xff] %vm700, %v663
  %714 = vst.msk [vmem:[#allocation2 + $0x68] sm:$0xff] %vm700, %v664
  %715 = vst.msk [vmem:[#allocation2 + $0x70] sm:$0xff] %vm700, %v665
  %716 = vst.msk [vmem:[#allocation2 + $0x78] sm:$0xff] %vm700, %v666
  %717 = vst.msk [vmem:[#allocation2 + $0x80] sm:$0xff] %vm700, %v667
  %718 = vst.msk [vmem:[#allocation2 + $0x88] sm:$0xff] %vm700, %v668
  %719 = vst.msk [vmem:[#allocation2 + $0x90] sm:$0xff] %vm700, %v669
  %720 = vst.msk [vmem:[#allocation2 + $0x98] sm:$0xff] %vm700, %v670
  %721 = vst.msk [vmem:[#allocation2 + $0xa0] sm:$0xff] %vm700, %v671
  %722 = vst.msk [vmem:[#allocation2 + $0xa8] sm:$0xff] %vm700, %v672
  %723 = vst.msk [vmem:[#allocation2 + $0xb0] sm:$0xff] %vm700, %v673
  %724 = vst.msk [vmem:[#allocation2 + $0xb8] sm:$0xff] %vm700, %v674
  %725 = vst.msk [vmem:[#allocation2 + $0xc0] sm:$0xff] %vm700, %v675
  %726 = vst.msk [vmem:[#allocation2 + $0xc8] sm:$0xff] %vm700, %v676
  %727 = vst.msk [vmem:[#allocation2 + $0xd0] sm:$0xff] %vm700, %v677
  %728 = vst.msk [vmem:[#allocation2 + $0xd8] sm:$0xff] %vm700, %v678
  %729 = vst.msk [vmem:[#allocation2 + $0xe0] sm:$0xff] %vm700, %v679
  %730 = vst.msk [vmem:[#allocation2 + $0xe8] sm:$0xff] %vm700, %v680
  %731 = vst.msk [vmem:[#allocation2 + $0xf0] sm:$0xff] %vm700, %v681
  %732 = vst.msk [vmem:[#allocation2 + $0xf8] sm:$0xff] %vm700, %v682
  %733 = vst.msk [vmem:[#allocation2 + $0x100] sm:$0xff] %vm700, %v683
  %734 = vst.msk [vmem:[#allocation2 + $0x108] sm:$0xff] %vm700, %v684
  %735 = vst.msk [vmem:[#allocation2 + $0x110] sm:$0xff] %vm700, %v685
  %736 = vst.msk [vmem:[#allocation2 + $0x118] sm:$0xff] %vm700, %v686
  %737 = vst.msk [vmem:[#allocation2 + $0x120] sm:$0xff] %vm700, %v687
  %738 = vst.msk [vmem:[#allocation2 + $0x128] sm:$0xff] %vm700, %v688
  %739 = vst.msk [vmem:[#allocation2 + $0x130] sm:$0xff] %vm700, %v689
  %740 = vst.msk [vmem:[#allocation2 + $0x138] sm:$0xff] %vm700, %v690
  %741 = vst.msk [vmem:[#allocation2 + $0x140] sm:$0xff] %vm700, %v691
  %742 = vst.msk [vmem:[#allocation2 + $0x148] sm:$0xff] %vm700, %v692
  %743 = vst.msk [vmem:[#allocation2 + $0x150] sm:$0xff] %vm700, %v693
  %744 = vst.msk [vmem:[#allocation2 + $0x158] sm:$0xff] %vm700, %v694
  %745 = vst.msk [vmem:[#allocation2 + $0x160] sm:$0xff] %vm700, %v695
  %746 = vst.msk [vmem:[#allocation2 + $0x168] sm:$0xff] %vm700, %v696
  %747 = vst.msk [vmem:[#allocation2 + $0x170] sm:$0xff] %vm700, %v697
  %748 = vst.msk [vmem:[#allocation2 + $0x178] sm:$0xff] %vm700, %v698
  %749 = vst.msk [vmem:[#allocation2 + $0x180] sm:$0xff] %vm700, %v699
  %v750 = vld [vmem:[#allocation2] sm:$0xff]
  %v751 = vld [vmem:[#allocation2 + $0x8] sm:$0xff]
  %v752 = vld [vmem:[#allocation2 + $0x10] sm:$0xff]
  %v753 = vld [vmem:[#allocation2 + $0x18] sm:$0xff]
  %v754 = vld [vmem:[#allocation2 + $0x20] sm:$0xff]
  %v755 = vld [vmem:[#allocation2 + $0x28] sm:$0xff]
  %v756 = vld [vmem:[#allocation2 + $0x30] sm:$0xff]
  %v757 = vld [vmem:[#allocation2 + $0x38] sm:$0xff]
  %v758 = vld [vmem:[#allocation2 + $0x40] sm:$0xff]
  %v759 = vld [vmem:[#allocation2 + $0x48] sm:$0xff]
  %v760 = vld [vmem:[#allocation2 + $0x50] sm:$0xff]
  %v761 = vld [vmem:[#allocation2 + $0x58] sm:$0xff]
  %v762 = vld [vmem:[#allocation2 + $0x60] sm:$0xff]
  %v763 = vld [vmem:[#allocation2 + $0x68] sm:$0xff]
  %v764 = vld [vmem:[#allocation2 + $0x70] sm:$0xff]
  %v765 = vld [vmem:[#allocation2 + $0x78] sm:$0xff]
  %v766 = vld [vmem:[#allocation2 + $0x80] sm:$0xff]
  %v767 = vld [vmem:[#allocation2 + $0x88] sm:$0xff]
  %v768 = vld [vmem:[#allocation2 + $0x90] sm:$0xff]
  %v769 = vld [vmem:[#allocation2 + $0x98] sm:$0xff]
  %v770 = vld [vmem:[#allocation2 + $0xa0] sm:$0xff]
  %v771 = vld [vmem:[#allocation2 + $0xa8] sm:$0xff]
  %v772 = vld [vmem:[#allocation2 + $0xb0] sm:$0xff]
  %v773 = vld [vmem:[#allocation2 + $0xb8] sm:$0xff]
  %v774 = vld [vmem:[#allocation2 + $0xc0] sm:$0xff]
  %v775 = vld [vmem:[#allocation2 + $0xc8] sm:$0xff]
  %v776 = vld [vmem:[#allocation2 + $0xd0] sm:$0xff]
  %v777 = vld [vmem:[#allocation2 + $0xd8] sm:$0xff]
  %v778 = vld [vmem:[#allocation2 + $0xe0] sm:$0xff]
  %v779 = vld [vmem:[#allocation2 + $0xe8] sm:$0xff]
  %v780 = vld [vmem:[#allocation2 + $0xf0] sm:$0xff]
  %v781 = vld [vmem:[#allocation2 + $0xf8] sm:$0xff]
  %v782 = vld [vmem:[#allocation2 + $0x100] sm:$0xff]
  %v783 = vld [vmem:[#allocation2 + $0x108] sm:$0xff]
  %v784 = vld [vmem:[#allocation2 + $0x110] sm:$0xff]
  %v785 = vld [vmem:[#allocation2 + $0x118] sm:$0xff]
  %v786 = vld [vmem:[#allocation2 + $0x120] sm:$0xff]
  %v787 = vld [vmem:[#allocation2 + $0x128] sm:$0xff]
  %v788 = vld [vmem:[#allocation2 + $0x130] sm:$0xff]
  %v789 = vld [vmem:[#allocation2 + $0x138] sm:$0xff]
  %v790 = vld [vmem:[#allocation2 + $0x140] sm:$0xff]
  %v791 = vld [vmem:[#allocation2 + $0x148] sm:$0xff]
  %v792 = vld [vmem:[#allocation2 + $0x150] sm:$0xff]
  %v793 = vld [vmem:[#allocation2 + $0x158] sm:$0xff]
  %v794 = vld [vmem:[#allocation2 + $0x160] sm:$0xff]
  %v795 = vld [vmem:[#allocation2 + $0x168] sm:$0xff]
  %v796 = vld [vmem:[#allocation2 + $0x170] sm:$0xff]
  %v797 = vld [vmem:[#allocation2 + $0x178] sm:$0xff]
  %v798 = vld [vmem:[#allocation2 + $0x180] sm:$0xff]
  %v799 = vld [vmem:[%s3] sm:$0xff]
  %v800 = vld [vmem:[%s3 + $0x8] sm:$0xff]
  %v801 = vld [vmem:[%s3 + $0x10] sm:$0xff]
  %v802 = vld [vmem:[%s3 + $0x18] sm:$0xff]
  %v803 = vld [vmem:[%s3 + $0x20] sm:$0xff]
  %v804 = vld [vmem:[%s3 + $0x28] sm:$0xff]
  %v805 = vld [vmem:[%s3 + $0x30] sm:$0xff]
  %v806 = vld [vmem:[%s3 + $0x38] sm:$0xff]
  %v807 = vld [vmem:[%s4] sm:$0x1]
  %v809 = vlaneseq
  %v810 = vshrl.u32 %v809, 7
  %v811 = vsub.s32 0, %v810
  %v812 = vrot.slane %v807, %v811
  %v815 = vsel %vm700, %v750, 0
  %v818 = vsel %vm700, %v751, 0
  %v821 = vsel %vm700, %v752, 0
  %v824 = vsel %vm700, %v753, 0
  %v827 = vsel %vm700, %v754, 0
  %v830 = vsel %vm700, %v755, 0
  %v833 = vsel %vm700, %v756, 0
  %v836 = vsel %vm700, %v757, 0
  %v839 = vsel %vm700, %v758, 0
  %v842 = vsel %vm700, %v759, 0
  %v845 = vsel %vm700, %v760, 0
  %v848 = vsel %vm700, %v761, 0
  %v851 = vsel %vm700, %v762, 0
  %v854 = vsel %vm700, %v763, 0
  %v857 = vsel %vm700, %v764, 0
  %v860 = vsel %vm700, %v765, 0
  %v863 = vsel %vm700, %v766, 0
  %v866 = vsel %vm700, %v767, 0
  %v869 = vsel %vm700, %v768, 0
  %v872 = vsel %vm700, %v769, 0
  %v875 = vsel %vm700, %v770, 0
  %v878 = vsel %vm700, %v771, 0
  %v881 = vsel %vm700, %v772, 0
  %v884 = vsel %vm700, %v773, 0
  %v887 = vsel %vm700, %v774, 0
  %v890 = vsel %vm700, %v775, 0
  %v893 = vsel %vm700, %v776, 0
  %v896 = vsel %vm700, %v777, 0
  %v899 = vsel %vm700, %v778, 0
  %v902 = vsel %vm700, %v779, 0
  %v905 = vsel %vm700, %v780, 0
  %v908 = vsel %vm700, %v781, 0
  %v911 = vsel %vm700, %v782, 0
  %v914 = vsel %vm700, %v783, 0
  %v917 = vsel %vm700, %v784, 0
  %v920 = vsel %vm700, %v785, 0
  %v923 = vsel %vm700, %v786, 0
  %v926 = vsel %vm700, %v787, 0
  %v929 = vsel %vm700, %v788, 0
  %v932 = vsel %vm700, %v789, 0
  %v935 = vsel %vm700, %v790, 0
  %v938 = vsel %vm700, %v791, 0
  %v941 = vsel %vm700, %v792, 0
  %v944 = vsel %vm700, %v793, 0
  %v947 = vsel %vm700, %v794, 0
  %v950 = vsel %vm700, %v795, 0
  %v953 = vsel %vm700, %v796, 0
  %v956 = vsel %vm700, %v797, 0
  %v959 = vsel %vm700, %v798, 0
  %961 = vmatprep.subr.mxu0 0.0
  %962 = vmatpush1.msra.mxu0 %v799
  %963 = vmatprep.subr.mxu0 0.0
  %964 = vmatpush1.msra.mxu0 %v800
  %965 = vmatprep.subr.mxu0 0.0
  %966 = vmatpush1.msra.mxu0 %v801
  %967 = vmatprep.subr.mxu0 0.0
  %968 = vmatpush1.msra.mxu0 %v802
  %969 = vmatprep.subr.mxu0 0.0
  %970 = vmatpush1.msra.mxu0 %v803
  %971 = vmatprep.subr.mxu0 0.0
  %972 = vmatpush1.msra.mxu0 %v804
  %973 = vmatprep.subr.mxu0 0.0
  %974 = vmatpush1.msra.mxu0 %v805
  %975 = vmatprep.subr.mxu0 0.0
  %976 = vmatpush1.msra.mxu0 %v806
  %977 = vmatprep.subr.mxu0 0.0
  %978 = vmatpush1.msra.mxu0 0.0
  %979 = vmatprep.subr.mxu0 0.0
  %980 = vmatpush1.msra.mxu0 0.0
  %981 = vmatprep.subr.mxu0 0.0
  %982 = vmatpush1.msra.mxu0 0.0
  %983 = vmatprep.subr.mxu0 0.0
  %984 = vmatpush1.msra.mxu0 0.0
  %985 = vmatprep.subr.mxu0 0.0
  %986 = vmatpush1.msra.mxu0 0.0
  %987 = vmatprep.subr.mxu0 0.0
  %988 = vmatpush1.msra.mxu0 0.0
  %989 = vmatprep.subr.mxu0 0.0
  %990 = vmatpush1.msra.mxu0 0.0
  %991 = vmatprep.subr.mxu0 0.0
  %992 = vmatpush1.msra.mxu0 0.0
  %993 = vmatprep.subr.mxu0 0.0
  %994 = vmatpush1.msra.mxu0 0.0
  %995 = vmatprep.subr.mxu0 0.0
  %996 = vmatpush1.msra.mxu0 0.0
  %997 = vmatprep.subr.mxu0 0.0
  %998 = vmatpush1.msra.mxu0 0.0
  %999 = vmatprep.subr.mxu0 0.0
  %1000 = vmatpush1.msra.mxu0 0.0
  %1001 = vmatprep.subr.mxu0 0.0
  %1002 = vmatpush1.msra.mxu0 0.0
  %1003 = vmatprep.subr.mxu0 0.0
  %1004 = vmatpush1.msra.mxu0 0.0
  %1005 = vmatprep.subr.mxu0 0.0
  %1006 = vmatpush1.msra.mxu0 0.0
  %1007 = vmatprep.subr.mxu0 0.0
  %1008 = vmatpush1.msra.mxu0 0.0
  %1009 = vmatprep.subr.mxu0 0.0
  %1010 = vmatpush1.msra.mxu0 0.0
  %1011 = vmatprep.subr.mxu0 0.0
  %1012 = vmatpush1.msra.mxu0 0.0
  %1013 = vmatprep.subr.mxu0 0.0
  %1014 = vmatpush1.msra.mxu0 0.0
  %1015 = vmatprep.subr.mxu0 0.0
  %1016 = vmatpush1.msra.mxu0 0.0
  %1017 = vmatprep.subr.mxu0 0.0
  %1018 = vmatpush1.msra.mxu0 0.0
  %1019 = vmatprep.subr.mxu0 0.0
  %1020 = vmatpush1.msra.mxu0 0.0
  %1021 = vmatprep.subr.mxu0 0.0
  %1022 = vmatpush1.msra.mxu0 0.0
  %1023 = vmatprep.subr.mxu0 0.0
  %1024 = vmatpush1.msra.mxu0 0.0
  %1025 = vmatprep.mubr.f32.mxu0 0.0
  %1026 = vmatmul.mubr.f32.gmra.mrb[0].mxu0 %v815
  %v1027 = vpop.f32.mrb[0].mxu0
  %v1028 = vadd.f32 %v812, %v1027
  %v1029 = vpop.f32.mrb[0].mxu0
  %1030 = vmatprep.mubr.f32.mxu0 0.0
  %1031 = vmatmul.mubr.f32.gmra.mrb[0].mxu0 %v818
  %v1032 = vpop.f32.mrb[0].mxu0
  %v1033 = vadd.f32 %v812, %v1032
  %v1034 = vpop.f32.mrb[0].mxu0
  %1035 = vmatprep.mubr.f32.mxu0 0.0
  %1036 = vmatmul.mubr.f32.gmra.mrb[0].mxu0 %v821
  %v1037 = vpop.f32.mrb[0].mxu0
  %v1038 = vadd.f32 %v812, %v1037
  %v1039 = vpop.f32.mrb[0].mxu0
  %1040 = vmatprep.mubr.f32.mxu0 0.0
  %1041 = vmatmul.mubr.f32.gmra.mrb[0].mxu0 %v824
  %v1042 = vpop.f32.mrb[0].mxu0
  %v1043 = vadd.f32 %v812, %v1042
  %v1044 = vpop.f32.mrb[0].mxu0
  %1045 = vmatprep.mubr.f32.mxu0 0.0
  %1046 = vmatmul.mubr.f32.gmra.mrb[0].mxu0 %v827
  %v1047 = vpop.f32.mrb[0].mxu0
  %v1048 = vadd.f32 %v812, %v1047
  %v1049 = vpop.f32.mrb[0].mxu0
  %1050 = vmatprep.mubr.f32.mxu0 0.0
  %1051 = vmatmul.mubr.f32.gmra.mrb[0].mxu0 %v830
  %v1052 = vpop.f32.mrb[0].mxu0
  %v1053 = vadd.f32 %v812, %v1052
  %v1054 = vpop.f32.mrb[0].mxu0
  %1055 = vmatprep.mubr.f32.mxu0 0.0
  %1056 = vmatmul.mubr.f32.gmra.mrb[0].mxu0 %v833
  %v1057 = vpop.f32.mrb[0].mxu0
  %v1058 = vadd.f32 %v812, %v1057
  %v1059 = vpop.f32.mrb[0].mxu0
  %1060 = vmatprep.mubr.f32.mxu0 0.0
  %1061 = vmatmul.mubr.f32.gmra.mrb[0].mxu0 %v836
  %v1062 = vpop.f32.mrb[0].mxu0
  %v1063 = vadd.f32 %v812, %v1062
  %v1064 = vpop.f32.mrb[0].mxu0
  %1065 = vmatprep.mubr.f32.mxu0 0.0
  %1066 = vmatmul.mubr.f32.gmra.mrb[0].mxu0 %v839
  %v1067 = vpop.f32.mrb[0].mxu0
  %v1068 = vadd.f32 %v812, %v1067
  %v1069 = vpop.f32.mrb[0].mxu0
  %1070 = vmatprep.mubr.f32.mxu0 0.0
  %1071 = vmatmul.mubr.f32.gmra.mrb[0].mxu0 %v842
  %v1072 = vpop.f32.mrb[0].mxu0
  %v1073 = vadd.f32 %v812, %v1072
  %v1074 = vpop.f32.mrb[0].mxu0
  %1075 = vmatprep.mubr.f32.mxu0 0.0
  %1076 = vmatmul.mubr.f32.gmra.mrb[0].mxu0 %v845
  %v1077 = vpop.f32.mrb[0].mxu0
  %v1078 = vadd.f32 %v812, %v1077
  %v1079 = vpop.f32.mrb[0].mxu0
  %1080 = vmatprep.mubr.f32.mxu0 0.0
  %1081 = vmatmul.mubr.f32.gmra.mrb[0].mxu0 %v848
  %v1082 = vpop.f32.mrb[0].mxu0
  %v1083 = vadd.f32 %v812, %v1082
  %v1084 = vpop.f32.mrb[0].mxu0
  %1085 = vmatprep.mubr.f32.mxu0 0.0
  %1086 = vmatmul.mubr.f32.gmra.mrb[0].mxu0 %v851
  %v1087 = vpop.f32.mrb[0].mxu0
  %v1088 = vadd.f32 %v812, %v1087
  %v1089 = vpop.f32.mrb[0].mxu0
  %1090 = vmatprep.mubr.f32.mxu0 0.0
  %1091 = vmatmul.mubr.f32.gmra.mrb[0].mxu0 %v854
  %v1092 = vpop.f32.mrb[0].mxu0
  %v1093 = vadd.f32 %v812, %v1092
  %v1094 = vpop.f32.mrb[0].mxu0
  %1095 = vmatprep.mubr.f32.mxu0 0.0
  %1096 = vmatmul.mubr.f32.gmra.mrb[0].mxu0 %v857
  %v1097 = vpop.f32.mrb[0].mxu0
  %v1098 = vadd.f32 %v812, %v1097
  %v1099 = vpop.f32.mrb[0].mxu0
  %1100 = vmatprep.mubr.f32.mxu0 0.0
  %1101 = vmatmul.mubr.f32.gmra.mrb[0].mxu0 %v860
  %v1102 = vpop.f32.mrb[0].mxu0
  %v1103 = vadd.f32 %v812, %v1102
  %v1104 = vpop.f32.mrb[0].mxu0
  %1105 = vmatprep.mubr.f32.mxu0 0.0
  %1106 = vmatmul.mubr.f32.gmra.mrb[0].mxu0 %v863
  %v1107 = vpop.f32.mrb[0].mxu0
  %v1108 = vadd.f32 %v812, %v1107
  %v1109 = vpop.f32.mrb[0].mxu0
  %1110 = vmatprep.mubr.f32.mxu0 0.0
  %1111 = vmatmul.mubr.f32.gmra.mrb[0].mxu0 %v866
  %v1112 = vpop.f32.mrb[0].mxu0
  %v1113 = vadd.f32 %v812, %v1112
  %v1114 = vpop.f32.mrb[0].mxu0
  %1115 = vmatprep.mubr.f32.mxu0 0.0
  %1116 = vmatmul.mubr.f32.gmra.mrb[0].mxu0 %v869
  %v1117 = vpop.f32.mrb[0].mxu0
  %v1118 = vadd.f32 %v812, %v1117
  %v1119 = vpop.f32.mrb[0].mxu0
  %1120 = vmatprep.mubr.f32.mxu0 0.0
  %1121 = vmatmul.mubr.f32.gmra.mrb[0].mxu0 %v872
  %v1122 = vpop.f32.mrb[0].mxu0
  %v1123 = vadd.f32 %v812, %v1122
  %v1124 = vpop.f32.mrb[0].mxu0
  %1125 = vmatprep.mubr.f32.mxu0 0.0
  %1126 = vmatmul.mubr.f32.gmra.mrb[0].mxu0 %v875
  %v1127 = vpop.f32.mrb[0].mxu0
  %v1128 = vadd.f32 %v812, %v1127
  %v1129 = vpop.f32.mrb[0].mxu0
  %1130 = vmatprep.mubr.f32.mxu0 0.0
  %1131 = vmatmul.mubr.f32.gmra.mrb[0].mxu0 %v878
  %v1132 = vpop.f32.mrb[0].mxu0
  %v1133 = vadd.f32 %v812, %v1132
  %v1134 = vpop.f32.mrb[0].mxu0
  %1135 = vmatprep.mubr.f32.mxu0 0.0
  %1136 = vmatmul.mubr.f32.gmra.mrb[0].mxu0 %v881
  %v1137 = vpop.f32.mrb[0].mxu0
  %v1138 = vadd.f32 %v812, %v1137
  %v1139 = vpop.f32.mrb[0].mxu0
  %1140 = vmatprep.mubr.f32.mxu0 0.0
  %1141 = vmatmul.mubr.f32.gmra.mrb[0].mxu0 %v884
  %v1142 = vpop.f32.mrb[0].mxu0
  %v1143 = vadd.f32 %v812, %v1142
  %v1144 = vpop.f32.mrb[0].mxu0
  %1145 = vmatprep.mubr.f32.mxu0 0.0
  %1146 = vmatmul.mubr.f32.gmra.mrb[0].mxu0 %v887
  %v1147 = vpop.f32.mrb[0].mxu0
  %v1148 = vadd.f32 %v812, %v1147
  %v1149 = vpop.f32.mrb[0].mxu0
  %1150 = vmatprep.mubr.f32.mxu0 0.0
  %1151 = vmatmul.mubr.f32.gmra.mrb[0].mxu0 %v890
  %v1152 = vpop.f32.mrb[0].mxu0
  %v1153 = vadd.f32 %v812, %v1152
  %v1154 = vpop.f32.mrb[0].mxu0
  %1155 = vmatprep.mubr.f32.mxu0 0.0
  %1156 = vmatmul.mubr.f32.gmra.mrb[0].mxu0 %v893
  %v1157 = vpop.f32.mrb[0].mxu0
  %v1158 = vadd.f32 %v812, %v1157
  %v1159 = vpop.f32.mrb[0].mxu0
  %1160 = vmatprep.mubr.f32.mxu0 0.0
  %1161 = vmatmul.mubr.f32.gmra.mrb[0].mxu0 %v896
  %v1162 = vpop.f32.mrb[0].mxu0
  %v1163 = vadd.f32 %v812, %v1162
  %v1164 = vpop.f32.mrb[0].mxu0
  %1165 = vmatprep.mubr.f32.mxu0 0.0
  %1166 = vmatmul.mubr.f32.gmra.mrb[0].mxu0 %v899
  %v1167 = vpop.f32.mrb[0].mxu0
  %v1168 = vadd.f32 %v812, %v1167
  %v1169 = vpop.f32.mrb[0].mxu0
  %1170 = vmatprep.mubr.f32.mxu0 0.0
  %1171 = vmatmul.mubr.f32.gmra.mrb[0].mxu0 %v902
  %v1172 = vpop.f32.mrb[0].mxu0
  %v1173 = vadd.f32 %v812, %v1172
  %v1174 = vpop.f32.mrb[0].mxu0
  %1175 = vmatprep.mubr.f32.mxu0 0.0
  %1176 = vmatmul.mubr.f32.gmra.mrb[0].mxu0 %v905
  %v1177 = vpop.f32.mrb[0].mxu0
  %v1178 = vadd.f32 %v812, %v1177
  %v1179 = vpop.f32.mrb[0].mxu0
  %1180 = vmatprep.mubr.f32.mxu0 0.0
  %1181 = vmatmul.mubr.f32.gmra.mrb[0].mxu0 %v908
  %v1182 = vpop.f32.mrb[0].mxu0
  %v1183 = vadd.f32 %v812, %v1182
  %v1184 = vpop.f32.mrb[0].mxu0
  %1185 = vmatprep.mubr.f32.mxu0 0.0
  %1186 = vmatmul.mubr.f32.gmra.mrb[0].mxu0 %v911
  %v1187 = vpop.f32.mrb[0].mxu0
  %v1188 = vadd.f32 %v812, %v1187
  %v1189 = vpop.f32.mrb[0].mxu0
  %1190 = vmatprep.mubr.f32.mxu0 0.0
  %1191 = vmatmul.mubr.f32.gmra.mrb[0].mxu0 %v914
  %v1192 = vpop.f32.mrb[0].mxu0
  %v1193 = vadd.f32 %v812, %v1192
  %v1194 = vpop.f32.mrb[0].mxu0
  %1195 = vmatprep.mubr.f32.mxu0 0.0
  %1196 = vmatmul.mubr.f32.gmra.mrb[0].mxu0 %v917
  %v1197 = vpop.f32.mrb[0].mxu0
  %v1198 = vadd.f32 %v812, %v1197
  %v1199 = vpop.f32.mrb[0].mxu0
  %1200 = vmatprep.mubr.f32.mxu0 0.0
  %1201 = vmatmul.mubr.f32.gmra.mrb[0].mxu0 %v920
  %v1202 = vpop.f32.mrb[0].mxu0
  %v1203 = vadd.f32 %v812, %v1202
  %v1204 = vpop.f32.mrb[0].mxu0
  %1205 = vmatprep.mubr.f32.mxu0 0.0
  %1206 = vmatmul.mubr.f32.gmra.mrb[0].mxu0 %v923
  %v1207 = vpop.f32.mrb[0].mxu0
  %v1208 = vadd.f32 %v812, %v1207
  %v1209 = vpop.f32.mrb[0].mxu0
  %1210 = vmatprep.mubr.f32.mxu0 0.0
  %1211 = vmatmul.mubr.f32.gmra.mrb[0].mxu0 %v926
  %v1212 = vpop.f32.mrb[0].mxu0
  %v1213 = vadd.f32 %v812, %v1212
  %v1214 = vpop.f32.mrb[0].mxu0
  %1215 = vmatprep.mubr.f32.mxu0 0.0
  %1216 = vmatmul.mubr.f32.gmra.mrb[0].mxu0 %v929
  %v1217 = vpop.f32.mrb[0].mxu0
  %v1218 = vadd.f32 %v812, %v1217
  %v1219 = vpop.f32.mrb[0].mxu0
  %1220 = vmatprep.mubr.f32.mxu0 0.0
  %1221 = vmatmul.mubr.f32.gmra.mrb[0].mxu0 %v932
  %v1222 = vpop.f32.mrb[0].mxu0
  %v1223 = vadd.f32 %v812, %v1222
  %v1224 = vpop.f32.mrb[0].mxu0
  %1225 = vmatprep.mubr.f32.mxu0 0.0
  %1226 = vmatmul.mubr.f32.gmra.mrb[0].mxu0 %v935
  %v1227 = vpop.f32.mrb[0].mxu0
  %v1228 = vadd.f32 %v812, %v1227
  %v1229 = vpop.f32.mrb[0].mxu0
  %1230 = vmatprep.mubr.f32.mxu0 0.0
  %1231 = vmatmul.mubr.f32.gmra.mrb[0].mxu0 %v938
  %v1232 = vpop.f32.mrb[0].mxu0
  %v1233 = vadd.f32 %v812, %v1232
  %v1234 = vpop.f32.mrb[0].mxu0
  %1235 = vmatprep.mubr.f32.mxu0 0.0
  %1236 = vmatmul.mubr.f32.gmra.mrb[0].mxu0 %v941
  %v1237 = vpop.f32.mrb[0].mxu0
  %v1238 = vadd.f32 %v812, %v1237
  %v1239 = vpop.f32.mrb[0].mxu0
  %1240 = vmatprep.mubr.f32.mxu0 0.0
  %1241 = vmatmul.mubr.f32.gmra.mrb[0].mxu0 %v944
  %v1242 = vpop.f32.mrb[0].mxu0
  %v1243 = vadd.f32 %v812, %v1242
  %v1244 = vpop.f32.mrb[0].mxu0
  %1245 = vmatprep.mubr.f32.mxu0 0.0
  %1246 = vmatmul.mubr.f32.gmra.mrb[0].mxu0 %v947
  %v1247 = vpop.f32.mrb[0].mxu0
  %v1248 = vadd.f32 %v812, %v1247
  %v1249 = vpop.f32.mrb[0].mxu0
  %1250 = vmatprep.mubr.f32.mxu0 0.0
  %1251 = vmatmul.mubr.f32.gmra.mrb[0].mxu0 %v950
  %v1252 = vpop.f32.mrb[0].mxu0
  %v1253 = vadd.f32 %v812, %v1252
  %v1254 = vpop.f32.mrb[0].mxu0
  %1255 = vmatprep.mubr.f32.mxu0 0.0
  %1256 = vmatmul.mubr.f32.gmra.mrb[0].mxu0 %v953
  %v1257 = vpop.f32.mrb[0].mxu0
  %v1258 = vadd.f32 %v812, %v1257
  %v1259 = vpop.f32.mrb[0].mxu0
  %1260 = vmatprep.mubr.f32.mxu0 0.0
  %1261 = vmatmul.mubr.f32.gmra.mrb[0].mxu0 %v956
  %v1262 = vpop.f32.mrb[0].mxu0
  %v1263 = vadd.f32 %v812, %v1262
  %v1264 = vpop.f32.mrb[0].mxu0
  %1265 = vmatprep.mubr.f32.mxu0 0.0
  %1266 = vmatmul.mubr.f32.gmra.mrb[0].mxu0 %v959
  %v1267 = vpop.f32.mrb[0].mxu0
  %v1268 = vadd.f32 %v812, %v1267
  %v1269 = vpop.f32.mrb[0].mxu0
  %1270 = vdwg.mxu0
  %v1271 = vmax.f32 %v1028, 0.0
  %v1272 = vmax.f32 %v1033, 0.0
  %v1273 = vmax.f32 %v1038, 0.0
  %v1274 = vmax.f32 %v1043, 0.0
  %v1275 = vmax.f32 %v1048, 0.0
  %v1276 = vmax.f32 %v1053, 0.0
  %v1277 = vmax.f32 %v1058, 0.0
  %v1278 = vmax.f32 %v1063, 0.0
  %v1279 = vmax.f32 %v1068, 0.0
  %v1280 = vmax.f32 %v1073, 0.0
  %v1281 = vmax.f32 %v1078, 0.0
  %v1282 = vmax.f32 %v1083, 0.0
  %v1283 = vmax.f32 %v1088, 0.0
  %v1284 = vmax.f32 %v1093, 0.0
  %v1285 = vmax.f32 %v1098, 0.0
  %v1286 = vmax.f32 %v1103, 0.0
  %v1287 = vmax.f32 %v1108, 0.0
  %v1288 = vmax.f32 %v1113, 0.0
  %v1289 = vmax.f32 %v1118, 0.0
  %v1290 = vmax.f32 %v1123, 0.0
  %v1291 = vmax.f32 %v1128, 0.0
  %v1292 = vmax.f32 %v1133, 0.0
  %v1293 = vmax.f32 %v1138, 0.0
  %v1294 = vmax.f32 %v1143, 0.0
  %v1295 = vmax.f32 %v1148, 0.0
  %v1296 = vmax.f32 %v1153, 0.0
  %v1297 = vmax.f32 %v1158, 0.0
  %v1298 = vmax.f32 %v1163, 0.0
  %v1299 = vmax.f32 %v1168, 0.0
  %v1300 = vmax.f32 %v1173, 0.0
  %v1301 = vmax.f32 %v1178, 0.0
  %v1302 = vmax.f32 %v1183, 0.0
  %v1303 = vmax.f32 %v1188, 0.0
  %v1304 = vmax.f32 %v1193, 0.0
  %v1305 = vmax.f32 %v1198, 0.0
  %v1306 = vmax.f32 %v1203, 0.0
  %v1307 = vmax.f32 %v1208, 0.0
  %v1308 = vmax.f32 %v1213, 0.0
  %v1309 = vmax.f32 %v1218, 0.0
  %v1310 = vmax.f32 %v1223, 0.0
  %v1311 = vmax.f32 %v1228, 0.0
  %v1312 = vmax.f32 %v1233, 0.0
  %v1313 = vmax.f32 %v1238, 0.0
  %v1314 = vmax.f32 %v1243, 0.0
  %v1315 = vmax.f32 %v1248, 0.0
  %v1316 = vmax.f32 %v1253, 0.0
  %v1317 = vmax.f32 %v1258, 0.0
  %v1318 = vmax.f32 %v1263, 0.0
  %v1319 = vmax.f32 %v1268, 0.0
  %vm1320 = vcmask 261120
  %1321 = vst.msk [vmem:[#allocation3] sm:$0xff] %vm1320, %v1271
  %1322 = vst.msk [vmem:[#allocation3 + $0x8] sm:$0xff] %vm1320, %v1272
  %1323 = vst.msk [vmem:[#allocation3 + $0x10] sm:$0xff] %vm1320, %v1273
  %1324 = vst.msk [vmem:[#allocation3 + $0x18] sm:$0xff] %vm1320, %v1274
  %1325 = vst.msk [vmem:[#allocation3 + $0x20] sm:$0xff] %vm1320, %v1275
  %1326 = vst.msk [vmem:[#allocation3 + $0x28] sm:$0xff] %vm1320, %v1276
  %1327 = vst.msk [vmem:[#allocation3 + $0x30] sm:$0xff] %vm1320, %v1277
  %1328 = vst.msk [vmem:[#allocation3 + $0x38] sm:$0xff] %vm1320, %v1278
  %1329 = vst.msk [vmem:[#allocation3 + $0x40] sm:$0xff] %vm1320, %v1279
  %1330 = vst.msk [vmem:[#allocation3 + $0x48] sm:$0xff] %vm1320, %v1280
  %1331 = vst.msk [vmem:[#allocation3 + $0x50] sm:$0xff] %vm1320, %v1281
  %1332 = vst.msk [vmem:[#allocation3 + $0x58] sm:$0xff] %vm1320, %v1282
  %1333 = vst.msk [vmem:[#allocation3 + $0x60] sm:$0xff] %vm1320, %v1283
  %1334 = vst.msk [vmem:[#allocation3 + $0x68] sm:$0xff] %vm1320, %v1284
  %1335 = vst.msk [vmem:[#allocation3 + $0x70] sm:$0xff] %vm1320, %v1285
  %1336 = vst.msk [vmem:[#allocation3 + $0x78] sm:$0xff] %vm1320, %v1286
  %1337 = vst.msk [vmem:[#allocation3 + $0x80] sm:$0xff] %vm1320, %v1287
  %1338 = vst.msk [vmem:[#allocation3 + $0x88] sm:$0xff] %vm1320, %v1288
  %1339 = vst.msk [vmem:[#allocation3 + $0x90] sm:$0xff] %vm1320, %v1289
  %1340 = vst.msk [vmem:[#allocation3 + $0x98] sm:$0xff] %vm1320, %v1290
  %1341 = vst.msk [vmem:[#allocation3 + $0xa0] sm:$0xff] %vm1320, %v1291
  %1342 = vst.msk [vmem:[#allocation3 + $0xa8] sm:$0xff] %vm1320, %v1292
  %1343 = vst.msk [vmem:[#allocation3 + $0xb0] sm:$0xff] %vm1320, %v1293
  %1344 = vst.msk [vmem:[#allocation3 + $0xb8] sm:$0xff] %vm1320, %v1294
  %1345 = vst.msk [vmem:[#allocation3 + $0xc0] sm:$0xff] %vm1320, %v1295
  %1346 = vst.msk [vmem:[#allocation3 + $0xc8] sm:$0xff] %vm1320, %v1296
  %1347 = vst.msk [vmem:[#allocation3 + $0xd0] sm:$0xff] %vm1320, %v1297
  %1348 = vst.msk [vmem:[#allocation3 + $0xd8] sm:$0xff] %vm1320, %v1298
  %1349 = vst.msk [vmem:[#allocation3 + $0xe0] sm:$0xff] %vm1320, %v1299
  %1350 = vst.msk [vmem:[#allocation3 + $0xe8] sm:$0xff] %vm1320, %v1300
  %1351 = vst.msk [vmem:[#allocation3 + $0xf0] sm:$0xff] %vm1320, %v1301
  %1352 = vst.msk [vmem:[#allocation3 + $0xf8] sm:$0xff] %vm1320, %v1302
  %1353 = vst.msk [vmem:[#allocation3 + $0x100] sm:$0xff] %vm1320, %v1303
  %1354 = vst.msk [vmem:[#allocation3 + $0x108] sm:$0xff] %vm1320, %v1304
  %1355 = vst.msk [vmem:[#allocation3 + $0x110] sm:$0xff] %vm1320, %v1305
  %1356 = vst.msk [vmem:[#allocation3 + $0x118] sm:$0xff] %vm1320, %v1306
  %1357 = vst.msk [vmem:[#allocation3 + $0x120] sm:$0xff] %vm1320, %v1307
  %1358 = vst.msk [vmem:[#allocation3 + $0x128] sm:$0xff] %vm1320, %v1308
  %1359 = vst.msk [vmem:[#allocation3 + $0x130] sm:$0xff] %vm1320, %v1309
  %1360 = vst.msk [vmem:[#allocation3 + $0x138] sm:$0xff] %vm1320, %v1310
  %1361 = vst.msk [vmem:[#allocation3 + $0x140] sm:$0xff] %vm1320, %v1311
  %1362 = vst.msk [vmem:[#allocation3 + $0x148] sm:$0xff] %vm1320, %v1312
  %1363 = vst.msk [vmem:[#allocation3 + $0x150] sm:$0xff] %vm1320, %v1313
  %1364 = vst.msk [vmem:[#allocation3 + $0x158] sm:$0xff] %vm1320, %v1314
  %1365 = vst.msk [vmem:[#allocation3 + $0x160] sm:$0xff] %vm1320, %v1315
  %1366 = vst.msk [vmem:[#allocation3 + $0x168] sm:$0xff] %vm1320, %v1316
  %1367 = vst.msk [vmem:[#allocation3 + $0x170] sm:$0xff] %vm1320, %v1317
  %1368 = vst.msk [vmem:[#allocation3 + $0x178] sm:$0xff] %vm1320, %v1318
  %1369 = vst.msk [vmem:[#allocation3 + $0x180] sm:$0xff] %vm1320, %v1319
  %1370 = vst.msk [vmem:[#allocation3 + $0x188] sm:$0xff] %vm1320, 0.0
  %1371 = vst.msk [vmem:[#allocation3 + $0x190] sm:$0xff] %vm1320, 0.0
  %1372 = vst.msk [vmem:[#allocation3 + $0x198] sm:$0xff] %vm1320, 0.0
  %1373 = vst.msk [vmem:[#allocation3 + $0x1a0] sm:$0xff] %vm1320, 0.0
  %1374 = vst.msk [vmem:[#allocation3 + $0x1a8] sm:$0xff] %vm1320, 0.0
  %v1375 = vld [vmem:[#allocation3] sm:$0xff]
  %v1376 = vld [vmem:[#allocation3 + $0x8] sm:$0xff]
  %v1377 = vld [vmem:[#allocation3 + $0x10] sm:$0xff]
  %v1378 = vld [vmem:[#allocation3 + $0x18] sm:$0xff]
  %v1379 = vld [vmem:[#allocation3 + $0x20] sm:$0xff]
  %v1380 = vld [vmem:[#allocation3 + $0x28] sm:$0xff]
  %v1381 = vld [vmem:[#allocation3 + $0x30] sm:$0xff]
  %v1382 = vld [vmem:[#allocation3 + $0x38] sm:$0xff]
  %v1383 = vld [vmem:[#allocation3 + $0x40] sm:$0xff]
  %v1384 = vld [vmem:[#allocation3 + $0x48] sm:$0xff]
  %v1385 = vld [vmem:[#allocation3 + $0x50] sm:$0xff]
  %v1386 = vld [vmem:[#allocation3 + $0x58] sm:$0xff]
  %v1387 = vld [vmem:[#allocation3 + $0x60] sm:$0xff]
  %v1388 = vld [vmem:[#allocation3 + $0x68] sm:$0xff]
  %v1389 = vld [vmem:[#allocation3 + $0x70] sm:$0xff]
  %v1390 = vld [vmem:[#allocation3 + $0x78] sm:$0xff]
  %v1391 = vld [vmem:[#allocation3 + $0x80] sm:$0xff]
  %v1392 = vld [vmem:[#allocation3 + $0x88] sm:$0xff]
  %v1393 = vld [vmem:[#allocation3 + $0x90] sm:$0xff]
  %v1394 = vld [vmem:[#allocation3 + $0x98] sm:$0xff]
  %v1395 = vld [vmem:[#allocation3 + $0xa0] sm:$0xff]
  %v1396 = vld [vmem:[#allocation3 + $0xa8] sm:$0xff]
  %v1397 = vld [vmem:[#allocation3 + $0xb0] sm:$0xff]
  %v1398 = vld [vmem:[#allocation3 + $0xb8] sm:$0xff]
  %v1399 = vld [vmem:[#allocation3 + $0xc0] sm:$0xff]
  %v1400 = vld [vmem:[#allocation3 + $0xc8] sm:$0xff]
  %v1401 = vld [vmem:[#allocation3 + $0xd0] sm:$0xff]
  %v1402 = vld [vmem:[#allocation3 + $0xd8] sm:$0xff]
  %v1403 = vld [vmem:[#allocation3 + $0xe0] sm:$0xff]
  %v1404 = vld [vmem:[#allocation3 + $0xe8] sm:$0xff]
  %v1405 = vld [vmem:[#allocation3 + $0xf0] sm:$0xff]
  %v1406 = vld [vmem:[#allocation3 + $0xf8] sm:$0xff]
  %v1407 = vld [vmem:[#allocation3 + $0x100] sm:$0xff]
  %v1408 = vld [vmem:[#allocation3 + $0x108] sm:$0xff]
  %v1409 = vld [vmem:[#allocation3 + $0x110] sm:$0xff]
  %v1410 = vld [vmem:[#allocation3 + $0x118] sm:$0xff]
  %v1411 = vld [vmem:[#allocation3 + $0x120] sm:$0xff]
  %v1412 = vld [vmem:[#allocation3 + $0x128] sm:$0xff]
  %v1413 = vld [vmem:[#allocation3 + $0x130] sm:$0xff]
  %v1414 = vld [vmem:[#allocation3 + $0x138] sm:$0xff]
  %v1415 = vld [vmem:[#allocation3 + $0x140] sm:$0xff]
  %v1416 = vld [vmem:[#allocation3 + $0x148] sm:$0xff]
  %v1417 = vld [vmem:[#allocation3 + $0x150] sm:$0xff]
  %v1418 = vld [vmem:[#allocation3 + $0x158] sm:$0xff]
  %v1419 = vld [vmem:[#allocation3 + $0x160] sm:$0xff]
  %v1420 = vld [vmem:[#allocation3 + $0x168] sm:$0xff]
  %v1421 = vld [vmem:[#allocation3 + $0x170] sm:$0xff]
  %v1422 = vld [vmem:[#allocation3 + $0x178] sm:$0xff]
  %v1423 = vld [vmem:[#allocation3 + $0x180] sm:$0xff]
  %v1424 = vld [vmem:[#allocation3 + $0x1] sm:$0xff]
  %v1425 = vld [vmem:[#allocation3 + $0x9] sm:$0xff]
  %v1426 = vld [vmem:[#allocation3 + $0x11] sm:$0xff]
  %v1427 = vld [vmem:[#allocation3 + $0x19] sm:$0xff]
  %v1428 = vld [vmem:[#allocation3 + $0x21] sm:$0xff]
  %v1429 = vld [vmem:[#allocation3 + $0x29] sm:$0xff]
  %v1430 = vld [vmem:[#allocation3 + $0x31] sm:$0xff]
  %v1431 = vld [vmem:[#allocation3 + $0x39] sm:$0xff]
  %v1432 = vld [vmem:[#allocation3 + $0x41] sm:$0xff]
  %v1433 = vld [vmem:[#allocation3 + $0x49] sm:$0xff]
  %v1434 = vld [vmem:[#allocation3 + $0x51] sm:$0xff]
  %v1435 = vld [vmem:[#allocation3 + $0x59] sm:$0xff]
  %v1436 = vld [vmem:[#allocation3 + $0x61] sm:$0xff]
  %v1437 = vld [vmem:[#allocation3 + $0x69] sm:$0xff]
  %v1438 = vld [vmem:[#allocation3 + $0x71] sm:$0xff]
  %v1439 = vld [vmem:[#allocation3 + $0x79] sm:$0xff]
  %v1440 = vld [vmem:[#allocation3 + $0x81] sm:$0xff]
  %v1441 = vld [vmem:[#allocation3 + $0x89] sm:$0xff]
  %v1442 = vld [vmem:[#allocation3 + $0x91] sm:$0xff]
  %v1443 = vld [vmem:[#allocation3 + $0x99] sm:$0xff]
  %v1444 = vld [vmem:[#allocation3 + $0xa1] sm:$0xff]
  %v1445 = vld [vmem:[#allocation3 + $0xa9] sm:$0xff]
  %v1446 = vld [vmem:[#allocation3 + $0xb1] sm:$0xff]
  %v1447 = vld [vmem:[#allocation3 + $0xb9] sm:$0xff]
  %v1448 = vld [vmem:[#allocation3 + $0xc1] sm:$0xff]
  %v1449 = vld [vmem:[#allocation3 + $0xc9] sm:$0xff]
  %v1450 = vld [vmem:[#allocation3 + $0xd1] sm:$0xff]
  %v1451 = vld [vmem:[#allocation3 + $0xd9] sm:$0xff]
  %v1452 = vld [vmem:[#allocation3 + $0xe1] sm:$0xff]
  %v1453 = vld [vmem:[#allocation3 + $0xe9] sm:$0xff]
  %v1454 = vld [vmem:[#allocation3 + $0xf1] sm:$0xff]
  %v1455 = vld [vmem:[#allocation3 + $0xf9] sm:$0xff]
  %v1456 = vld [vmem:[#allocation3 + $0x101] sm:$0xff]
  %v1457 = vld [vmem:[#allocation3 + $0x109] sm:$0xff]
  %v1458 = vld [vmem:[#allocation3 + $0x111] sm:$0xff]
  %v1459 = vld [vmem:[#allocation3 + $0x119] sm:$0xff]
  %v1460 = vld [vmem:[#allocation3 + $0x121] sm:$0xff]
  %v1461 = vld [vmem:[#allocation3 + $0x129] sm:$0xff]
  %v1462 = vld [vmem:[#allocation3 + $0x131] sm:$0xff]
  %v1463 = vld [vmem:[#allocation3 + $0x139] sm:$0xff]
  %v1464 = vld [vmem:[#allocation3 + $0x141] sm:$0xff]
  %v1465 = vld [vmem:[#allocation3 + $0x149] sm:$0xff]
  %v1466 = vld [vmem:[#allocation3 + $0x151] sm:$0xff]
  %v1467 = vld [vmem:[#allocation3 + $0x159] sm:$0xff]
  %v1468 = vld [vmem:[#allocation3 + $0x161] sm:$0xff]
  %v1469 = vld [vmem:[#allocation3 + $0x169] sm:$0xff]
  %v1470 = vld [vmem:[#allocation3 + $0x171] sm:$0xff]
  %v1471 = vld [vmem:[#allocation3 + $0x179] sm:$0xff]
  %v1472 = vld [vmem:[#allocation3 + $0x181] sm:$0xff]
  %v1473 = vld [vmem:[#allocation3 + $0x2] sm:$0xff]
  %v1474 = vld [vmem:[#allocation3 + $0xa] sm:$0xff]
  %v1475 = vld [vmem:[#allocation3 + $0x12] sm:$0xff]
  %v1476 = vld [vmem:[#allocation3 + $0x1a] sm:$0xff]
  %v1477 = vld [vmem:[#allocation3 + $0x22] sm:$0xff]
  %v1478 = vld [vmem:[#allocation3 + $0x2a] sm:$0xff]
  %v1479 = vld [vmem:[#allocation3 + $0x32] sm:$0xff]
  %v1480 = vld [vmem:[#allocation3 + $0x3a] sm:$0xff]
  %v1481 = vld [vmem:[#allocation3 + $0x42] sm:$0xff]
  %v1482 = vld [vmem:[#allocation3 + $0x4a] sm:$0xff]
  %v1483 = vld [vmem:[#allocation3 + $0x52] sm:$0xff]
  %v1484 = vld [vmem:[#allocation3 + $0x5a] sm:$0xff]
  %v1485 = vld [vmem:[#allocation3 + $0x62] sm:$0xff]
  %v1486 = vld [vmem:[#allocation3 + $0x6a] sm:$0xff]
  %v1487 = vld [vmem:[#allocation3 + $0x72] sm:$0xff]
  %v1488 = vld [vmem:[#allocation3 + $0x7a] sm:$0xff]
  %v1489 = vld [vmem:[#allocation3 + $0x82] sm:$0xff]
  %v1490 = vld [vmem:[#allocation3 + $0x8a] sm:$0xff]
  %v1491 = vld [vmem:[#allocation3 + $0x92] sm:$0xff]
  %v1492 = vld [vmem:[#allocation3 + $0x9a] sm:$0xff]
  %v1493 = vld [vmem:[#allocation3 + $0xa2] sm:$0xff]
  %v1494 = vld [vmem:[#allocation3 + $0xaa] sm:$0xff]
  %v1495 = vld [vmem:[#allocation3 + $0xb2] sm:$0xff]
  %v1496 = vld [vmem:[#allocation3 + $0xba] sm:$0xff]
  %v1497 = vld [vmem:[#allocation3 + $0xc2] sm:$0xff]
  %v1498 = vld [vmem:[#allocation3 + $0xca] sm:$0xff]
  %v1499 = vld [vmem:[#allocation3 + $0xd2] sm:$0xff]
  %v1500 = vld [vmem:[#allocation3 + $0xda] sm:$0xff]
  %v1501 = vld [vmem:[#allocation3 + $0xe2] sm:$0xff]
  %v1502 = vld [vmem:[#allocation3 + $0xea] sm:$0xff]
  %v1503 = vld [vmem:[#allocation3 + $0xf2] sm:$0xff]
  %v1504 = vld [vmem:[#allocation3 + $0xfa] sm:$0xff]
  %v1505 = vld [vmem:[#allocation3 + $0x102] sm:$0xff]
  %v1506 = vld [vmem:[#allocation3 + $0x10a] sm:$0xff]
  %v1507 = vld [vmem:[#allocation3 + $0x112] sm:$0xff]
  %v1508 = vld [vmem:[#allocation3 + $0x11a] sm:$0xff]
  %v1509 = vld [vmem:[#allocation3 + $0x122] sm:$0xff]
  %v1510 = vld [vmem:[#allocation3 + $0x12a] sm:$0xff]
  %v1511 = vld [vmem:[#allocation3 + $0x132] sm:$0xff]
  %v1512 = vld [vmem:[#allocation3 + $0x13a] sm:$0xff]
  %v1513 = vld [vmem:[#allocation3 + $0x142] sm:$0xff]
  %v1514 = vld [vmem:[#allocation3 + $0x14a] sm:$0xff]
  %v1515 = vld [vmem:[#allocation3 + $0x152] sm:$0xff]
  %v1516 = vld [vmem:[#allocation3 + $0x15a] sm:$0xff]
  %v1517 = vld [vmem:[#allocation3 + $0x162] sm:$0xff]
  %v1518 = vld [vmem:[#allocation3 + $0x16a] sm:$0xff]
  %v1519 = vld [vmem:[#allocation3 + $0x172] sm:$0xff]
  %v1520 = vld [vmem:[#allocation3 + $0x17a] sm:$0xff]
  %v1521 = vld [vmem:[#allocation3 + $0x182] sm:$0xff]
  %v1522 = vld [vmem:[#allocation3 + $0xe] sm:$0xff]
  %v1523 = vld [vmem:[#allocation3 + $0x16] sm:$0xff]
  %v1524 = vld [vmem:[#allocation3 + $0x1e] sm:$0xff]
  %v1525 = vld [vmem:[#allocation3 + $0x26] sm:$0xff]
  %v1526 = vld [vmem:[#allocation3 + $0x2e] sm:$0xff]
  %v1527 = vld [vmem:[#allocation3 + $0x36] sm:$0xff]
  %v1528 = vld [vmem:[#allocation3 + $0x3e] sm:$0xff]
  %v1529 = vld [vmem:[#allocation3 + $0x46] sm:$0xff]
  %v1530 = vld [vmem:[#allocation3 + $0x4e] sm:$0xff]
  %v1531 = vld [vmem:[#allocation3 + $0x56] sm:$0xff]
  %v1532 = vld [vmem:[#allocation3 + $0x5e] sm:$0xff]
  %v1533 = vld [vmem:[#allocation3 + $0x66] sm:$0xff]
  %v1534 = vld [vmem:[#allocation3 + $0x6e] sm:$0xff]
  %v1535 = vld [vmem:[#allocation3 + $0x76] sm:$0xff]
  %v1536 = vld [vmem:[#allocation3 + $0x7e] sm:$0xff]
  %v1537 = vld [vmem:[#allocation3 + $0x86] sm:$0xff]
  %v1538 = vld [vmem:[#allocation3 + $0x8e] sm:$0xff]
  %v1539 = vld [vmem:[#allocation3 + $0x96] sm:$0xff]
  %v1540 = vld [vmem:[#allocation3 + $0x9e] sm:$0xff]
  %v1541 = vld [vmem:[#allocation3 + $0xa6] sm:$0xff]
  %v1542 = vld [vmem:[#allocation3 + $0xae] sm:$0xff]
  %v1543 = vld [vmem:[#allocation3 + $0xb6] sm:$0xff]
  %v1544 = vld [vmem:[#allocation3 + $0xbe] sm:$0xff]
  %v1545 = vld [vmem:[#allocation3 + $0xc6] sm:$0xff]
  %v1546 = vld [vmem:[#allocation3 + $0xce] sm:$0xff]
  %v1547 = vld [vmem:[#allocation3 + $0xd6] sm:$0xff]
  %v1548 = vld [vmem:[#allocation3 + $0xde] sm:$0xff]
  %v1549 = vld [vmem:[#allocation3 + $0xe6] sm:$0xff]
  %v1550 = vld [vmem:[#allocation3 + $0xee] sm:$0xff]
  %v1551 = vld [vmem:[#allocation3 + $0xf6] sm:$0xff]
  %v1552 = vld [vmem:[#allocation3 + $0xfe] sm:$0xff]
  %v1553 = vld [vmem:[#allocation3 + $0x106] sm:$0xff]
  %v1554 = vld [vmem:[#allocation3 + $0x10e] sm:$0xff]
  %v1555 = vld [vmem:[#allocation3 + $0x116] sm:$0xff]
  %v1556 = vld [vmem:[#allocation3 + $0x11e] sm:$0xff]
  %v1557 = vld [vmem:[#allocation3 + $0x126] sm:$0xff]
  %v1558 = vld [vmem:[#allocation3 + $0x12e] sm:$0xff]
  %v1559 = vld [vmem:[#allocation3 + $0x136] sm:$0xff]
  %v1560 = vld [vmem:[#allocation3 + $0x13e] sm:$0xff]
  %v1561 = vld [vmem:[#allocation3 + $0x146] sm:$0xff]
  %v1562 = vld [vmem:[#allocation3 + $0x14e] sm:$0xff]
  %v1563 = vld [vmem:[#allocation3 + $0x156] sm:$0xff]
  %v1564 = vld [vmem:[#allocation3 + $0x15e] sm:$0xff]
  %v1565 = vld [vmem:[#allocation3 + $0x166] sm:$0xff]
  %v1566 = vld [vmem:[#allocation3 + $0x16e] sm:$0xff]
  %v1567 = vld [vmem:[#allocation3 + $0x176] sm:$0xff]
  %v1568 = vld [vmem:[#allocation3 + $0x17e] sm:$0xff]
  %v1569 = vld [vmem:[#allocation3 + $0x186] sm:$0xff]
  %v1570 = vld [vmem:[#allocation3 + $0x18e] sm:$0xff]
  %v1571 = vld [vmem:[#allocation3 + $0xf] sm:$0xff]
  %v1572 = vld [vmem:[#allocation3 + $0x17] sm:$0xff]
  %v1573 = vld [vmem:[#allocation3 + $0x1f] sm:$0xff]
  %v1574 = vld [vmem:[#allocation3 + $0x27] sm:$0xff]
  %v1575 = vld [vmem:[#allocation3 + $0x2f] sm:$0xff]
  %v1576 = vld [vmem:[#allocation3 + $0x37] sm:$0xff]
  %v1577 = vld [vmem:[#allocation3 + $0x3f] sm:$0xff]
  %v1578 = vld [vmem:[#allocation3 + $0x47] sm:$0xff]
  %v1579 = vld [vmem:[#allocation3 + $0x4f] sm:$0xff]
  %v1580 = vld [vmem:[#allocation3 + $0x57] sm:$0xff]
  %v1581 = vld [vmem:[#allocation3 + $0x5f] sm:$0xff]
  %v1582 = vld [vmem:[#allocation3 + $0x67] sm:$0xff]
  %v1583 = vld [vmem:[#allocation3 + $0x6f] sm:$0xff]
  %v1584 = vld [vmem:[#allocation3 + $0x77] sm:$0xff]
  %v1585 = vld [vmem:[#allocation3 + $0x7f] sm:$0xff]
  %v1586 = vld [vmem:[#allocation3 + $0x87] sm:$0xff]
  %v1587 = vld [vmem:[#allocation3 + $0x8f] sm:$0xff]
  %v1588 = vld [vmem:[#allocation3 + $0x97] sm:$0xff]
  %v1589 = vld [vmem:[#allocation3 + $0x9f] sm:$0xff]
  %v1590 = vld [vmem:[#allocation3 + $0xa7] sm:$0xff]
  %v1591 = vld [vmem:[#allocation3 + $0xaf] sm:$0xff]
  %v1592 = vld [vmem:[#allocation3 + $0xb7] sm:$0xff]
  %v1593 = vld [vmem:[#allocation3 + $0xbf] sm:$0xff]
  %v1594 = vld [vmem:[#allocation3 + $0xc7] sm:$0xff]
  %v1595 = vld [vmem:[#allocation3 + $0xcf] sm:$0xff]
  %v1596 = vld [vmem:[#allocation3 + $0xd7] sm:$0xff]
  %v1597 = vld [vmem:[#allocation3 + $0xdf] sm:$0xff]
  %v1598 = vld [vmem:[#allocation3 + $0xe7] sm:$0xff]
  %v1599 = vld [vmem:[#allocation3 + $0xef] sm:$0xff]
  %v1600 = vld [vmem:[#allocation3 + $0xf7] sm:$0xff]
  %v1601 = vld [vmem:[#allocation3 + $0xff] sm:$0xff]
  %v1602 = vld [vmem:[#allocation3 + $0x107] sm:$0xff]
  %v1603 = vld [vmem:[#allocation3 + $0x10f] sm:$0xff]
  %v1604 = vld [vmem:[#allocation3 + $0x117] sm:$0xff]
  %v1605 = vld [vmem:[#allocation3 + $0x11f] sm:$0xff]
  %v1606 = vld [vmem:[#allocation3 + $0x127] sm:$0xff]
  %v1607 = vld [vmem:[#allocation3 + $0x12f] sm:$0xff]
  %v1608 = vld [vmem:[#allocation3 + $0x137] sm:$0xff]
  %v1609 = vld [vmem:[#allocation3 + $0x13f] sm:$0xff]
  %v1610 = vld [vmem:[#allocation3 + $0x147] sm:$0xff]
  %v1611 = vld [vmem:[#allocation3 + $0x14f] sm:$0xff]
  %v1612 = vld [vmem:[#allocation3 + $0x157] sm:$0xff]
  %v1613 = vld [vmem:[#allocation3 + $0x15f] sm:$0xff]
  %v1614 = vld [vmem:[#allocation3 + $0x167] sm:$0xff]
  %v1615 = vld [vmem:[#allocation3 + $0x16f] sm:$0xff]
  %v1616 = vld [vmem:[#allocation3 + $0x177] sm:$0xff]
  %v1617 = vld [vmem:[#allocation3 + $0x17f] sm:$0xff]
  %v1618 = vld [vmem:[#allocation3 + $0x187] sm:$0xff]
  %v1619 = vld [vmem:[#allocation3 + $0x18f] sm:$0xff]
  %v1620 = vld [vmem:[#allocation3 + $0x188] sm:$0xff]
  %v1621 = vld [vmem:[#allocation3 + $0x190] sm:$0xff]
  %v1622 = vld [vmem:[#allocation3 + $0x1c] sm:$0xff]
  %v1623 = vld [vmem:[#allocation3 + $0x24] sm:$0xff]
  %v1624 = vld [vmem:[#allocation3 + $0x2c] sm:$0xff]
  %v1625 = vld [vmem:[#allocation3 + $0x34] sm:$0xff]
  %v1626 = vld [vmem:[#allocation3 + $0x3c] sm:$0xff]
  %v1627 = vld [vmem:[#allocation3 + $0x44] sm:$0xff]
  %v1628 = vld [vmem:[#allocation3 + $0x4c] sm:$0xff]
  %v1629 = vld [vmem:[#allocation3 + $0x54] sm:$0xff]
  %v1630 = vld [vmem:[#allocation3 + $0x5c] sm:$0xff]
  %v1631 = vld [vmem:[#allocation3 + $0x64] sm:$0xff]
  %v1632 = vld [vmem:[#allocation3 + $0x6c] sm:$0xff]
  %v1633 = vld [vmem:[#allocation3 + $0x74] sm:$0xff]
  %v1634 = vld [vmem:[#allocation3 + $0x7c] sm:$0xff]
  %v1635 = vld [vmem:[#allocation3 + $0x84] sm:$0xff]
  %v1636 = vld [vmem:[#allocation3 + $0x8c] sm:$0xff]
  %v1637 = vld [vmem:[#allocation3 + $0x94] sm:$0xff]
  %v1638 = vld [vmem:[#allocation3 + $0x9c] sm:$0xff]
  %v1639 = vld [vmem:[#allocation3 + $0xa4] sm:$0xff]
  %v1640 = vld [vmem:[#allocation3 + $0xac] sm:$0xff]
  %v1641 = vld [vmem:[#allocation3 + $0xb4] sm:$0xff]
  %v1642 = vld [vmem:[#allocation3 + $0xbc] sm:$0xff]
  %v1643 = vld [vmem:[#allocation3 + $0xc4] sm:$0xff]
  %v1644 = vld [vmem:[#allocation3 + $0xcc] sm:$0xff]
  %v1645 = vld [vmem:[#allocation3 + $0xd4] sm:$0xff]
  %v1646 = vld [vmem:[#allocation3 + $0xdc] sm:$0xff]
  %v1647 = vld [vmem:[#allocation3 + $0xe4] sm:$0xff]
  %v1648 = vld [vmem:[#allocation3 + $0xec] sm:$0xff]
  %v1649 = vld [vmem:[#allocation3 + $0xf4] sm:$0xff]
  %v1650 = vld [vmem:[#allocation3 + $0xfc] sm:$0xff]
  %v1651 = vld [vmem:[#allocation3 + $0x104] sm:$0xff]
  %v1652 = vld [vmem:[#allocation3 + $0x10c] sm:$0xff]
  %v1653 = vld [vmem:[#allocation3 + $0x114] sm:$0xff]
  %v1654 = vld [vmem:[#allocation3 + $0x11c] sm:$0xff]
  %v1655 = vld [vmem:[#allocation3 + $0x124] sm:$0xff]
  %v1656 = vld [vmem:[#allocation3 + $0x12c] sm:$0xff]
  %v1657 = vld [vmem:[#allocation3 + $0x134] sm:$0xff]
  %v1658 = vld [vmem:[#allocation3 + $0x13c] sm:$0xff]
  %v1659 = vld [vmem:[#allocation3 + $0x144] sm:$0xff]
  %v1660 = vld [vmem:[#allocation3 + $0x14c] sm:$0xff]
  %v1661 = vld [vmem:[#allocation3 + $0x154] sm:$0xff]
  %v1662 = vld [vmem:[#allocation3 + $0x15c] sm:$0xff]
  %v1663 = vld [vmem:[#allocation3 + $0x164] sm:$0xff]
  %v1664 = vld [vmem:[#allocation3 + $0x16c] sm:$0xff]
  %v1665 = vld [vmem:[#allocation3 + $0x174] sm:$0xff]
  %v1666 = vld [vmem:[#allocation3 + $0x17c] sm:$0xff]
  %v1667 = vld [vmem:[#allocation3 + $0x184] sm:$0xff]
  %v1668 = vld [vmem:[#allocation3 + $0x18c] sm:$0xff]
  %v1669 = vld [vmem:[#allocation3 + $0x194] sm:$0xff]
  %v1670 = vld [vmem:[#allocation3 + $0x19c] sm:$0xff]
  %v1671 = vld [vmem:[#allocation3 + $0x1d] sm:$0xff]
  %v1672 = vld [vmem:[#allocation3 + $0x25] sm:$0xff]
  %v1673 = vld [vmem:[#allocation3 + $0x2d] sm:$0xff]
  %v1674 = vld [vmem:[#allocation3 + $0x35] sm:$0xff]
  %v1675 = vld [vmem:[#allocation3 + $0x3d] sm:$0xff]
  %v1676 = vld [vmem:[#allocation3 + $0x45] sm:$0xff]
  %v1677 = vld [vmem:[#allocation3 + $0x4d] sm:$0xff]
  %v1678 = vld [vmem:[#allocation3 + $0x55] sm:$0xff]
  %v1679 = vld [vmem:[#allocation3 + $0x5d] sm:$0xff]
  %v1680 = vld [vmem:[#allocation3 + $0x65] sm:$0xff]
  %v1681 = vld [vmem:[#allocation3 + $0x6d] sm:$0xff]
  %v1682 = vld [vmem:[#allocation3 + $0x75] sm:$0xff]
  %v1683 = vld [vmem:[#allocation3 + $0x7d] sm:$0xff]
  %v1684 = vld [vmem:[#allocation3 + $0x85] sm:$0xff]
  %v1685 = vld [vmem:[#allocation3 + $0x8d] sm:$0xff]
  %v1686 = vld [vmem:[#allocation3 + $0x95] sm:$0xff]
  %v1687 = vld [vmem:[#allocation3 + $0x9d] sm:$0xff]
  %v1688 = vld [vmem:[#allocation3 + $0xa5] sm:$0xff]
  %v1689 = vld [vmem:[#allocation3 + $0xad] sm:$0xff]
  %v1690 = vld [vmem:[#allocation3 + $0xb5] sm:$0xff]
  %v1691 = vld [vmem:[#allocation3 + $0xbd] sm:$0xff]
  %v1692 = vld [vmem:[#allocation3 + $0xc5] sm:$0xff]
  %v1693 = vld [vmem:[#allocation3 + $0xcd] sm:$0xff]
  %v1694 = vld [vmem:[#allocation3 + $0xd5] sm:$0xff]
  %v1695 = vld [vmem:[#allocation3 + $0xdd] sm:$0xff]
  %v1696 = vld [vmem:[#allocation3 + $0xe5] sm:$0xff]
  %v1697 = vld [vmem:[#allocation3 + $0xed] sm:$0xff]
  %v1698 = vld [vmem:[#allocation3 + $0xf5] sm:$0xff]
  %v1699 = vld [vmem:[#allocation3 + $0xfd] sm:$0xff]
  %v1700 = vld [vmem:[#allocation3 + $0x105] sm:$0xff]
  %v1701 = vld [vmem:[#allocation3 + $0x10d] sm:$0xff]
  %v1702 = vld [vmem:[#allocation3 + $0x115] sm:$0xff]
  %v1703 = vld [vmem:[#allocation3 + $0x11d] sm:$0xff]
  %v1704 = vld [vmem:[#allocation3 + $0x125] sm:$0xff]
  %v1705 = vld [vmem:[#allocation3 + $0x12d] sm:$0xff]
  %v1706 = vld [vmem:[#allocation3 + $0x135] sm:$0xff]
  %v1707 = vld [vmem:[#allocation3 + $0x13d] sm:$0xff]
  %v1708 = vld [vmem:[#allocation3 + $0x145] sm:$0xff]
  %v1709 = vld [vmem:[#allocation3 + $0x14d] sm:$0xff]
  %v1710 = vld [vmem:[#allocation3 + $0x155] sm:$0xff]
  %v1711 = vld [vmem:[#allocation3 + $0x15d] sm:$0xff]
  %v1712 = vld [vmem:[#allocation3 + $0x165] sm:$0xff]
  %v1713 = vld [vmem:[#allocation3 + $0x16d] sm:$0xff]
  %v1714 = vld [vmem:[#allocation3 + $0x175] sm:$0xff]
  %v1715 = vld [vmem:[#allocation3 + $0x17d] sm:$0xff]
  %v1716 = vld [vmem:[#allocation3 + $0x185] sm:$0xff]
  %v1717 = vld [vmem:[#allocation3 + $0x18d] sm:$0xff]
  %v1718 = vld [vmem:[#allocation3 + $0x195] sm:$0xff]
  %v1719 = vld [vmem:[#allocation3 + $0x19d] sm:$0xff]
  %v1720 = vld [vmem:[#allocation3 + $0x196] sm:$0xff]
  %v1721 = vld [vmem:[#allocation3 + $0x19e] sm:$0xff]
  %1771 = vrot.lane.b32.xlu0 %v1424, 32
  %v1772 = vpop.permute.xlu0 %1771
  %1773 = vrot.lane.b32.xlu0 %v1425, 32
  %v1774 = vpop.permute.xlu0 %1773
  %1775 = vrot.lane.b32.xlu0 %v1426, 32
  %v1776 = vpop.permute.xlu0 %1775
  %1777 = vrot.lane.b32.xlu0 %v1427, 32
  %v1778 = vpop.permute.xlu0 %1777
  %1779 = vrot.lane.b32.xlu0 %v1428, 32
  %v1780 = vpop.permute.xlu0 %1779
  %1781 = vrot.lane.b32.xlu0 %v1429, 32
  %v1782 = vpop.permute.xlu0 %1781
  %1783 = vrot.lane.b32.xlu0 %v1430, 32
  %v1784 = vpop.permute.xlu0 %1783
  %1785 = vrot.lane.b32.xlu0 %v1431, 32
  %v1786 = vpop.permute.xlu0 %1785
  %1787 = vrot.lane.b32.xlu0 %v1432, 32
  %v1788 = vpop.permute.xlu0 %1787
  %1789 = vrot.lane.b32.xlu0 %v1433, 32
  %v1790 = vpop.permute.xlu0 %1789
  %1791 = vrot.lane.b32.xlu0 %v1434, 32
  %v1792 = vpop.permute.xlu0 %1791
  %1793 = vrot.lane.b32.xlu0 %v1435, 32
  %v1794 = vpop.permute.xlu0 %1793
  %1795 = vrot.lane.b32.xlu0 %v1436, 32
  %v1796 = vpop.permute.xlu0 %1795
  %1797 = vrot.lane.b32.xlu0 %v1437, 32
  %v1798 = vpop.permute.xlu0 %1797
  %1799 = vrot.lane.b32.xlu0 %v1438, 32
  %v1800 = vpop.permute.xlu0 %1799
  %1801 = vrot.lane.b32.xlu0 %v1439, 32
  %v1802 = vpop.permute.xlu0 %1801
  %1803 = vrot.lane.b32.xlu0 %v1440, 32
  %v1804 = vpop.permute.xlu0 %1803
  %1805 = vrot.lane.b32.xlu0 %v1441, 32
  %v1806 = vpop.permute.xlu0 %1805
  %1807 = vrot.lane.b32.xlu0 %v1442, 32
  %v1808 = vpop.permute.xlu0 %1807
  %1809 = vrot.lane.b32.xlu0 %v1443, 32
  %v1810 = vpop.permute.xlu0 %1809
  %1811 = vrot.lane.b32.xlu0 %v1444, 32
  %v1812 = vpop.permute.xlu0 %1811
  %1813 = vrot.lane.b32.xlu0 %v1445, 32
  %v1814 = vpop.permute.xlu0 %1813
  %1815 = vrot.lane.b32.xlu0 %v1446, 32
  %v1816 = vpop.permute.xlu0 %1815
  %1817 = vrot.lane.b32.xlu0 %v1447, 32
  %v1818 = vpop.permute.xlu0 %1817
  %1819 = vrot.lane.b32.xlu0 %v1448, 32
  %v1820 = vpop.permute.xlu0 %1819
  %1821 = vrot.lane.b32.xlu0 %v1449, 32
  %v1822 = vpop.permute.xlu0 %1821
  %1823 = vrot.lane.b32.xlu0 %v1450, 32
  %v1824 = vpop.permute.xlu0 %1823
  %1825 = vrot.lane.b32.xlu0 %v1451, 32
  %v1826 = vpop.permute.xlu0 %1825
  %1827 = vrot.lane.b32.xlu0 %v1452, 32
  %v1828 = vpop.permute.xlu0 %1827
  %1829 = vrot.lane.b32.xlu0 %v1453, 32
  %v1830 = vpop.permute.xlu0 %1829
  %1831 = vrot.lane.b32.xlu0 %v1454, 32
  %v1832 = vpop.permute.xlu0 %1831
  %1833 = vrot.lane.b32.xlu0 %v1455, 32
  %v1834 = vpop.permute.xlu0 %1833
  %1835 = vrot.lane.b32.xlu0 %v1456, 32
  %v1836 = vpop.permute.xlu0 %1835
  %1837 = vrot.lane.b32.xlu0 %v1457, 32
  %v1838 = vpop.permute.xlu0 %1837
  %1839 = vrot.lane.b32.xlu0 %v1458, 32
  %v1840 = vpop.permute.xlu0 %1839
  %1841 = vrot.lane.b32.xlu0 %v1459, 32
  %v1842 = vpop.permute.xlu0 %1841
  %1843 = vrot.lane.b32.xlu0 %v1460, 32
  %v1844 = vpop.permute.xlu0 %1843
  %1845 = vrot.lane.b32.xlu0 %v1461, 32
  %v1846 = vpop.permute.xlu0 %1845
  %1847 = vrot.lane.b32.xlu0 %v1462, 32
  %v1848 = vpop.permute.xlu0 %1847
  %1849 = vrot.lane.b32.xlu0 %v1463, 32
  %v1850 = vpop.permute.xlu0 %1849
  %1851 = vrot.lane.b32.xlu0 %v1464, 32
  %v1852 = vpop.permute.xlu0 %1851
  %1853 = vrot.lane.b32.xlu0 %v1465, 32
  %v1854 = vpop.permute.xlu0 %1853
  %1855 = vrot.lane.b32.xlu0 %v1466, 32
  %v1856 = vpop.permute.xlu0 %1855
  %1857 = vrot.lane.b32.xlu0 %v1467, 32
  %v1858 = vpop.permute.xlu0 %1857
  %1859 = vrot.lane.b32.xlu0 %v1468, 32
  %v1860 = vpop.permute.xlu0 %1859
  %1861 = vrot.lane.b32.xlu0 %v1469, 32
  %v1862 = vpop.permute.xlu0 %1861
  %1863 = vrot.lane.b32.xlu0 %v1470, 32
  %v1864 = vpop.permute.xlu0 %1863
  %1865 = vrot.lane.b32.xlu0 %v1471, 32
  %v1866 = vpop.permute.xlu0 %1865
  %1867 = vrot.lane.b32.xlu0 %v1472, 32
  %v1868 = vpop.permute.xlu0 %1867
  %1967 = vrot.lane.b32.xlu0 %v1473, 64
  %v1968 = vpop.permute.xlu0 %1967
  %1969 = vrot.lane.b32.xlu0 %v1474, 64
  %v1970 = vpop.permute.xlu0 %1969
  %1971 = vrot.lane.b32.xlu0 %v1475, 64
  %v1972 = vpop.permute.xlu0 %1971
  %1973 = vrot.lane.b32.xlu0 %v1476, 64
  %v1974 = vpop.permute.xlu0 %1973
  %1975 = vrot.lane.b32.xlu0 %v1477, 64
  %v1976 = vpop.permute.xlu0 %1975
  %1977 = vrot.lane.b32.xlu0 %v1478, 64
  %v1978 = vpop.permute.xlu0 %1977
  %1979 = vrot.lane.b32.xlu0 %v1479, 64
  %v1980 = vpop.permute.xlu0 %1979
  %1981 = vrot.lane.b32.xlu0 %v1480, 64
  %v1982 = vpop.permute.xlu0 %1981
  %1983 = vrot.lane.b32.xlu0 %v1481, 64
  %v1984 = vpop.permute.xlu0 %1983
  %1985 = vrot.lane.b32.xlu0 %v1482, 64
  %v1986 = vpop.permute.xlu0 %1985
  %1987 = vrot.lane.b32.xlu0 %v1483, 64
  %v1988 = vpop.permute.xlu0 %1987
  %1989 = vrot.lane.b32.xlu0 %v1484, 64
  %v1990 = vpop.permute.xlu0 %1989
  %1991 = vrot.lane.b32.xlu0 %v1485, 64
  %v1992 = vpop.permute.xlu0 %1991
  %1993 = vrot.lane.b32.xlu0 %v1486, 64
  %v1994 = vpop.permute.xlu0 %1993
  %1995 = vrot.lane.b32.xlu0 %v1487, 64
  %v1996 = vpop.permute.xlu0 %1995
  %1997 = vrot.lane.b32.xlu0 %v1488, 64
  %v1998 = vpop.permute.xlu0 %1997
  %1999 = vrot.lane.b32.xlu0 %v1489, 64
  %v2000 = vpop.permute.xlu0 %1999
  %2001 = vrot.lane.b32.xlu0 %v1490, 64
  %v2002 = vpop.permute.xlu0 %2001
  %2003 = vrot.lane.b32.xlu0 %v1491, 64
  %v2004 = vpop.permute.xlu0 %2003
  %2005 = vrot.lane.b32.xlu0 %v1492, 64
  %v2006 = vpop.permute.xlu0 %2005
  %2007 = vrot.lane.b32.xlu0 %v1493, 64
  %v2008 = vpop.permute.xlu0 %2007
  %2009 = vrot.lane.b32.xlu0 %v1494, 64
  %v2010 = vpop.permute.xlu0 %2009
  %2011 = vrot.lane.b32.xlu0 %v1495, 64
  %v2012 = vpop.permute.xlu0 %2011
  %2013 = vrot.lane.b32.xlu0 %v1496, 64
  %v2014 = vpop.permute.xlu0 %2013
  %2015 = vrot.lane.b32.xlu0 %v1497, 64
  %v2016 = vpop.permute.xlu0 %2015
  %2017 = vrot.lane.b32.xlu0 %v1498, 64
  %v2018 = vpop.permute.xlu0 %2017
  %2019 = vrot.lane.b32.xlu0 %v1499, 64
  %v2020 = vpop.permute.xlu0 %2019
  %2021 = vrot.lane.b32.xlu0 %v1500, 64
  %v2022 = vpop.permute.xlu0 %2021
  %2023 = vrot.lane.b32.xlu0 %v1501, 64
  %v2024 = vpop.permute.xlu0 %2023
  %2025 = vrot.lane.b32.xlu0 %v1502, 64
  %v2026 = vpop.permute.xlu0 %2025
  %2027 = vrot.lane.b32.xlu0 %v1503, 64
  %v2028 = vpop.permute.xlu0 %2027
  %2029 = vrot.lane.b32.xlu0 %v1504, 64
  %v2030 = vpop.permute.xlu0 %2029
  %2031 = vrot.lane.b32.xlu0 %v1505, 64
  %v2032 = vpop.permute.xlu0 %2031
  %2033 = vrot.lane.b32.xlu0 %v1506, 64
  %v2034 = vpop.permute.xlu0 %2033
  %2035 = vrot.lane.b32.xlu0 %v1507, 64
  %v2036 = vpop.permute.xlu0 %2035
  %2037 = vrot.lane.b32.xlu0 %v1508, 64
  %v2038 = vpop.permute.xlu0 %2037
  %2039 = vrot.lane.b32.xlu0 %v1509, 64
  %v2040 = vpop.permute.xlu0 %2039
  %2041 = vrot.lane.b32.xlu0 %v1510, 64
  %v2042 = vpop.permute.xlu0 %2041
  %2043 = vrot.lane.b32.xlu0 %v1511, 64
  %v2044 = vpop.permute.xlu0 %2043
  %2045 = vrot.lane.b32.xlu0 %v1512, 64
  %v2046 = vpop.permute.xlu0 %2045
  %2047 = vrot.lane.b32.xlu0 %v1513, 64
  %v2048 = vpop.permute.xlu0 %2047
  %2049 = vrot.lane.b32.xlu0 %v1514, 64
  %v2050 = vpop.permute.xlu0 %2049
  %2051 = vrot.lane.b32.xlu0 %v1515, 64
  %v2052 = vpop.permute.xlu0 %2051
  %2053 = vrot.lane.b32.xlu0 %v1516, 64
  %v2054 = vpop.permute.xlu0 %2053
  %2055 = vrot.lane.b32.xlu0 %v1517, 64
  %v2056 = vpop.permute.xlu0 %2055
  %2057 = vrot.lane.b32.xlu0 %v1518, 64
  %v2058 = vpop.permute.xlu0 %2057
  %2059 = vrot.lane.b32.xlu0 %v1519, 64
  %v2060 = vpop.permute.xlu0 %2059
  %2061 = vrot.lane.b32.xlu0 %v1520, 64
  %v2062 = vpop.permute.xlu0 %2061
  %2063 = vrot.lane.b32.xlu0 %v1521, 64
  %v2064 = vpop.permute.xlu0 %2063
  %2163 = vrot.lane.b32.xlu0 %v1522, 96
  %v2164 = vpop.permute.xlu0 %2163
  %2165 = vrot.lane.b32.xlu0 %v1523, 96
  %v2166 = vpop.permute.xlu0 %2165
  %2167 = vrot.lane.b32.xlu0 %v1524, 96
  %v2168 = vpop.permute.xlu0 %2167
  %2169 = vrot.lane.b32.xlu0 %v1525, 96
  %v2170 = vpop.permute.xlu0 %2169
  %2171 = vrot.lane.b32.xlu0 %v1526, 96
  %v2172 = vpop.permute.xlu0 %2171
  %2173 = vrot.lane.b32.xlu0 %v1527, 96
  %v2174 = vpop.permute.xlu0 %2173
  %2175 = vrot.lane.b32.xlu0 %v1528, 96
  %v2176 = vpop.permute.xlu0 %2175
  %2177 = vrot.lane.b32.xlu0 %v1529, 96
  %v2178 = vpop.permute.xlu0 %2177
  %2179 = vrot.lane.b32.xlu0 %v1530, 96
  %v2180 = vpop.permute.xlu0 %2179
  %2181 = vrot.lane.b32.xlu0 %v1531, 96
  %v2182 = vpop.permute.xlu0 %2181
  %2183 = vrot.lane.b32.xlu0 %v1532, 96
  %v2184 = vpop.permute.xlu0 %2183
  %2185 = vrot.lane.b32.xlu0 %v1533, 96
  %v2186 = vpop.permute.xlu0 %2185
  %2187 = vrot.lane.b32.xlu0 %v1534, 96
  %v2188 = vpop.permute.xlu0 %2187
  %2189 = vrot.lane.b32.xlu0 %v1535, 96
  %v2190 = vpop.permute.xlu0 %2189
  %2191 = vrot.lane.b32.xlu0 %v1536, 96
  %v2192 = vpop.permute.xlu0 %2191
  %2193 = vrot.lane.b32.xlu0 %v1537, 96
  %v2194 = vpop.permute.xlu0 %2193
  %2195 = vrot.lane.b32.xlu0 %v1538, 96
  %v2196 = vpop.permute.xlu0 %2195
  %2197 = vrot.lane.b32.xlu0 %v1539, 96
  %v2198 = vpop.permute.xlu0 %2197
  %2199 = vrot.lane.b32.xlu0 %v1540, 96
  %v2200 = vpop.permute.xlu0 %2199
  %2201 = vrot.lane.b32.xlu0 %v1541, 96
  %v2202 = vpop.permute.xlu0 %2201
  %2203 = vrot.lane.b32.xlu0 %v1542, 96
  %v2204 = vpop.permute.xlu0 %2203
  %2205 = vrot.lane.b32.xlu0 %v1543, 96
  %v2206 = vpop.permute.xlu0 %2205
  %2207 = vrot.lane.b32.xlu0 %v1544, 96
  %v2208 = vpop.permute.xlu0 %2207
  %2209 = vrot.lane.b32.xlu0 %v1545, 96
  %v2210 = vpop.permute.xlu0 %2209
  %2211 = vrot.lane.b32.xlu0 %v1546, 96
  %v2212 = vpop.permute.xlu0 %2211
  %2213 = vrot.lane.b32.xlu0 %v1547, 96
  %v2214 = vpop.permute.xlu0 %2213
  %2215 = vrot.lane.b32.xlu0 %v1548, 96
  %v2216 = vpop.permute.xlu0 %2215
  %2217 = vrot.lane.b32.xlu0 %v1549, 96
  %v2218 = vpop.permute.xlu0 %2217
  %2219 = vrot.lane.b32.xlu0 %v1550, 96
  %v2220 = vpop.permute.xlu0 %2219
  %2221 = vrot.lane.b32.xlu0 %v1551, 96
  %v2222 = vpop.permute.xlu0 %2221
  %2223 = vrot.lane.b32.xlu0 %v1552, 96
  %v2224 = vpop.permute.xlu0 %2223
  %2225 = vrot.lane.b32.xlu0 %v1553, 96
  %v2226 = vpop.permute.xlu0 %2225
  %2227 = vrot.lane.b32.xlu0 %v1554, 96
  %v2228 = vpop.permute.xlu0 %2227
  %2229 = vrot.lane.b32.xlu0 %v1555, 96
  %v2230 = vpop.permute.xlu0 %2229
  %2231 = vrot.lane.b32.xlu0 %v1556, 96
  %v2232 = vpop.permute.xlu0 %2231
  %2233 = vrot.lane.b32.xlu0 %v1557, 96
  %v2234 = vpop.permute.xlu0 %2233
  %2235 = vrot.lane.b32.xlu0 %v1558, 96
  %v2236 = vpop.permute.xlu0 %2235
  %2237 = vrot.lane.b32.xlu0 %v1559, 96
  %v2238 = vpop.permute.xlu0 %2237
  %2239 = vrot.lane.b32.xlu0 %v1560, 96
  %v2240 = vpop.permute.xlu0 %2239
  %2241 = vrot.lane.b32.xlu0 %v1561, 96
  %v2242 = vpop.permute.xlu0 %2241
  %2243 = vrot.lane.b32.xlu0 %v1562, 96
  %v2244 = vpop.permute.xlu0 %2243
  %2245 = vrot.lane.b32.xlu0 %v1563, 96
  %v2246 = vpop.permute.xlu0 %2245
  %2247 = vrot.lane.b32.xlu0 %v1564, 96
  %v2248 = vpop.permute.xlu0 %2247
  %2249 = vrot.lane.b32.xlu0 %v1565, 96
  %v2250 = vpop.permute.xlu0 %2249
  %2251 = vrot.lane.b32.xlu0 %v1566, 96
  %v2252 = vpop.permute.xlu0 %2251
  %2253 = vrot.lane.b32.xlu0 %v1567, 96
  %v2254 = vpop.permute.xlu0 %2253
  %2255 = vrot.lane.b32.xlu0 %v1568, 96
  %v2256 = vpop.permute.xlu0 %2255
  %2257 = vrot.lane.b32.xlu0 %v1569, 96
  %v2258 = vpop.permute.xlu0 %2257
  %2259 = vrot.lane.b32.xlu0 %v1570, 96
  %v2260 = vpop.permute.xlu0 %2259
  %2359 = vrot.lane.b32.xlu0 %v1377, 32
  %v2360 = vpop.permute.xlu0 %2359
  %2361 = vrot.lane.b32.xlu0 %v1378, 32
  %v2362 = vpop.permute.xlu0 %2361
  %2363 = vrot.lane.b32.xlu0 %v1379, 32
  %v2364 = vpop.permute.xlu0 %2363
  %2365 = vrot.lane.b32.xlu0 %v1380, 32
  %v2366 = vpop.permute.xlu0 %2365
  %2367 = vrot.lane.b32.xlu0 %v1381, 32
  %v2368 = vpop.permute.xlu0 %2367
  %2369 = vrot.lane.b32.xlu0 %v1382, 32
  %v2370 = vpop.permute.xlu0 %2369
  %2371 = vrot.lane.b32.xlu0 %v1383, 32
  %v2372 = vpop.permute.xlu0 %2371
  %2373 = vrot.lane.b32.xlu0 %v1384, 32
  %v2374 = vpop.permute.xlu0 %2373
  %2375 = vrot.lane.b32.xlu0 %v1385, 32
  %v2376 = vpop.permute.xlu0 %2375
  %2377 = vrot.lane.b32.xlu0 %v1386, 32
  %v2378 = vpop.permute.xlu0 %2377
  %2379 = vrot.lane.b32.xlu0 %v1387, 32
  %v2380 = vpop.permute.xlu0 %2379
  %2381 = vrot.lane.b32.xlu0 %v1388, 32
  %v2382 = vpop.permute.xlu0 %2381
  %2383 = vrot.lane.b32.xlu0 %v1389, 32
  %v2384 = vpop.permute.xlu0 %2383
  %2385 = vrot.lane.b32.xlu0 %v1390, 32
  %v2386 = vpop.permute.xlu0 %2385
  %2387 = vrot.lane.b32.xlu0 %v1391, 32
  %v2388 = vpop.permute.xlu0 %2387
  %2389 = vrot.lane.b32.xlu0 %v1392, 32
  %v2390 = vpop.permute.xlu0 %2389
  %2391 = vrot.lane.b32.xlu0 %v1393, 32
  %v2392 = vpop.permute.xlu0 %2391
  %2393 = vrot.lane.b32.xlu0 %v1394, 32
  %v2394 = vpop.permute.xlu0 %2393
  %2395 = vrot.lane.b32.xlu0 %v1395, 32
  %v2396 = vpop.permute.xlu0 %2395
  %2397 = vrot.lane.b32.xlu0 %v1396, 32
  %v2398 = vpop.permute.xlu0 %2397
  %2399 = vrot.lane.b32.xlu0 %v1397, 32
  %v2400 = vpop.permute.xlu0 %2399
  %2401 = vrot.lane.b32.xlu0 %v1398, 32
  %v2402 = vpop.permute.xlu0 %2401
  %2403 = vrot.lane.b32.xlu0 %v1399, 32
  %v2404 = vpop.permute.xlu0 %2403
  %2405 = vrot.lane.b32.xlu0 %v1400, 32
  %v2406 = vpop.permute.xlu0 %2405
  %2407 = vrot.lane.b32.xlu0 %v1401, 32
  %v2408 = vpop.permute.xlu0 %2407
  %2409 = vrot.lane.b32.xlu0 %v1402, 32
  %v2410 = vpop.permute.xlu0 %2409
  %2411 = vrot.lane.b32.xlu0 %v1403, 32
  %v2412 = vpop.permute.xlu0 %2411
  %2413 = vrot.lane.b32.xlu0 %v1404, 32
  %v2414 = vpop.permute.xlu0 %2413
  %2415 = vrot.lane.b32.xlu0 %v1405, 32
  %v2416 = vpop.permute.xlu0 %2415
  %2417 = vrot.lane.b32.xlu0 %v1406, 32
  %v2418 = vpop.permute.xlu0 %2417
  %2419 = vrot.lane.b32.xlu0 %v1407, 32
  %v2420 = vpop.permute.xlu0 %2419
  %2421 = vrot.lane.b32.xlu0 %v1408, 32
  %v2422 = vpop.permute.xlu0 %2421
  %2423 = vrot.lane.b32.xlu0 %v1409, 32
  %v2424 = vpop.permute.xlu0 %2423
  %2425 = vrot.lane.b32.xlu0 %v1410, 32
  %v2426 = vpop.permute.xlu0 %2425
  %2427 = vrot.lane.b32.xlu0 %v1411, 32
  %v2428 = vpop.permute.xlu0 %2427
  %2429 = vrot.lane.b32.xlu0 %v1412, 32
  %v2430 = vpop.permute.xlu0 %2429
  %2431 = vrot.lane.b32.xlu0 %v1413, 32
  %v2432 = vpop.permute.xlu0 %2431
  %2433 = vrot.lane.b32.xlu0 %v1414, 32
  %v2434 = vpop.permute.xlu0 %2433
  %2435 = vrot.lane.b32.xlu0 %v1415, 32
  %v2436 = vpop.permute.xlu0 %2435
  %2437 = vrot.lane.b32.xlu0 %v1416, 32
  %v2438 = vpop.permute.xlu0 %2437
  %2439 = vrot.lane.b32.xlu0 %v1417, 32
  %v2440 = vpop.permute.xlu0 %2439
  %2441 = vrot.lane.b32.xlu0 %v1418, 32
  %v2442 = vpop.permute.xlu0 %2441
  %2443 = vrot.lane.b32.xlu0 %v1419, 32
  %v2444 = vpop.permute.xlu0 %2443
  %2445 = vrot.lane.b32.xlu0 %v1420, 32
  %v2446 = vpop.permute.xlu0 %2445
  %2447 = vrot.lane.b32.xlu0 %v1421, 32
  %v2448 = vpop.permute.xlu0 %2447
  %2449 = vrot.lane.b32.xlu0 %v1422, 32
  %v2450 = vpop.permute.xlu0 %2449
  %2451 = vrot.lane.b32.xlu0 %v1423, 32
  %v2452 = vpop.permute.xlu0 %2451
  %2453 = vrot.lane.b32.xlu0 %v1620, 32
  %v2454 = vpop.permute.xlu0 %2453
  %2455 = vrot.lane.b32.xlu0 %v1621, 32
  %v2456 = vpop.permute.xlu0 %2455
  %2555 = vrot.lane.b32.xlu0 %v1622, 64
  %v2556 = vpop.permute.xlu0 %2555
  %2557 = vrot.lane.b32.xlu0 %v1623, 64
  %v2558 = vpop.permute.xlu0 %2557
  %2559 = vrot.lane.b32.xlu0 %v1624, 64
  %v2560 = vpop.permute.xlu0 %2559
  %2561 = vrot.lane.b32.xlu0 %v1625, 64
  %v2562 = vpop.permute.xlu0 %2561
  %2563 = vrot.lane.b32.xlu0 %v1626, 64
  %v2564 = vpop.permute.xlu0 %2563
  %2565 = vrot.lane.b32.xlu0 %v1627, 64
  %v2566 = vpop.permute.xlu0 %2565
  %2567 = vrot.lane.b32.xlu0 %v1628, 64
  %v2568 = vpop.permute.xlu0 %2567
  %2569 = vrot.lane.b32.xlu0 %v1629, 64
  %v2570 = vpop.permute.xlu0 %2569
  %2571 = vrot.lane.b32.xlu0 %v1630, 64
  %v2572 = vpop.permute.xlu0 %2571
  %2573 = vrot.lane.b32.xlu0 %v1631, 64
  %v2574 = vpop.permute.xlu0 %2573
  %2575 = vrot.lane.b32.xlu0 %v1632, 64
  %v2576 = vpop.permute.xlu0 %2575
  %2577 = vrot.lane.b32.xlu0 %v1633, 64
  %v2578 = vpop.permute.xlu0 %2577
  %2579 = vrot.lane.b32.xlu0 %v1634, 64
  %v2580 = vpop.permute.xlu0 %2579
  %2581 = vrot.lane.b32.xlu0 %v1635, 64
  %v2582 = vpop.permute.xlu0 %2581
  %2583 = vrot.lane.b32.xlu0 %v1636, 64
  %v2584 = vpop.permute.xlu0 %2583
  %2585 = vrot.lane.b32.xlu0 %v1637, 64
  %v2586 = vpop.permute.xlu0 %2585
  %2587 = vrot.lane.b32.xlu0 %v1638, 64
  %v2588 = vpop.permute.xlu0 %2587
  %2589 = vrot.lane.b32.xlu0 %v1639, 64
  %v2590 = vpop.permute.xlu0 %2589
  %2591 = vrot.lane.b32.xlu0 %v1640, 64
  %v2592 = vpop.permute.xlu0 %2591
  %2593 = vrot.lane.b32.xlu0 %v1641, 64
  %v2594 = vpop.permute.xlu0 %2593
  %2595 = vrot.lane.b32.xlu0 %v1642, 64
  %v2596 = vpop.permute.xlu0 %2595
  %2597 = vrot.lane.b32.xlu0 %v1643, 64
  %v2598 = vpop.permute.xlu0 %2597
  %2599 = vrot.lane.b32.xlu0 %v1644, 64
  %v2600 = vpop.permute.xlu0 %2599
  %2601 = vrot.lane.b32.xlu0 %v1645, 64
  %v2602 = vpop.permute.xlu0 %2601
  %2603 = vrot.lane.b32.xlu0 %v1646, 64
  %v2604 = vpop.permute.xlu0 %2603
  %2605 = vrot.lane.b32.xlu0 %v1647, 64
  %v2606 = vpop.permute.xlu0 %2605
  %2607 = vrot.lane.b32.xlu0 %v1648, 64
  %v2608 = vpop.permute.xlu0 %2607
  %2609 = vrot.lane.b32.xlu0 %v1649, 64
  %v2610 = vpop.permute.xlu0 %2609
  %2611 = vrot.lane.b32.xlu0 %v1650, 64
  %v2612 = vpop.permute.xlu0 %2611
  %2613 = vrot.lane.b32.xlu0 %v1651, 64
  %v2614 = vpop.permute.xlu0 %2613
  %2615 = vrot.lane.b32.xlu0 %v1652, 64
  %v2616 = vpop.permute.xlu0 %2615
  %2617 = vrot.lane.b32.xlu0 %v1653, 64
  %v2618 = vpop.permute.xlu0 %2617
  %2619 = vrot.lane.b32.xlu0 %v1654, 64
  %v2620 = vpop.permute.xlu0 %2619
  %2621 = vrot.lane.b32.xlu0 %v1655, 64
  %v2622 = vpop.permute.xlu0 %2621
  %2623 = vrot.lane.b32.xlu0 %v1656, 64
  %v2624 = vpop.permute.xlu0 %2623
  %2625 = vrot.lane.b32.xlu0 %v1657, 64
  %v2626 = vpop.permute.xlu0 %2625
  %2627 = vrot.lane.b32.xlu0 %v1658, 64
  %v2628 = vpop.permute.xlu0 %2627
  %2629 = vrot.lane.b32.xlu0 %v1659, 64
  %v2630 = vpop.permute.xlu0 %2629
  %2631 = vrot.lane.b32.xlu0 %v1660, 64
  %v2632 = vpop.permute.xlu0 %2631
  %2633 = vrot.lane.b32.xlu0 %v1661, 64
  %v2634 = vpop.permute.xlu0 %2633
  %2635 = vrot.lane.b32.xlu0 %v1662, 64
  %v2636 = vpop.permute.xlu0 %2635
  %2637 = vrot.lane.b32.xlu0 %v1663, 64
  %v2638 = vpop.permute.xlu0 %2637
  %2639 = vrot.lane.b32.xlu0 %v1664, 64
  %v2640 = vpop.permute.xlu0 %2639
  %2641 = vrot.lane.b32.xlu0 %v1665, 64
  %v2642 = vpop.permute.xlu0 %2641
  %2643 = vrot.lane.b32.xlu0 %v1666, 64
  %v2644 = vpop.permute.xlu0 %2643
  %2645 = vrot.lane.b32.xlu0 %v1667, 64
  %v2646 = vpop.permute.xlu0 %2645
  %2647 = vrot.lane.b32.xlu0 %v1668, 64
  %v2648 = vpop.permute.xlu0 %2647
  %2649 = vrot.lane.b32.xlu0 %v1669, 64
  %v2650 = vpop.permute.xlu0 %2649
  %2651 = vrot.lane.b32.xlu0 %v1670, 64
  %v2652 = vpop.permute.xlu0 %2651
  %2751 = vrot.lane.b32.xlu0 %v1671, 96
  %v2752 = vpop.permute.xlu0 %2751
  %2753 = vrot.lane.b32.xlu0 %v1672, 96
  %v2754 = vpop.permute.xlu0 %2753
  %2755 = vrot.lane.b32.xlu0 %v1673, 96
  %v2756 = vpop.permute.xlu0 %2755
  %2757 = vrot.lane.b32.xlu0 %v1674, 96
  %v2758 = vpop.permute.xlu0 %2757
  %2759 = vrot.lane.b32.xlu0 %v1675, 96
  %v2760 = vpop.permute.xlu0 %2759
  %2761 = vrot.lane.b32.xlu0 %v1676, 96
  %v2762 = vpop.permute.xlu0 %2761
  %2763 = vrot.lane.b32.xlu0 %v1677, 96
  %v2764 = vpop.permute.xlu0 %2763
  %2765 = vrot.lane.b32.xlu0 %v1678, 96
  %v2766 = vpop.permute.xlu0 %2765
  %2767 = vrot.lane.b32.xlu0 %v1679, 96
  %v2768 = vpop.permute.xlu0 %2767
  %2769 = vrot.lane.b32.xlu0 %v1680, 96
  %v2770 = vpop.permute.xlu0 %2769
  %2771 = vrot.lane.b32.xlu0 %v1681, 96
  %v2772 = vpop.permute.xlu0 %2771
  %2773 = vrot.lane.b32.xlu0 %v1682, 96
  %v2774 = vpop.permute.xlu0 %2773
  %2775 = vrot.lane.b32.xlu0 %v1683, 96
  %v2776 = vpop.permute.xlu0 %2775
  %2777 = vrot.lane.b32.xlu0 %v1684, 96
  %v2778 = vpop.permute.xlu0 %2777
  %2779 = vrot.lane.b32.xlu0 %v1685, 96
  %v2780 = vpop.permute.xlu0 %2779
  %2781 = vrot.lane.b32.xlu0 %v1686, 96
  %v2782 = vpop.permute.xlu0 %2781
  %2783 = vrot.lane.b32.xlu0 %v1687, 96
  %v2784 = vpop.permute.xlu0 %2783
  %2785 = vrot.lane.b32.xlu0 %v1688, 96
  %v2786 = vpop.permute.xlu0 %2785
  %2787 = vrot.lane.b32.xlu0 %v1689, 96
  %v2788 = vpop.permute.xlu0 %2787
  %2789 = vrot.lane.b32.xlu0 %v1690, 96
  %v2790 = vpop.permute.xlu0 %2789
  %2791 = vrot.lane.b32.xlu0 %v1691, 96
  %v2792 = vpop.permute.xlu0 %2791
  %2793 = vrot.lane.b32.xlu0 %v1692, 96
  %v2794 = vpop.permute.xlu0 %2793
  %2795 = vrot.lane.b32.xlu0 %v1693, 96
  %v2796 = vpop.permute.xlu0 %2795
  %2797 = vrot.lane.b32.xlu0 %v1694, 96
  %v2798 = vpop.permute.xlu0 %2797
  %2799 = vrot.lane.b32.xlu0 %v1695, 96
  %v2800 = vpop.permute.xlu0 %2799
  %2801 = vrot.lane.b32.xlu0 %v1696, 96
  %v2802 = vpop.permute.xlu0 %2801
  %2803 = vrot.lane.b32.xlu0 %v1697, 96
  %v2804 = vpop.permute.xlu0 %2803
  %2805 = vrot.lane.b32.xlu0 %v1698, 96
  %v2806 = vpop.permute.xlu0 %2805
  %2807 = vrot.lane.b32.xlu0 %v1699, 96
  %v2808 = vpop.permute.xlu0 %2807
  %2809 = vrot.lane.b32.xlu0 %v1700, 96
  %v2810 = vpop.permute.xlu0 %2809
  %2811 = vrot.lane.b32.xlu0 %v1701, 96
  %v2812 = vpop.permute.xlu0 %2811
  %2813 = vrot.lane.b32.xlu0 %v1702, 96
  %v2814 = vpop.permute.xlu0 %2813
  %2815 = vrot.lane.b32.xlu0 %v1703, 96
  %v2816 = vpop.permute.xlu0 %2815
  %2817 = vrot.lane.b32.xlu0 %v1704, 96
  %v2818 = vpop.permute.xlu0 %2817
  %2819 = vrot.lane.b32.xlu0 %v1705, 96
  %v2820 = vpop.permute.xlu0 %2819
  %2821 = vrot.lane.b32.xlu0 %v1706, 96
  %v2822 = vpop.permute.xlu0 %2821
  %2823 = vrot.lane.b32.xlu0 %v1707, 96
  %v2824 = vpop.permute.xlu0 %2823
  %2825 = vrot.lane.b32.xlu0 %v1708, 96
  %v2826 = vpop.permute.xlu0 %2825
  %2827 = vrot.lane.b32.xlu0 %v1709, 96
  %v2828 = vpop.permute.xlu0 %2827
  %2829 = vrot.lane.b32.xlu0 %v1710, 96
  %v2830 = vpop.permute.xlu0 %2829
  %2831 = vrot.lane.b32.xlu0 %v1711, 96
  %v2832 = vpop.permute.xlu0 %2831
  %2833 = vrot.lane.b32.xlu0 %v1712, 96
  %v2834 = vpop.permute.xlu0 %2833
  %2835 = vrot.lane.b32.xlu0 %v1713, 96
  %v2836 = vpop.permute.xlu0 %2835
  %2837 = vrot.lane.b32.xlu0 %v1714, 96
  %v2838 = vpop.permute.xlu0 %2837
  %2839 = vrot.lane.b32.xlu0 %v1715, 96
  %v2840 = vpop.permute.xlu0 %2839
  %2841 = vrot.lane.b32.xlu0 %v1716, 96
  %v2842 = vpop.permute.xlu0 %2841
  %2843 = vrot.lane.b32.xlu0 %v1717, 96
  %v2844 = vpop.permute.xlu0 %2843
  %2845 = vrot.lane.b32.xlu0 %v1718, 96
  %v2846 = vpop.permute.xlu0 %2845
  %2847 = vrot.lane.b32.xlu0 %v1719, 96
  %v2848 = vpop.permute.xlu0 %2847
  %v2898 = vsel %vm1320, %v1375, %v1772
  %v2899 = vsel %vm1320, %v1376, %v1774
  %v2900 = vsel %vm1320, %v1377, %v1776
  %v2901 = vsel %vm1320, %v1378, %v1778
  %v2902 = vsel %vm1320, %v1379, %v1780
  %v2903 = vsel %vm1320, %v1380, %v1782
  %v2904 = vsel %vm1320, %v1381, %v1784
  %v2905 = vsel %vm1320, %v1382, %v1786
  %v2906 = vsel %vm1320, %v1383, %v1788
  %v2907 = vsel %vm1320, %v1384, %v1790
  %v2908 = vsel %vm1320, %v1385, %v1792
  %v2909 = vsel %vm1320, %v1386, %v1794
  %v2910 = vsel %vm1320, %v1387, %v1796
  %v2911 = vsel %vm1320, %v1388, %v1798
  %v2912 = vsel %vm1320, %v1389, %v1800
  %v2913 = vsel %vm1320, %v1390, %v1802
  %v2914 = vsel %vm1320, %v1391, %v1804
  %v2915 = vsel %vm1320, %v1392, %v1806
  %v2916 = vsel %vm1320, %v1393, %v1808
  %v2917 = vsel %vm1320, %v1394, %v1810
  %v2918 = vsel %vm1320, %v1395, %v1812
  %v2919 = vsel %vm1320, %v1396, %v1814
  %v2920 = vsel %vm1320, %v1397, %v1816
  %v2921 = vsel %vm1320, %v1398, %v1818
  %v2922 = vsel %vm1320, %v1399, %v1820
  %v2923 = vsel %vm1320, %v1400, %v1822
  %v2924 = vsel %vm1320, %v1401, %v1824
  %v2925 = vsel %vm1320, %v1402, %v1826
  %v2926 = vsel %vm1320, %v1403, %v1828
  %v2927 = vsel %vm1320, %v1404, %v1830
  %v2928 = vsel %vm1320, %v1405, %v1832
  %v2929 = vsel %vm1320, %v1406, %v1834
  %v2930 = vsel %vm1320, %v1407, %v1836
  %v2931 = vsel %vm1320, %v1408, %v1838
  %v2932 = vsel %vm1320, %v1409, %v1840
  %v2933 = vsel %vm1320, %v1410, %v1842
  %v2934 = vsel %vm1320, %v1411, %v1844
  %v2935 = vsel %vm1320, %v1412, %v1846
  %v2936 = vsel %vm1320, %v1413, %v1848
  %v2937 = vsel %vm1320, %v1414, %v1850
  %v2938 = vsel %vm1320, %v1415, %v1852
  %v2939 = vsel %vm1320, %v1416, %v1854
  %v2940 = vsel %vm1320, %v1417, %v1856
  %v2941 = vsel %vm1320, %v1418, %v1858
  %v2942 = vsel %vm1320, %v1419, %v1860
  %v2943 = vsel %vm1320, %v1420, %v1862
  %v2944 = vsel %vm1320, %v1421, %v1864
  %v2945 = vsel %vm1320, %v1422, %v1866
  %v2946 = vsel %vm1320, %v1423, %v1868
  %v2947 = vsel %vm700, %v2898, %v1968
  %v2948 = vsel %vm700, %v2899, %v1970
  %v2949 = vsel %vm700, %v2900, %v1972
  %v2950 = vsel %vm700, %v2901, %v1974
  %v2951 = vsel %vm700, %v2902, %v1976
  %v2952 = vsel %vm700, %v2903, %v1978
  %v2953 = vsel %vm700, %v2904, %v1980
  %v2954 = vsel %vm700, %v2905, %v1982
  %v2955 = vsel %vm700, %v2906, %v1984
  %v2956 = vsel %vm700, %v2907, %v1986
  %v2957 = vsel %vm700, %v2908, %v1988
  %v2958 = vsel %vm700, %v2909, %v1990
  %v2959 = vsel %vm700, %v2910, %v1992
  %v2960 = vsel %vm700, %v2911, %v1994
  %v2961 = vsel %vm700, %v2912, %v1996
  %v2962 = vsel %vm700, %v2913, %v1998
  %v2963 = vsel %vm700, %v2914, %v2000
  %v2964 = vsel %vm700, %v2915, %v2002
  %v2965 = vsel %vm700, %v2916, %v2004
  %v2966 = vsel %vm700, %v2917, %v2006
  %v2967 = vsel %vm700, %v2918, %v2008
  %v2968 = vsel %vm700, %v2919, %v2010
  %v2969 = vsel %vm700, %v2920, %v2012
  %v2970 = vsel %vm700, %v2921, %v2014
  %v2971 = vsel %vm700, %v2922, %v2016
  %v2972 = vsel %vm700, %v2923, %v2018
  %v2973 = vsel %vm700, %v2924, %v2020
  %v2974 = vsel %vm700, %v2925, %v2022
  %v2975 = vsel %vm700, %v2926, %v2024
  %v2976 = vsel %vm700, %v2927, %v2026
  %v2977 = vsel %vm700, %v2928, %v2028
  %v2978 = vsel %vm700, %v2929, %v2030
  %v2979 = vsel %vm700, %v2930, %v2032
  %v2980 = vsel %vm700, %v2931, %v2034
  %v2981 = vsel %vm700, %v2932, %v2036
  %v2982 = vsel %vm700, %v2933, %v2038
  %v2983 = vsel %vm700, %v2934, %v2040
  %v2984 = vsel %vm700, %v2935, %v2042
  %v2985 = vsel %vm700, %v2936, %v2044
  %v2986 = vsel %vm700, %v2937, %v2046
  %v2987 = vsel %vm700, %v2938, %v2048
  %v2988 = vsel %vm700, %v2939, %v2050
  %v2989 = vsel %vm700, %v2940, %v2052
  %v2990 = vsel %vm700, %v2941, %v2054
  %v2991 = vsel %vm700, %v2942, %v2056
  %v2992 = vsel %vm700, %v2943, %v2058
  %v2993 = vsel %vm700, %v2944, %v2060
  %v2994 = vsel %vm700, %v2945, %v2062
  %v2995 = vsel %vm700, %v2946, %v2064
  %vm2996 = vcmask 785408
  %v2997 = vsel %vm2996, %v2947, %v2164
  %v2998 = vsel %vm2996, %v2948, %v2166
  %v2999 = vsel %vm2996, %v2949, %v2168
  %v3000 = vsel %vm2996, %v2950, %v2170
  %v3001 = vsel %vm2996, %v2951, %v2172
  %v3002 = vsel %vm2996, %v2952, %v2174
  %v3003 = vsel %vm2996, %v2953, %v2176
  %v3004 = vsel %vm2996, %v2954, %v2178
  %v3005 = vsel %vm2996, %v2955, %v2180
  %v3006 = vsel %vm2996, %v2956, %v2182
  %v3007 = vsel %vm2996, %v2957, %v2184
  %v3008 = vsel %vm2996, %v2958, %v2186
  %v3009 = vsel %vm2996, %v2959, %v2188
  %v3010 = vsel %vm2996, %v2960, %v2190
  %v3011 = vsel %vm2996, %v2961, %v2192
  %v3012 = vsel %vm2996, %v2962, %v2194
  %v3013 = vsel %vm2996, %v2963, %v2196
  %v3014 = vsel %vm2996, %v2964, %v2198
  %v3015 = vsel %vm2996, %v2965, %v2200
  %v3016 = vsel %vm2996, %v2966, %v2202
  %v3017 = vsel %vm2996, %v2967, %v2204
  %v3018 = vsel %vm2996, %v2968, %v2206
  %v3019 = vsel %vm2996, %v2969, %v2208
  %v3020 = vsel %vm2996, %v2970, %v2210
  %v3021 = vsel %vm2996, %v2971, %v2212
  %v3022 = vsel %vm2996, %v2972, %v2214
  %v3023 = vsel %vm2996, %v2973, %v2216
  %v3024 = vsel %vm2996, %v2974, %v2218
  %v3025 = vsel %vm2996, %v2975, %v2220
  %v3026 = vsel %vm2996, %v2976, %v2222
  %v3027 = vsel %vm2996, %v2977, %v2224
  %v3028 = vsel %vm2996, %v2978, %v2226
  %v3029 = vsel %vm2996, %v2979, %v2228
  %v3030 = vsel %vm2996, %v2980, %v2230
  %v3031 = vsel %vm2996, %v2981, %v2232
  %v3032 = vsel %vm2996, %v2982, %v2234
  %v3033 = vsel %vm2996, %v2983, %v2236
  %v3034 = vsel %vm2996, %v2984, %v2238
  %v3035 = vsel %vm2996, %v2985, %v2240
  %v3036 = vsel %vm2996, %v2986, %v2242
  %v3037 = vsel %vm2996, %v2987, %v2244
  %v3038 = vsel %vm2996, %v2988, %v2246
  %v3039 = vsel %vm2996, %v2989, %v2248
  %v3040 = vsel %vm2996, %v2990, %v2250
  %v3041 = vsel %vm2996, %v2991, %v2252
  %v3042 = vsel %vm2996, %v2992, %v2254
  %v3043 = vsel %vm2996, %v2993, %v2256
  %v3044 = vsel %vm2996, %v2994, %v2258
  %v3045 = vsel %vm2996, %v2995, %v2260
  %v3046 = vsel %vm1320, %v1571, %v2360
  %v3047 = vsel %vm1320, %v1572, %v2362
  %v3048 = vsel %vm1320, %v1573, %v2364
  %v3049 = vsel %vm1320, %v1574, %v2366
  %v3050 = vsel %vm1320, %v1575, %v2368
  %v3051 = vsel %vm1320, %v1576, %v2370
  %v3052 = vsel %vm1320, %v1577, %v2372
  %v3053 = vsel %vm1320, %v1578, %v2374
  %v3054 = vsel %vm1320, %v1579, %v2376
  %v3055 = vsel %vm1320, %v1580, %v2378
  %v3056 = vsel %vm1320, %v1581, %v2380
  %v3057 = vsel %vm1320, %v1582, %v2382
  %v3058 = vsel %vm1320, %v1583, %v2384
  %v3059 = vsel %vm1320, %v1584, %v2386
  %v3060 = vsel %vm1320, %v1585, %v2388
  %v3061 = vsel %vm1320, %v1586, %v2390
  %v3062 = vsel %vm1320, %v1587, %v2392
  %v3063 = vsel %vm1320, %v1588, %v2394
  %v3064 = vsel %vm1320, %v1589, %v2396
  %v3065 = vsel %vm1320, %v1590, %v2398
  %v3066 = vsel %vm1320, %v1591, %v2400
  %v3067 = vsel %vm1320, %v1592, %v2402
  %v3068 = vsel %vm1320, %v1593, %v2404
  %v3069 = vsel %vm1320, %v1594, %v2406
  %v3070 = vsel %vm1320, %v1595, %v2408
  %v3071 = vsel %vm1320, %v1596, %v2410
  %v3072 = vsel %vm1320, %v1597, %v2412
  %v3073 = vsel %vm1320, %v1598, %v2414
  %v3074 = vsel %vm1320, %v1599, %v2416
  %v3075 = vsel %vm1320, %v1600, %v2418
  %v3076 = vsel %vm1320, %v1601, %v2420
  %v3077 = vsel %vm1320, %v1602, %v2422
  %v3078 = vsel %vm1320, %v1603, %v2424
  %v3079 = vsel %vm1320, %v1604, %v2426
  %v3080 = vsel %vm1320, %v1605, %v2428
  %v3081 = vsel %vm1320, %v1606, %v2430
  %v3082 = vsel %vm1320, %v1607, %v2432
  %v3083 = vsel %vm1320, %v1608, %v2434
  %v3084 = vsel %vm1320, %v1609, %v2436
  %v3085 = vsel %vm1320, %v1610, %v2438
  %v3086 = vsel %vm1320, %v1611, %v2440
  %v3087 = vsel %vm1320, %v1612, %v2442
  %v3088 = vsel %vm1320, %v1613, %v2444
  %v3089 = vsel %vm1320, %v1614, %v2446
  %v3090 = vsel %vm1320, %v1615, %v2448
  %v3091 = vsel %vm1320, %v1616, %v2450
  %v3092 = vsel %vm1320, %v1617, %v2452
  %v3093 = vsel %vm1320, %v1618, %v2454
  %v3094 = vsel %vm1320, %v1619, %v2456
  %v3095 = vsel %vm700, %v3046, %v2556
  %v3096 = vsel %vm700, %v3047, %v2558
  %v3097 = vsel %vm700, %v3048, %v2560
  %v3098 = vsel %vm700, %v3049, %v2562
  %v3099 = vsel %vm700, %v3050, %v2564
  %v3100 = vsel %vm700, %v3051, %v2566
  %v3101 = vsel %vm700, %v3052, %v2568
  %v3102 = vsel %vm700, %v3053, %v2570
  %v3103 = vsel %vm700, %v3054, %v2572
  %v3104 = vsel %vm700, %v3055, %v2574
  %v3105 = vsel %vm700, %v3056, %v2576
  %v3106 = vsel %vm700, %v3057, %v2578
  %v3107 = vsel %vm700, %v3058, %v2580
  %v3108 = vsel %vm700, %v3059, %v2582
  %v3109 = vsel %vm700, %v3060, %v2584
  %v3110 = vsel %vm700, %v3061, %v2586
  %v3111 = vsel %vm700, %v3062, %v2588
  %v3112 = vsel %vm700, %v3063, %v2590
  %v3113 = vsel %vm700, %v3064, %v2592
  %v3114 = vsel %vm700, %v3065, %v2594
  %v3115 = vsel %vm700, %v3066, %v2596
  %v3116 = vsel %vm700, %v3067, %v2598
  %v3117 = vsel %vm700, %v3068, %v2600
  %v3118 = vsel %vm700, %v3069, %v2602
  %v3119 = vsel %vm700, %v3070, %v2604
  %v3120 = vsel %vm700, %v3071, %v2606
  %v3121 = vsel %vm700, %v3072, %v2608
  %v3122 = vsel %vm700, %v3073, %v2610
  %v3123 = vsel %vm700, %v3074, %v2612
  %v3124 = vsel %vm700, %v3075, %v2614
  %v3125 = vsel %vm700, %v3076, %v2616
  %v3126 = vsel %vm700, %v3077, %v2618
  %v3127 = vsel %vm700, %v3078, %v2620
  %v3128 = vsel %vm700, %v3079, %v2622
  %v3129 = vsel %vm700, %v3080, %v2624
  %v3130 = vsel %vm700, %v3081, %v2626
  %v3131 = vsel %vm700, %v3082, %v2628
  %v3132 = vsel %vm700, %v3083, %v2630
  %v3133 = vsel %vm700, %v3084, %v2632
  %v3134 = vsel %vm700, %v3085, %v2634
  %v3135 = vsel %vm700, %v3086, %v2636
  %v3136 = vsel %vm700, %v3087, %v2638
  %v3137 = vsel %vm700, %v3088, %v2640
  %v3138 = vsel %vm700, %v3089, %v2642
  %v3139 = vsel %vm700, %v3090, %v2644
  %v3140 = vsel %vm700, %v3091, %v2646
  %v3141 = vsel %vm700, %v3092, %v2648
  %v3142 = vsel %vm700, %v3093, %v2650
  %v3143 = vsel %vm700, %v3094, %v2652
  %v3144 = vsel %vm2996, %v3095, %v2752
  %v3145 = vsel %vm2996, %v3096, %v2754
  %v3146 = vsel %vm2996, %v3097, %v2756
  %v3147 = vsel %vm2996, %v3098, %v2758
  %v3148 = vsel %vm2996, %v3099, %v2760
  %v3149 = vsel %vm2996, %v3100, %v2762
  %v3150 = vsel %vm2996, %v3101, %v2764
  %v3151 = vsel %vm2996, %v3102, %v2766
  %v3152 = vsel %vm2996, %v3103, %v2768
  %v3153 = vsel %vm2996, %v3104, %v2770
  %v3154 = vsel %vm2996, %v3105, %v2772
  %v3155 = vsel %vm2996, %v3106, %v2774
  %v3156 = vsel %vm2996, %v3107, %v2776
  %v3157 = vsel %vm2996, %v3108, %v2778
  %v3158 = vsel %vm2996, %v3109, %v2780
  %v3159 = vsel %vm2996, %v3110, %v2782
  %v3160 = vsel %vm2996, %v3111, %v2784
  %v3161 = vsel %vm2996, %v3112, %v2786
  %v3162 = vsel %vm2996, %v3113, %v2788
  %v3163 = vsel %vm2996, %v3114, %v2790
  %v3164 = vsel %vm2996, %v3115, %v2792
  %v3165 = vsel %vm2996, %v3116, %v2794
  %v3166 = vsel %vm2996, %v3117, %v2796
  %v3167 = vsel %vm2996, %v3118, %v2798
  %v3168 = vsel %vm2996, %v3119, %v2800
  %v3169 = vsel %vm2996, %v3120, %v2802
  %v3170 = vsel %vm2996, %v3121, %v2804
  %v3171 = vsel %vm2996, %v3122, %v2806
  %v3172 = vsel %vm2996, %v3123, %v2808
  %v3173 = vsel %vm2996, %v3124, %v2810
  %v3174 = vsel %vm2996, %v3125, %v2812
  %v3175 = vsel %vm2996, %v3126, %v2814
  %v3176 = vsel %vm2996, %v3127, %v2816
  %v3177 = vsel %vm2996, %v3128, %v2818
  %v3178 = vsel %vm2996, %v3129, %v2820
  %v3179 = vsel %vm2996, %v3130, %v2822
  %v3180 = vsel %vm2996, %v3131, %v2824
  %v3181 = vsel %vm2996, %v3132, %v2826
  %v3182 = vsel %vm2996, %v3133, %v2828
  %v3183 = vsel %vm2996, %v3134, %v2830
  %v3184 = vsel %vm2996, %v3135, %v2832
  %v3185 = vsel %vm2996, %v3136, %v2834
  %v3186 = vsel %vm2996, %v3137, %v2836
  %v3187 = vsel %vm2996, %v3138, %v2838
  %v3188 = vsel %vm2996, %v3139, %v2840
  %v3189 = vsel %vm2996, %v3140, %v2842
  %v3190 = vsel %vm2996, %v3141, %v2844
  %v3191 = vsel %vm2996, %v3142, %v2846
  %v3192 = vsel %vm2996, %v3143, %v2848
  %v3193 = vld [vmem:[%s5] sm:$0xff]
  %v3194 = vld [vmem:[%s5 + $0x8] sm:$0xff]
  %v3195 = vld [vmem:[%s5 + $0x10] sm:$0xff]
  %v3196 = vld [vmem:[%s5 + $0x18] sm:$0xff]
  %v3197 = vld [vmem:[%s5 + $0x20] sm:$0xff]
  %v3198 = vld [vmem:[%s5 + $0x28] sm:$0xff]
  %v3199 = vld [vmem:[%s5 + $0x30] sm:$0xff]
  %v3200 = vld [vmem:[%s5 + $0x38] sm:$0xff]
  %v3201 = vld [vmem:[%s5 + $0x40] sm:$0xff]
  %v3202 = vld [vmem:[%s5 + $0x48] sm:$0xff]
  %v3203 = vld [vmem:[%s5 + $0x50] sm:$0xff]
  %v3204 = vld [vmem:[%s5 + $0x58] sm:$0xff]
  %v3205 = vld [vmem:[%s5 + $0x60] sm:$0xff]
  %v3206 = vld [vmem:[%s5 + $0x68] sm:$0xff]
  %v3207 = vld [vmem:[%s5 + $0x70] sm:$0xff]
  %v3208 = vld [vmem:[%s5 + $0x78] sm:$0xff]
  %v3209 = vld [vmem:[%s5 + $0x80] sm:$0xff]
  %v3210 = vld [vmem:[%s5 + $0x88] sm:$0xff]
  %v3211 = vld [vmem:[%s5 + $0x90] sm:$0xff]
  %v3212 = vld [vmem:[%s5 + $0x98] sm:$0xff]
  %v3213 = vld [vmem:[%s5 + $0xa0] sm:$0xff]
  %v3214 = vld [vmem:[%s5 + $0xa8] sm:$0xff]
  %v3215 = vld [vmem:[%s5 + $0xb0] sm:$0xff]
  %v3216 = vld [vmem:[%s5 + $0xb8] sm:$0xff]
  %v3217 = vld [vmem:[%s5 + $0xc0] sm:$0xff]
  %v3218 = vld [vmem:[%s5 + $0xc8] sm:$0xff]
  %v3219 = vld [vmem:[%s5 + $0xd0] sm:$0xff]
  %v3220 = vld [vmem:[%s5 + $0xd8] sm:$0xff]
  %v3221 = vld [vmem:[%s5 + $0xe0] sm:$0xff]
  %v3222 = vld [vmem:[%s5 + $0xe8] sm:$0xff]
  %v3223 = vld [vmem:[%s5 + $0xf0] sm:$0xff]
  %v3224 = vld [vmem:[%s5 + $0xf8] sm:$0xff]
  %v3225 = vld [vmem:[%s5 + $0x100] sm:$0xff]
  %v3226 = vld [vmem:[%s5 + $0x108] sm:$0xff]
  %v3227 = vld [vmem:[%s5 + $0x110] sm:$0xff]
  %v3228 = vld [vmem:[%s5 + $0x118] sm:$0xff]
  %v3229 = vld [vmem:[%s6] sm:$0x1]
  %v3231 = vlaneseq
  %v3232 = vshrl.u32 %v3231, 7
  %v3233 = vsub.s32 0, %v3232
  %v3234 = vrot.slane %v3229, %v3233
  %v3236 = vsel %vm1320, %v1524, 0
  %v3238 = vsel %vm1320, %v1525, 0
  %v3240 = vsel %vm1320, %v1526, 0
  %v3242 = vsel %vm1320, %v1527, 0
  %v3244 = vsel %vm1320, %v1528, 0
  %v3246 = vsel %vm1320, %v1529, 0
  %v3248 = vsel %vm1320, %v1530, 0
  %v3250 = vsel %vm1320, %v1531, 0
  %v3252 = vsel %vm1320, %v1532, 0
  %v3254 = vsel %vm1320, %v1533, 0
  %v3256 = vsel %vm1320, %v1534, 0
  %v3258 = vsel %vm1320, %v1535, 0
  %v3260 = vsel %vm1320, %v1536, 0
  %v3262 = vsel %vm1320, %v1537, 0
  %v3264 = vsel %vm1320, %v1538, 0
  %v3266 = vsel %vm1320, %v1539, 0
  %v3268 = vsel %vm1320, %v1540, 0
  %v3270 = vsel %vm1320, %v1541, 0
  %v3272 = vsel %vm1320, %v1542, 0
  %v3274 = vsel %vm1320, %v1543, 0
  %v3276 = vsel %vm1320, %v1544, 0
  %v3278 = vsel %vm1320, %v1545, 0
  %v3280 = vsel %vm1320, %v1546, 0
  %v3282 = vsel %vm1320, %v1547, 0
  %v3284 = vsel %vm1320, %v1548, 0
  %v3286 = vsel %vm1320, %v1549, 0
  %v3288 = vsel %vm1320, %v1550, 0
  %v3290 = vsel %vm1320, %v1551, 0
  %v3292 = vsel %vm1320, %v1552, 0
  %v3294 = vsel %vm1320, %v1553, 0
  %v3296 = vsel %vm1320, %v1554, 0
  %v3298 = vsel %vm1320, %v1555, 0
  %v3300 = vsel %vm1320, %v1556, 0
  %v3302 = vsel %vm1320, %v1557, 0
  %v3304 = vsel %vm1320, %v1558, 0
  %v3306 = vsel %vm1320, %v1559, 0
  %v3308 = vsel %vm1320, %v1560, 0
  %v3310 = vsel %vm1320, %v1561, 0
  %v3312 = vsel %vm1320, %v1562, 0
  %v3314 = vsel %vm1320, %v1563, 0
  %v3316 = vsel %vm1320, %v1564, 0
  %v3318 = vsel %vm1320, %v1565, 0
  %v3320 = vsel %vm1320, %v1566, 0
  %v3322 = vsel %vm1320, %v1567, 0
  %v3324 = vsel %vm1320, %v1568, 0
  %v3326 = vsel %vm1320, %v1569, 0
  %v3328 = vsel %vm1320, %v1570, 0
  %v3331 = vsel %vm1320, %v1720, 0
  %v3334 = vsel %vm1320, %v1721, 0
  %3336 = vmatprep.subr.mxu0 0.0
  %3337 = vmatpush1.msra.mxu0 %v3193
  %3338 = vmatprep.subr.mxu0 0.0
  %3339 = vmatpush1.msra.mxu0 %v3194
  %3340 = vmatprep.subr.mxu0 0.0
  %3341 = vmatpush1.msra.mxu0 %v3195
  %3342 = vmatprep.subr.mxu0 0.0
  %3343 = vmatpush1.msra.mxu0 %v3196
  %3344 = vmatprep.subr.mxu0 0.0
  %3345 = vmatpush1.msra.mxu0 %v3197
  %3346 = vmatprep.subr.mxu0 0.0
  %3347 = vmatpush1.msra.mxu0 %v3198
  %3348 = vmatprep.subr.mxu0 0.0
  %3349 = vmatpush1.msra.mxu0 %v3199
  %3350 = vmatprep.subr.mxu0 0.0
  %3351 = vmatpush1.msra.mxu0 %v3200
  %3352 = vmatprep.subr.mxu0 0.0
  %3353 = vmatpush1.msra.mxu0 %v3201
  %3354 = vmatprep.subr.mxu0 0.0
  %3355 = vmatpush1.msra.mxu0 %v3202
  %3356 = vmatprep.subr.mxu0 0.0
  %3357 = vmatpush1.msra.mxu0 %v3203
  %3358 = vmatprep.subr.mxu0 0.0
  %3359 = vmatpush1.msra.mxu0 %v3204
  %3360 = vmatprep.subr.mxu0 0.0
  %3361 = vmatpush1.msra.mxu0 %v3205
  %3362 = vmatprep.subr.mxu0 0.0
  %3363 = vmatpush1.msra.mxu0 %v3206
  %3364 = vmatprep.subr.mxu0 0.0
  %3365 = vmatpush1.msra.mxu0 %v3207
  %3366 = vmatprep.subr.mxu0 0.0
  %3367 = vmatpush1.msra.mxu0 %v3208
  %3368 = vmatprep.subr.mxu0 0.0
  %3369 = vmatpush1.msra.mxu0 %v3209
  %3370 = vmatprep.subr.mxu0 0.0
  %3371 = vmatpush1.msra.mxu0 %v3210
  %3372 = vmatprep.subr.mxu0 0.0
  %3373 = vmatpush1.msra.mxu0 %v3211
  %3374 = vmatprep.subr.mxu0 0.0
  %3375 = vmatpush1.msra.mxu0 %v3212
  %3376 = vmatprep.subr.mxu0 0.0
  %3377 = vmatpush1.msra.mxu0 %v3213
  %3378 = vmatprep.subr.mxu0 0.0
  %3379 = vmatpush1.msra.mxu0 %v3214
  %3380 = vmatprep.subr.mxu0 0.0
  %3381 = vmatpush1.msra.mxu0 %v3215
  %3382 = vmatprep.subr.mxu0 0.0
  %3383 = vmatpush1.msra.mxu0 %v3216
  %3384 = vmatprep.subr.mxu0 0.0
  %3385 = vmatpush1.msra.mxu0 %v3217
  %3386 = vmatprep.subr.mxu0 0.0
  %3387 = vmatpush1.msra.mxu0 %v3218
  %3388 = vmatprep.subr.mxu0 0.0
  %3389 = vmatpush1.msra.mxu0 %v3219
  %3390 = vmatprep.subr.mxu0 0.0
  %3391 = vmatpush1.msra.mxu0 %v3220
  %3392 = vmatprep.subr.mxu0 0.0
  %3393 = vmatpush1.msra.mxu0 %v3221
  %3394 = vmatprep.subr.mxu0 0.0
  %3395 = vmatpush1.msra.mxu0 %v3222
  %3396 = vmatprep.subr.mxu0 0.0
  %3397 = vmatpush1.msra.mxu0 %v3223
  %3398 = vmatprep.subr.mxu0 0.0
  %3399 = vmatpush1.msra.mxu0 %v3224
  %3400 = vmatprep.mubr.f32.mxu0 %v3144
  %3401 = vmatmul.mubr.f32.gmra.mrb[0].mxu0 %v2997
  %v3402 = vpop.f32.mrb[0].mxu0
  %v3403 = vadd.f32 %v3234, %v3402
  %v3404 = vpop.f32.mrb[0].mxu0
  %3405 = vmatprep.mubr.f32.mxu0 %v3145
  %3406 = vmatmul.mubr.f32.gmra.mrb[0].mxu0 %v2998
  %v3407 = vpop.f32.mrb[0].mxu0
  %v3408 = vadd.f32 %v3234, %v3407
  %v3409 = vpop.f32.mrb[0].mxu0
  %3410 = vmatprep.mubr.f32.mxu0 %v3146
  %3411 = vmatmul.mubr.f32.gmra.mrb[0].mxu0 %v2999
  %v3412 = vpop.f32.mrb[0].mxu0
  %v3413 = vadd.f32 %v3234, %v3412
  %v3414 = vpop.f32.mrb[0].mxu0
  %3415 = vmatprep.mubr.f32.mxu0 %v3147
  %3416 = vmatmul.mubr.f32.gmra.mrb[0].mxu0 %v3000
  %v3417 = vpop.f32.mrb[0].mxu0
  %v3418 = vadd.f32 %v3234, %v3417
  %v3419 = vpop.f32.mrb[0].mxu0
  %3420 = vmatprep.mubr.f32.mxu0 %v3148
  %3421 = vmatmul.mubr.f32.gmra.mrb[0].mxu0 %v3001
  %v3422 = vpop.f32.mrb[0].mxu0
  %v3423 = vadd.f32 %v3234, %v3422
  %v3424 = vpop.f32.mrb[0].mxu0
  %3425 = vmatprep.mubr.f32.mxu0 %v3149
  %3426 = vmatmul.mubr.f32.gmra.mrb[0].mxu0 %v3002
  %v3427 = vpop.f32.mrb[0].mxu0
  %v3428 = vadd.f32 %v3234, %v3427
  %v3429 = vpop.f32.mrb[0].mxu0
  %3430 = vmatprep.mubr.f32.mxu0 %v3150
  %3431 = vmatmul.mubr.f32.gmra.mrb[0].mxu0 %v3003
  %v3432 = vpop.f32.mrb[0].mxu0
  %v3433 = vadd.f32 %v3234, %v3432
  %v3434 = vpop.f32.mrb[0].mxu0
  %3435 = vmatprep.mubr.f32.mxu0 %v3151
  %3436 = vmatmul.mubr.f32.gmra.mrb[0].mxu0 %v3004
  %v3437 = vpop.f32.mrb[0].mxu0
  %v3438 = vadd.f32 %v3234, %v3437
  %v3439 = vpop.f32.mrb[0].mxu0
  %3440 = vmatprep.mubr.f32.mxu0 %v3152
  %3441 = vmatmul.mubr.f32.gmra.mrb[0].mxu0 %v3005
  %v3442 = vpop.f32.mrb[0].mxu0
  %v3443 = vadd.f32 %v3234, %v3442
  %v3444 = vpop.f32.mrb[0].mxu0
  %3445 = vmatprep.mubr.f32.mxu0 %v3153
  %3446 = vmatmul.mubr.f32.gmra.mrb[0].mxu0 %v3006
  %v3447 = vpop.f32.mrb[0].mxu0
  %v3448 = vadd.f32 %v3234, %v3447
  %v3449 = vpop.f32.mrb[0].mxu0
  %3450 = vmatprep.mubr.f32.mxu0 %v3154
  %3451 = vmatmul.mubr.f32.gmra.mrb[0].mxu0 %v3007
  %v3452 = vpop.f32.mrb[0].mxu0
  %v3453 = vadd.f32 %v3234, %v3452
  %v3454 = vpop.f32.mrb[0].mxu0
  %3455 = vmatprep.mubr.f32.mxu0 %v3155
  %3456 = vmatmul.mubr.f32.gmra.mrb[0].mxu0 %v3008
  %v3457 = vpop.f32.mrb[0].mxu0
  %v3458 = vadd.f32 %v3234, %v3457
  %v3459 = vpop.f32.mrb[0].mxu0
  %3460 = vmatprep.mubr.f32.mxu0 %v3156
  %3461 = vmatmul.mubr.f32.gmra.mrb[0].mxu0 %v3009
  %v3462 = vpop.f32.mrb[0].mxu0
  %v3463 = vadd.f32 %v3234, %v3462
  %v3464 = vpop.f32.mrb[0].mxu0
  %3465 = vmatprep.mubr.f32.mxu0 %v3157
  %3466 = vmatmul.mubr.f32.gmra.mrb[0].mxu0 %v3010
  %v3467 = vpop.f32.mrb[0].mxu0
  %v3468 = vadd.f32 %v3234, %v3467
  %v3469 = vpop.f32.mrb[0].mxu0
  %3470 = vmatprep.mubr.f32.mxu0 %v3158
  %3471 = vmatmul.mubr.f32.gmra.mrb[0].mxu0 %v3011
  %v3472 = vpop.f32.mrb[0].mxu0
  %v3473 = vadd.f32 %v3234, %v3472
  %v3474 = vpop.f32.mrb[0].mxu0
  %3475 = vmatprep.mubr.f32.mxu0 %v3159
  %3476 = vmatmul.mubr.f32.gmra.mrb[0].mxu0 %v3012
  %v3477 = vpop.f32.mrb[0].mxu0
  %v3478 = vadd.f32 %v3234, %v3477
  %v3479 = vpop.f32.mrb[0].mxu0
  %3480 = vmatprep.mubr.f32.mxu0 %v3160
  %3481 = vmatmul.mubr.f32.gmra.mrb[0].mxu0 %v3013
  %v3482 = vpop.f32.mrb[0].mxu0
  %v3483 = vadd.f32 %v3234, %v3482
  %v3484 = vpop.f32.mrb[0].mxu0
  %3485 = vmatprep.mubr.f32.mxu0 %v3161
  %3486 = vmatmul.mubr.f32.gmra.mrb[0].mxu0 %v3014
  %v3487 = vpop.f32.mrb[0].mxu0
  %v3488 = vadd.f32 %v3234, %v3487
  %v3489 = vpop.f32.mrb[0].mxu0
  %3490 = vmatprep.mubr.f32.mxu0 %v3162
  %3491 = vmatmul.mubr.f32.gmra.mrb[0].mxu0 %v3015
  %v3492 = vpop.f32.mrb[0].mxu0
  %v3493 = vadd.f32 %v3234, %v3492
  %v3494 = vpop.f32.mrb[0].mxu0
  %3495 = vmatprep.mubr.f32.mxu0 %v3163
  %3496 = vmatmul.mubr.f32.gmra.mrb[0].mxu0 %v3016
  %v3497 = vpop.f32.mrb[0].mxu0
  %v3498 = vadd.f32 %v3234, %v3497
  %v3499 = vpop.f32.mrb[0].mxu0
  %3500 = vmatprep.mubr.f32.mxu0 %v3164
  %3501 = vmatmul.mubr.f32.gmra.mrb[0].mxu0 %v3017
  %v3502 = vpop.f32.mrb[0].mxu0
  %v3503 = vadd.f32 %v3234, %v3502
  %v3504 = vpop.f32.mrb[0].mxu0
  %3505 = vmatprep.mubr.f32.mxu0 %v3165
  %3506 = vmatmul.mubr.f32.gmra.mrb[0].mxu0 %v3018
  %v3507 = vpop.f32.mrb[0].mxu0
  %v3508 = vadd.f32 %v3234, %v3507
  %v3509 = vpop.f32.mrb[0].mxu0
  %3510 = vmatprep.mubr.f32.mxu0 %v3166
  %3511 = vmatmul.mubr.f32.gmra.mrb[0].mxu0 %v3019
  %v3512 = vpop.f32.mrb[0].mxu0
  %v3513 = vadd.f32 %v3234, %v3512
  %v3514 = vpop.f32.mrb[0].mxu0
  %3515 = vmatprep.mubr.f32.mxu0 %v3167
  %3516 = vmatmul.mubr.f32.gmra.mrb[0].mxu0 %v3020
  %v3517 = vpop.f32.mrb[0].mxu0
  %v3518 = vadd.f32 %v3234, %v3517
  %v3519 = vpop.f32.mrb[0].mxu0
  %3520 = vmatprep.mubr.f32.mxu0 %v3168
  %3521 = vmatmul.mubr.f32.gmra.mrb[0].mxu0 %v3021
  %v3522 = vpop.f32.mrb[0].mxu0
  %v3523 = vadd.f32 %v3234, %v3522
  %v3524 = vpop.f32.mrb[0].mxu0
  %3525 = vmatprep.mubr.f32.mxu0 %v3169
  %3526 = vmatmul.mubr.f32.gmra.mrb[0].mxu0 %v3022
  %v3527 = vpop.f32.mrb[0].mxu0
  %v3528 = vadd.f32 %v3234, %v3527
  %v3529 = vpop.f32.mrb[0].mxu0
  %3530 = vmatprep.mubr.f32.mxu0 %v3170
  %3531 = vmatmul.mubr.f32.gmra.mrb[0].mxu0 %v3023
  %v3532 = vpop.f32.mrb[0].mxu0
  %v3533 = vadd.f32 %v3234, %v3532
  %v3534 = vpop.f32.mrb[0].mxu0
  %3535 = vmatprep.mubr.f32.mxu0 %v3171
  %3536 = vmatmul.mubr.f32.gmra.mrb[0].mxu0 %v3024
  %v3537 = vpop.f32.mrb[0].mxu0
  %v3538 = vadd.f32 %v3234, %v3537
  %v3539 = vpop.f32.mrb[0].mxu0
  %3540 = vmatprep.mubr.f32.mxu0 %v3172
  %3541 = vmatmul.mubr.f32.gmra.mrb[0].mxu0 %v3025
  %v3542 = vpop.f32.mrb[0].mxu0
  %v3543 = vadd.f32 %v3234, %v3542
  %v3544 = vpop.f32.mrb[0].mxu0
  %3545 = vmatprep.mubr.f32.mxu0 %v3173
  %3546 = vmatmul.mubr.f32.gmra.mrb[0].mxu0 %v3026
  %v3547 = vpop.f32.mrb[0].mxu0
  %v3548 = vadd.f32 %v3234, %v3547
  %v3549 = vpop.f32.mrb[0].mxu0
  %3550 = vmatprep.mubr.f32.mxu0 %v3174
  %3551 = vmatmul.mubr.f32.gmra.mrb[0].mxu0 %v3027
  %v3552 = vpop.f32.mrb[0].mxu0
  %v3553 = vadd.f32 %v3234, %v3552
  %v3554 = vpop.f32.mrb[0].mxu0
  %3555 = vmatprep.mubr.f32.mxu0 %v3175
  %3556 = vmatmul.mubr.f32.gmra.mrb[0].mxu0 %v3028
  %v3557 = vpop.f32.mrb[0].mxu0
  %v3558 = vadd.f32 %v3234, %v3557
  %v3559 = vpop.f32.mrb[0].mxu0
  %3560 = vmatprep.mubr.f32.mxu0 %v3176
  %3561 = vmatmul.mubr.f32.gmra.mrb[0].mxu0 %v3029
  %v3562 = vpop.f32.mrb[0].mxu0
  %v3563 = vadd.f32 %v3234, %v3562
  %v3564 = vpop.f32.mrb[0].mxu0
  %3565 = vmatprep.mubr.f32.mxu0 %v3177
  %3566 = vmatmul.mubr.f32.gmra.mrb[0].mxu0 %v3030
  %v3567 = vpop.f32.mrb[0].mxu0
  %v3568 = vadd.f32 %v3234, %v3567
  %v3569 = vpop.f32.mrb[0].mxu0
  %3570 = vmatprep.mubr.f32.mxu0 %v3178
  %3571 = vmatmul.mubr.f32.gmra.mrb[0].mxu0 %v3031
  %v3572 = vpop.f32.mrb[0].mxu0
  %v3573 = vadd.f32 %v3234, %v3572
  %v3574 = vpop.f32.mrb[0].mxu0
  %3575 = vmatprep.mubr.f32.mxu0 %v3179
  %3576 = vmatmul.mubr.f32.gmra.mrb[0].mxu0 %v3032
  %v3577 = vpop.f32.mrb[0].mxu0
  %v3578 = vadd.f32 %v3234, %v3577
  %v3579 = vpop.f32.mrb[0].mxu0
  %3580 = vmatprep.mubr.f32.mxu0 %v3180
  %3581 = vmatmul.mubr.f32.gmra.mrb[0].mxu0 %v3033
  %v3582 = vpop.f32.mrb[0].mxu0
  %v3583 = vadd.f32 %v3234, %v3582
  %v3584 = vpop.f32.mrb[0].mxu0
  %3585 = vmatprep.mubr.f32.mxu0 %v3181
  %3586 = vmatmul.mubr.f32.gmra.mrb[0].mxu0 %v3034
  %v3587 = vpop.f32.mrb[0].mxu0
  %v3588 = vadd.f32 %v3234, %v3587
  %v3589 = vpop.f32.mrb[0].mxu0
  %3590 = vmatprep.mubr.f32.mxu0 %v3182
  %3591 = vmatmul.mubr.f32.gmra.mrb[0].mxu0 %v3035
  %v3592 = vpop.f32.mrb[0].mxu0
  %v3593 = vadd.f32 %v3234, %v3592
  %v3594 = vpop.f32.mrb[0].mxu0
  %3595 = vmatprep.mubr.f32.mxu0 %v3183
  %3596 = vmatmul.mubr.f32.gmra.mrb[0].mxu0 %v3036
  %v3597 = vpop.f32.mrb[0].mxu0
  %v3598 = vadd.f32 %v3234, %v3597
  %v3599 = vpop.f32.mrb[0].mxu0
  %3600 = vmatprep.mubr.f32.mxu0 %v3184
  %3601 = vmatmul.mubr.f32.gmra.mrb[0].mxu0 %v3037
  %v3602 = vpop.f32.mrb[0].mxu0
  %v3603 = vadd.f32 %v3234, %v3602
  %v3604 = vpop.f32.mrb[0].mxu0
  %3605 = vmatprep.mubr.f32.mxu0 %v3185
  %3606 = vmatmul.mubr.f32.gmra.mrb[0].mxu0 %v3038
  %v3607 = vpop.f32.mrb[0].mxu0
  %v3608 = vadd.f32 %v3234, %v3607
  %v3609 = vpop.f32.mrb[0].mxu0
  %3610 = vmatprep.mubr.f32.mxu0 %v3186
  %3611 = vmatmul.mubr.f32.gmra.mrb[0].mxu0 %v3039
  %v3612 = vpop.f32.mrb[0].mxu0
  %v3613 = vadd.f32 %v3234, %v3612
  %v3614 = vpop.f32.mrb[0].mxu0
  %3615 = vmatprep.mubr.f32.mxu0 %v3187
  %3616 = vmatmul.mubr.f32.gmra.mrb[0].mxu0 %v3040
  %v3617 = vpop.f32.mrb[0].mxu0
  %v3618 = vadd.f32 %v3234, %v3617
  %v3619 = vpop.f32.mrb[0].mxu0
  %3620 = vmatprep.mubr.f32.mxu0 %v3188
  %3621 = vmatmul.mubr.f32.gmra.mrb[0].mxu0 %v3041
  %v3622 = vpop.f32.mrb[0].mxu0
  %v3623 = vadd.f32 %v3234, %v3622
  %v3624 = vpop.f32.mrb[0].mxu0
  %3625 = vmatprep.mubr.f32.mxu0 %v3189
  %3626 = vmatmul.mubr.f32.gmra.mrb[0].mxu0 %v3042
  %v3627 = vpop.f32.mrb[0].mxu0
  %v3628 = vadd.f32 %v3234, %v3627
  %v3629 = vpop.f32.mrb[0].mxu0
  %3630 = vmatprep.mubr.f32.mxu0 %v3190
  %3631 = vmatmul.mubr.f32.gmra.mrb[0].mxu0 %v3043
  %v3632 = vpop.f32.mrb[0].mxu0
  %v3633 = vadd.f32 %v3234, %v3632
  %v3634 = vpop.f32.mrb[0].mxu0
  %3635 = vmatprep.mubr.f32.mxu0 %v3191
  %3636 = vmatmul.mubr.f32.gmra.mrb[0].mxu0 %v3044
  %v3637 = vpop.f32.mrb[0].mxu0
  %v3638 = vadd.f32 %v3234, %v3637
  %v3639 = vpop.f32.mrb[0].mxu0
  %3640 = vmatprep.mubr.f32.mxu0 %v3192
  %3641 = vmatmul.mubr.f32.gmra.mrb[0].mxu0 %v3045
  %v3642 = vpop.f32.mrb[0].mxu0
  %v3643 = vadd.f32 %v3234, %v3642
  %v3644 = vpop.f32.mrb[0].mxu0
  %3645 = vdwg.mxu0
  %3646 = vmatprep.subr.mxu0 0.0
  %3647 = vmatpush1.msra.mxu0 %v3225
  %3648 = vmatprep.subr.mxu0 0.0
  %3649 = vmatpush1.msra.mxu0 %v3226
  %3650 = vmatprep.subr.mxu0 0.0
  %3651 = vmatpush1.msra.mxu0 %v3227
  %3652 = vmatprep.subr.mxu0 0.0
  %3653 = vmatpush1.msra.mxu0 %v3228
  %3654 = vmatprep.subr.mxu0 0.0
  %3655 = vmatpush1.msra.mxu0 0.0
  %3656 = vmatprep.subr.mxu0 0.0
  %3657 = vmatpush1.msra.mxu0 0.0
  %3658 = vmatprep.subr.mxu0 0.0
  %3659 = vmatpush1.msra.mxu0 0.0
  %3660 = vmatprep.subr.mxu0 0.0
  %3661 = vmatpush1.msra.mxu0 0.0
  %3662 = vmatprep.subr.mxu0 0.0
  %3663 = vmatpush1.msra.mxu0 0.0
  %3664 = vmatprep.subr.mxu0 0.0
  %3665 = vmatpush1.msra.mxu0 0.0
  %3666 = vmatprep.subr.mxu0 0.0
  %3667 = vmatpush1.msra.mxu0 0.0
  %3668 = vmatprep.subr.mxu0 0.0
  %3669 = vmatpush1.msra.mxu0 0.0
  %3670 = vmatprep.subr.mxu0 0.0
  %3671 = vmatpush1.msra.mxu0 0.0
  %3672 = vmatprep.subr.mxu0 0.0
  %3673 = vmatpush1.msra.mxu0 0.0
  %3674 = vmatprep.subr.mxu0 0.0
  %3675 = vmatpush1.msra.mxu0 0.0
  %3676 = vmatprep.subr.mxu0 0.0
  %3677 = vmatpush1.msra.mxu0 0.0
  %3678 = vmatprep.subr.mxu0 0.0
  %3679 = vmatpush1.msra.mxu0 0.0
  %3680 = vmatprep.subr.mxu0 0.0
  %3681 = vmatpush1.msra.mxu0 0.0
  %3682 = vmatprep.subr.mxu0 0.0
  %3683 = vmatpush1.msra.mxu0 0.0
  %3684 = vmatprep.subr.mxu0 0.0
  %3685 = vmatpush1.msra.mxu0 0.0
  %3686 = vmatprep.subr.mxu0 0.0
  %3687 = vmatpush1.msra.mxu0 0.0
  %3688 = vmatprep.subr.mxu0 0.0
  %3689 = vmatpush1.msra.mxu0 0.0
  %3690 = vmatprep.subr.mxu0 0.0
  %3691 = vmatpush1.msra.mxu0 0.0
  %3692 = vmatprep.subr.mxu0 0.0
  %3693 = vmatpush1.msra.mxu0 0.0
  %3694 = vmatprep.subr.mxu0 0.0
  %3695 = vmatpush1.msra.mxu0 0.0
  %3696 = vmatprep.subr.mxu0 0.0
  %3697 = vmatpush1.msra.mxu0 0.0
  %3698 = vmatprep.subr.mxu0 0.0
  %3699 = vmatpush1.msra.mxu0 0.0
  %3700 = vmatprep.subr.mxu0 0.0
  %3701 = vmatpush1.msra.mxu0 0.0
  %3702 = vmatprep.subr.mxu0 0.0
  %3703 = vmatpush1.msra.mxu0 0.0
  %3704 = vmatprep.subr.mxu0 0.0
  %3705 = vmatpush1.msra.mxu0 0.0
  %3706 = vmatprep.subr.mxu0 0.0
  %3707 = vmatpush1.msra.mxu0 0.0
  %3708 = vmatprep.subr.mxu0 0.0
  %3709 = vmatpush1.msra.mxu0 0.0
  %3710 = vmatprep.mubr.f32.mxu0 0.0
  %3711 = vmatmul.mubr.f32.gmra.mrb[0].mxu0 %v3236
  %v3712 = vpop.f32.mrb[0].mxu0
  %v3713 = vadd.f32 %v3403, %v3712
  %v3714 = vpop.f32.mrb[0].mxu0
  %3715 = vmatprep.mubr.f32.mxu0 0.0
  %3716 = vmatmul.mubr.f32.gmra.mrb[0].mxu0 %v3238
  %v3717 = vpop.f32.mrb[0].mxu0
  %v3718 = vadd.f32 %v3408, %v3717
  %v3719 = vpop.f32.mrb[0].mxu0
  %3720 = vmatprep.mubr.f32.mxu0 0.0
  %3721 = vmatmul.mubr.f32.gmra.mrb[0].mxu0 %v3240
  %v3722 = vpop.f32.mrb[0].mxu0
  %v3723 = vadd.f32 %v3413, %v3722
  %v3724 = vpop.f32.mrb[0].mxu0
  %3725 = vmatprep.mubr.f32.mxu0 0.0
  %3726 = vmatmul.mubr.f32.gmra.mrb[0].mxu0 %v3242
  %v3727 = vpop.f32.mrb[0].mxu0
  %v3728 = vadd.f32 %v3418, %v3727
  %v3729 = vpop.f32.mrb[0].mxu0
  %3730 = vmatprep.mubr.f32.mxu0 0.0
  %3731 = vmatmul.mubr.f32.gmra.mrb[0].mxu0 %v3244
  %v3732 = vpop.f32.mrb[0].mxu0
  %v3733 = vadd.f32 %v3423, %v3732
  %v3734 = vpop.f32.mrb[0].mxu0
  %3735 = vmatprep.mubr.f32.mxu0 0.0
  %3736 = vmatmul.mubr.f32.gmra.mrb[0].mxu0 %v3246
  %v3737 = vpop.f32.mrb[0].mxu0
  %v3738 = vadd.f32 %v3428, %v3737
  %v3739 = vpop.f32.mrb[0].mxu0
  %3740 = vmatprep.mubr.f32.mxu0 0.0
  %3741 = vmatmul.mubr.f32.gmra.mrb[0].mxu0 %v3248
  %v3742 = vpop.f32.mrb[0].mxu0
  %v3743 = vadd.f32 %v3433, %v3742
  %v3744 = vpop.f32.mrb[0].mxu0
  %3745 = vmatprep.mubr.f32.mxu0 0.0
  %3746 = vmatmul.mubr.f32.gmra.mrb[0].mxu0 %v3250
  %v3747 = vpop.f32.mrb[0].mxu0
  %v3748 = vadd.f32 %v3438, %v3747
  %v3749 = vpop.f32.mrb[0].mxu0
  %3750 = vmatprep.mubr.f32.mxu0 0.0
  %3751 = vmatmul.mubr.f32.gmra.mrb[0].mxu0 %v3252
  %v3752 = vpop.f32.mrb[0].mxu0
  %v3753 = vadd.f32 %v3443, %v3752
  %v3754 = vpop.f32.mrb[0].mxu0
  %3755 = vmatprep.mubr.f32.mxu0 0.0
  %3756 = vmatmul.mubr.f32.gmra.mrb[0].mxu0 %v3254
  %v3757 = vpop.f32.mrb[0].mxu0
  %v3758 = vadd.f32 %v3448, %v3757
  %v3759 = vpop.f32.mrb[0].mxu0
  %3760 = vmatprep.mubr.f32.mxu0 0.0
  %3761 = vmatmul.mubr.f32.gmra.mrb[0].mxu0 %v3256
  %v3762 = vpop.f32.mrb[0].mxu0
  %v3763 = vadd.f32 %v3453, %v3762
  %v3764 = vpop.f32.mrb[0].mxu0
  %3765 = vmatprep.mubr.f32.mxu0 0.0
  %3766 = vmatmul.mubr.f32.gmra.mrb[0].mxu0 %v3258
  %v3767 = vpop.f32.mrb[0].mxu0
  %v3768 = vadd.f32 %v3458, %v3767
  %v3769 = vpop.f32.mrb[0].mxu0
  %3770 = vmatprep.mubr.f32.mxu0 0.0
  %3771 = vmatmul.mubr.f32.gmra.mrb[0].mxu0 %v3260
  %v3772 = vpop.f32.mrb[0].mxu0
  %v3773 = vadd.f32 %v3463, %v3772
  %v3774 = vpop.f32.mrb[0].mxu0
  %3775 = vmatprep.mubr.f32.mxu0 0.0
  %3776 = vmatmul.mubr.f32.gmra.mrb[0].mxu0 %v3262
  %v3777 = vpop.f32.mrb[0].mxu0
  %v3778 = vadd.f32 %v3468, %v3777
  %v3779 = vpop.f32.mrb[0].mxu0
  %3780 = vmatprep.mubr.f32.mxu0 0.0
  %3781 = vmatmul.mubr.f32.gmra.mrb[0].mxu0 %v3264
  %v3782 = vpop.f32.mrb[0].mxu0
  %v3783 = vadd.f32 %v3473, %v3782
  %v3784 = vpop.f32.mrb[0].mxu0
  %3785 = vmatprep.mubr.f32.mxu0 0.0
  %3786 = vmatmul.mubr.f32.gmra.mrb[0].mxu0 %v3266
  %v3787 = vpop.f32.mrb[0].mxu0
  %v3788 = vadd.f32 %v3478, %v3787
  %v3789 = vpop.f32.mrb[0].mxu0
  %3790 = vmatprep.mubr.f32.mxu0 0.0
  %3791 = vmatmul.mubr.f32.gmra.mrb[0].mxu0 %v3268
  %v3792 = vpop.f32.mrb[0].mxu0
  %v3793 = vadd.f32 %v3483, %v3792
  %v3794 = vpop.f32.mrb[0].mxu0
  %3795 = vmatprep.mubr.f32.mxu0 0.0
  %3796 = vmatmul.mubr.f32.gmra.mrb[0].mxu0 %v3270
  %v3797 = vpop.f32.mrb[0].mxu0
  %v3798 = vadd.f32 %v3488, %v3797
  %v3799 = vpop.f32.mrb[0].mxu0
  %3800 = vmatprep.mubr.f32.mxu0 0.0
  %3801 = vmatmul.mubr.f32.gmra.mrb[0].mxu0 %v3272
  %v3802 = vpop.f32.mrb[0].mxu0
  %v3803 = vadd.f32 %v3493, %v3802
  %v3804 = vpop.f32.mrb[0].mxu0
  %3805 = vmatprep.mubr.f32.mxu0 0.0
  %3806 = vmatmul.mubr.f32.gmra.mrb[0].mxu0 %v3274
  %v3807 = vpop.f32.mrb[0].mxu0
  %v3808 = vadd.f32 %v3498, %v3807
  %v3809 = vpop.f32.mrb[0].mxu0
  %3810 = vmatprep.mubr.f32.mxu0 0.0
  %3811 = vmatmul.mubr.f32.gmra.mrb[0].mxu0 %v3276
  %v3812 = vpop.f32.mrb[0].mxu0
  %v3813 = vadd.f32 %v3503, %v3812
  %v3814 = vpop.f32.mrb[0].mxu0
  %3815 = vmatprep.mubr.f32.mxu0 0.0
  %3816 = vmatmul.mubr.f32.gmra.mrb[0].mxu0 %v3278
  %v3817 = vpop.f32.mrb[0].mxu0
  %v3818 = vadd.f32 %v3508, %v3817
  %v3819 = vpop.f32.mrb[0].mxu0
  %3820 = vmatprep.mubr.f32.mxu0 0.0
  %3821 = vmatmul.mubr.f32.gmra.mrb[0].mxu0 %v3280
  %v3822 = vpop.f32.mrb[0].mxu0
  %v3823 = vadd.f32 %v3513, %v3822
  %v3824 = vpop.f32.mrb[0].mxu0
  %3825 = vmatprep.mubr.f32.mxu0 0.0
  %3826 = vmatmul.mubr.f32.gmra.mrb[0].mxu0 %v3282
  %v3827 = vpop.f32.mrb[0].mxu0
  %v3828 = vadd.f32 %v3518, %v3827
  %v3829 = vpop.f32.mrb[0].mxu0
  %3830 = vmatprep.mubr.f32.mxu0 0.0
  %3831 = vmatmul.mubr.f32.gmra.mrb[0].mxu0 %v3284
  %v3832 = vpop.f32.mrb[0].mxu0
  %v3833 = vadd.f32 %v3523, %v3832
  %v3834 = vpop.f32.mrb[0].mxu0
  %3835 = vmatprep.mubr.f32.mxu0 0.0
  %3836 = vmatmul.mubr.f32.gmra.mrb[0].mxu0 %v3286
  %v3837 = vpop.f32.mrb[0].mxu0
  %v3838 = vadd.f32 %v3528, %v3837
  %v3839 = vpop.f32.mrb[0].mxu0
  %3840 = vmatprep.mubr.f32.mxu0 0.0
  %3841 = vmatmul.mubr.f32.gmra.mrb[0].mxu0 %v3288
  %v3842 = vpop.f32.mrb[0].mxu0
  %v3843 = vadd.f32 %v3533, %v3842
  %v3844 = vpop.f32.mrb[0].mxu0
  %3845 = vmatprep.mubr.f32.mxu0 0.0
  %3846 = vmatmul.mubr.f32.gmra.mrb[0].mxu0 %v3290
  %v3847 = vpop.f32.mrb[0].mxu0
  %v3848 = vadd.f32 %v3538, %v3847
  %v3849 = vpop.f32.mrb[0].mxu0
  %3850 = vmatprep.mubr.f32.mxu0 0.0
  %3851 = vmatmul.mubr.f32.gmra.mrb[0].mxu0 %v3292
  %v3852 = vpop.f32.mrb[0].mxu0
  %v3853 = vadd.f32 %v3543, %v3852
  %v3854 = vpop.f32.mrb[0].mxu0
  %3855 = vmatprep.mubr.f32.mxu0 0.0
  %3856 = vmatmul.mubr.f32.gmra.mrb[0].mxu0 %v3294
  %v3857 = vpop.f32.mrb[0].mxu0
  %v3858 = vadd.f32 %v3548, %v3857
  %v3859 = vpop.f32.mrb[0].mxu0
  %3860 = vmatprep.mubr.f32.mxu0 0.0
  %3861 = vmatmul.mubr.f32.gmra.mrb[0].mxu0 %v3296
  %v3862 = vpop.f32.mrb[0].mxu0
  %v3863 = vadd.f32 %v3553, %v3862
  %v3864 = vpop.f32.mrb[0].mxu0
  %3865 = vmatprep.mubr.f32.mxu0 0.0
  %3866 = vmatmul.mubr.f32.gmra.mrb[0].mxu0 %v3298
  %v3867 = vpop.f32.mrb[0].mxu0
  %v3868 = vadd.f32 %v3558, %v3867
  %v3869 = vpop.f32.mrb[0].mxu0
  %3870 = vmatprep.mubr.f32.mxu0 0.0
  %3871 = vmatmul.mubr.f32.gmra.mrb[0].mxu0 %v3300
  %v3872 = vpop.f32.mrb[0].mxu0
  %v3873 = vadd.f32 %v3563, %v3872
  %v3874 = vpop.f32.mrb[0].mxu0
  %3875 = vmatprep.mubr.f32.mxu0 0.0
  %3876 = vmatmul.mubr.f32.gmra.mrb[0].mxu0 %v3302
  %v3877 = vpop.f32.mrb[0].mxu0
  %v3878 = vadd.f32 %v3568, %v3877
  %v3879 = vpop.f32.mrb[0].mxu0
  %3880 = vmatprep.mubr.f32.mxu0 0.0
  %3881 = vmatmul.mubr.f32.gmra.mrb[0].mxu0 %v3304
  %v3882 = vpop.f32.mrb[0].mxu0
  %v3883 = vadd.f32 %v3573, %v3882
  %v3884 = vpop.f32.mrb[0].mxu0
  %3885 = vmatprep.mubr.f32.mxu0 0.0
  %3886 = vmatmul.mubr.f32.gmra.mrb[0].mxu0 %v3306
  %v3887 = vpop.f32.mrb[0].mxu0
  %v3888 = vadd.f32 %v3578, %v3887
  %v3889 = vpop.f32.mrb[0].mxu0
  %3890 = vmatprep.mubr.f32.mxu0 0.0
  %3891 = vmatmul.mubr.f32.gmra.mrb[0].mxu0 %v3308
  %v3892 = vpop.f32.mrb[0].mxu0
  %v3893 = vadd.f32 %v3583, %v3892
  %v3894 = vpop.f32.mrb[0].mxu0
  %3895 = vmatprep.mubr.f32.mxu0 0.0
  %3896 = vmatmul.mubr.f32.gmra.mrb[0].mxu0 %v3310
  %v3897 = vpop.f32.mrb[0].mxu0
  %v3898 = vadd.f32 %v3588, %v3897
  %v3899 = vpop.f32.mrb[0].mxu0
  %3900 = vmatprep.mubr.f32.mxu0 0.0
  %3901 = vmatmul.mubr.f32.gmra.mrb[0].mxu0 %v3312
  %v3902 = vpop.f32.mrb[0].mxu0
  %v3903 = vadd.f32 %v3593, %v3902
  %v3904 = vpop.f32.mrb[0].mxu0
  %3905 = vmatprep.mubr.f32.mxu0 0.0
  %3906 = vmatmul.mubr.f32.gmra.mrb[0].mxu0 %v3314
  %v3907 = vpop.f32.mrb[0].mxu0
  %v3908 = vadd.f32 %v3598, %v3907
  %v3909 = vpop.f32.mrb[0].mxu0
  %3910 = vmatprep.mubr.f32.mxu0 0.0
  %3911 = vmatmul.mubr.f32.gmra.mrb[0].mxu0 %v3316
  %v3912 = vpop.f32.mrb[0].mxu0
  %v3913 = vadd.f32 %v3603, %v3912
  %v3914 = vpop.f32.mrb[0].mxu0
  %3915 = vmatprep.mubr.f32.mxu0 0.0
  %3916 = vmatmul.mubr.f32.gmra.mrb[0].mxu0 %v3318
  %v3917 = vpop.f32.mrb[0].mxu0
  %v3918 = vadd.f32 %v3608, %v3917
  %v3919 = vpop.f32.mrb[0].mxu0
  %3920 = vmatprep.mubr.f32.mxu0 0.0
  %3921 = vmatmul.mubr.f32.gmra.mrb[0].mxu0 %v3320
  %v3922 = vpop.f32.mrb[0].mxu0
  %v3923 = vadd.f32 %v3613, %v3922
  %v3924 = vpop.f32.mrb[0].mxu0
  %3925 = vmatprep.mubr.f32.mxu0 0.0
  %3926 = vmatmul.mubr.f32.gmra.mrb[0].mxu0 %v3322
  %v3927 = vpop.f32.mrb[0].mxu0
  %v3928 = vadd.f32 %v3618, %v3927
  %v3929 = vpop.f32.mrb[0].mxu0
  %3930 = vmatprep.mubr.f32.mxu0 0.0
  %3931 = vmatmul.mubr.f32.gmra.mrb[0].mxu0 %v3324
  %v3932 = vpop.f32.mrb[0].mxu0
  %v3933 = vadd.f32 %v3623, %v3932
  %v3934 = vpop.f32.mrb[0].mxu0
  %3935 = vmatprep.mubr.f32.mxu0 0.0
  %3936 = vmatmul.mubr.f32.gmra.mrb[0].mxu0 %v3326
  %v3937 = vpop.f32.mrb[0].mxu0
  %v3938 = vadd.f32 %v3628, %v3937
  %v3939 = vpop.f32.mrb[0].mxu0
  %3940 = vmatprep.mubr.f32.mxu0 0.0
  %3941 = vmatmul.mubr.f32.gmra.mrb[0].mxu0 %v3328
  %v3942 = vpop.f32.mrb[0].mxu0
  %v3943 = vadd.f32 %v3633, %v3942
  %v3944 = vpop.f32.mrb[0].mxu0
  %3945 = vmatprep.mubr.f32.mxu0 0.0
  %3946 = vmatmul.mubr.f32.gmra.mrb[0].mxu0 %v3331
  %v3947 = vpop.f32.mrb[0].mxu0
  %v3948 = vadd.f32 %v3638, %v3947
  %v3949 = vpop.f32.mrb[0].mxu0
  %3950 = vmatprep.mubr.f32.mxu0 0.0
  %3951 = vmatmul.mubr.f32.gmra.mrb[0].mxu0 %v3334
  %v3952 = vpop.f32.mrb[0].mxu0
  %v3953 = vadd.f32 %v3643, %v3952
  %v3954 = vpop.f32.mrb[0].mxu0
  %3955 = vdwg.mxu0
  %v3956 = vmax.f32 %v3713, 0.0
  %v3957 = vmax.f32 %v3718, 0.0
  %v3958 = vmax.f32 %v3723, 0.0
  %v3959 = vmax.f32 %v3728, 0.0
  %v3960 = vmax.f32 %v3733, 0.0
  %v3961 = vmax.f32 %v3738, 0.0
  %v3962 = vmax.f32 %v3743, 0.0
  %v3963 = vmax.f32 %v3748, 0.0
  %v3964 = vmax.f32 %v3753, 0.0
  %v3965 = vmax.f32 %v3758, 0.0
  %v3966 = vmax.f32 %v3763, 0.0
  %v3967 = vmax.f32 %v3768, 0.0
  %v3968 = vmax.f32 %v3773, 0.0
  %v3969 = vmax.f32 %v3778, 0.0
  %v3970 = vmax.f32 %v3783, 0.0
  %v3971 = vmax.f32 %v3788, 0.0
  %v3972 = vmax.f32 %v3793, 0.0
  %v3973 = vmax.f32 %v3798, 0.0
  %v3974 = vmax.f32 %v3803, 0.0
  %v3975 = vmax.f32 %v3808, 0.0
  %v3976 = vmax.f32 %v3813, 0.0
  %v3977 = vmax.f32 %v3818, 0.0
  %v3978 = vmax.f32 %v3823, 0.0
  %v3979 = vmax.f32 %v3828, 0.0
  %v3980 = vmax.f32 %v3833, 0.0
  %v3981 = vmax.f32 %v3838, 0.0
  %v3982 = vmax.f32 %v3843, 0.0
  %v3983 = vmax.f32 %v3848, 0.0
  %v3984 = vmax.f32 %v3853, 0.0
  %v3985 = vmax.f32 %v3858, 0.0
  %v3986 = vmax.f32 %v3863, 0.0
  %v3987 = vmax.f32 %v3868, 0.0
  %v3988 = vmax.f32 %v3873, 0.0
  %v3989 = vmax.f32 %v3878, 0.0
  %v3990 = vmax.f32 %v3883, 0.0
  %v3991 = vmax.f32 %v3888, 0.0
  %v3992 = vmax.f32 %v3893, 0.0
  %v3993 = vmax.f32 %v3898, 0.0
  %v3994 = vmax.f32 %v3903, 0.0
  %v3995 = vmax.f32 %v3908, 0.0
  %v3996 = vmax.f32 %v3913, 0.0
  %v3997 = vmax.f32 %v3918, 0.0
  %v3998 = vmax.f32 %v3923, 0.0
  %v3999 = vmax.f32 %v3928, 0.0
  %v4000 = vmax.f32 %v3933, 0.0
  %v4001 = vmax.f32 %v3938, 0.0
  %v4002 = vmax.f32 %v3943, 0.0
  %v4003 = vmax.f32 %v3948, 0.0
  %v4004 = vmax.f32 %v3953, 0.0
  %4005 = vst.msk [vmem:[#allocation4] sm:$0xff] %vm1320, %v3956
  %4006 = vst.msk [vmem:[#allocation4 + $0x8] sm:$0xff] %vm1320, %v3957
  %4007 = vst.msk [vmem:[#allocation4 + $0x10] sm:$0xff] %vm1320, %v3958
  %4008 = vst.msk [vmem:[#allocation4 + $0x18] sm:$0xff] %vm1320, %v3959
  %4009 = vst.msk [vmem:[#allocation4 + $0x20] sm:$0xff] %vm1320, %v3960
  %4010 = vst.msk [vmem:[#allocation4 + $0x28] sm:$0xff] %vm1320, %v3961
  %4011 = vst.msk [vmem:[#allocation4 + $0x30] sm:$0xff] %vm1320, %v3962
  %4012 = vst.msk [vmem:[#allocation4 + $0x38] sm:$0xff] %vm1320, %v3963
  %4013 = vst.msk [vmem:[#allocation4 + $0x40] sm:$0xff] %vm1320, %v3964
  %4014 = vst.msk [vmem:[#allocation4 + $0x48] sm:$0xff] %vm1320, %v3965
  %4015 = vst.msk [vmem:[#allocation4 + $0x50] sm:$0xff] %vm1320, %v3966
  %4016 = vst.msk [vmem:[#allocation4 + $0x58] sm:$0xff] %vm1320, %v3967
  %4017 = vst.msk [vmem:[#allocation4 + $0x60] sm:$0xff] %vm1320, %v3968
  %4018 = vst.msk [vmem:[#allocation4 + $0x68] sm:$0xff] %vm1320, %v3969
  %4019 = vst.msk [vmem:[#allocation4 + $0x70] sm:$0xff] %vm1320, %v3970
  %4020 = vst.msk [vmem:[#allocation4 + $0x78] sm:$0xff] %vm1320, %v3971
  %4021 = vst.msk [vmem:[#allocation4 + $0x80] sm:$0xff] %vm1320, %v3972
  %4022 = vst.msk [vmem:[#allocation4 + $0x88] sm:$0xff] %vm1320, %v3973
  %4023 = vst.msk [vmem:[#allocation4 + $0x90] sm:$0xff] %vm1320, %v3974
  %4024 = vst.msk [vmem:[#allocation4 + $0x98] sm:$0xff] %vm1320, %v3975
  %4025 = vst.msk [vmem:[#allocation4 + $0xa0] sm:$0xff] %vm1320, %v3976
  %4026 = vst.msk [vmem:[#allocation4 + $0xa8] sm:$0xff] %vm1320, %v3977
  %4027 = vst.msk [vmem:[#allocation4 + $0xb0] sm:$0xff] %vm1320, %v3978
  %4028 = vst.msk [vmem:[#allocation4 + $0xb8] sm:$0xff] %vm1320, %v3979
  %4029 = vst.msk [vmem:[#allocation4 + $0xc0] sm:$0xff] %vm1320, %v3980
  %4030 = vst.msk [vmem:[#allocation4 + $0xc8] sm:$0xff] %vm1320, %v3981
  %4031 = vst.msk [vmem:[#allocation4 + $0xd0] sm:$0xff] %vm1320, %v3982
  %4032 = vst.msk [vmem:[#allocation4 + $0xd8] sm:$0xff] %vm1320, %v3983
  %4033 = vst.msk [vmem:[#allocation4 + $0xe0] sm:$0xff] %vm1320, %v3984
  %4034 = vst.msk [vmem:[#allocation4 + $0xe8] sm:$0xff] %vm1320, %v3985
  %4035 = vst.msk [vmem:[#allocation4 + $0xf0] sm:$0xff] %vm1320, %v3986
  %4036 = vst.msk [vmem:[#allocation4 + $0xf8] sm:$0xff] %vm1320, %v3987
  %4037 = vst.msk [vmem:[#allocation4 + $0x100] sm:$0xff] %vm1320, %v3988
  %4038 = vst.msk [vmem:[#allocation4 + $0x108] sm:$0xff] %vm1320, %v3989
  %4039 = vst.msk [vmem:[#allocation4 + $0x110] sm:$0xff] %vm1320, %v3990
  %4040 = vst.msk [vmem:[#allocation4 + $0x118] sm:$0xff] %vm1320, %v3991
  %4041 = vst.msk [vmem:[#allocation4 + $0x120] sm:$0xff] %vm1320, %v3992
  %4042 = vst.msk [vmem:[#allocation4 + $0x128] sm:$0xff] %vm1320, %v3993
  %4043 = vst.msk [vmem:[#allocation4 + $0x130] sm:$0xff] %vm1320, %v3994
  %4044 = vst.msk [vmem:[#allocation4 + $0x138] sm:$0xff] %vm1320, %v3995
  %4045 = vst.msk [vmem:[#allocation4 + $0x140] sm:$0xff] %vm1320, %v3996
  %4046 = vst.msk [vmem:[#allocation4 + $0x148] sm:$0xff] %vm1320, %v3997
  %4047 = vst.msk [vmem:[#allocation4 + $0x150] sm:$0xff] %vm1320, %v3998
  %4048 = vst.msk [vmem:[#allocation4 + $0x158] sm:$0xff] %vm1320, %v3999
  %4049 = vst.msk [vmem:[#allocation4 + $0x160] sm:$0xff] %vm1320, %v4000
  %4050 = vst.msk [vmem:[#allocation4 + $0x168] sm:$0xff] %vm1320, %v4001
  %4051 = vst.msk [vmem:[#allocation4 + $0x170] sm:$0xff] %vm1320, %v4002
  %4052 = vst.msk [vmem:[#allocation4 + $0x178] sm:$0xff] %vm1320, %v4003
  %4053 = vst.msk [vmem:[#allocation4 + $0x180] sm:$0xff] %vm1320, %v4004
  %4054 = vst.msk [vmem:[#allocation4 + $0x188] sm:$0xff] %vm1320, 0.0
  %4055 = vst.msk [vmem:[#allocation4 + $0x190] sm:$0xff] %vm1320, 0.0
  %4056 = vst.msk [vmem:[#allocation4 + $0x198] sm:$0xff] %vm1320, 0.0
  %4057 = vst.msk [vmem:[#allocation4 + $0x1a0] sm:$0xff] %vm1320, 0.0
  %4058 = vst.msk [vmem:[#allocation4 + $0x1a8] sm:$0xff] %vm1320, 0.0
  %v4059 = vld [vmem:[#allocation4] sm:$0xff]
  %v4060 = vld [vmem:[#allocation4 + $0x8] sm:$0xff]
  %v4061 = vld [vmem:[#allocation4 + $0x10] sm:$0xff]
  %v4062 = vld [vmem:[#allocation4 + $0x18] sm:$0xff]
  %v4063 = vld [vmem:[#allocation4 + $0x20] sm:$0xff]
  %v4064 = vld [vmem:[#allocation4 + $0x28] sm:$0xff]
  %v4065 = vld [vmem:[#allocation4 + $0x30] sm:$0xff]
  %v4066 = vld [vmem:[#allocation4 + $0x38] sm:$0xff]
  %v4067 = vld [vmem:[#allocation4 + $0x40] sm:$0xff]
  %v4068 = vld [vmem:[#allocation4 + $0x48] sm:$0xff]
  %v4069 = vld [vmem:[#allocation4 + $0x50] sm:$0xff]
  %v4070 = vld [vmem:[#allocation4 + $0x58] sm:$0xff]
  %v4071 = vld [vmem:[#allocation4 + $0x60] sm:$0xff]
  %v4072 = vld [vmem:[#allocation4 + $0x68] sm:$0xff]
  %v4073 = vld [vmem:[#allocation4 + $0x70] sm:$0xff]
  %v4074 = vld [vmem:[#allocation4 + $0x78] sm:$0xff]
  %v4075 = vld [vmem:[#allocation4 + $0x80] sm:$0xff]
  %v4076 = vld [vmem:[#allocation4 + $0x88] sm:$0xff]
  %v4077 = vld [vmem:[#allocation4 + $0x90] sm:$0xff]
  %v4078 = vld [vmem:[#allocation4 + $0x98] sm:$0xff]
  %v4079 = vld [vmem:[#allocation4 + $0xa0] sm:$0xff]
  %v4080 = vld [vmem:[#allocation4 + $0xa8] sm:$0xff]
  %v4081 = vld [vmem:[#allocation4 + $0xb0] sm:$0xff]
  %v4082 = vld [vmem:[#allocation4 + $0xb8] sm:$0xff]
  %v4083 = vld [vmem:[#allocation4 + $0xc0] sm:$0xff]
  %v4084 = vld [vmem:[#allocation4 + $0xc8] sm:$0xff]
  %v4085 = vld [vmem:[#allocation4 + $0xd0] sm:$0xff]
  %v4086 = vld [vmem:[#allocation4 + $0xd8] sm:$0xff]
  %v4087 = vld [vmem:[#allocation4 + $0xe0] sm:$0xff]
  %v4088 = vld [vmem:[#allocation4 + $0xe8] sm:$0xff]
  %v4089 = vld [vmem:[#allocation4 + $0xf0] sm:$0xff]
  %v4090 = vld [vmem:[#allocation4 + $0xf8] sm:$0xff]
  %v4091 = vld [vmem:[#allocation4 + $0x100] sm:$0xff]
  %v4092 = vld [vmem:[#allocation4 + $0x108] sm:$0xff]
  %v4093 = vld [vmem:[#allocation4 + $0x110] sm:$0xff]
  %v4094 = vld [vmem:[#allocation4 + $0x118] sm:$0xff]
  %v4095 = vld [vmem:[#allocation4 + $0x120] sm:$0xff]
  %v4096 = vld [vmem:[#allocation4 + $0x128] sm:$0xff]
  %v4097 = vld [vmem:[#allocation4 + $0x130] sm:$0xff]
  %v4098 = vld [vmem:[#allocation4 + $0x138] sm:$0xff]
  %v4099 = vld [vmem:[#allocation4 + $0x140] sm:$0xff]
  %v4100 = vld [vmem:[#allocation4 + $0x148] sm:$0xff]
  %v4101 = vld [vmem:[#allocation4 + $0x150] sm:$0xff]
  %v4102 = vld [vmem:[#allocation4 + $0x158] sm:$0xff]
  %v4103 = vld [vmem:[#allocation4 + $0x160] sm:$0xff]
  %v4104 = vld [vmem:[#allocation4 + $0x168] sm:$0xff]
  %v4105 = vld [vmem:[#allocation4 + $0x170] sm:$0xff]
  %v4106 = vld [vmem:[#allocation4 + $0x178] sm:$0xff]
  %v4107 = vld [vmem:[#allocation4 + $0x180] sm:$0xff]
  %v4108 = vld [vmem:[#allocation4 + $0x1] sm:$0xff]
  %v4109 = vld [vmem:[#allocation4 + $0x9] sm:$0xff]
  %v4110 = vld [vmem:[#allocation4 + $0x11] sm:$0xff]
  %v4111 = vld [vmem:[#allocation4 + $0x19] sm:$0xff]
  %v4112 = vld [vmem:[#allocation4 + $0x21] sm:$0xff]
  %v4113 = vld [vmem:[#allocation4 + $0x29] sm:$0xff]
  %v4114 = vld [vmem:[#allocation4 + $0x31] sm:$0xff]
  %v4115 = vld [vmem:[#allocation4 + $0x39] sm:$0xff]
  %v4116 = vld [vmem:[#allocation4 + $0x41] sm:$0xff]
  %v4117 = vld [vmem:[#allocation4 + $0x49] sm:$0xff]
  %v4118 = vld [vmem:[#allocation4 + $0x51] sm:$0xff]
  %v4119 = vld [vmem:[#allocation4 + $0x59] sm:$0xff]
  %v4120 = vld [vmem:[#allocation4 + $0x61] sm:$0xff]
  %v4121 = vld [vmem:[#allocation4 + $0x69] sm:$0xff]
  %v4122 = vld [vmem:[#allocation4 + $0x71] sm:$0xff]
  %v4123 = vld [vmem:[#allocation4 + $0x79] sm:$0xff]
  %v4124 = vld [vmem:[#allocation4 + $0x81] sm:$0xff]
  %v4125 = vld [vmem:[#allocation4 + $0x89] sm:$0xff]
  %v4126 = vld [vmem:[#allocation4 + $0x91] sm:$0xff]
  %v4127 = vld [vmem:[#allocation4 + $0x99] sm:$0xff]
  %v4128 = vld [vmem:[#allocation4 + $0xa1] sm:$0xff]
  %v4129 = vld [vmem:[#allocation4 + $0xa9] sm:$0xff]
  %v4130 = vld [vmem:[#allocation4 + $0xb1] sm:$0xff]
  %v4131 = vld [vmem:[#allocation4 + $0xb9] sm:$0xff]
  %v4132 = vld [vmem:[#allocation4 + $0xc1] sm:$0xff]
  %v4133 = vld [vmem:[#allocation4 + $0xc9] sm:$0xff]
  %v4134 = vld [vmem:[#allocation4 + $0xd1] sm:$0xff]
  %v4135 = vld [vmem:[#allocation4 + $0xd9] sm:$0xff]
  %v4136 = vld [vmem:[#allocation4 + $0xe1] sm:$0xff]
  %v4137 = vld [vmem:[#allocation4 + $0xe9] sm:$0xff]
  %v4138 = vld [vmem:[#allocation4 + $0xf1] sm:$0xff]
  %v4139 = vld [vmem:[#allocation4 + $0xf9] sm:$0xff]
  %v4140 = vld [vmem:[#allocation4 + $0x101] sm:$0xff]
  %v4141 = vld [vmem:[#allocation4 + $0x109] sm:$0xff]
  %v4142 = vld [vmem:[#allocation4 + $0x111] sm:$0xff]
  %v4143 = vld [vmem:[#allocation4 + $0x119] sm:$0xff]
  %v4144 = vld [vmem:[#allocation4 + $0x121] sm:$0xff]
  %v4145 = vld [vmem:[#allocation4 + $0x129] sm:$0xff]
  %v4146 = vld [vmem:[#allocation4 + $0x131] sm:$0xff]
  %v4147 = vld [vmem:[#allocation4 + $0x139] sm:$0xff]
  %v4148 = vld [vmem:[#allocation4 + $0x141] sm:$0xff]
  %v4149 = vld [vmem:[#allocation4 + $0x149] sm:$0xff]
  %v4150 = vld [vmem:[#allocation4 + $0x151] sm:$0xff]
  %v4151 = vld [vmem:[#allocation4 + $0x159] sm:$0xff]
  %v4152 = vld [vmem:[#allocation4 + $0x161] sm:$0xff]
  %v4153 = vld [vmem:[#allocation4 + $0x169] sm:$0xff]
  %v4154 = vld [vmem:[#allocation4 + $0x171] sm:$0xff]
  %v4155 = vld [vmem:[#allocation4 + $0x179] sm:$0xff]
  %v4156 = vld [vmem:[#allocation4 + $0x181] sm:$0xff]
  %v4157 = vld [vmem:[#allocation4 + $0x2] sm:$0xff]
  %v4158 = vld [vmem:[#allocation4 + $0xa] sm:$0xff]
  %v4159 = vld [vmem:[#allocation4 + $0x12] sm:$0xff]
  %v4160 = vld [vmem:[#allocation4 + $0x1a] sm:$0xff]
  %v4161 = vld [vmem:[#allocation4 + $0x22] sm:$0xff]
  %v4162 = vld [vmem:[#allocation4 + $0x2a] sm:$0xff]
  %v4163 = vld [vmem:[#allocation4 + $0x32] sm:$0xff]
  %v4164 = vld [vmem:[#allocation4 + $0x3a] sm:$0xff]
  %v4165 = vld [vmem:[#allocation4 + $0x42] sm:$0xff]
  %v4166 = vld [vmem:[#allocation4 + $0x4a] sm:$0xff]
  %v4167 = vld [vmem:[#allocation4 + $0x52] sm:$0xff]
  %v4168 = vld [vmem:[#allocation4 + $0x5a] sm:$0xff]
  %v4169 = vld [vmem:[#allocation4 + $0x62] sm:$0xff]
  %v4170 = vld [vmem:[#allocation4 + $0x6a] sm:$0xff]
  %v4171 = vld [vmem:[#allocation4 + $0x72] sm:$0xff]
  %v4172 = vld [vmem:[#allocation4 + $0x7a] sm:$0xff]
  %v4173 = vld [vmem:[#allocation4 + $0x82] sm:$0xff]
  %v4174 = vld [vmem:[#allocation4 + $0x8a] sm:$0xff]
  %v4175 = vld [vmem:[#allocation4 + $0x92] sm:$0xff]
  %v4176 = vld [vmem:[#allocation4 + $0x9a] sm:$0xff]
  %v4177 = vld [vmem:[#allocation4 + $0xa2] sm:$0xff]
  %v4178 = vld [vmem:[#allocation4 + $0xaa] sm:$0xff]
  %v4179 = vld [vmem:[#allocation4 + $0xb2] sm:$0xff]
  %v4180 = vld [vmem:[#allocation4 + $0xba] sm:$0xff]
  %v4181 = vld [vmem:[#allocation4 + $0xc2] sm:$0xff]
  %v4182 = vld [vmem:[#allocation4 + $0xca] sm:$0xff]
  %v4183 = vld [vmem:[#allocation4 + $0xd2] sm:$0xff]
  %v4184 = vld [vmem:[#allocation4 + $0xda] sm:$0xff]
  %v4185 = vld [vmem:[#allocation4 + $0xe2] sm:$0xff]
  %v4186 = vld [vmem:[#allocation4 + $0xea] sm:$0xff]
  %v4187 = vld [vmem:[#allocation4 + $0xf2] sm:$0xff]
  %v4188 = vld [vmem:[#allocation4 + $0xfa] sm:$0xff]
  %v4189 = vld [vmem:[#allocation4 + $0x102] sm:$0xff]
  %v4190 = vld [vmem:[#allocation4 + $0x10a] sm:$0xff]
  %v4191 = vld [vmem:[#allocation4 + $0x112] sm:$0xff]
  %v4192 = vld [vmem:[#allocation4 + $0x11a] sm:$0xff]
  %v4193 = vld [vmem:[#allocation4 + $0x122] sm:$0xff]
  %v4194 = vld [vmem:[#allocation4 + $0x12a] sm:$0xff]
  %v4195 = vld [vmem:[#allocation4 + $0x132] sm:$0xff]
  %v4196 = vld [vmem:[#allocation4 + $0x13a] sm:$0xff]
  %v4197 = vld [vmem:[#allocation4 + $0x142] sm:$0xff]
  %v4198 = vld [vmem:[#allocation4 + $0x14a] sm:$0xff]
  %v4199 = vld [vmem:[#allocation4 + $0x152] sm:$0xff]
  %v4200 = vld [vmem:[#allocation4 + $0x15a] sm:$0xff]
  %v4201 = vld [vmem:[#allocation4 + $0x162] sm:$0xff]
  %v4202 = vld [vmem:[#allocation4 + $0x16a] sm:$0xff]
  %v4203 = vld [vmem:[#allocation4 + $0x172] sm:$0xff]
  %v4204 = vld [vmem:[#allocation4 + $0x17a] sm:$0xff]
  %v4205 = vld [vmem:[#allocation4 + $0x182] sm:$0xff]
  %v4206 = vld [vmem:[#allocation4 + $0xe] sm:$0xff]
  %v4207 = vld [vmem:[#allocation4 + $0x16] sm:$0xff]
  %v4208 = vld [vmem:[#allocation4 + $0x1e] sm:$0xff]
  %v4209 = vld [vmem:[#allocation4 + $0x26] sm:$0xff]
  %v4210 = vld [vmem:[#allocation4 + $0x2e] sm:$0xff]
  %v4211 = vld [vmem:[#allocation4 + $0x36] sm:$0xff]
  %v4212 = vld [vmem:[#allocation4 + $0x3e] sm:$0xff]
  %v4213 = vld [vmem:[#allocation4 + $0x46] sm:$0xff]
  %v4214 = vld [vmem:[#allocation4 + $0x4e] sm:$0xff]
  %v4215 = vld [vmem:[#allocation4 + $0x56] sm:$0xff]
  %v4216 = vld [vmem:[#allocation4 + $0x5e] sm:$0xff]
  %v4217 = vld [vmem:[#allocation4 + $0x66] sm:$0xff]
  %v4218 = vld [vmem:[#allocation4 + $0x6e] sm:$0xff]
  %v4219 = vld [vmem:[#allocation4 + $0x76] sm:$0xff]
  %v4220 = vld [vmem:[#allocation4 + $0x7e] sm:$0xff]
  %v4221 = vld [vmem:[#allocation4 + $0x86] sm:$0xff]
  %v4222 = vld [vmem:[#allocation4 + $0x8e] sm:$0xff]
  %v4223 = vld [vmem:[#allocation4 + $0x96] sm:$0xff]
  %v4224 = vld [vmem:[#allocation4 + $0x9e] sm:$0xff]
  %v4225 = vld [vmem:[#allocation4 + $0xa6] sm:$0xff]
  %v4226 = vld [vmem:[#allocation4 + $0xae] sm:$0xff]
  %v4227 = vld [vmem:[#allocation4 + $0xb6] sm:$0xff]
  %v4228 = vld [vmem:[#allocation4 + $0xbe] sm:$0xff]
  %v4229 = vld [vmem:[#allocation4 + $0xc6] sm:$0xff]
  %v4230 = vld [vmem:[#allocation4 + $0xce] sm:$0xff]
  %v4231 = vld [vmem:[#allocation4 + $0xd6] sm:$0xff]
  %v4232 = vld [vmem:[#allocation4 + $0xde] sm:$0xff]
  %v4233 = vld [vmem:[#allocation4 + $0xe6] sm:$0xff]
  %v4234 = vld [vmem:[#allocation4 + $0xee] sm:$0xff]
  %v4235 = vld [vmem:[#allocation4 + $0xf6] sm:$0xff]
  %v4236 = vld [vmem:[#allocation4 + $0xfe] sm:$0xff]
  %v4237 = vld [vmem:[#allocation4 + $0x106] sm:$0xff]
  %v4238 = vld [vmem:[#allocation4 + $0x10e] sm:$0xff]
  %v4239 = vld [vmem:[#allocation4 + $0x116] sm:$0xff]
  %v4240 = vld [vmem:[#allocation4 + $0x11e] sm:$0xff]
  %v4241 = vld [vmem:[#allocation4 + $0x126] sm:$0xff]
  %v4242 = vld [vmem:[#allocation4 + $0x12e] sm:$0xff]
  %v4243 = vld [vmem:[#allocation4 + $0x136] sm:$0xff]
  %v4244 = vld [vmem:[#allocation4 + $0x13e] sm:$0xff]
  %v4245 = vld [vmem:[#allocation4 + $0x146] sm:$0xff]
  %v4246 = vld [vmem:[#allocation4 + $0x14e] sm:$0xff]
  %v4247 = vld [vmem:[#allocation4 + $0x156] sm:$0xff]
  %v4248 = vld [vmem:[#allocation4 + $0x15e] sm:$0xff]
  %v4249 = vld [vmem:[#allocation4 + $0x166] sm:$0xff]
  %v4250 = vld [vmem:[#allocation4 + $0x16e] sm:$0xff]
  %v4251 = vld [vmem:[#allocation4 + $0x176] sm:$0xff]
  %v4252 = vld [vmem:[#allocation4 + $0x17e] sm:$0xff]
  %v4253 = vld [vmem:[#allocation4 + $0x186] sm:$0xff]
  %v4254 = vld [vmem:[#allocation4 + $0x18e] sm:$0xff]
  %v4255 = vld [vmem:[#allocation4 + $0xf] sm:$0xff]
  %v4256 = vld [vmem:[#allocation4 + $0x17] sm:$0xff]
  %v4257 = vld [vmem:[#allocation4 + $0x1f] sm:$0xff]
  %v4258 = vld [vmem:[#allocation4 + $0x27] sm:$0xff]
  %v4259 = vld [vmem:[#allocation4 + $0x2f] sm:$0xff]
  %v4260 = vld [vmem:[#allocation4 + $0x37] sm:$0xff]
  %v4261 = vld [vmem:[#allocation4 + $0x3f] sm:$0xff]
  %v4262 = vld [vmem:[#allocation4 + $0x47] sm:$0xff]
  %v4263 = vld [vmem:[#allocation4 + $0x4f] sm:$0xff]
  %v4264 = vld [vmem:[#allocation4 + $0x57] sm:$0xff]
  %v4265 = vld [vmem:[#allocation4 + $0x5f] sm:$0xff]
  %v4266 = vld [vmem:[#allocation4 + $0x67] sm:$0xff]
  %v4267 = vld [vmem:[#allocation4 + $0x6f] sm:$0xff]
  %v4268 = vld [vmem:[#allocation4 + $0x77] sm:$0xff]
  %v4269 = vld [vmem:[#allocation4 + $0x7f] sm:$0xff]
  %v4270 = vld [vmem:[#allocation4 + $0x87] sm:$0xff]
  %v4271 = vld [vmem:[#allocation4 + $0x8f] sm:$0xff]
  %v4272 = vld [vmem:[#allocation4 + $0x97] sm:$0xff]
  %v4273 = vld [vmem:[#allocation4 + $0x9f] sm:$0xff]
  %v4274 = vld [vmem:[#allocation4 + $0xa7] sm:$0xff]
  %v4275 = vld [vmem:[#allocation4 + $0xaf] sm:$0xff]
  %v4276 = vld [vmem:[#allocation4 + $0xb7] sm:$0xff]
  %v4277 = vld [vmem:[#allocation4 + $0xbf] sm:$0xff]
  %v4278 = vld [vmem:[#allocation4 + $0xc7] sm:$0xff]
  %v4279 = vld [vmem:[#allocation4 + $0xcf] sm:$0xff]
  %v4280 = vld [vmem:[#allocation4 + $0xd7] sm:$0xff]
  %v4281 = vld [vmem:[#allocation4 + $0xdf] sm:$0xff]
  %v4282 = vld [vmem:[#allocation4 + $0xe7] sm:$0xff]
  %v4283 = vld [vmem:[#allocation4 + $0xef] sm:$0xff]
  %v4284 = vld [vmem:[#allocation4 + $0xf7] sm:$0xff]
  %v4285 = vld [vmem:[#allocation4 + $0xff] sm:$0xff]
  %v4286 = vld [vmem:[#allocation4 + $0x107] sm:$0xff]
  %v4287 = vld [vmem:[#allocation4 + $0x10f] sm:$0xff]
  %v4288 = vld [vmem:[#allocation4 + $0x117] sm:$0xff]
  %v4289 = vld [vmem:[#allocation4 + $0x11f] sm:$0xff]
  %v4290 = vld [vmem:[#allocation4 + $0x127] sm:$0xff]
  %v4291 = vld [vmem:[#allocation4 + $0x12f] sm:$0xff]
  %v4292 = vld [vmem:[#allocation4 + $0x137] sm:$0xff]
  %v4293 = vld [vmem:[#allocation4 + $0x13f] sm:$0xff]
  %v4294 = vld [vmem:[#allocation4 + $0x147] sm:$0xff]
  %v4295 = vld [vmem:[#allocation4 + $0x14f] sm:$0xff]
  %v4296 = vld [vmem:[#allocation4 + $0x157] sm:$0xff]
  %v4297 = vld [vmem:[#allocation4 + $0x15f] sm:$0xff]
  %v4298 = vld [vmem:[#allocation4 + $0x167] sm:$0xff]
  %v4299 = vld [vmem:[#allocation4 + $0x16f] sm:$0xff]
  %v4300 = vld [vmem:[#allocation4 + $0x177] sm:$0xff]
  %v4301 = vld [vmem:[#allocation4 + $0x17f] sm:$0xff]
  %v4302 = vld [vmem:[#allocation4 + $0x187] sm:$0xff]
  %v4303 = vld [vmem:[#allocation4 + $0x18f] sm:$0xff]
  %v4304 = vld [vmem:[#allocation4 + $0x188] sm:$0xff]
  %v4305 = vld [vmem:[#allocation4 + $0x190] sm:$0xff]
  %v4306 = vld [vmem:[#allocation4 + $0x1c] sm:$0xff]
  %v4307 = vld [vmem:[#allocation4 + $0x24] sm:$0xff]
  %v4308 = vld [vmem:[#allocation4 + $0x2c] sm:$0xff]
  %v4309 = vld [vmem:[#allocation4 + $0x34] sm:$0xff]
  %v4310 = vld [vmem:[#allocation4 + $0x3c] sm:$0xff]
  %v4311 = vld [vmem:[#allocation4 + $0x44] sm:$0xff]
  %v4312 = vld [vmem:[#allocation4 + $0x4c] sm:$0xff]
  %v4313 = vld [vmem:[#allocation4 + $0x54] sm:$0xff]
  %v4314 = vld [vmem:[#allocation4 + $0x5c] sm:$0xff]
  %v4315 = vld [vmem:[#allocation4 + $0x64] sm:$0xff]
  %v4316 = vld [vmem:[#allocation4 + $0x6c] sm:$0xff]
  %v4317 = vld [vmem:[#allocation4 + $0x74] sm:$0xff]
  %v4318 = vld [vmem:[#allocation4 + $0x7c] sm:$0xff]
  %v4319 = vld [vmem:[#allocation4 + $0x84] sm:$0xff]
  %v4320 = vld [vmem:[#allocation4 + $0x8c] sm:$0xff]
  %v4321 = vld [vmem:[#allocation4 + $0x94] sm:$0xff]
  %v4322 = vld [vmem:[#allocation4 + $0x9c] sm:$0xff]
  %v4323 = vld [vmem:[#allocation4 + $0xa4] sm:$0xff]
  %v4324 = vld [vmem:[#allocation4 + $0xac] sm:$0xff]
  %v4325 = vld [vmem:[#allocation4 + $0xb4] sm:$0xff]
  %v4326 = vld [vmem:[#allocation4 + $0xbc] sm:$0xff]
  %v4327 = vld [vmem:[#allocation4 + $0xc4] sm:$0xff]
  %v4328 = vld [vmem:[#allocation4 + $0xcc] sm:$0xff]
  %v4329 = vld [vmem:[#allocation4 + $0xd4] sm:$0xff]
  %v4330 = vld [vmem:[#allocation4 + $0xdc] sm:$0xff]
  %v4331 = vld [vmem:[#allocation4 + $0xe4] sm:$0xff]
  %v4332 = vld [vmem:[#allocation4 + $0xec] sm:$0xff]
  %v4333 = vld [vmem:[#allocation4 + $0xf4] sm:$0xff]
  %v4334 = vld [vmem:[#allocation4 + $0xfc] sm:$0xff]
  %v4335 = vld [vmem:[#allocation4 + $0x104] sm:$0xff]
  %v4336 = vld [vmem:[#allocation4 + $0x10c] sm:$0xff]
  %v4337 = vld [vmem:[#allocation4 + $0x114] sm:$0xff]
  %v4338 = vld [vmem:[#allocation4 + $0x11c] sm:$0xff]
  %v4339 = vld [vmem:[#allocation4 + $0x124] sm:$0xff]
  %v4340 = vld [vmem:[#allocation4 + $0x12c] sm:$0xff]
  %v4341 = vld [vmem:[#allocation4 + $0x134] sm:$0xff]
  %v4342 = vld [vmem:[#allocation4 + $0x13c] sm:$0xff]
  %v4343 = vld [vmem:[#allocation4 + $0x144] sm:$0xff]
  %v4344 = vld [vmem:[#allocation4 + $0x14c] sm:$0xff]
  %v4345 = vld [vmem:[#allocation4 + $0x154] sm:$0xff]
  %v4346 = vld [vmem:[#allocation4 + $0x15c] sm:$0xff]
  %v4347 = vld [vmem:[#allocation4 + $0x164] sm:$0xff]
  %v4348 = vld [vmem:[#allocation4 + $0x16c] sm:$0xff]
  %v4349 = vld [vmem:[#allocation4 + $0x174] sm:$0xff]
  %v4350 = vld [vmem:[#allocation4 + $0x17c] sm:$0xff]
  %v4351 = vld [vmem:[#allocation4 + $0x184] sm:$0xff]
  %v4352 = vld [vmem:[#allocation4 + $0x18c] sm:$0xff]
  %v4353 = vld [vmem:[#allocation4 + $0x194] sm:$0xff]
  %v4354 = vld [vmem:[#allocation4 + $0x19c] sm:$0xff]
  %v4355 = vld [vmem:[#allocation4 + $0x1d] sm:$0xff]
  %v4356 = vld [vmem:[#allocation4 + $0x25] sm:$0xff]
  %v4357 = vld [vmem:[#allocation4 + $0x2d] sm:$0xff]
  %v4358 = vld [vmem:[#allocation4 + $0x35] sm:$0xff]
  %v4359 = vld [vmem:[#allocation4 + $0x3d] sm:$0xff]
  %v4360 = vld [vmem:[#allocation4 + $0x45] sm:$0xff]
  %v4361 = vld [vmem:[#allocation4 + $0x4d] sm:$0xff]
  %v4362 = vld [vmem:[#allocation4 + $0x55] sm:$0xff]
  %v4363 = vld [vmem:[#allocation4 + $0x5d] sm:$0xff]
  %v4364 = vld [vmem:[#allocation4 + $0x65] sm:$0xff]
  %v4365 = vld [vmem:[#allocation4 + $0x6d] sm:$0xff]
  %v4366 = vld [vmem:[#allocation4 + $0x75] sm:$0xff]
  %v4367 = vld [vmem:[#allocation4 + $0x7d] sm:$0xff]
  %v4368 = vld [vmem:[#allocation4 + $0x85] sm:$0xff]
  %v4369 = vld [vmem:[#allocation4 + $0x8d] sm:$0xff]
  %v4370 = vld [vmem:[#allocation4 + $0x95] sm:$0xff]
  %v4371 = vld [vmem:[#allocation4 + $0x9d] sm:$0xff]
  %v4372 = vld [vmem:[#allocation4 + $0xa5] sm:$0xff]
  %v4373 = vld [vmem:[#allocation4 + $0xad] sm:$0xff]
  %v4374 = vld [vmem:[#allocation4 + $0xb5] sm:$0xff]
  %v4375 = vld [vmem:[#allocation4 + $0xbd] sm:$0xff]
  %v4376 = vld [vmem:[#allocation4 + $0xc5] sm:$0xff]
  %v4377 = vld [vmem:[#allocation4 + $0xcd] sm:$0xff]
  %v4378 = vld [vmem:[#allocation4 + $0xd5] sm:$0xff]
  %v4379 = vld [vmem:[#allocation4 + $0xdd] sm:$0xff]
  %v4380 = vld [vmem:[#allocation4 + $0xe5] sm:$0xff]
  %v4381 = vld [vmem:[#allocation4 + $0xed] sm:$0xff]
  %v4382 = vld [vmem:[#allocation4 + $0xf5] sm:$0xff]
  %v4383 = vld [vmem:[#allocation4 + $0xfd] sm:$0xff]
  %v4384 = vld [vmem:[#allocation4 + $0x105] sm:$0xff]
  %v4385 = vld [vmem:[#allocation4 + $0x10d] sm:$0xff]
  %v4386 = vld [vmem:[#allocation4 + $0x115] sm:$0xff]
  %v4387 = vld [vmem:[#allocation4 + $0x11d] sm:$0xff]
  %v4388 = vld [vmem:[#allocation4 + $0x125] sm:$0xff]
  %v4389 = vld [vmem:[#allocation4 + $0x12d] sm:$0xff]
  %v4390 = vld [vmem:[#allocation4 + $0x135] sm:$0xff]
  %v4391 = vld [vmem:[#allocation4 + $0x13d] sm:$0xff]
  %v4392 = vld [vmem:[#allocation4 + $0x145] sm:$0xff]
  %v4393 = vld [vmem:[#allocation4 + $0x14d] sm:$0xff]
  %v4394 = vld [vmem:[#allocation4 + $0x155] sm:$0xff]
  %v4395 = vld [vmem:[#allocation4 + $0x15d] sm:$0xff]
  %v4396 = vld [vmem:[#allocation4 + $0x165] sm:$0xff]
  %v4397 = vld [vmem:[#allocation4 + $0x16d] sm:$0xff]
  %v4398 = vld [vmem:[#allocation4 + $0x175] sm:$0xff]
  %v4399 = vld [vmem:[#allocation4 + $0x17d] sm:$0xff]
  %v4400 = vld [vmem:[#allocation4 + $0x185] sm:$0xff]
  %v4401 = vld [vmem:[#allocation4 + $0x18d] sm:$0xff]
  %v4402 = vld [vmem:[#allocation4 + $0x195] sm:$0xff]
  %v4403 = vld [vmem:[#allocation4 + $0x19d] sm:$0xff]
  %v4404 = vld [vmem:[#allocation4 + $0x196] sm:$0xff]
  %v4405 = vld [vmem:[#allocation4 + $0x19e] sm:$0xff]
  %4455 = vrot.lane.b32.xlu0 %v4108, 32
  %v4456 = vpop.permute.xlu0 %4455
  %4457 = vrot.lane.b32.xlu0 %v4109, 32
  %v4458 = vpop.permute.xlu0 %4457
  %4459 = vrot.lane.b32.xlu0 %v4110, 32
  %v4460 = vpop.permute.xlu0 %4459
  %4461 = vrot.lane.b32.xlu0 %v4111, 32
  %v4462 = vpop.permute.xlu0 %4461
  %4463 = vrot.lane.b32.xlu0 %v4112, 32
  %v4464 = vpop.permute.xlu0 %4463
  %4465 = vrot.lane.b32.xlu0 %v4113, 32
  %v4466 = vpop.permute.xlu0 %4465
  %4467 = vrot.lane.b32.xlu0 %v4114, 32
  %v4468 = vpop.permute.xlu0 %4467
  %4469 = vrot.lane.b32.xlu0 %v4115, 32
  %v4470 = vpop.permute.xlu0 %4469
  %4471 = vrot.lane.b32.xlu0 %v4116, 32
  %v4472 = vpop.permute.xlu0 %4471
  %4473 = vrot.lane.b32.xlu0 %v4117, 32
  %v4474 = vpop.permute.xlu0 %4473
  %4475 = vrot.lane.b32.xlu0 %v4118, 32
  %v4476 = vpop.permute.xlu0 %4475
  %4477 = vrot.lane.b32.xlu0 %v4119, 32
  %v4478 = vpop.permute.xlu0 %4477
  %4479 = vrot.lane.b32.xlu0 %v4120, 32
  %v4480 = vpop.permute.xlu0 %4479
  %4481 = vrot.lane.b32.xlu0 %v4121, 32
  %v4482 = vpop.permute.xlu0 %4481
  %4483 = vrot.lane.b32.xlu0 %v4122, 32
  %v4484 = vpop.permute.xlu0 %4483
  %4485 = vrot.lane.b32.xlu0 %v4123, 32
  %v4486 = vpop.permute.xlu0 %4485
  %4487 = vrot.lane.b32.xlu0 %v4124, 32
  %v4488 = vpop.permute.xlu0 %4487
  %4489 = vrot.lane.b32.xlu0 %v4125, 32
  %v4490 = vpop.permute.xlu0 %4489
  %4491 = vrot.lane.b32.xlu0 %v4126, 32
  %v4492 = vpop.permute.xlu0 %4491
  %4493 = vrot.lane.b32.xlu0 %v4127, 32
  %v4494 = vpop.permute.xlu0 %4493
  %4495 = vrot.lane.b32.xlu0 %v4128, 32
  %v4496 = vpop.permute.xlu0 %4495
  %4497 = vrot.lane.b32.xlu0 %v4129, 32
  %v4498 = vpop.permute.xlu0 %4497
  %4499 = vrot.lane.b32.xlu0 %v4130, 32
  %v4500 = vpop.permute.xlu0 %4499
  %4501 = vrot.lane.b32.xlu0 %v4131, 32
  %v4502 = vpop.permute.xlu0 %4501
  %4503 = vrot.lane.b32.xlu0 %v4132, 32
  %v4504 = vpop.permute.xlu0 %4503
  %4505 = vrot.lane.b32.xlu0 %v4133, 32
  %v4506 = vpop.permute.xlu0 %4505
  %4507 = vrot.lane.b32.xlu0 %v4134, 32
  %v4508 = vpop.permute.xlu0 %4507
  %4509 = vrot.lane.b32.xlu0 %v4135, 32
  %v4510 = vpop.permute.xlu0 %4509
  %4511 = vrot.lane.b32.xlu0 %v4136, 32
  %v4512 = vpop.permute.xlu0 %4511
  %4513 = vrot.lane.b32.xlu0 %v4137, 32
  %v4514 = vpop.permute.xlu0 %4513
  %4515 = vrot.lane.b32.xlu0 %v4138, 32
  %v4516 = vpop.permute.xlu0 %4515
  %4517 = vrot.lane.b32.xlu0 %v4139, 32
  %v4518 = vpop.permute.xlu0 %4517
  %4519 = vrot.lane.b32.xlu0 %v4140, 32
  %v4520 = vpop.permute.xlu0 %4519
  %4521 = vrot.lane.b32.xlu0 %v4141, 32
  %v4522 = vpop.permute.xlu0 %4521
  %4523 = vrot.lane.b32.xlu0 %v4142, 32
  %v4524 = vpop.permute.xlu0 %4523
  %4525 = vrot.lane.b32.xlu0 %v4143, 32
  %v4526 = vpop.permute.xlu0 %4525
  %4527 = vrot.lane.b32.xlu0 %v4144, 32
  %v4528 = vpop.permute.xlu0 %4527
  %4529 = vrot.lane.b32.xlu0 %v4145, 32
  %v4530 = vpop.permute.xlu0 %4529
  %4531 = vrot.lane.b32.xlu0 %v4146, 32
  %v4532 = vpop.permute.xlu0 %4531
  %4533 = vrot.lane.b32.xlu0 %v4147, 32
  %v4534 = vpop.permute.xlu0 %4533
  %4535 = vrot.lane.b32.xlu0 %v4148, 32
  %v4536 = vpop.permute.xlu0 %4535
  %4537 = vrot.lane.b32.xlu0 %v4149, 32
  %v4538 = vpop.permute.xlu0 %4537
  %4539 = vrot.lane.b32.xlu0 %v4150, 32
  %v4540 = vpop.permute.xlu0 %4539
  %4541 = vrot.lane.b32.xlu0 %v4151, 32
  %v4542 = vpop.permute.xlu0 %4541
  %4543 = vrot.lane.b32.xlu0 %v4152, 32
  %v4544 = vpop.permute.xlu0 %4543
  %4545 = vrot.lane.b32.xlu0 %v4153, 32
  %v4546 = vpop.permute.xlu0 %4545
  %4547 = vrot.lane.b32.xlu0 %v4154, 32
  %v4548 = vpop.permute.xlu0 %4547
  %4549 = vrot.lane.b32.xlu0 %v4155, 32
  %v4550 = vpop.permute.xlu0 %4549
  %4551 = vrot.lane.b32.xlu0 %v4156, 32
  %v4552 = vpop.permute.xlu0 %4551
  %4651 = vrot.lane.b32.xlu0 %v4157, 64
  %v4652 = vpop.permute.xlu0 %4651
  %4653 = vrot.lane.b32.xlu0 %v4158, 64
  %v4654 = vpop.permute.xlu0 %4653
  %4655 = vrot.lane.b32.xlu0 %v4159, 64
  %v4656 = vpop.permute.xlu0 %4655
  %4657 = vrot.lane.b32.xlu0 %v4160, 64
  %v4658 = vpop.permute.xlu0 %4657
  %4659 = vrot.lane.b32.xlu0 %v4161, 64
  %v4660 = vpop.permute.xlu0 %4659
  %4661 = vrot.lane.b32.xlu0 %v4162, 64
  %v4662 = vpop.permute.xlu0 %4661
  %4663 = vrot.lane.b32.xlu0 %v4163, 64
  %v4664 = vpop.permute.xlu0 %4663
  %4665 = vrot.lane.b32.xlu0 %v4164, 64
  %v4666 = vpop.permute.xlu0 %4665
  %4667 = vrot.lane.b32.xlu0 %v4165, 64
  %v4668 = vpop.permute.xlu0 %4667
  %4669 = vrot.lane.b32.xlu0 %v4166, 64
  %v4670 = vpop.permute.xlu0 %4669
  %4671 = vrot.lane.b32.xlu0 %v4167, 64
  %v4672 = vpop.permute.xlu0 %4671
  %4673 = vrot.lane.b32.xlu0 %v4168, 64
  %v4674 = vpop.permute.xlu0 %4673
  %4675 = vrot.lane.b32.xlu0 %v4169, 64
  %v4676 = vpop.permute.xlu0 %4675
  %4677 = vrot.lane.b32.xlu0 %v4170, 64
  %v4678 = vpop.permute.xlu0 %4677
  %4679 = vrot.lane.b32.xlu0 %v4171, 64
  %v4680 = vpop.permute.xlu0 %4679
  %4681 = vrot.lane.b32.xlu0 %v4172, 64
  %v4682 = vpop.permute.xlu0 %4681
  %4683 = vrot.lane.b32.xlu0 %v4173, 64
  %v4684 = vpop.permute.xlu0 %4683
  %4685 = vrot.lane.b32.xlu0 %v4174, 64
  %v4686 = vpop.permute.xlu0 %4685
  %4687 = vrot.lane.b32.xlu0 %v4175, 64
  %v4688 = vpop.permute.xlu0 %4687
  %4689 = vrot.lane.b32.xlu0 %v4176, 64
  %v4690 = vpop.permute.xlu0 %4689
  %4691 = vrot.lane.b32.xlu0 %v4177, 64
  %v4692 = vpop.permute.xlu0 %4691
  %4693 = vrot.lane.b32.xlu0 %v4178, 64
  %v4694 = vpop.permute.xlu0 %4693
  %4695 = vrot.lane.b32.xlu0 %v4179, 64
  %v4696 = vpop.permute.xlu0 %4695
  %4697 = vrot.lane.b32.xlu0 %v4180, 64
  %v4698 = vpop.permute.xlu0 %4697
  %4699 = vrot.lane.b32.xlu0 %v4181, 64
  %v4700 = vpop.permute.xlu0 %4699
  %4701 = vrot.lane.b32.xlu0 %v4182, 64
  %v4702 = vpop.permute.xlu0 %4701
  %4703 = vrot.lane.b32.xlu0 %v4183, 64
  %v4704 = vpop.permute.xlu0 %4703
  %4705 = vrot.lane.b32.xlu0 %v4184, 64
  %v4706 = vpop.permute.xlu0 %4705
  %4707 = vrot.lane.b32.xlu0 %v4185, 64
  %v4708 = vpop.permute.xlu0 %4707
  %4709 = vrot.lane.b32.xlu0 %v4186, 64
  %v4710 = vpop.permute.xlu0 %4709
  %4711 = vrot.lane.b32.xlu0 %v4187, 64
  %v4712 = vpop.permute.xlu0 %4711
  %4713 = vrot.lane.b32.xlu0 %v4188, 64
  %v4714 = vpop.permute.xlu0 %4713
  %4715 = vrot.lane.b32.xlu0 %v4189, 64
  %v4716 = vpop.permute.xlu0 %4715
  %4717 = vrot.lane.b32.xlu0 %v4190, 64
  %v4718 = vpop.permute.xlu0 %4717
  %4719 = vrot.lane.b32.xlu0 %v4191, 64
  %v4720 = vpop.permute.xlu0 %4719
  %4721 = vrot.lane.b32.xlu0 %v4192, 64
  %v4722 = vpop.permute.xlu0 %4721
  %4723 = vrot.lane.b32.xlu0 %v4193, 64
  %v4724 = vpop.permute.xlu0 %4723
  %4725 = vrot.lane.b32.xlu0 %v4194, 64
  %v4726 = vpop.permute.xlu0 %4725
  %4727 = vrot.lane.b32.xlu0 %v4195, 64
  %v4728 = vpop.permute.xlu0 %4727
  %4729 = vrot.lane.b32.xlu0 %v4196, 64
  %v4730 = vpop.permute.xlu0 %4729
  %4731 = vrot.lane.b32.xlu0 %v4197, 64
  %v4732 = vpop.permute.xlu0 %4731
  %4733 = vrot.lane.b32.xlu0 %v4198, 64
  %v4734 = vpop.permute.xlu0 %4733
  %4735 = vrot.lane.b32.xlu0 %v4199, 64
  %v4736 = vpop.permute.xlu0 %4735
  %4737 = vrot.lane.b32.xlu0 %v4200, 64
  %v4738 = vpop.permute.xlu0 %4737
  %4739 = vrot.lane.b32.xlu0 %v4201, 64
  %v4740 = vpop.permute.xlu0 %4739
  %4741 = vrot.lane.b32.xlu0 %v4202, 64
  %v4742 = vpop.permute.xlu0 %4741
  %4743 = vrot.lane.b32.xlu0 %v4203, 64
  %v4744 = vpop.permute.xlu0 %4743
  %4745 = vrot.lane.b32.xlu0 %v4204, 64
  %v4746 = vpop.permute.xlu0 %4745
  %4747 = vrot.lane.b32.xlu0 %v4205, 64
  %v4748 = vpop.permute.xlu0 %4747
  %4847 = vrot.lane.b32.xlu0 %v4206, 96
  %v4848 = vpop.permute.xlu0 %4847
  %4849 = vrot.lane.b32.xlu0 %v4207, 96
  %v4850 = vpop.permute.xlu0 %4849
  %4851 = vrot.lane.b32.xlu0 %v4208, 96
  %v4852 = vpop.permute.xlu0 %4851
  %4853 = vrot.lane.b32.xlu0 %v4209, 96
  %v4854 = vpop.permute.xlu0 %4853
  %4855 = vrot.lane.b32.xlu0 %v4210, 96
  %v4856 = vpop.permute.xlu0 %4855
  %4857 = vrot.lane.b32.xlu0 %v4211, 96
  %v4858 = vpop.permute.xlu0 %4857
  %4859 = vrot.lane.b32.xlu0 %v4212, 96
  %v4860 = vpop.permute.xlu0 %4859
  %4861 = vrot.lane.b32.xlu0 %v4213, 96
  %v4862 = vpop.permute.xlu0 %4861
  %4863 = vrot.lane.b32.xlu0 %v4214, 96
  %v4864 = vpop.permute.xlu0 %4863
  %4865 = vrot.lane.b32.xlu0 %v4215, 96
  %v4866 = vpop.permute.xlu0 %4865
  %4867 = vrot.lane.b32.xlu0 %v4216, 96
  %v4868 = vpop.permute.xlu0 %4867
  %4869 = vrot.lane.b32.xlu0 %v4217, 96
  %v4870 = vpop.permute.xlu0 %4869
  %4871 = vrot.lane.b32.xlu0 %v4218, 96
  %v4872 = vpop.permute.xlu0 %4871
  %4873 = vrot.lane.b32.xlu0 %v4219, 96
  %v4874 = vpop.permute.xlu0 %4873
  %4875 = vrot.lane.b32.xlu0 %v4220, 96
  %v4876 = vpop.permute.xlu0 %4875
  %4877 = vrot.lane.b32.xlu0 %v4221, 96
  %v4878 = vpop.permute.xlu0 %4877
  %4879 = vrot.lane.b32.xlu0 %v4222, 96
  %v4880 = vpop.permute.xlu0 %4879
  %4881 = vrot.lane.b32.xlu0 %v4223, 96
  %v4882 = vpop.permute.xlu0 %4881
  %4883 = vrot.lane.b32.xlu0 %v4224, 96
  %v4884 = vpop.permute.xlu0 %4883
  %4885 = vrot.lane.b32.xlu0 %v4225, 96
  %v4886 = vpop.permute.xlu0 %4885
  %4887 = vrot.lane.b32.xlu0 %v4226, 96
  %v4888 = vpop.permute.xlu0 %4887
  %4889 = vrot.lane.b32.xlu0 %v4227, 96
  %v4890 = vpop.permute.xlu0 %4889
  %4891 = vrot.lane.b32.xlu0 %v4228, 96
  %v4892 = vpop.permute.xlu0 %4891
  %4893 = vrot.lane.b32.xlu0 %v4229, 96
  %v4894 = vpop.permute.xlu0 %4893
  %4895 = vrot.lane.b32.xlu0 %v4230, 96
  %v4896 = vpop.permute.xlu0 %4895
  %4897 = vrot.lane.b32.xlu0 %v4231, 96
  %v4898 = vpop.permute.xlu0 %4897
  %4899 = vrot.lane.b32.xlu0 %v4232, 96
  %v4900 = vpop.permute.xlu0 %4899
  %4901 = vrot.lane.b32.xlu0 %v4233, 96
  %v4902 = vpop.permute.xlu0 %4901
  %4903 = vrot.lane.b32.xlu0 %v4234, 96
  %v4904 = vpop.permute.xlu0 %4903
  %4905 = vrot.lane.b32.xlu0 %v4235, 96
  %v4906 = vpop.permute.xlu0 %4905
  %4907 = vrot.lane.b32.xlu0 %v4236, 96
  %v4908 = vpop.permute.xlu0 %4907
  %4909 = vrot.lane.b32.xlu0 %v4237, 96
  %v4910 = vpop.permute.xlu0 %4909
  %4911 = vrot.lane.b32.xlu0 %v4238, 96
  %v4912 = vpop.permute.xlu0 %4911
  %4913 = vrot.lane.b32.xlu0 %v4239, 96
  %v4914 = vpop.permute.xlu0 %4913
  %4915 = vrot.lane.b32.xlu0 %v4240, 96
  %v4916 = vpop.permute.xlu0 %4915
  %4917 = vrot.lane.b32.xlu0 %v4241, 96
  %v4918 = vpop.permute.xlu0 %4917
  %4919 = vrot.lane.b32.xlu0 %v4242, 96
  %v4920 = vpop.permute.xlu0 %4919
  %4921 = vrot.lane.b32.xlu0 %v4243, 96
  %v4922 = vpop.permute.xlu0 %4921
  %4923 = vrot.lane.b32.xlu0 %v4244, 96
  %v4924 = vpop.permute.xlu0 %4923
  %4925 = vrot.lane.b32.xlu0 %v4245, 96
  %v4926 = vpop.permute.xlu0 %4925
  %4927 = vrot.lane.b32.xlu0 %v4246, 96
  %v4928 = vpop.permute.xlu0 %4927
  %4929 = vrot.lane.b32.xlu0 %v4247, 96
  %v4930 = vpop.permute.xlu0 %4929
  %4931 = vrot.lane.b32.xlu0 %v4248, 96
  %v4932 = vpop.permute.xlu0 %4931
  %4933 = vrot.lane.b32.xlu0 %v4249, 96
  %v4934 = vpop.permute.xlu0 %4933
  %4935 = vrot.lane.b32.xlu0 %v4250, 96
  %v4936 = vpop.permute.xlu0 %4935
  %4937 = vrot.lane.b32.xlu0 %v4251, 96
  %v4938 = vpop.permute.xlu0 %4937
  %4939 = vrot.lane.b32.xlu0 %v4252, 96
  %v4940 = vpop.permute.xlu0 %4939
  %4941 = vrot.lane.b32.xlu0 %v4253, 96
  %v4942 = vpop.permute.xlu0 %4941
  %4943 = vrot.lane.b32.xlu0 %v4254, 96
  %v4944 = vpop.permute.xlu0 %4943
  %5043 = vrot.lane.b32.xlu0 %v4061, 32
  %v5044 = vpop.permute.xlu0 %5043
  %5045 = vrot.lane.b32.xlu0 %v4062, 32
  %v5046 = vpop.permute.xlu0 %5045
  %5047 = vrot.lane.b32.xlu0 %v4063, 32
  %v5048 = vpop.permute.xlu0 %5047
  %5049 = vrot.lane.b32.xlu0 %v4064, 32
  %v5050 = vpop.permute.xlu0 %5049
  %5051 = vrot.lane.b32.xlu0 %v4065, 32
  %v5052 = vpop.permute.xlu0 %5051
  %5053 = vrot.lane.b32.xlu0 %v4066, 32
  %v5054 = vpop.permute.xlu0 %5053
  %5055 = vrot.lane.b32.xlu0 %v4067, 32
  %v5056 = vpop.permute.xlu0 %5055
  %5057 = vrot.lane.b32.xlu0 %v4068, 32
  %v5058 = vpop.permute.xlu0 %5057
  %5059 = vrot.lane.b32.xlu0 %v4069, 32
  %v5060 = vpop.permute.xlu0 %5059
  %5061 = vrot.lane.b32.xlu0 %v4070, 32
  %v5062 = vpop.permute.xlu0 %5061
  %5063 = vrot.lane.b32.xlu0 %v4071, 32
  %v5064 = vpop.permute.xlu0 %5063
  %5065 = vrot.lane.b32.xlu0 %v4072, 32
  %v5066 = vpop.permute.xlu0 %5065
  %5067 = vrot.lane.b32.xlu0 %v4073, 32
  %v5068 = vpop.permute.xlu0 %5067
  %5069 = vrot.lane.b32.xlu0 %v4074, 32
  %v5070 = vpop.permute.xlu0 %5069
  %5071 = vrot.lane.b32.xlu0 %v4075, 32
  %v5072 = vpop.permute.xlu0 %5071
  %5073 = vrot.lane.b32.xlu0 %v4076, 32
  %v5074 = vpop.permute.xlu0 %5073
  %5075 = vrot.lane.b32.xlu0 %v4077, 32
  %v5076 = vpop.permute.xlu0 %5075
  %5077 = vrot.lane.b32.xlu0 %v4078, 32
  %v5078 = vpop.permute.xlu0 %5077
  %5079 = vrot.lane.b32.xlu0 %v4079, 32
  %v5080 = vpop.permute.xlu0 %5079
  %5081 = vrot.lane.b32.xlu0 %v4080, 32
  %v5082 = vpop.permute.xlu0 %5081
  %5083 = vrot.lane.b32.xlu0 %v4081, 32
  %v5084 = vpop.permute.xlu0 %5083
  %5085 = vrot.lane.b32.xlu0 %v4082, 32
  %v5086 = vpop.permute.xlu0 %5085
  %5087 = vrot.lane.b32.xlu0 %v4083, 32
  %v5088 = vpop.permute.xlu0 %5087
  %5089 = vrot.lane.b32.xlu0 %v4084, 32
  %v5090 = vpop.permute.xlu0 %5089
  %5091 = vrot.lane.b32.xlu0 %v4085, 32
  %v5092 = vpop.permute.xlu0 %5091
  %5093 = vrot.lane.b32.xlu0 %v4086, 32
  %v5094 = vpop.permute.xlu0 %5093
  %5095 = vrot.lane.b32.xlu0 %v4087, 32
  %v5096 = vpop.permute.xlu0 %5095
  %5097 = vrot.lane.b32.xlu0 %v4088, 32
  %v5098 = vpop.permute.xlu0 %5097
  %5099 = vrot.lane.b32.xlu0 %v4089, 32
  %v5100 = vpop.permute.xlu0 %5099
  %5101 = vrot.lane.b32.xlu0 %v4090, 32
  %v5102 = vpop.permute.xlu0 %5101
  %5103 = vrot.lane.b32.xlu0 %v4091, 32
  %v5104 = vpop.permute.xlu0 %5103
  %5105 = vrot.lane.b32.xlu0 %v4092, 32
  %v5106 = vpop.permute.xlu0 %5105
  %5107 = vrot.lane.b32.xlu0 %v4093, 32
  %v5108 = vpop.permute.xlu0 %5107
  %5109 = vrot.lane.b32.xlu0 %v4094, 32
  %v5110 = vpop.permute.xlu0 %5109
  %5111 = vrot.lane.b32.xlu0 %v4095, 32
  %v5112 = vpop.permute.xlu0 %5111
  %5113 = vrot.lane.b32.xlu0 %v4096, 32
  %v5114 = vpop.permute.xlu0 %5113
  %5115 = vrot.lane.b32.xlu0 %v4097, 32
  %v5116 = vpop.permute.xlu0 %5115
  %5117 = vrot.lane.b32.xlu0 %v4098, 32
  %v5118 = vpop.permute.xlu0 %5117
  %5119 = vrot.lane.b32.xlu0 %v4099, 32
  %v5120 = vpop.permute.xlu0 %5119
  %5121 = vrot.lane.b32.xlu0 %v4100, 32
  %v5122 = vpop.permute.xlu0 %5121
  %5123 = vrot.lane.b32.xlu0 %v4101, 32
  %v5124 = vpop.permute.xlu0 %5123
  %5125 = vrot.lane.b32.xlu0 %v4102, 32
  %v5126 = vpop.permute.xlu0 %5125
  %5127 = vrot.lane.b32.xlu0 %v4103, 32
  %v5128 = vpop.permute.xlu0 %5127
  %5129 = vrot.lane.b32.xlu0 %v4104, 32
  %v5130 = vpop.permute.xlu0 %5129
  %5131 = vrot.lane.b32.xlu0 %v4105, 32
  %v5132 = vpop.permute.xlu0 %5131
  %5133 = vrot.lane.b32.xlu0 %v4106, 32
  %v5134 = vpop.permute.xlu0 %5133
  %5135 = vrot.lane.b32.xlu0 %v4107, 32
  %v5136 = vpop.permute.xlu0 %5135
  %5137 = vrot.lane.b32.xlu0 %v4304, 32
  %v5138 = vpop.permute.xlu0 %5137
  %5139 = vrot.lane.b32.xlu0 %v4305, 32
  %v5140 = vpop.permute.xlu0 %5139
  %5239 = vrot.lane.b32.xlu0 %v4306, 64
  %v5240 = vpop.permute.xlu0 %5239
  %5241 = vrot.lane.b32.xlu0 %v4307, 64
  %v5242 = vpop.permute.xlu0 %5241
  %5243 = vrot.lane.b32.xlu0 %v4308, 64
  %v5244 = vpop.permute.xlu0 %5243
  %5245 = vrot.lane.b32.xlu0 %v4309, 64
  %v5246 = vpop.permute.xlu0 %5245
  %5247 = vrot.lane.b32.xlu0 %v4310, 64
  %v5248 = vpop.permute.xlu0 %5247
  %5249 = vrot.lane.b32.xlu0 %v4311, 64
  %v5250 = vpop.permute.xlu0 %5249
  %5251 = vrot.lane.b32.xlu0 %v4312, 64
  %v5252 = vpop.permute.xlu0 %5251
  %5253 = vrot.lane.b32.xlu0 %v4313, 64
  %v5254 = vpop.permute.xlu0 %5253
  %5255 = vrot.lane.b32.xlu0 %v4314, 64
  %v5256 = vpop.permute.xlu0 %5255
  %5257 = vrot.lane.b32.xlu0 %v4315, 64
  %v5258 = vpop.permute.xlu0 %5257
  %5259 = vrot.lane.b32.xlu0 %v4316, 64
  %v5260 = vpop.permute.xlu0 %5259
  %5261 = vrot.lane.b32.xlu0 %v4317, 64
  %v5262 = vpop.permute.xlu0 %5261
  %5263 = vrot.lane.b32.xlu0 %v4318, 64
  %v5264 = vpop.permute.xlu0 %5263
  %5265 = vrot.lane.b32.xlu0 %v4319, 64
  %v5266 = vpop.permute.xlu0 %5265
  %5267 = vrot.lane.b32.xlu0 %v4320, 64
  %v5268 = vpop.permute.xlu0 %5267
  %5269 = vrot.lane.b32.xlu0 %v4321, 64
  %v5270 = vpop.permute.xlu0 %5269
  %5271 = vrot.lane.b32.xlu0 %v4322, 64
  %v5272 = vpop.permute.xlu0 %5271
  %5273 = vrot.lane.b32.xlu0 %v4323, 64
  %v5274 = vpop.permute.xlu0 %5273
  %5275 = vrot.lane.b32.xlu0 %v4324, 64
  %v5276 = vpop.permute.xlu0 %5275
  %5277 = vrot.lane.b32.xlu0 %v4325, 64
  %v5278 = vpop.permute.xlu0 %5277
  %5279 = vrot.lane.b32.xlu0 %v4326, 64
  %v5280 = vpop.permute.xlu0 %5279
  %5281 = vrot.lane.b32.xlu0 %v4327, 64
  %v5282 = vpop.permute.xlu0 %5281
  %5283 = vrot.lane.b32.xlu0 %v4328, 64
  %v5284 = vpop.permute.xlu0 %5283
  %5285 = vrot.lane.b32.xlu0 %v4329, 64
  %v5286 = vpop.permute.xlu0 %5285
  %5287 = vrot.lane.b32.xlu0 %v4330, 64
  %v5288 = vpop.permute.xlu0 %5287
  %5289 = vrot.lane.b32.xlu0 %v4331, 64
  %v5290 = vpop.permute.xlu0 %5289
  %5291 = vrot.lane.b32.xlu0 %v4332, 64
  %v5292 = vpop.permute.xlu0 %5291
  %5293 = vrot.lane.b32.xlu0 %v4333, 64
  %v5294 = vpop.permute.xlu0 %5293
  %5295 = vrot.lane.b32.xlu0 %v4334, 64
  %v5296 = vpop.permute.xlu0 %5295
  %5297 = vrot.lane.b32.xlu0 %v4335, 64
  %v5298 = vpop.permute.xlu0 %5297
  %5299 = vrot.lane.b32.xlu0 %v4336, 64
  %v5300 = vpop.permute.xlu0 %5299
  %5301 = vrot.lane.b32.xlu0 %v4337, 64
  %v5302 = vpop.permute.xlu0 %5301
  %5303 = vrot.lane.b32.xlu0 %v4338, 64
  %v5304 = vpop.permute.xlu0 %5303
  %5305 = vrot.lane.b32.xlu0 %v4339, 64
  %v5306 = vpop.permute.xlu0 %5305
  %5307 = vrot.lane.b32.xlu0 %v4340, 64
  %v5308 = vpop.permute.xlu0 %5307
  %5309 = vrot.lane.b32.xlu0 %v4341, 64
  %v5310 = vpop.permute.xlu0 %5309
  %5311 = vrot.lane.b32.xlu0 %v4342, 64
  %v5312 = vpop.permute.xlu0 %5311
  %5313 = vrot.lane.b32.xlu0 %v4343, 64
  %v5314 = vpop.permute.xlu0 %5313
  %5315 = vrot.lane.b32.xlu0 %v4344, 64
  %v5316 = vpop.permute.xlu0 %5315
  %5317 = vrot.lane.b32.xlu0 %v4345, 64
  %v5318 = vpop.permute.xlu0 %5317
  %5319 = vrot.lane.b32.xlu0 %v4346, 64
  %v5320 = vpop.permute.xlu0 %5319
  %5321 = vrot.lane.b32.xlu0 %v4347, 64
  %v5322 = vpop.permute.xlu0 %5321
  %5323 = vrot.lane.b32.xlu0 %v4348, 64
  %v5324 = vpop.permute.xlu0 %5323
  %5325 = vrot.lane.b32.xlu0 %v4349, 64
  %v5326 = vpop.permute.xlu0 %5325
  %5327 = vrot.lane.b32.xlu0 %v4350, 64
  %v5328 = vpop.permute.xlu0 %5327
  %5329 = vrot.lane.b32.xlu0 %v4351, 64
  %v5330 = vpop.permute.xlu0 %5329
  %5331 = vrot.lane.b32.xlu0 %v4352, 64
  %v5332 = vpop.permute.xlu0 %5331
  %5333 = vrot.lane.b32.xlu0 %v4353, 64
  %v5334 = vpop.permute.xlu0 %5333
  %5335 = vrot.lane.b32.xlu0 %v4354, 64
  %v5336 = vpop.permute.xlu0 %5335
  %5435 = vrot.lane.b32.xlu0 %v4355, 96
  %v5436 = vpop.permute.xlu0 %5435
  %5437 = vrot.lane.b32.xlu0 %v4356, 96
  %v5438 = vpop.permute.xlu0 %5437
  %5439 = vrot.lane.b32.xlu0 %v4357, 96
  %v5440 = vpop.permute.xlu0 %5439
  %5441 = vrot.lane.b32.xlu0 %v4358, 96
  %v5442 = vpop.permute.xlu0 %5441
  %5443 = vrot.lane.b32.xlu0 %v4359, 96
  %v5444 = vpop.permute.xlu0 %5443
  %5445 = vrot.lane.b32.xlu0 %v4360, 96
  %v5446 = vpop.permute.xlu0 %5445
  %5447 = vrot.lane.b32.xlu0 %v4361, 96
  %v5448 = vpop.permute.xlu0 %5447
  %5449 = vrot.lane.b32.xlu0 %v4362, 96
  %v5450 = vpop.permute.xlu0 %5449
  %5451 = vrot.lane.b32.xlu0 %v4363, 96
  %v5452 = vpop.permute.xlu0 %5451
  %5453 = vrot.lane.b32.xlu0 %v4364, 96
  %v5454 = vpop.permute.xlu0 %5453
  %5455 = vrot.lane.b32.xlu0 %v4365, 96
  %v5456 = vpop.permute.xlu0 %5455
  %5457 = vrot.lane.b32.xlu0 %v4366, 96
  %v5458 = vpop.permute.xlu0 %5457
  %5459 = vrot.lane.b32.xlu0 %v4367, 96
  %v5460 = vpop.permute.xlu0 %5459
  %5461 = vrot.lane.b32.xlu0 %v4368, 96
  %v5462 = vpop.permute.xlu0 %5461
  %5463 = vrot.lane.b32.xlu0 %v4369, 96
  %v5464 = vpop.permute.xlu0 %5463
  %5465 = vrot.lane.b32.xlu0 %v4370, 96
  %v5466 = vpop.permute.xlu0 %5465
  %5467 = vrot.lane.b32.xlu0 %v4371, 96
  %v5468 = vpop.permute.xlu0 %5467
  %5469 = vrot.lane.b32.xlu0 %v4372, 96
  %v5470 = vpop.permute.xlu0 %5469
  %5471 = vrot.lane.b32.xlu0 %v4373, 96
  %v5472 = vpop.permute.xlu0 %5471
  %5473 = vrot.lane.b32.xlu0 %v4374, 96
  %v5474 = vpop.permute.xlu0 %5473
  %5475 = vrot.lane.b32.xlu0 %v4375, 96
  %v5476 = vpop.permute.xlu0 %5475
  %5477 = vrot.lane.b32.xlu0 %v4376, 96
  %v5478 = vpop.permute.xlu0 %5477
  %5479 = vrot.lane.b32.xlu0 %v4377, 96
  %v5480 = vpop.permute.xlu0 %5479
  %5481 = vrot.lane.b32.xlu0 %v4378, 96
  %v5482 = vpop.permute.xlu0 %5481
  %5483 = vrot.lane.b32.xlu0 %v4379, 96
  %v5484 = vpop.permute.xlu0 %5483
  %5485 = vrot.lane.b32.xlu0 %v4380, 96
  %v5486 = vpop.permute.xlu0 %5485
  %5487 = vrot.lane.b32.xlu0 %v4381, 96
  %v5488 = vpop.permute.xlu0 %5487
  %5489 = vrot.lane.b32.xlu0 %v4382, 96
  %v5490 = vpop.permute.xlu0 %5489
  %5491 = vrot.lane.b32.xlu0 %v4383, 96
  %v5492 = vpop.permute.xlu0 %5491
  %5493 = vrot.lane.b32.xlu0 %v4384, 96
  %v5494 = vpop.permute.xlu0 %5493
  %5495 = vrot.lane.b32.xlu0 %v4385, 96
  %v5496 = vpop.permute.xlu0 %5495
  %5497 = vrot.lane.b32.xlu0 %v4386, 96
  %v5498 = vpop.permute.xlu0 %5497
  %5499 = vrot.lane.b32.xlu0 %v4387, 96
  %v5500 = vpop.permute.xlu0 %5499
  %5501 = vrot.lane.b32.xlu0 %v4388, 96
  %v5502 = vpop.permute.xlu0 %5501
  %5503 = vrot.lane.b32.xlu0 %v4389, 96
  %v5504 = vpop.permute.xlu0 %5503
  %5505 = vrot.lane.b32.xlu0 %v4390, 96
  %v5506 = vpop.permute.xlu0 %5505
  %5507 = vrot.lane.b32.xlu0 %v4391, 96
  %v5508 = vpop.permute.xlu0 %5507
  %5509 = vrot.lane.b32.xlu0 %v4392, 96
  %v5510 = vpop.permute.xlu0 %5509
  %5511 = vrot.lane.b32.xlu0 %v4393, 96
  %v5512 = vpop.permute.xlu0 %5511
  %5513 = vrot.lane.b32.xlu0 %v4394, 96
  %v5514 = vpop.permute.xlu0 %5513
  %5515 = vrot.lane.b32.xlu0 %v4395, 96
  %v5516 = vpop.permute.xlu0 %5515
  %5517 = vrot.lane.b32.xlu0 %v4396, 96
  %v5518 = vpop.permute.xlu0 %5517
  %5519 = vrot.lane.b32.xlu0 %v4397, 96
  %v5520 = vpop.permute.xlu0 %5519
  %5521 = vrot.lane.b32.xlu0 %v4398, 96
  %v5522 = vpop.permute.xlu0 %5521
  %5523 = vrot.lane.b32.xlu0 %v4399, 96
  %v5524 = vpop.permute.xlu0 %5523
  %5525 = vrot.lane.b32.xlu0 %v4400, 96
  %v5526 = vpop.permute.xlu0 %5525
  %5527 = vrot.lane.b32.xlu0 %v4401, 96
  %v5528 = vpop.permute.xlu0 %5527
  %5529 = vrot.lane.b32.xlu0 %v4402, 96
  %v5530 = vpop.permute.xlu0 %5529
  %5531 = vrot.lane.b32.xlu0 %v4403, 96
  %v5532 = vpop.permute.xlu0 %5531
  %v5582 = vsel %vm1320, %v4059, %v4456
  %v5583 = vsel %vm1320, %v4060, %v4458
  %v5584 = vsel %vm1320, %v4061, %v4460
  %v5585 = vsel %vm1320, %v4062, %v4462
  %v5586 = vsel %vm1320, %v4063, %v4464
  %v5587 = vsel %vm1320, %v4064, %v4466
  %v5588 = vsel %vm1320, %v4065, %v4468
  %v5589 = vsel %vm1320, %v4066, %v4470
  %v5590 = vsel %vm1320, %v4067, %v4472
  %v5591 = vsel %vm1320, %v4068, %v4474
  %v5592 = vsel %vm1320, %v4069, %v4476
  %v5593 = vsel %vm1320, %v4070, %v4478
  %v5594 = vsel %vm1320, %v4071, %v4480
  %v5595 = vsel %vm1320, %v4072, %v4482
  %v5596 = vsel %vm1320, %v4073, %v4484
  %v5597 = vsel %vm1320, %v4074, %v4486
  %v5598 = vsel %vm1320, %v4075, %v4488
  %v5599 = vsel %vm1320, %v4076, %v4490
  %v5600 = vsel %vm1320, %v4077, %v4492
  %v5601 = vsel %vm1320, %v4078, %v4494
  %v5602 = vsel %vm1320, %v4079, %v4496
  %v5603 = vsel %vm1320, %v4080, %v4498
  %v5604 = vsel %vm1320, %v4081, %v4500
  %v5605 = vsel %vm1320, %v4082, %v4502
  %v5606 = vsel %vm1320, %v4083, %v4504
  %v5607 = vsel %vm1320, %v4084, %v4506
  %v5608 = vsel %vm1320, %v4085, %v4508
  %v5609 = vsel %vm1320, %v4086, %v4510
  %v5610 = vsel %vm1320, %v4087, %v4512
  %v5611 = vsel %vm1320, %v4088, %v4514
  %v5612 = vsel %vm1320, %v4089, %v4516
  %v5613 = vsel %vm1320, %v4090, %v4518
  %v5614 = vsel %vm1320, %v4091, %v4520
  %v5615 = vsel %vm1320, %v4092, %v4522
  %v5616 = vsel %vm1320, %v4093, %v4524
  %v5617 = vsel %vm1320, %v4094, %v4526
  %v5618 = vsel %vm1320, %v4095, %v4528
  %v5619 = vsel %vm1320, %v4096, %v4530
  %v5620 = vsel %vm1320, %v4097, %v4532
  %v5621 = vsel %vm1320, %v4098, %v4534
  %v5622 = vsel %vm1320, %v4099, %v4536
  %v5623 = vsel %vm1320, %v4100, %v4538
  %v5624 = vsel %vm1320, %v4101, %v4540
  %v5625 = vsel %vm1320, %v4102, %v4542
  %v5626 = vsel %vm1320, %v4103, %v4544
  %v5627 = vsel %vm1320, %v4104, %v4546
  %v5628 = vsel %vm1320, %v4105, %v4548
  %v5629 = vsel %vm1320, %v4106, %v4550
  %v5630 = vsel %vm1320, %v4107, %v4552
  %v5631 = vsel %vm700, %v5582, %v4652
  %v5632 = vsel %vm700, %v5583, %v4654
  %v5633 = vsel %vm700, %v5584, %v4656
  %v5634 = vsel %vm700, %v5585, %v4658
  %v5635 = vsel %vm700, %v5586, %v4660
  %v5636 = vsel %vm700, %v5587, %v4662
  %v5637 = vsel %vm700, %v5588, %v4664
  %v5638 = vsel %vm700, %v5589, %v4666
  %v5639 = vsel %vm700, %v5590, %v4668
  %v5640 = vsel %vm700, %v5591, %v4670
  %v5641 = vsel %vm700, %v5592, %v4672
  %v5642 = vsel %vm700, %v5593, %v4674
  %v5643 = vsel %vm700, %v5594, %v4676
  %v5644 = vsel %vm700, %v5595, %v4678
  %v5645 = vsel %vm700, %v5596, %v4680
  %v5646 = vsel %vm700, %v5597, %v4682
  %v5647 = vsel %vm700, %v5598, %v4684
  %v5648 = vsel %vm700, %v5599, %v4686
  %v5649 = vsel %vm700, %v5600, %v4688
  %v5650 = vsel %vm700, %v5601, %v4690
  %v5651 = vsel %vm700, %v5602, %v4692
  %v5652 = vsel %vm700, %v5603, %v4694
  %v5653 = vsel %vm700, %v5604, %v4696
  %v5654 = vsel %vm700, %v5605, %v4698
  %v5655 = vsel %vm700, %v5606, %v4700
  %v5656 = vsel %vm700, %v5607, %v4702
  %v5657 = vsel %vm700, %v5608, %v4704
  %v5658 = vsel %vm700, %v5609, %v4706
  %v5659 = vsel %vm700, %v5610, %v4708
  %v5660 = vsel %vm700, %v5611, %v4710
  %v5661 = vsel %vm700, %v5612, %v4712
  %v5662 = vsel %vm700, %v5613, %v4714
  %v5663 = vsel %vm700, %v5614, %v4716
  %v5664 = vsel %vm700, %v5615, %v4718
  %v5665 = vsel %vm700, %v5616, %v4720
  %v5666 = vsel %vm700, %v5617, %v4722
  %v5667 = vsel %vm700, %v5618, %v4724
  %v5668 = vsel %vm700, %v5619, %v4726
  %v5669 = vsel %vm700, %v5620, %v4728
  %v5670 = vsel %vm700, %v5621, %v4730
  %v5671 = vsel %vm700, %v5622, %v4732
  %v5672 = vsel %vm700, %v5623, %v4734
  %v5673 = vsel %vm700, %v5624, %v4736
  %v5674 = vsel %vm700, %v5625, %v4738
  %v5675 = vsel %vm700, %v5626, %v4740
  %v5676 = vsel %vm700, %v5627, %v4742
  %v5677 = vsel %vm700, %v5628, %v4744
  %v5678 = vsel %vm700, %v5629, %v4746
  %v5679 = vsel %vm700, %v5630, %v4748
  %v5680 = vsel %vm2996, %v5631, %v4848
  %v5681 = vsel %vm2996, %v5632, %v4850
  %v5682 = vsel %vm2996, %v5633, %v4852
  %v5683 = vsel %vm2996, %v5634, %v4854
  %v5684 = vsel %vm2996, %v5635, %v4856
  %v5685 = vsel %vm2996, %v5636, %v4858
  %v5686 = vsel %vm2996, %v5637, %v4860
  %v5687 = vsel %vm2996, %v5638, %v4862
  %v5688 = vsel %vm2996, %v5639, %v4864
  %v5689 = vsel %vm2996, %v5640, %v4866
  %v5690 = vsel %vm2996, %v5641, %v4868
  %v5691 = vsel %vm2996, %v5642, %v4870
  %v5692 = vsel %vm2996, %v5643, %v4872
  %v5693 = vsel %vm2996, %v5644, %v4874
  %v5694 = vsel %vm2996, %v5645, %v4876
  %v5695 = vsel %vm2996, %v5646, %v4878
  %v5696 = vsel %vm2996, %v5647, %v4880
  %v5697 = vsel %vm2996, %v5648, %v4882
  %v5698 = vsel %vm2996, %v5649, %v4884
  %v5699 = vsel %vm2996, %v5650, %v4886
  %v5700 = vsel %vm2996, %v5651, %v4888
  %v5701 = vsel %vm2996, %v5652, %v4890
  %v5702 = vsel %vm2996, %v5653, %v4892
  %v5703 = vsel %vm2996, %v5654, %v4894
  %v5704 = vsel %vm2996, %v5655, %v4896
  %v5705 = vsel %vm2996, %v5656, %v4898
  %v5706 = vsel %vm2996, %v5657, %v4900
  %v5707 = vsel %vm2996, %v5658, %v4902
  %v5708 = vsel %vm2996, %v5659, %v4904
  %v5709 = vsel %vm2996, %v5660, %v4906
  %v5710 = vsel %vm2996, %v5661, %v4908
  %v5711 = vsel %vm2996, %v5662, %v4910
  %v5712 = vsel %vm2996, %v5663, %v4912
  %v5713 = vsel %vm2996, %v5664, %v4914
  %v5714 = vsel %vm2996, %v5665, %v4916
  %v5715 = vsel %vm2996, %v5666, %v4918
  %v5716 = vsel %vm2996, %v5667, %v4920
  %v5717 = vsel %vm2996, %v5668, %v4922
  %v5718 = vsel %vm2996, %v5669, %v4924
  %v5719 = vsel %vm2996, %v5670, %v4926
  %v5720 = vsel %vm2996, %v5671, %v4928
  %v5721 = vsel %vm2996, %v5672, %v4930
  %v5722 = vsel %vm2996, %v5673, %v4932
  %v5723 = vsel %vm2996, %v5674, %v4934
  %v5724 = vsel %vm2996, %v5675, %v4936
  %v5725 = vsel %vm2996, %v5676, %v4938
  %v5726 = vsel %vm2996, %v5677, %v4940
  %v5727 = vsel %vm2996, %v5678, %v4942
  %v5728 = vsel %vm2996, %v5679, %v4944
  %v5729 = vsel %vm1320, %v4255, %v5044
  %v5730 = vsel %vm1320, %v4256, %v5046
  %v5731 = vsel %vm1320, %v4257, %v5048
  %v5732 = vsel %vm1320, %v4258, %v5050
  %v5733 = vsel %vm1320, %v4259, %v5052
  %v5734 = vsel %vm1320, %v4260, %v5054
  %v5735 = vsel %vm1320, %v4261, %v5056
  %v5736 = vsel %vm1320, %v4262, %v5058
  %v5737 = vsel %vm1320, %v4263, %v5060
  %v5738 = vsel %vm1320, %v4264, %v5062
  %v5739 = vsel %vm1320, %v4265, %v5064
  %v5740 = vsel %vm1320, %v4266, %v5066
  %v5741 = vsel %vm1320, %v4267, %v5068
  %v5742 = vsel %vm1320, %v4268, %v5070
  %v5743 = vsel %vm1320, %v4269, %v5072
  %v5744 = vsel %vm1320, %v4270, %v5074
  %v5745 = vsel %vm1320, %v4271, %v5076
  %v5746 = vsel %vm1320, %v4272, %v5078
  %v5747 = vsel %vm1320, %v4273, %v5080
  %v5748 = vsel %vm1320, %v4274, %v5082
  %v5749 = vsel %vm1320, %v4275, %v5084
  %v5750 = vsel %vm1320, %v4276, %v5086
  %v5751 = vsel %vm1320, %v4277, %v5088
  %v5752 = vsel %vm1320, %v4278, %v5090
  %v5753 = vsel %vm1320, %v4279, %v5092
  %v5754 = vsel %vm1320, %v4280, %v5094
  %v5755 = vsel %vm1320, %v4281, %v5096
  %v5756 = vsel %vm1320, %v4282, %v5098
  %v5757 = vsel %vm1320, %v4283, %v5100
  %v5758 = vsel %vm1320, %v4284, %v5102
  %v5759 = vsel %vm1320, %v4285, %v5104
  %v5760 = vsel %vm1320, %v4286, %v5106
  %v5761 = vsel %vm1320, %v4287, %v5108
  %v5762 = vsel %vm1320, %v4288, %v5110
  %v5763 = vsel %vm1320, %v4289, %v5112
  %v5764 = vsel %vm1320, %v4290, %v5114
  %v5765 = vsel %vm1320, %v4291, %v5116
  %v5766 = vsel %vm1320, %v4292, %v5118
  %v5767 = vsel %vm1320, %v4293, %v5120
  %v5768 = vsel %vm1320, %v4294, %v5122
  %v5769 = vsel %vm1320, %v4295, %v5124
  %v5770 = vsel %vm1320, %v4296, %v5126
  %v5771 = vsel %vm1320, %v4297, %v5128
  %v5772 = vsel %vm1320, %v4298, %v5130
  %v5773 = vsel %vm1320, %v4299, %v5132
  %v5774 = vsel %vm1320, %v4300, %v5134
  %v5775 = vsel %vm1320, %v4301, %v5136
  %v5776 = vsel %vm1320, %v4302, %v5138
  %v5777 = vsel %vm1320, %v4303, %v5140
  %v5778 = vsel %vm700, %v5729, %v5240
  %v5779 = vsel %vm700, %v5730, %v5242
  %v5780 = vsel %vm700, %v5731, %v5244
  %v5781 = vsel %vm700, %v5732, %v5246
  %v5782 = vsel %vm700, %v5733, %v5248
  %v5783 = vsel %vm700, %v5734, %v5250
  %v5784 = vsel %vm700, %v5735, %v5252
  %v5785 = vsel %vm700, %v5736, %v5254
  %v5786 = vsel %vm700, %v5737, %v5256
  %v5787 = vsel %vm700, %v5738, %v5258
  %v5788 = vsel %vm700, %v5739, %v5260
  %v5789 = vsel %vm700, %v5740, %v5262
  %v5790 = vsel %vm700, %v5741, %v5264
  %v5791 = vsel %vm700, %v5742, %v5266
  %v5792 = vsel %vm700, %v5743, %v5268
  %v5793 = vsel %vm700, %v5744, %v5270
  %v5794 = vsel %vm700, %v5745, %v5272
  %v5795 = vsel %vm700, %v5746, %v5274
  %v5796 = vsel %vm700, %v5747, %v5276
  %v5797 = vsel %vm700, %v5748, %v5278
  %v5798 = vsel %vm700, %v5749, %v5280
  %v5799 = vsel %vm700, %v5750, %v5282
  %v5800 = vsel %vm700, %v5751, %v5284
  %v5801 = vsel %vm700, %v5752, %v5286
  %v5802 = vsel %vm700, %v5753, %v5288
  %v5803 = vsel %vm700, %v5754, %v5290
  %v5804 = vsel %vm700, %v5755, %v5292
  %v5805 = vsel %vm700, %v5756, %v5294
  %v5806 = vsel %vm700, %v5757, %v5296
  %v5807 = vsel %vm700, %v5758, %v5298
  %v5808 = vsel %vm700, %v5759, %v5300
  %v5809 = vsel %vm700, %v5760, %v5302
  %v5810 = vsel %vm700, %v5761, %v5304
  %v5811 = vsel %vm700, %v5762, %v5306
  %v5812 = vsel %vm700, %v5763, %v5308
  %v5813 = vsel %vm700, %v5764, %v5310
  %v5814 = vsel %vm700, %v5765, %v5312
  %v5815 = vsel %vm700, %v5766, %v5314
  %v5816 = vsel %vm700, %v5767, %v5316
  %v5817 = vsel %vm700, %v5768, %v5318
  %v5818 = vsel %vm700, %v5769, %v5320
  %v5819 = vsel %vm700, %v5770, %v5322
  %v5820 = vsel %vm700, %v5771, %v5324
  %v5821 = vsel %vm700, %v5772, %v5326
  %v5822 = vsel %vm700, %v5773, %v5328
  %v5823 = vsel %vm700, %v5774, %v5330
  %v5824 = vsel %vm700, %v5775, %v5332
  %v5825 = vsel %vm700, %v5776, %v5334
  %v5826 = vsel %vm700, %v5777, %v5336
  %v5827 = vsel %vm2996, %v5778, %v5436
  %v5828 = vsel %vm2996, %v5779, %v5438
  %v5829 = vsel %vm2996, %v5780, %v5440
  %v5830 = vsel %vm2996, %v5781, %v5442
  %v5831 = vsel %vm2996, %v5782, %v5444
  %v5832 = vsel %vm2996, %v5783, %v5446
  %v5833 = vsel %vm2996, %v5784, %v5448
  %v5834 = vsel %vm2996, %v5785, %v5450
  %v5835 = vsel %vm2996, %v5786, %v5452
  %v5836 = vsel %vm2996, %v5787, %v5454
  %v5837 = vsel %vm2996, %v5788, %v5456
  %v5838 = vsel %vm2996, %v5789, %v5458
  %v5839 = vsel %vm2996, %v5790, %v5460
  %v5840 = vsel %vm2996, %v5791, %v5462
  %v5841 = vsel %vm2996, %v5792, %v5464
  %v5842 = vsel %vm2996, %v5793, %v5466
  %v5843 = vsel %vm2996, %v5794, %v5468
  %v5844 = vsel %vm2996, %v5795, %v5470
  %v5845 = vsel %vm2996, %v5796, %v5472
  %v5846 = vsel %vm2996, %v5797, %v5474
  %v5847 = vsel %vm2996, %v5798, %v5476
  %v5848 = vsel %vm2996, %v5799, %v5478
  %v5849 = vsel %vm2996, %v5800, %v5480
  %v5850 = vsel %vm2996, %v5801, %v5482
  %v5851 = vsel %vm2996, %v5802, %v5484
  %v5852 = vsel %vm2996, %v5803, %v5486
  %v5853 = vsel %vm2996, %v5804, %v5488
  %v5854 = vsel %vm2996, %v5805, %v5490
  %v5855 = vsel %vm2996, %v5806, %v5492
  %v5856 = vsel %vm2996, %v5807, %v5494
  %v5857 = vsel %vm2996, %v5808, %v5496
  %v5858 = vsel %vm2996, %v5809, %v5498
  %v5859 = vsel %vm2996, %v5810, %v5500
  %v5860 = vsel %vm2996, %v5811, %v5502
  %v5861 = vsel %vm2996, %v5812, %v5504
  %v5862 = vsel %vm2996, %v5813, %v5506
  %v5863 = vsel %vm2996, %v5814, %v5508
  %v5864 = vsel %vm2996, %v5815, %v5510
  %v5865 = vsel %vm2996, %v5816, %v5512
  %v5866 = vsel %vm2996, %v5817, %v5514
  %v5867 = vsel %vm2996, %v5818, %v5516
  %v5868 = vsel %vm2996, %v5819, %v5518
  %v5869 = vsel %vm2996, %v5820, %v5520
  %v5870 = vsel %vm2996, %v5821, %v5522
  %v5871 = vsel %vm2996, %v5822, %v5524
  %v5872 = vsel %vm2996, %v5823, %v5526
  %v5873 = vsel %vm2996, %v5824, %v5528
  %v5874 = vsel %vm2996, %v5825, %v5530
  %v5875 = vsel %vm2996, %v5826, %v5532
  %v5876 = vld [vmem:[%s7] sm:$0xff]
  %v5877 = vld [vmem:[%s7 + $0x8] sm:$0xff]
  %v5878 = vld [vmem:[%s7 + $0x10] sm:$0xff]
  %v5879 = vld [vmem:[%s7 + $0x18] sm:$0xff]
  %v5880 = vld [vmem:[%s7 + $0x20] sm:$0xff]
  %v5881 = vld [vmem:[%s7 + $0x28] sm:$0xff]
  %v5882 = vld [vmem:[%s7 + $0x30] sm:$0xff]
  %v5883 = vld [vmem:[%s7 + $0x38] sm:$0xff]
  %v5884 = vld [vmem:[%s7 + $0x40] sm:$0xff]
  %v5885 = vld [vmem:[%s7 + $0x48] sm:$0xff]
  %v5886 = vld [vmem:[%s7 + $0x50] sm:$0xff]
  %v5887 = vld [vmem:[%s7 + $0x58] sm:$0xff]
  %v5888 = vld [vmem:[%s7 + $0x60] sm:$0xff]
  %v5889 = vld [vmem:[%s7 + $0x68] sm:$0xff]
  %v5890 = vld [vmem:[%s7 + $0x70] sm:$0xff]
  %v5891 = vld [vmem:[%s7 + $0x78] sm:$0xff]
  %v5892 = vld [vmem:[%s7 + $0x80] sm:$0xff]
  %v5893 = vld [vmem:[%s7 + $0x88] sm:$0xff]
  %v5894 = vld [vmem:[%s7 + $0x90] sm:$0xff]
  %v5895 = vld [vmem:[%s7 + $0x98] sm:$0xff]
  %v5896 = vld [vmem:[%s7 + $0xa0] sm:$0xff]
  %v5897 = vld [vmem:[%s7 + $0xa8] sm:$0xff]
  %v5898 = vld [vmem:[%s7 + $0xb0] sm:$0xff]
  %v5899 = vld [vmem:[%s7 + $0xb8] sm:$0xff]
  %v5900 = vld [vmem:[%s7 + $0xc0] sm:$0xff]
  %v5901 = vld [vmem:[%s7 + $0xc8] sm:$0xff]
  %v5902 = vld [vmem:[%s7 + $0xd0] sm:$0xff]
  %v5903 = vld [vmem:[%s7 + $0xd8] sm:$0xff]
  %v5904 = vld [vmem:[%s7 + $0xe0] sm:$0xff]
  %v5905 = vld [vmem:[%s7 + $0xe8] sm:$0xff]
  %v5906 = vld [vmem:[%s7 + $0xf0] sm:$0xff]
  %v5907 = vld [vmem:[%s7 + $0xf8] sm:$0xff]
  %v5908 = vld [vmem:[%s7 + $0x100] sm:$0xff]
  %v5909 = vld [vmem:[%s7 + $0x108] sm:$0xff]
  %v5910 = vld [vmem:[%s7 + $0x110] sm:$0xff]
  %v5911 = vld [vmem:[%s7 + $0x118] sm:$0xff]
  %v5912 = vld [vmem:[%s8] sm:$0x1]
  %v5914 = vlaneseq
  %v5915 = vshrl.u32 %v5914, 7
  %v5916 = vsub.s32 0, %v5915
  %v5917 = vrot.slane %v5912, %v5916
  %v5919 = vsel %vm1320, %v4208, 0
  %v5921 = vsel %vm1320, %v4209, 0
  %v5923 = vsel %vm1320, %v4210, 0
  %v5925 = vsel %vm1320, %v4211, 0
  %v5927 = vsel %vm1320, %v4212, 0
  %v5929 = vsel %vm1320, %v4213, 0
  %v5931 = vsel %vm1320, %v4214, 0
  %v5933 = vsel %vm1320, %v4215, 0
  %v5935 = vsel %vm1320, %v4216, 0
  %v5937 = vsel %vm1320, %v4217, 0
  %v5939 = vsel %vm1320, %v4218, 0
  %v5941 = vsel %vm1320, %v4219, 0
  %v5943 = vsel %vm1320, %v4220, 0
  %v5945 = vsel %vm1320, %v4221, 0
  %v5947 = vsel %vm1320, %v4222, 0
  %v5949 = vsel %vm1320, %v4223, 0
  %v5951 = vsel %vm1320, %v4224, 0
  %v5953 = vsel %vm1320, %v4225, 0
  %v5955 = vsel %vm1320, %v4226, 0
  %v5957 = vsel %vm1320, %v4227, 0
  %v5959 = vsel %vm1320, %v4228, 0
  %v5961 = vsel %vm1320, %v4229, 0
  %v5963 = vsel %vm1320, %v4230, 0
  %v5965 = vsel %vm1320, %v4231, 0
  %v5967 = vsel %vm1320, %v4232, 0
  %v5969 = vsel %vm1320, %v4233, 0
  %v5971 = vsel %vm1320, %v4234, 0
  %v5973 = vsel %vm1320, %v4235, 0
  %v5975 = vsel %vm1320, %v4236, 0
  %v5977 = vsel %vm1320, %v4237, 0
  %v5979 = vsel %vm1320, %v4238, 0
  %v5981 = vsel %vm1320, %v4239, 0
  %v5983 = vsel %vm1320, %v4240, 0
  %v5985 = vsel %vm1320, %v4241, 0
  %v5987 = vsel %vm1320, %v4242, 0
  %v5989 = vsel %vm1320, %v4243, 0
  %v5991 = vsel %vm1320, %v4244, 0
  %v5993 = vsel %vm1320, %v4245, 0
  %v5995 = vsel %vm1320, %v4246, 0
  %v5997 = vsel %vm1320, %v4247, 0
  %v5999 = vsel %vm1320, %v4248, 0
  %v6001 = vsel %vm1320, %v4249, 0
  %v6003 = vsel %vm1320, %v4250, 0
  %v6005 = vsel %vm1320, %v4251, 0
  %v6007 = vsel %vm1320, %v4252, 0
  %v6009 = vsel %vm1320, %v4253, 0
  %v6011 = vsel %vm1320, %v4254, 0
  %v6014 = vsel %vm1320, %v4404, 0
  %v6017 = vsel %vm1320, %v4405, 0
  %6019 = vmatprep.subr.mxu0 0.0
  %6020 = vmatpush1.msra.mxu0 %v5876
  %6021 = vmatprep.subr.mxu0 0.0
  %6022 = vmatpush1.msra.mxu0 %v5877
  %6023 = vmatprep.subr.mxu0 0.0
  %6024 = vmatpush1.msra.mxu0 %v5878
  %6025 = vmatprep.subr.mxu0 0.0
  %6026 = vmatpush1.msra.mxu0 %v5879
  %6027 = vmatprep.subr.mxu0 0.0
  %6028 = vmatpush1.msra.mxu0 %v5880
  %6029 = vmatprep.subr.mxu0 0.0
  %6030 = vmatpush1.msra.mxu0 %v5881
  %6031 = vmatprep.subr.mxu0 0.0
  %6032 = vmatpush1.msra.mxu0 %v5882
  %6033 = vmatprep.subr.mxu0 0.0
  %6034 = vmatpush1.msra.mxu0 %v5883
  %6035 = vmatprep.subr.mxu0 0.0
  %6036 = vmatpush1.msra.mxu0 %v5884
  %6037 = vmatprep.subr.mxu0 0.0
  %6038 = vmatpush1.msra.mxu0 %v5885
  %6039 = vmatprep.subr.mxu0 0.0
  %6040 = vmatpush1.msra.mxu0 %v5886
  %6041 = vmatprep.subr.mxu0 0.0
  %6042 = vmatpush1.msra.mxu0 %v5887
  %6043 = vmatprep.subr.mxu0 0.0
  %6044 = vmatpush1.msra.mxu0 %v5888
  %6045 = vmatprep.subr.mxu0 0.0
  %6046 = vmatpush1.msra.mxu0 %v5889
  %6047 = vmatprep.subr.mxu0 0.0
  %6048 = vmatpush1.msra.mxu0 %v5890
  %6049 = vmatprep.subr.mxu0 0.0
  %6050 = vmatpush1.msra.mxu0 %v5891
  %6051 = vmatprep.subr.mxu0 0.0
  %6052 = vmatpush1.msra.mxu0 %v5892
  %6053 = vmatprep.subr.mxu0 0.0
  %6054 = vmatpush1.msra.mxu0 %v5893
  %6055 = vmatprep.subr.mxu0 0.0
  %6056 = vmatpush1.msra.mxu0 %v5894
  %6057 = vmatprep.subr.mxu0 0.0
  %6058 = vmatpush1.msra.mxu0 %v5895
  %6059 = vmatprep.subr.mxu0 0.0
  %6060 = vmatpush1.msra.mxu0 %v5896
  %6061 = vmatprep.subr.mxu0 0.0
  %6062 = vmatpush1.msra.mxu0 %v5897
  %6063 = vmatprep.subr.mxu0 0.0
  %6064 = vmatpush1.msra.mxu0 %v5898
  %6065 = vmatprep.subr.mxu0 0.0
  %6066 = vmatpush1.msra.mxu0 %v5899
  %6067 = vmatprep.subr.mxu0 0.0
  %6068 = vmatpush1.msra.mxu0 %v5900
  %6069 = vmatprep.subr.mxu0 0.0
  %6070 = vmatpush1.msra.mxu0 %v5901
  %6071 = vmatprep.subr.mxu0 0.0
  %6072 = vmatpush1.msra.mxu0 %v5902
  %6073 = vmatprep.subr.mxu0 0.0
  %6074 = vmatpush1.msra.mxu0 %v5903
  %6075 = vmatprep.subr.mxu0 0.0
  %6076 = vmatpush1.msra.mxu0 %v5904
  %6077 = vmatprep.subr.mxu0 0.0
  %6078 = vmatpush1.msra.mxu0 %v5905
  %6079 = vmatprep.subr.mxu0 0.0
  %6080 = vmatpush1.msra.mxu0 %v5906
  %6081 = vmatprep.subr.mxu0 0.0
  %6082 = vmatpush1.msra.mxu0 %v5907
  %6083 = vmatprep.mubr.f32.mxu0 %v5827
  %6084 = vmatmul.mubr.f32.gmra.mrb[0].mxu0 %v5680
  %v6085 = vpop.f32.mrb[0].mxu0
  %v6086 = vadd.f32 %v5917, %v6085
  %v6087 = vpop.f32.mrb[0].mxu0
  %6088 = vmatprep.mubr.f32.mxu0 %v5828
  %6089 = vmatmul.mubr.f32.gmra.mrb[0].mxu0 %v5681
  %v6090 = vpop.f32.mrb[0].mxu0
  %v6091 = vadd.f32 %v5917, %v6090
  %v6092 = vpop.f32.mrb[0].mxu0
  %6093 = vmatprep.mubr.f32.mxu0 %v5829
  %6094 = vmatmul.mubr.f32.gmra.mrb[0].mxu0 %v5682
  %v6095 = vpop.f32.mrb[0].mxu0
  %v6096 = vadd.f32 %v5917, %v6095
  %v6097 = vpop.f32.mrb[0].mxu0
  %6098 = vmatprep.mubr.f32.mxu0 %v5830
  %6099 = vmatmul.mubr.f32.gmra.mrb[0].mxu0 %v5683
  %v6100 = vpop.f32.mrb[0].mxu0
  %v6101 = vadd.f32 %v5917, %v6100
  %v6102 = vpop.f32.mrb[0].mxu0
  %6103 = vmatprep.mubr.f32.mxu0 %v5831
  %6104 = vmatmul.mubr.f32.gmra.mrb[0].mxu0 %v5684
  %v6105 = vpop.f32.mrb[0].mxu0
  %v6106 = vadd.f32 %v5917, %v6105
  %v6107 = vpop.f32.mrb[0].mxu0
  %6108 = vmatprep.mubr.f32.mxu0 %v5832
  %6109 = vmatmul.mubr.f32.gmra.mrb[0].mxu0 %v5685
  %v6110 = vpop.f32.mrb[0].mxu0
  %v6111 = vadd.f32 %v5917, %v6110
  %v6112 = vpop.f32.mrb[0].mxu0
  %6113 = vmatprep.mubr.f32.mxu0 %v5833
  %6114 = vmatmul.mubr.f32.gmra.mrb[0].mxu0 %v5686
  %v6115 = vpop.f32.mrb[0].mxu0
  %v6116 = vadd.f32 %v5917, %v6115
  %v6117 = vpop.f32.mrb[0].mxu0
  %6118 = vmatprep.mubr.f32.mxu0 %v5834
  %6119 = vmatmul.mubr.f32.gmra.mrb[0].mxu0 %v5687
  %v6120 = vpop.f32.mrb[0].mxu0
  %v6121 = vadd.f32 %v5917, %v6120
  %v6122 = vpop.f32.mrb[0].mxu0
  %6123 = vmatprep.mubr.f32.mxu0 %v5835
  %6124 = vmatmul.mubr.f32.gmra.mrb[0].mxu0 %v5688
  %v6125 = vpop.f32.mrb[0].mxu0
  %v6126 = vadd.f32 %v5917, %v6125
  %v6127 = vpop.f32.mrb[0].mxu0
  %6128 = vmatprep.mubr.f32.mxu0 %v5836
  %6129 = vmatmul.mubr.f32.gmra.mrb[0].mxu0 %v5689
  %v6130 = vpop.f32.mrb[0].mxu0
  %v6131 = vadd.f32 %v5917, %v6130
  %v6132 = vpop.f32.mrb[0].mxu0
  %6133 = vmatprep.mubr.f32.mxu0 %v5837
  %6134 = vmatmul.mubr.f32.gmra.mrb[0].mxu0 %v5690
  %v6135 = vpop.f32.mrb[0].mxu0
  %v6136 = vadd.f32 %v5917, %v6135
  %v6137 = vpop.f32.mrb[0].mxu0
  %6138 = vmatprep.mubr.f32.mxu0 %v5838
  %6139 = vmatmul.mubr.f32.gmra.mrb[0].mxu0 %v5691
  %v6140 = vpop.f32.mrb[0].mxu0
  %v6141 = vadd.f32 %v5917, %v6140
  %v6142 = vpop.f32.mrb[0].mxu0
  %6143 = vmatprep.mubr.f32.mxu0 %v5839
  %6144 = vmatmul.mubr.f32.gmra.mrb[0].mxu0 %v5692
  %v6145 = vpop.f32.mrb[0].mxu0
  %v6146 = vadd.f32 %v5917, %v6145
  %v6147 = vpop.f32.mrb[0].mxu0
  %6148 = vmatprep.mubr.f32.mxu0 %v5840
  %6149 = vmatmul.mubr.f32.gmra.mrb[0].mxu0 %v5693
  %v6150 = vpop.f32.mrb[0].mxu0
  %v6151 = vadd.f32 %v5917, %v6150
  %v6152 = vpop.f32.mrb[0].mxu0
  %6153 = vmatprep.mubr.f32.mxu0 %v5841
  %6154 = vmatmul.mubr.f32.gmra.mrb[0].mxu0 %v5694
  %v6155 = vpop.f32.mrb[0].mxu0
  %v6156 = vadd.f32 %v5917, %v6155
  %v6157 = vpop.f32.mrb[0].mxu0
  %6158 = vmatprep.mubr.f32.mxu0 %v5842
  %6159 = vmatmul.mubr.f32.gmra.mrb[0].mxu0 %v5695
  %v6160 = vpop.f32.mrb[0].mxu0
  %v6161 = vadd.f32 %v5917, %v6160
  %v6162 = vpop.f32.mrb[0].mxu0
  %6163 = vmatprep.mubr.f32.mxu0 %v5843
  %6164 = vmatmul.mubr.f32.gmra.mrb[0].mxu0 %v5696
  %v6165 = vpop.f32.mrb[0].mxu0
  %v6166 = vadd.f32 %v5917, %v6165
  %v6167 = vpop.f32.mrb[0].mxu0
  %6168 = vmatprep.mubr.f32.mxu0 %v5844
  %6169 = vmatmul.mubr.f32.gmra.mrb[0].mxu0 %v5697
  %v6170 = vpop.f32.mrb[0].mxu0
  %v6171 = vadd.f32 %v5917, %v6170
  %v6172 = vpop.f32.mrb[0].mxu0
  %6173 = vmatprep.mubr.f32.mxu0 %v5845
  %6174 = vmatmul.mubr.f32.gmra.mrb[0].mxu0 %v5698
  %v6175 = vpop.f32.mrb[0].mxu0
  %v6176 = vadd.f32 %v5917, %v6175
  %v6177 = vpop.f32.mrb[0].mxu0
  %6178 = vmatprep.mubr.f32.mxu0 %v5846
  %6179 = vmatmul.mubr.f32.gmra.mrb[0].mxu0 %v5699
  %v6180 = vpop.f32.mrb[0].mxu0
  %v6181 = vadd.f32 %v5917, %v6180
  %v6182 = vpop.f32.mrb[0].mxu0
  %6183 = vmatprep.mubr.f32.mxu0 %v5847
  %6184 = vmatmul.mubr.f32.gmra.mrb[0].mxu0 %v5700
  %v6185 = vpop.f32.mrb[0].mxu0
  %v6186 = vadd.f32 %v5917, %v6185
  %v6187 = vpop.f32.mrb[0].mxu0
  %6188 = vmatprep.mubr.f32.mxu0 %v5848
  %6189 = vmatmul.mubr.f32.gmra.mrb[0].mxu0 %v5701
  %v6190 = vpop.f32.mrb[0].mxu0
  %v6191 = vadd.f32 %v5917, %v6190
  %v6192 = vpop.f32.mrb[0].mxu0
  %6193 = vmatprep.mubr.f32.mxu0 %v5849
  %6194 = vmatmul.mubr.f32.gmra.mrb[0].mxu0 %v5702
  %v6195 = vpop.f32.mrb[0].mxu0
  %v6196 = vadd.f32 %v5917, %v6195
  %v6197 = vpop.f32.mrb[0].mxu0
  %6198 = vmatprep.mubr.f32.mxu0 %v5850
  %6199 = vmatmul.mubr.f32.gmra.mrb[0].mxu0 %v5703
  %v6200 = vpop.f32.mrb[0].mxu0
  %v6201 = vadd.f32 %v5917, %v6200
  %v6202 = vpop.f32.mrb[0].mxu0
  %6203 = vmatprep.mubr.f32.mxu0 %v5851
  %6204 = vmatmul.mubr.f32.gmra.mrb[0].mxu0 %v5704
  %v6205 = vpop.f32.mrb[0].mxu0
  %v6206 = vadd.f32 %v5917, %v6205
  %v6207 = vpop.f32.mrb[0].mxu0
  %6208 = vmatprep.mubr.f32.mxu0 %v5852
  %6209 = vmatmul.mubr.f32.gmra.mrb[0].mxu0 %v5705
  %v6210 = vpop.f32.mrb[0].mxu0
  %v6211 = vadd.f32 %v5917, %v6210
  %v6212 = vpop.f32.mrb[0].mxu0
  %6213 = vmatprep.mubr.f32.mxu0 %v5853
  %6214 = vmatmul.mubr.f32.gmra.mrb[0].mxu0 %v5706
  %v6215 = vpop.f32.mrb[0].mxu0
  %v6216 = vadd.f32 %v5917, %v6215
  %v6217 = vpop.f32.mrb[0].mxu0
  %6218 = vmatprep.mubr.f32.mxu0 %v5854
  %6219 = vmatmul.mubr.f32.gmra.mrb[0].mxu0 %v5707
  %v6220 = vpop.f32.mrb[0].mxu0
  %v6221 = vadd.f32 %v5917, %v6220
  %v6222 = vpop.f32.mrb[0].mxu0
  %6223 = vmatprep.mubr.f32.mxu0 %v5855
  %6224 = vmatmul.mubr.f32.gmra.mrb[0].mxu0 %v5708
  %v6225 = vpop.f32.mrb[0].mxu0
  %v6226 = vadd.f32 %v5917, %v6225
  %v6227 = vpop.f32.mrb[0].mxu0
  %6228 = vmatprep.mubr.f32.mxu0 %v5856
  %6229 = vmatmul.mubr.f32.gmra.mrb[0].mxu0 %v5709
  %v6230 = vpop.f32.mrb[0].mxu0
  %v6231 = vadd.f32 %v5917, %v6230
  %v6232 = vpop.f32.mrb[0].mxu0
  %6233 = vmatprep.mubr.f32.mxu0 %v5857
  %6234 = vmatmul.mubr.f32.gmra.mrb[0].mxu0 %v5710
  %v6235 = vpop.f32.mrb[0].mxu0
  %v6236 = vadd.f32 %v5917, %v6235
  %v6237 = vpop.f32.mrb[0].mxu0
  %6238 = vmatprep.mubr.f32.mxu0 %v5858
  %6239 = vmatmul.mubr.f32.gmra.mrb[0].mxu0 %v5711
  %v6240 = vpop.f32.mrb[0].mxu0
  %v6241 = vadd.f32 %v5917, %v6240
  %v6242 = vpop.f32.mrb[0].mxu0
  %6243 = vmatprep.mubr.f32.mxu0 %v5859
  %6244 = vmatmul.mubr.f32.gmra.mrb[0].mxu0 %v5712
  %v6245 = vpop.f32.mrb[0].mxu0
  %v6246 = vadd.f32 %v5917, %v6245
  %v6247 = vpop.f32.mrb[0].mxu0
  %6248 = vmatprep.mubr.f32.mxu0 %v5860
  %6249 = vmatmul.mubr.f32.gmra.mrb[0].mxu0 %v5713
  %v6250 = vpop.f32.mrb[0].mxu0
  %v6251 = vadd.f32 %v5917, %v6250
  %v6252 = vpop.f32.mrb[0].mxu0
  %6253 = vmatprep.mubr.f32.mxu0 %v5861
  %6254 = vmatmul.mubr.f32.gmra.mrb[0].mxu0 %v5714
  %v6255 = vpop.f32.mrb[0].mxu0
  %v6256 = vadd.f32 %v5917, %v6255
  %v6257 = vpop.f32.mrb[0].mxu0
  %6258 = vmatprep.mubr.f32.mxu0 %v5862
  %6259 = vmatmul.mubr.f32.gmra.mrb[0].mxu0 %v5715
  %v6260 = vpop.f32.mrb[0].mxu0
  %v6261 = vadd.f32 %v5917, %v6260
  %v6262 = vpop.f32.mrb[0].mxu0
  %6263 = vmatprep.mubr.f32.mxu0 %v5863
  %6264 = vmatmul.mubr.f32.gmra.mrb[0].mxu0 %v5716
  %v6265 = vpop.f32.mrb[0].mxu0
  %v6266 = vadd.f32 %v5917, %v6265
  %v6267 = vpop.f32.mrb[0].mxu0
  %6268 = vmatprep.mubr.f32.mxu0 %v5864
  %6269 = vmatmul.mubr.f32.gmra.mrb[0].mxu0 %v5717
  %v6270 = vpop.f32.mrb[0].mxu0
  %v6271 = vadd.f32 %v5917, %v6270
  %v6272 = vpop.f32.mrb[0].mxu0
  %6273 = vmatprep.mubr.f32.mxu0 %v5865
  %6274 = vmatmul.mubr.f32.gmra.mrb[0].mxu0 %v5718
  %v6275 = vpop.f32.mrb[0].mxu0
  %v6276 = vadd.f32 %v5917, %v6275
  %v6277 = vpop.f32.mrb[0].mxu0
  %6278 = vmatprep.mubr.f32.mxu0 %v5866
  %6279 = vmatmul.mubr.f32.gmra.mrb[0].mxu0 %v5719
  %v6280 = vpop.f32.mrb[0].mxu0
  %v6281 = vadd.f32 %v5917, %v6280
  %v6282 = vpop.f32.mrb[0].mxu0
  %6283 = vmatprep.mubr.f32.mxu0 %v5867
  %6284 = vmatmul.mubr.f32.gmra.mrb[0].mxu0 %v5720
  %v6285 = vpop.f32.mrb[0].mxu0
  %v6286 = vadd.f32 %v5917, %v6285
  %v6287 = vpop.f32.mrb[0].mxu0
  %6288 = vmatprep.mubr.f32.mxu0 %v5868
  %6289 = vmatmul.mubr.f32.gmra.mrb[0].mxu0 %v5721
  %v6290 = vpop.f32.mrb[0].mxu0
  %v6291 = vadd.f32 %v5917, %v6290
  %v6292 = vpop.f32.mrb[0].mxu0
  %6293 = vmatprep.mubr.f32.mxu0 %v5869
  %6294 = vmatmul.mubr.f32.gmra.mrb[0].mxu0 %v5722
  %v6295 = vpop.f32.mrb[0].mxu0
  %v6296 = vadd.f32 %v5917, %v6295
  %v6297 = vpop.f32.mrb[0].mxu0
  %6298 = vmatprep.mubr.f32.mxu0 %v5870
  %6299 = vmatmul.mubr.f32.gmra.mrb[0].mxu0 %v5723
  %v6300 = vpop.f32.mrb[0].mxu0
  %v6301 = vadd.f32 %v5917, %v6300
  %v6302 = vpop.f32.mrb[0].mxu0
  %6303 = vmatprep.mubr.f32.mxu0 %v5871
  %6304 = vmatmul.mubr.f32.gmra.mrb[0].mxu0 %v5724
  %v6305 = vpop.f32.mrb[0].mxu0
  %v6306 = vadd.f32 %v5917, %v6305
  %v6307 = vpop.f32.mrb[0].mxu0
  %6308 = vmatprep.mubr.f32.mxu0 %v5872
  %6309 = vmatmul.mubr.f32.gmra.mrb[0].mxu0 %v5725
  %v6310 = vpop.f32.mrb[0].mxu0
  %v6311 = vadd.f32 %v5917, %v6310
  %v6312 = vpop.f32.mrb[0].mxu0
  %6313 = vmatprep.mubr.f32.mxu0 %v5873
  %6314 = vmatmul.mubr.f32.gmra.mrb[0].mxu0 %v5726
  %v6315 = vpop.f32.mrb[0].mxu0
  %v6316 = vadd.f32 %v5917, %v6315
  %v6317 = vpop.f32.mrb[0].mxu0
  %6318 = vmatprep.mubr.f32.mxu0 %v5874
  %6319 = vmatmul.mubr.f32.gmra.mrb[0].mxu0 %v5727
  %v6320 = vpop.f32.mrb[0].mxu0
  %v6321 = vadd.f32 %v5917, %v6320
  %v6322 = vpop.f32.mrb[0].mxu0
  %6323 = vmatprep.mubr.f32.mxu0 %v5875
  %6324 = vmatmul.mubr.f32.gmra.mrb[0].mxu0 %v5728
  %v6325 = vpop.f32.mrb[0].mxu0
  %v6326 = vadd.f32 %v5917, %v6325
  %v6327 = vpop.f32.mrb[0].mxu0
  %6328 = vdwg.mxu0
  %6329 = vmatprep.subr.mxu0 0.0
  %6330 = vmatpush1.msra.mxu0 %v5908
  %6331 = vmatprep.subr.mxu0 0.0
  %6332 = vmatpush1.msra.mxu0 %v5909
  %6333 = vmatprep.subr.mxu0 0.0
  %6334 = vmatpush1.msra.mxu0 %v5910
  %6335 = vmatprep.subr.mxu0 0.0
  %6336 = vmatpush1.msra.mxu0 %v5911
  %6337 = vmatprep.subr.mxu0 0.0
  %6338 = vmatpush1.msra.mxu0 0.0
  %6339 = vmatprep.subr.mxu0 0.0
  %6340 = vmatpush1.msra.mxu0 0.0
  %6341 = vmatprep.subr.mxu0 0.0
  %6342 = vmatpush1.msra.mxu0 0.0
  %6343 = vmatprep.subr.mxu0 0.0
  %6344 = vmatpush1.msra.mxu0 0.0
  %6345 = vmatprep.subr.mxu0 0.0
  %6346 = vmatpush1.msra.mxu0 0.0
  %6347 = vmatprep.subr.mxu0 0.0
  %6348 = vmatpush1.msra.mxu0 0.0
  %6349 = vmatprep.subr.mxu0 0.0
  %6350 = vmatpush1.msra.mxu0 0.0
  %6351 = vmatprep.subr.mxu0 0.0
  %6352 = vmatpush1.msra.mxu0 0.0
  %6353 = vmatprep.subr.mxu0 0.0
  %6354 = vmatpush1.msra.mxu0 0.0
  %6355 = vmatprep.subr.mxu0 0.0
  %6356 = vmatpush1.msra.mxu0 0.0
  %6357 = vmatprep.subr.mxu0 0.0
  %6358 = vmatpush1.msra.mxu0 0.0
  %6359 = vmatprep.subr.mxu0 0.0
  %6360 = vmatpush1.msra.mxu0 0.0
  %6361 = vmatprep.subr.mxu0 0.0
  %6362 = vmatpush1.msra.mxu0 0.0
  %6363 = vmatprep.subr.mxu0 0.0
  %6364 = vmatpush1.msra.mxu0 0.0
  %6365 = vmatprep.subr.mxu0 0.0
  %6366 = vmatpush1.msra.mxu0 0.0
  %6367 = vmatprep.subr.mxu0 0.0
  %6368 = vmatpush1.msra.mxu0 0.0
  %6369 = vmatprep.subr.mxu0 0.0
  %6370 = vmatpush1.msra.mxu0 0.0
  %6371 = vmatprep.subr.mxu0 0.0
  %6372 = vmatpush1.msra.mxu0 0.0
  %6373 = vmatprep.subr.mxu0 0.0
  %6374 = vmatpush1.msra.mxu0 0.0
  %6375 = vmatprep.subr.mxu0 0.0
  %6376 = vmatpush1.msra.mxu0 0.0
  %6377 = vmatprep.subr.mxu0 0.0
  %6378 = vmatpush1.msra.mxu0 0.0
  %6379 = vmatprep.subr.mxu0 0.0
  %6380 = vmatpush1.msra.mxu0 0.0
  %6381 = vmatprep.subr.mxu0 0.0
  %6382 = vmatpush1.msra.mxu0 0.0
  %6383 = vmatprep.subr.mxu0 0.0
  %6384 = vmatpush1.msra.mxu0 0.0
  %6385 = vmatprep.subr.mxu0 0.0
  %6386 = vmatpush1.msra.mxu0 0.0
  %6387 = vmatprep.subr.mxu0 0.0
  %6388 = vmatpush1.msra.mxu0 0.0
  %6389 = vmatprep.subr.mxu0 0.0
  %6390 = vmatpush1.msra.mxu0 0.0
  %6391 = vmatprep.subr.mxu0 0.0
  %6392 = vmatpush1.msra.mxu0 0.0
  %6393 = vmatprep.mubr.f32.mxu0 0.0
  %6394 = vmatmul.mubr.f32.gmra.mrb[0].mxu0 %v5919
  %v6395 = vpop.f32.mrb[0].mxu0
  %v6396 = vadd.f32 %v6086, %v6395
  %v6397 = vpop.f32.mrb[0].mxu0
  %6398 = vmatprep.mubr.f32.mxu0 0.0
  %6399 = vmatmul.mubr.f32.gmra.mrb[0].mxu0 %v5921
  %v6400 = vpop.f32.mrb[0].mxu0
  %v6401 = vadd.f32 %v6091, %v6400
  %v6402 = vpop.f32.mrb[0].mxu0
  %6403 = vmatprep.mubr.f32.mxu0 0.0
  %6404 = vmatmul.mubr.f32.gmra.mrb[0].mxu0 %v5923
  %v6405 = vpop.f32.mrb[0].mxu0
  %v6406 = vadd.f32 %v6096, %v6405
  %v6407 = vpop.f32.mrb[0].mxu0
  %6408 = vmatprep.mubr.f32.mxu0 0.0
  %6409 = vmatmul.mubr.f32.gmra.mrb[0].mxu0 %v5925
  %v6410 = vpop.f32.mrb[0].mxu0
  %v6411 = vadd.f32 %v6101, %v6410
  %v6412 = vpop.f32.mrb[0].mxu0
  %6413 = vmatprep.mubr.f32.mxu0 0.0
  %6414 = vmatmul.mubr.f32.gmra.mrb[0].mxu0 %v5927
  %v6415 = vpop.f32.mrb[0].mxu0
  %v6416 = vadd.f32 %v6106, %v6415
  %v6417 = vpop.f32.mrb[0].mxu0
  %6418 = vmatprep.mubr.f32.mxu0 0.0
  %6419 = vmatmul.mubr.f32.gmra.mrb[0].mxu0 %v5929
  %v6420 = vpop.f32.mrb[0].mxu0
  %v6421 = vadd.f32 %v6111, %v6420
  %v6422 = vpop.f32.mrb[0].mxu0
  %6423 = vmatprep.mubr.f32.mxu0 0.0
  %6424 = vmatmul.mubr.f32.gmra.mrb[0].mxu0 %v5931
  %v6425 = vpop.f32.mrb[0].mxu0
  %v6426 = vadd.f32 %v6116, %v6425
  %v6427 = vpop.f32.mrb[0].mxu0
  %6428 = vmatprep.mubr.f32.mxu0 0.0
  %6429 = vmatmul.mubr.f32.gmra.mrb[0].mxu0 %v5933
  %v6430 = vpop.f32.mrb[0].mxu0
  %v6431 = vadd.f32 %v6121, %v6430
  %v6432 = vpop.f32.mrb[0].mxu0
  %6433 = vmatprep.mubr.f32.mxu0 0.0
  %6434 = vmatmul.mubr.f32.gmra.mrb[0].mxu0 %v5935
  %v6435 = vpop.f32.mrb[0].mxu0
  %v6436 = vadd.f32 %v6126, %v6435
  %v6437 = vpop.f32.mrb[0].mxu0
  %6438 = vmatprep.mubr.f32.mxu0 0.0
  %6439 = vmatmul.mubr.f32.gmra.mrb[0].mxu0 %v5937
  %v6440 = vpop.f32.mrb[0].mxu0
  %v6441 = vadd.f32 %v6131, %v6440
  %v6442 = vpop.f32.mrb[0].mxu0
  %6443 = vmatprep.mubr.f32.mxu0 0.0
  %6444 = vmatmul.mubr.f32.gmra.mrb[0].mxu0 %v5939
  %v6445 = vpop.f32.mrb[0].mxu0
  %v6446 = vadd.f32 %v6136, %v6445
  %v6447 = vpop.f32.mrb[0].mxu0
  %6448 = vmatprep.mubr.f32.mxu0 0.0
  %6449 = vmatmul.mubr.f32.gmra.mrb[0].mxu0 %v5941
  %v6450 = vpop.f32.mrb[0].mxu0
  %v6451 = vadd.f32 %v6141, %v6450
  %v6452 = vpop.f32.mrb[0].mxu0
  %6453 = vmatprep.mubr.f32.mxu0 0.0
  %6454 = vmatmul.mubr.f32.gmra.mrb[0].mxu0 %v5943
  %v6455 = vpop.f32.mrb[0].mxu0
  %v6456 = vadd.f32 %v6146, %v6455
  %v6457 = vpop.f32.mrb[0].mxu0
  %6458 = vmatprep.mubr.f32.mxu0 0.0
  %6459 = vmatmul.mubr.f32.gmra.mrb[0].mxu0 %v5945
  %v6460 = vpop.f32.mrb[0].mxu0
  %v6461 = vadd.f32 %v6151, %v6460
  %v6462 = vpop.f32.mrb[0].mxu0
  %6463 = vmatprep.mubr.f32.mxu0 0.0
  %6464 = vmatmul.mubr.f32.gmra.mrb[0].mxu0 %v5947
  %v6465 = vpop.f32.mrb[0].mxu0
  %v6466 = vadd.f32 %v6156, %v6465
  %v6467 = vpop.f32.mrb[0].mxu0
  %6468 = vmatprep.mubr.f32.mxu0 0.0
  %6469 = vmatmul.mubr.f32.gmra.mrb[0].mxu0 %v5949
  %v6470 = vpop.f32.mrb[0].mxu0
  %v6471 = vadd.f32 %v6161, %v6470
  %v6472 = vpop.f32.mrb[0].mxu0
  %6473 = vmatprep.mubr.f32.mxu0 0.0
  %6474 = vmatmul.mubr.f32.gmra.mrb[0].mxu0 %v5951
  %v6475 = vpop.f32.mrb[0].mxu0
  %v6476 = vadd.f32 %v6166, %v6475
  %v6477 = vpop.f32.mrb[0].mxu0
  %6478 = vmatprep.mubr.f32.mxu0 0.0
  %6479 = vmatmul.mubr.f32.gmra.mrb[0].mxu0 %v5953
  %v6480 = vpop.f32.mrb[0].mxu0
  %v6481 = vadd.f32 %v6171, %v6480
  %v6482 = vpop.f32.mrb[0].mxu0
  %6483 = vmatprep.mubr.f32.mxu0 0.0
  %6484 = vmatmul.mubr.f32.gmra.mrb[0].mxu0 %v5955
  %v6485 = vpop.f32.mrb[0].mxu0
  %v6486 = vadd.f32 %v6176, %v6485
  %v6487 = vpop.f32.mrb[0].mxu0
  %6488 = vmatprep.mubr.f32.mxu0 0.0
  %6489 = vmatmul.mubr.f32.gmra.mrb[0].mxu0 %v5957
  %v6490 = vpop.f32.mrb[0].mxu0
  %v6491 = vadd.f32 %v6181, %v6490
  %v6492 = vpop.f32.mrb[0].mxu0
  %6493 = vmatprep.mubr.f32.mxu0 0.0
  %6494 = vmatmul.mubr.f32.gmra.mrb[0].mxu0 %v5959
  %v6495 = vpop.f32.mrb[0].mxu0
  %v6496 = vadd.f32 %v6186, %v6495
  %v6497 = vpop.f32.mrb[0].mxu0
  %6498 = vmatprep.mubr.f32.mxu0 0.0
  %6499 = vmatmul.mubr.f32.gmra.mrb[0].mxu0 %v5961
  %v6500 = vpop.f32.mrb[0].mxu0
  %v6501 = vadd.f32 %v6191, %v6500
  %v6502 = vpop.f32.mrb[0].mxu0
  %6503 = vmatprep.mubr.f32.mxu0 0.0
  %6504 = vmatmul.mubr.f32.gmra.mrb[0].mxu0 %v5963
  %v6505 = vpop.f32.mrb[0].mxu0
  %v6506 = vadd.f32 %v6196, %v6505
  %v6507 = vpop.f32.mrb[0].mxu0
  %6508 = vmatprep.mubr.f32.mxu0 0.0
  %6509 = vmatmul.mubr.f32.gmra.mrb[0].mxu0 %v5965
  %v6510 = vpop.f32.mrb[0].mxu0
  %v6511 = vadd.f32 %v6201, %v6510
  %v6512 = vpop.f32.mrb[0].mxu0
  %6513 = vmatprep.mubr.f32.mxu0 0.0
  %6514 = vmatmul.mubr.f32.gmra.mrb[0].mxu0 %v5967
  %v6515 = vpop.f32.mrb[0].mxu0
  %v6516 = vadd.f32 %v6206, %v6515
  %v6517 = vpop.f32.mrb[0].mxu0
  %6518 = vmatprep.mubr.f32.mxu0 0.0
  %6519 = vmatmul.mubr.f32.gmra.mrb[0].mxu0 %v5969
  %v6520 = vpop.f32.mrb[0].mxu0
  %v6521 = vadd.f32 %v6211, %v6520
  %v6522 = vpop.f32.mrb[0].mxu0
  %6523 = vmatprep.mubr.f32.mxu0 0.0
  %6524 = vmatmul.mubr.f32.gmra.mrb[0].mxu0 %v5971
  %v6525 = vpop.f32.mrb[0].mxu0
  %v6526 = vadd.f32 %v6216, %v6525
  %v6527 = vpop.f32.mrb[0].mxu0
  %6528 = vmatprep.mubr.f32.mxu0 0.0
  %6529 = vmatmul.mubr.f32.gmra.mrb[0].mxu0 %v5973
  %v6530 = vpop.f32.mrb[0].mxu0
  %v6531 = vadd.f32 %v6221, %v6530
  %v6532 = vpop.f32.mrb[0].mxu0
  %6533 = vmatprep.mubr.f32.mxu0 0.0
  %6534 = vmatmul.mubr.f32.gmra.mrb[0].mxu0 %v5975
  %v6535 = vpop.f32.mrb[0].mxu0
  %v6536 = vadd.f32 %v6226, %v6535
  %v6537 = vpop.f32.mrb[0].mxu0
  %6538 = vmatprep.mubr.f32.mxu0 0.0
  %6539 = vmatmul.mubr.f32.gmra.mrb[0].mxu0 %v5977
  %v6540 = vpop.f32.mrb[0].mxu0
  %v6541 = vadd.f32 %v6231, %v6540
  %v6542 = vpop.f32.mrb[0].mxu0
  %6543 = vmatprep.mubr.f32.mxu0 0.0
  %6544 = vmatmul.mubr.f32.gmra.mrb[0].mxu0 %v5979
  %v6545 = vpop.f32.mrb[0].mxu0
  %v6546 = vadd.f32 %v6236, %v6545
  %v6547 = vpop.f32.mrb[0].mxu0
  %6548 = vmatprep.mubr.f32.mxu0 0.0
  %6549 = vmatmul.mubr.f32.gmra.mrb[0].mxu0 %v5981
  %v6550 = vpop.f32.mrb[0].mxu0
  %v6551 = vadd.f32 %v6241, %v6550
  %v6552 = vpop.f32.mrb[0].mxu0
  %6553 = vmatprep.mubr.f32.mxu0 0.0
  %6554 = vmatmul.mubr.f32.gmra.mrb[0].mxu0 %v5983
  %v6555 = vpop.f32.mrb[0].mxu0
  %v6556 = vadd.f32 %v6246, %v6555
  %v6557 = vpop.f32.mrb[0].mxu0
  %6558 = vmatprep.mubr.f32.mxu0 0.0
  %6559 = vmatmul.mubr.f32.gmra.mrb[0].mxu0 %v5985
  %v6560 = vpop.f32.mrb[0].mxu0
  %v6561 = vadd.f32 %v6251, %v6560
  %v6562 = vpop.f32.mrb[0].mxu0
  %6563 = vmatprep.mubr.f32.mxu0 0.0
  %6564 = vmatmul.mubr.f32.gmra.mrb[0].mxu0 %v5987
  %v6565 = vpop.f32.mrb[0].mxu0
  %v6566 = vadd.f32 %v6256, %v6565
  %v6567 = vpop.f32.mrb[0].mxu0
  %6568 = vmatprep.mubr.f32.mxu0 0.0
  %6569 = vmatmul.mubr.f32.gmra.mrb[0].mxu0 %v5989
  %v6570 = vpop.f32.mrb[0].mxu0
  %v6571 = vadd.f32 %v6261, %v6570
  %v6572 = vpop.f32.mrb[0].mxu0
  %6573 = vmatprep.mubr.f32.mxu0 0.0
  %6574 = vmatmul.mubr.f32.gmra.mrb[0].mxu0 %v5991
  %v6575 = vpop.f32.mrb[0].mxu0
  %v6576 = vadd.f32 %v6266, %v6575
  %v6577 = vpop.f32.mrb[0].mxu0
  %6578 = vmatprep.mubr.f32.mxu0 0.0
  %6579 = vmatmul.mubr.f32.gmra.mrb[0].mxu0 %v5993
  %v6580 = vpop.f32.mrb[0].mxu0
  %v6581 = vadd.f32 %v6271, %v6580
  %v6582 = vpop.f32.mrb[0].mxu0
  %6583 = vmatprep.mubr.f32.mxu0 0.0
  %6584 = vmatmul.mubr.f32.gmra.mrb[0].mxu0 %v5995
  %v6585 = vpop.f32.mrb[0].mxu0
  %v6586 = vadd.f32 %v6276, %v6585
  %v6587 = vpop.f32.mrb[0].mxu0
  %6588 = vmatprep.mubr.f32.mxu0 0.0
  %6589 = vmatmul.mubr.f32.gmra.mrb[0].mxu0 %v5997
  %v6590 = vpop.f32.mrb[0].mxu0
  %v6591 = vadd.f32 %v6281, %v6590
  %v6592 = vpop.f32.mrb[0].mxu0
  %6593 = vmatprep.mubr.f32.mxu0 0.0
  %6594 = vmatmul.mubr.f32.gmra.mrb[0].mxu0 %v5999
  %v6595 = vpop.f32.mrb[0].mxu0
  %v6596 = vadd.f32 %v6286, %v6595
  %v6597 = vpop.f32.mrb[0].mxu0
  %6598 = vmatprep.mubr.f32.mxu0 0.0
  %6599 = vmatmul.mubr.f32.gmra.mrb[0].mxu0 %v6001
  %v6600 = vpop.f32.mrb[0].mxu0
  %v6601 = vadd.f32 %v6291, %v6600
  %v6602 = vpop.f32.mrb[0].mxu0
  %6603 = vmatprep.mubr.f32.mxu0 0.0
  %6604 = vmatmul.mubr.f32.gmra.mrb[0].mxu0 %v6003
  %v6605 = vpop.f32.mrb[0].mxu0
  %v6606 = vadd.f32 %v6296, %v6605
  %v6607 = vpop.f32.mrb[0].mxu0
  %6608 = vmatprep.mubr.f32.mxu0 0.0
  %6609 = vmatmul.mubr.f32.gmra.mrb[0].mxu0 %v6005
  %v6610 = vpop.f32.mrb[0].mxu0
  %v6611 = vadd.f32 %v6301, %v6610
  %v6612 = vpop.f32.mrb[0].mxu0
  %6613 = vmatprep.mubr.f32.mxu0 0.0
  %6614 = vmatmul.mubr.f32.gmra.mrb[0].mxu0 %v6007
  %v6615 = vpop.f32.mrb[0].mxu0
  %v6616 = vadd.f32 %v6306, %v6615
  %v6617 = vpop.f32.mrb[0].mxu0
  %6618 = vmatprep.mubr.f32.mxu0 0.0
  %6619 = vmatmul.mubr.f32.gmra.mrb[0].mxu0 %v6009
  %v6620 = vpop.f32.mrb[0].mxu0
  %v6621 = vadd.f32 %v6311, %v6620
  %v6622 = vpop.f32.mrb[0].mxu0
  %6623 = vmatprep.mubr.f32.mxu0 0.0
  %6624 = vmatmul.mubr.f32.gmra.mrb[0].mxu0 %v6011
  %v6625 = vpop.f32.mrb[0].mxu0
  %v6626 = vadd.f32 %v6316, %v6625
  %v6627 = vpop.f32.mrb[0].mxu0
  %6628 = vmatprep.mubr.f32.mxu0 0.0
  %6629 = vmatmul.mubr.f32.gmra.mrb[0].mxu0 %v6014
  %v6630 = vpop.f32.mrb[0].mxu0
  %v6631 = vadd.f32 %v6321, %v6630
  %v6632 = vpop.f32.mrb[0].mxu0
  %6633 = vmatprep.mubr.f32.mxu0 0.0
  %6634 = vmatmul.mubr.f32.gmra.mrb[0].mxu0 %v6017
  %v6635 = vpop.f32.mrb[0].mxu0
  %v6636 = vadd.f32 %v6326, %v6635
  %v6637 = vpop.f32.mrb[0].mxu0
  %6638 = vdwg.mxu0
  %v6639 = vmax.f32 %v6396, 0.0
  %v6640 = vmax.f32 %v6401, 0.0
  %v6641 = vmax.f32 %v6406, 0.0
  %v6642 = vmax.f32 %v6411, 0.0
  %v6643 = vmax.f32 %v6416, 0.0
  %v6644 = vmax.f32 %v6421, 0.0
  %v6645 = vmax.f32 %v6426, 0.0
  %v6646 = vmax.f32 %v6431, 0.0
  %v6647 = vmax.f32 %v6436, 0.0
  %v6648 = vmax.f32 %v6441, 0.0
  %v6649 = vmax.f32 %v6446, 0.0
  %v6650 = vmax.f32 %v6451, 0.0
  %v6651 = vmax.f32 %v6456, 0.0
  %v6652 = vmax.f32 %v6461, 0.0
  %v6653 = vmax.f32 %v6466, 0.0
  %v6654 = vmax.f32 %v6471, 0.0
  %v6655 = vmax.f32 %v6476, 0.0
  %v6656 = vmax.f32 %v6481, 0.0
  %v6657 = vmax.f32 %v6486, 0.0
  %v6658 = vmax.f32 %v6491, 0.0
  %v6659 = vmax.f32 %v6496, 0.0
  %v6660 = vmax.f32 %v6501, 0.0
  %v6661 = vmax.f32 %v6506, 0.0
  %v6662 = vmax.f32 %v6511, 0.0
  %v6663 = vmax.f32 %v6516, 0.0
  %v6664 = vmax.f32 %v6521, 0.0
  %v6665 = vmax.f32 %v6526, 0.0
  %v6666 = vmax.f32 %v6531, 0.0
  %v6667 = vmax.f32 %v6536, 0.0
  %v6668 = vmax.f32 %v6541, 0.0
  %v6669 = vmax.f32 %v6546, 0.0
  %v6670 = vmax.f32 %v6551, 0.0
  %v6671 = vmax.f32 %v6556, 0.0
  %v6672 = vmax.f32 %v6561, 0.0
  %v6673 = vmax.f32 %v6566, 0.0
  %v6674 = vmax.f32 %v6571, 0.0
  %v6675 = vmax.f32 %v6576, 0.0
  %v6676 = vmax.f32 %v6581, 0.0
  %v6677 = vmax.f32 %v6586, 0.0
  %v6678 = vmax.f32 %v6591, 0.0
  %v6679 = vmax.f32 %v6596, 0.0
  %v6680 = vmax.f32 %v6601, 0.0
  %v6681 = vmax.f32 %v6606, 0.0
  %v6682 = vmax.f32 %v6611, 0.0
  %v6683 = vmax.f32 %v6616, 0.0
  %v6684 = vmax.f32 %v6621, 0.0
  %v6685 = vmax.f32 %v6626, 0.0
  %v6686 = vmax.f32 %v6631, 0.0
  %v6687 = vmax.f32 %v6636, 0.0
  %6688 = vst.msk [vmem:[#allocation5] sm:$0xff] %vm1320, %v6639
  %6689 = vst.msk [vmem:[#allocation5 + $0x8] sm:$0xff] %vm1320, %v6640
  %6690 = vst.msk [vmem:[#allocation5 + $0x10] sm:$0xff] %vm1320, %v6641
  %6691 = vst.msk [vmem:[#allocation5 + $0x18] sm:$0xff] %vm1320, %v6642
  %6692 = vst.msk [vmem:[#allocation5 + $0x20] sm:$0xff] %vm1320, %v6643
  %6693 = vst.msk [vmem:[#allocation5 + $0x28] sm:$0xff] %vm1320, %v6644
  %6694 = vst.msk [vmem:[#allocation5 + $0x30] sm:$0xff] %vm1320, %v6645
  %6695 = vst.msk [vmem:[#allocation5 + $0x38] sm:$0xff] %vm1320, %v6646
  %6696 = vst.msk [vmem:[#allocation5 + $0x40] sm:$0xff] %vm1320, %v6647
  %6697 = vst.msk [vmem:[#allocation5 + $0x48] sm:$0xff] %vm1320, %v6648
  %6698 = vst.msk [vmem:[#allocation5 + $0x50] sm:$0xff] %vm1320, %v6649
  %6699 = vst.msk [vmem:[#allocation5 + $0x58] sm:$0xff] %vm1320, %v6650
  %6700 = vst.msk [vmem:[#allocation5 + $0x60] sm:$0xff] %vm1320, %v6651
  %6701 = vst.msk [vmem:[#allocation5 + $0x68] sm:$0xff] %vm1320, %v6652
  %6702 = vst.msk [vmem:[#allocation5 + $0x70] sm:$0xff] %vm1320, %v6653
  %6703 = vst.msk [vmem:[#allocation5 + $0x78] sm:$0xff] %vm1320, %v6654
  %6704 = vst.msk [vmem:[#allocation5 + $0x80] sm:$0xff] %vm1320, %v6655
  %6705 = vst.msk [vmem:[#allocation5 + $0x88] sm:$0xff] %vm1320, %v6656
  %6706 = vst.msk [vmem:[#allocation5 + $0x90] sm:$0xff] %vm1320, %v6657
  %6707 = vst.msk [vmem:[#allocation5 + $0x98] sm:$0xff] %vm1320, %v6658
  %6708 = vst.msk [vmem:[#allocation5 + $0xa0] sm:$0xff] %vm1320, %v6659
  %6709 = vst.msk [vmem:[#allocation5 + $0xa8] sm:$0xff] %vm1320, %v6660
  %6710 = vst.msk [vmem:[#allocation5 + $0xb0] sm:$0xff] %vm1320, %v6661
  %6711 = vst.msk [vmem:[#allocation5 + $0xb8] sm:$0xff] %vm1320, %v6662
  %6712 = vst.msk [vmem:[#allocation5 + $0xc0] sm:$0xff] %vm1320, %v6663
  %6713 = vst.msk [vmem:[#allocation5 + $0xc8] sm:$0xff] %vm1320, %v6664
  %6714 = vst.msk [vmem:[#allocation5 + $0xd0] sm:$0xff] %vm1320, %v6665
  %6715 = vst.msk [vmem:[#allocation5 + $0xd8] sm:$0xff] %vm1320, %v6666
  %6716 = vst.msk [vmem:[#allocation5 + $0xe0] sm:$0xff] %vm1320, %v6667
  %6717 = vst.msk [vmem:[#allocation5 + $0xe8] sm:$0xff] %vm1320, %v6668
  %6718 = vst.msk [vmem:[#allocation5 + $0xf0] sm:$0xff] %vm1320, %v6669
  %6719 = vst.msk [vmem:[#allocation5 + $0xf8] sm:$0xff] %vm1320, %v6670
  %6720 = vst.msk [vmem:[#allocation5 + $0x100] sm:$0xff] %vm1320, %v6671
  %6721 = vst.msk [vmem:[#allocation5 + $0x108] sm:$0xff] %vm1320, %v6672
  %6722 = vst.msk [vmem:[#allocation5 + $0x110] sm:$0xff] %vm1320, %v6673
  %6723 = vst.msk [vmem:[#allocation5 + $0x118] sm:$0xff] %vm1320, %v6674
  %6724 = vst.msk [vmem:[#allocation5 + $0x120] sm:$0xff] %vm1320, %v6675
  %6725 = vst.msk [vmem:[#allocation5 + $0x128] sm:$0xff] %vm1320, %v6676
  %6726 = vst.msk [vmem:[#allocation5 + $0x130] sm:$0xff] %vm1320, %v6677
  %6727 = vst.msk [vmem:[#allocation5 + $0x138] sm:$0xff] %vm1320, %v6678
  %6728 = vst.msk [vmem:[#allocation5 + $0x140] sm:$0xff] %vm1320, %v6679
  %6729 = vst.msk [vmem:[#allocation5 + $0x148] sm:$0xff] %vm1320, %v6680
  %6730 = vst.msk [vmem:[#allocation5 + $0x150] sm:$0xff] %vm1320, %v6681
  %6731 = vst.msk [vmem:[#allocation5 + $0x158] sm:$0xff] %vm1320, %v6682
  %6732 = vst.msk [vmem:[#allocation5 + $0x160] sm:$0xff] %vm1320, %v6683
  %6733 = vst.msk [vmem:[#allocation5 + $0x168] sm:$0xff] %vm1320, %v6684
  %6734 = vst.msk [vmem:[#allocation5 + $0x170] sm:$0xff] %vm1320, %v6685
  %6735 = vst.msk [vmem:[#allocation5 + $0x178] sm:$0xff] %vm1320, %v6686
  %6736 = vst.msk [vmem:[#allocation5 + $0x180] sm:$0xff] %vm1320, %v6687
  %v6737 = vld [vmem:[%s9] sm:$0xff]
  %v6738 = vld [vmem:[%s9 + $0x8] sm:$0xff]
  %v6739 = vld [vmem:[%s9 + $0x10] sm:$0xff]
  %v6740 = vld [vmem:[%s9 + $0x18] sm:$0xff]
  %v6741 = vld [vmem:[%s9 + $0x20] sm:$0xff]
  %v6742 = vld [vmem:[%s9 + $0x28] sm:$0xff]
  %v6743 = vld [vmem:[%s9 + $0x30] sm:$0xff]
  %v6744 = vld [vmem:[%s9 + $0x38] sm:$0xff]
  %v6745 = vld [vmem:[%s9 + $0x40] sm:$0xff]
  %v6746 = vld [vmem:[%s9 + $0x48] sm:$0xff]
  %v6747 = vld [vmem:[%s9 + $0x50] sm:$0xff]
  %v6748 = vld [vmem:[%s9 + $0x58] sm:$0xff]
  %v6749 = vld [vmem:[%s9 + $0x60] sm:$0xff]
  %v6750 = vld [vmem:[%s9 + $0x68] sm:$0xff]
  %v6751 = vld [vmem:[%s9 + $0x70] sm:$0xff]
  %v6752 = vld [vmem:[%s9 + $0x78] sm:$0xff]
  %v6753 = vld [vmem:[%s9 + $0x80] sm:$0xff]
  %v6754 = vld [vmem:[%s9 + $0x88] sm:$0xff]
  %v6755 = vld [vmem:[%s9 + $0x90] sm:$0xff]
  %v6756 = vld [vmem:[%s9 + $0x98] sm:$0xff]
  %v6757 = vld [vmem:[%s9 + $0xa0] sm:$0xff]
  %v6758 = vld [vmem:[%s9 + $0xa8] sm:$0xff]
  %v6759 = vld [vmem:[%s9 + $0xb0] sm:$0xff]
  %v6760 = vld [vmem:[%s9 + $0xb8] sm:$0xff]
  %v6761 = vld [vmem:[%s9 + $0xc0] sm:$0xf]
  %v6762 = vld [vmem:[#allocation5] sm:$0xff]
  %v6763 = vld [vmem:[#allocation5 + $0x8] sm:$0xff]
  %v6764 = vld [vmem:[#allocation5 + $0x10] sm:$0xff]
  %v6765 = vld [vmem:[#allocation5 + $0x18] sm:$0xff]
  %v6766 = vld [vmem:[#allocation5 + $0x20] sm:$0xff]
  %v6767 = vld [vmem:[#allocation5 + $0x28] sm:$0xff]
  %v6768 = vld [vmem:[#allocation5 + $0x30] sm:$0xff]
  %v6769 = vld [vmem:[#allocation5 + $0x38] sm:$0xff]
  %v6770 = vld [vmem:[#allocation5 + $0x40] sm:$0xff]
  %v6771 = vld [vmem:[#allocation5 + $0x48] sm:$0xff]
  %v6772 = vld [vmem:[#allocation5 + $0x50] sm:$0xff]
  %v6773 = vld [vmem:[#allocation5 + $0x58] sm:$0xff]
  %v6774 = vld [vmem:[#allocation5 + $0x60] sm:$0xff]
  %v6775 = vld [vmem:[#allocation5 + $0x68] sm:$0xff]
  %v6776 = vld [vmem:[#allocation5 + $0x70] sm:$0xff]
  %v6777 = vld [vmem:[#allocation5 + $0x78] sm:$0xff]
  %v6778 = vld [vmem:[#allocation5 + $0x80] sm:$0xff]
  %v6779 = vld [vmem:[#allocation5 + $0x88] sm:$0xff]
  %v6780 = vld [vmem:[#allocation5 + $0x90] sm:$0xff]
  %v6781 = vld [vmem:[#allocation5 + $0x98] sm:$0xff]
  %v6782 = vld [vmem:[#allocation5 + $0xa0] sm:$0xff]
  %v6783 = vld [vmem:[#allocation5 + $0xa8] sm:$0xff]
  %v6784 = vld [vmem:[#allocation5 + $0xb0] sm:$0xff]
  %v6785 = vld [vmem:[#allocation5 + $0xb8] sm:$0xff]
  %v6786 = vld [vmem:[#allocation5 + $0xc0] sm:$0xf]
  %6788 = vset.pattern.permute.xlu0 0
  %6789 = vperm.xlu0 %6788, %v6737
  %v6790 = vpop.permute.xlu0 %6789
  %6793 = vset.pattern.permute.xlu0 0
  %6794 = vperm.xlu0 %6793, %v6738
  %v6795 = vpop.permute.xlu0 %6794
  %6798 = vset.pattern.permute.xlu0 0
  %6799 = vperm.xlu0 %6798, %v6739
  %v6800 = vpop.permute.xlu0 %6799
  %6803 = vset.pattern.permute.xlu0 0
  %6804 = vperm.xlu0 %6803, %v6740
  %v6805 = vpop.permute.xlu0 %6804
  %6808 = vset.pattern.permute.xlu0 0
  %6809 = vperm.xlu0 %6808, %v6741
  %v6810 = vpop.permute.xlu0 %6809
  %6813 = vset.pattern.permute.xlu0 0
  %6814 = vperm.xlu0 %6813, %v6742
  %v6815 = vpop.permute.xlu0 %6814
  %6818 = vset.pattern.permute.xlu0 0
  %6819 = vperm.xlu0 %6818, %v6743
  %v6820 = vpop.permute.xlu0 %6819
  %6823 = vset.pattern.permute.xlu0 0
  %6824 = vperm.xlu0 %6823, %v6744
  %v6825 = vpop.permute.xlu0 %6824
  %6828 = vset.pattern.permute.xlu0 0
  %6829 = vperm.xlu0 %6828, %v6745
  %v6830 = vpop.permute.xlu0 %6829
  %6833 = vset.pattern.permute.xlu0 0
  %6834 = vperm.xlu0 %6833, %v6746
  %v6835 = vpop.permute.xlu0 %6834
  %6838 = vset.pattern.permute.xlu0 0
  %6839 = vperm.xlu0 %6838, %v6747
  %v6840 = vpop.permute.xlu0 %6839
  %6843 = vset.pattern.permute.xlu0 0
  %6844 = vperm.xlu0 %6843, %v6748
  %v6845 = vpop.permute.xlu0 %6844
  %6848 = vset.pattern.permute.xlu0 0
  %6849 = vperm.xlu0 %6848, %v6749
  %v6850 = vpop.permute.xlu0 %6849
  %6853 = vset.pattern.permute.xlu0 0
  %6854 = vperm.xlu0 %6853, %v6750
  %v6855 = vpop.permute.xlu0 %6854
  %6858 = vset.pattern.permute.xlu0 0
  %6859 = vperm.xlu0 %6858, %v6751
  %v6860 = vpop.permute.xlu0 %6859
  %6863 = vset.pattern.permute.xlu0 0
  %6864 = vperm.xlu0 %6863, %v6752
  %v6865 = vpop.permute.xlu0 %6864
  %6868 = vset.pattern.permute.xlu0 0
  %6869 = vperm.xlu0 %6868, %v6753
  %v6870 = vpop.permute.xlu0 %6869
  %6873 = vset.pattern.permute.xlu0 0
  %6874 = vperm.xlu0 %6873, %v6754
  %v6875 = vpop.permute.xlu0 %6874
  %6878 = vset.pattern.permute.xlu0 0
  %6879 = vperm.xlu0 %6878, %v6755
  %v6880 = vpop.permute.xlu0 %6879
  %6883 = vset.pattern.permute.xlu0 0
  %6884 = vperm.xlu0 %6883, %v6756
  %v6885 = vpop.permute.xlu0 %6884
  %6888 = vset.pattern.permute.xlu0 0
  %6889 = vperm.xlu0 %6888, %v6757
  %v6890 = vpop.permute.xlu0 %6889
  %6893 = vset.pattern.permute.xlu0 0
  %6894 = vperm.xlu0 %6893, %v6758
  %v6895 = vpop.permute.xlu0 %6894
  %6898 = vset.pattern.permute.xlu0 0
  %6899 = vperm.xlu0 %6898, %v6759
  %v6900 = vpop.permute.xlu0 %6899
  %6903 = vset.pattern.permute.xlu0 0
  %6904 = vperm.xlu0 %6903, %v6760
  %v6905 = vpop.permute.xlu0 %6904
  %6908 = vset.pattern.permute.xlu0 0
  %6909 = vperm.xlu0 %6908, %v6761
  %v6910 = vpop.permute.xlu0 %6909
  %v6912 = vadd.f32 %v6762, %v6790
  %v6913 = vadd.f32 %v6763, %v6795
  %v6914 = vadd.f32 %v6764, %v6800
  %v6915 = vadd.f32 %v6765, %v6805
  %v6916 = vadd.f32 %v6766, %v6810
  %v6917 = vadd.f32 %v6767, %v6815
  %v6918 = vadd.f32 %v6768, %v6820
  %v6919 = vadd.f32 %v6769, %v6825
  %v6920 = vadd.f32 %v6770, %v6830
  %v6921 = vadd.f32 %v6771, %v6835
  %v6922 = vadd.f32 %v6772, %v6840
  %v6923 = vadd.f32 %v6773, %v6845
  %v6924 = vadd.f32 %v6774, %v6850
  %v6925 = vadd.f32 %v6775, %v6855
  %v6926 = vadd.f32 %v6776, %v6860
  %v6927 = vadd.f32 %v6777, %v6865
  %v6928 = vadd.f32 %v6778, %v6870
  %v6929 = vadd.f32 %v6779, %v6875
  %v6930 = vadd.f32 %v6780, %v6880
  %v6931 = vadd.f32 %v6781, %v6885
  %v6932 = vadd.f32 %v6782, %v6890
  %v6933 = vadd.f32 %v6783, %v6895
  %v6934 = vadd.f32 %v6784, %v6900
  %v6935 = vadd.f32 %v6785, %v6905
  %v6936 = vadd.f32 %v6786, %v6910
  %v6937 = vsel %vm1320, %v6912, -inf
  %v6938 = vsel %vm1320, %v6913, -inf
  %v6939 = vsel %vm1320, %v6914, -inf
  %v6940 = vsel %vm1320, %v6915, -inf
  %v6941 = vsel %vm1320, %v6916, -inf
  %v6942 = vmax.f32 %v6937, %v6941
  %v6943 = vsel %vm1320, %v6917, -inf
  %v6944 = vmax.f32 %v6938, %v6943
  %v6945 = vsel %vm1320, %v6918, -inf
  %v6946 = vmax.f32 %v6939, %v6945
  %v6947 = vsel %vm1320, %v6919, -inf
  %v6948 = vmax.f32 %v6940, %v6947
  %v6949 = vsel %vm1320, %v6920, -inf
  %v6950 = vmax.f32 %v6942, %v6949
  %v6951 = vsel %vm1320, %v6921, -inf
  %v6952 = vmax.f32 %v6944, %v6951
  %v6953 = vsel %vm1320, %v6922, -inf
  %v6954 = vmax.f32 %v6946, %v6953
  %v6955 = vsel %vm1320, %v6923, -inf
  %v6956 = vmax.f32 %v6948, %v6955
  %v6957 = vsel %vm1320, %v6924, -inf
  %v6958 = vmax.f32 %v6950, %v6957
  %v6959 = vsel %vm1320, %v6925, -inf
  %v6960 = vmax.f32 %v6952, %v6959
  %v6961 = vsel %vm1320, %v6926, -inf
  %v6962 = vmax.f32 %v6954, %v6961
  %v6963 = vsel %vm1320, %v6927, -inf
  %v6964 = vmax.f32 %v6956, %v6963
  %v6965 = vsel %vm1320, %v6928, -inf
  %v6966 = vmax.f32 %v6958, %v6965
  %v6967 = vsel %vm1320, %v6929, -inf
  %v6968 = vmax.f32 %v6960, %v6967
  %v6969 = vsel %vm1320, %v6930, -inf
  %v6970 = vmax.f32 %v6962, %v6969
  %v6971 = vsel %vm1320, %v6931, -inf
  %v6972 = vmax.f32 %v6964, %v6971
  %v6973 = vsel %vm1320, %v6932, -inf
  %v6974 = vmax.f32 %v6966, %v6973
  %v6975 = vsel %vm1320, %v6933, -inf
  %v6976 = vmax.f32 %v6968, %v6975
  %v6977 = vsel %vm1320, %v6934, -inf
  %v6978 = vmax.f32 %v6970, %v6977
  %v6979 = vsel %vm1320, %v6935, -inf
  %v6980 = vmax.f32 %v6972, %v6979
  %vm6981 = vcmask 257024
  %v6982 = vsel %vm6981, %v6936, -inf
  %v6983 = vmax.f32 %v6974, %v6982
  %v6984 = vmax.f32 %v6983, %v6976
  %v6985 = vmax.f32 %v6978, %v6980
  %v6986 = vmax.f32 %v6984, %v6985
  %v6987 = vrot.slane %v6986, 4
  %v6988 = vmax.f32 %v6986, %v6987
  %v6989 = vrot.slane %v6988, 2
  %v6990 = vmax.f32 %v6988, %v6989
  %v6991 = vrot.slane %v6990, 1
  %v6992 = vmax.f32 %v6990, %v6991
  %v6993 = vsub.f32 %v6912, %v6992
  %v6994 = vsub.f32 %v6913, %v6992
  %v6995 = vsub.f32 %v6914, %v6992
  %v6996 = vsub.f32 %v6915, %v6992
  %v6997 = vsub.f32 %v6916, %v6992
  %v6998 = vsub.f32 %v6917, %v6992
  %v6999 = vsub.f32 %v6918, %v6992
  %v7000 = vsub.f32 %v6919, %v6992
  %v7001 = vsub.f32 %v6920, %v6992
  %v7002 = vsub.f32 %v6921, %v6992
  %v7003 = vsub.f32 %v6922, %v6992
  %v7004 = vsub.f32 %v6923, %v6992
  %v7005 = vsub.f32 %v6924, %v6992
  %v7006 = vsub.f32 %v6925, %v6992
  %v7007 = vsub.f32 %v6926, %v6992
  %v7008 = vsub.f32 %v6927, %v6992
  %v7009 = vsub.f32 %v6928, %v6992
  %v7010 = vsub.f32 %v6929, %v6992
  %v7011 = vsub.f32 %v6930, %v6992
  %v7012 = vsub.f32 %v6931, %v6992
  %v7013 = vsub.f32 %v6932, %v6992
  %v7014 = vsub.f32 %v6933, %v6992
  %v7015 = vsub.f32 %v6934, %v6992
  %v7016 = vsub.f32 %v6935, %v6992
  %v7017 = vsub.f32 %v6936, %v6992
  %v7018 = vmul.f32 %v6993, 1.442695
  %v7019 = vpow.pop %v7018
  %v7020 = vmul.f32 %v6994, 1.442695
  %v7021 = vpow.pop %v7020
  %v7022 = vmul.f32 %v6995, 1.442695
  %v7023 = vpow.pop %v7022
  %v7024 = vmul.f32 %v6996, 1.442695
  %v7025 = vpow.pop %v7024
  %v7026 = vmul.f32 %v6997, 1.442695
  %v7027 = vpow.pop %v7026
  %v7028 = vmul.f32 %v6998, 1.442695
  %v7029 = vpow.pop %v7028
  %v7030 = vmul.f32 %v6999, 1.442695
  %v7031 = vpow.pop %v7030
  %v7032 = vmul.f32 %v7000, 1.442695
  %v7033 = vpow.pop %v7032
  %v7034 = vmul.f32 %v7001, 1.442695
  %v7035 = vpow.pop %v7034
  %v7036 = vmul.f32 %v7002, 1.442695
  %v7037 = vpow.pop %v7036
  %v7038 = vmul.f32 %v7003, 1.442695
  %v7039 = vpow.pop %v7038
  %v7040 = vmul.f32 %v7004, 1.442695
  %v7041 = vpow.pop %v7040
  %v7042 = vmul.f32 %v7005, 1.442695
  %v7043 = vpow.pop %v7042
  %v7044 = vmul.f32 %v7006, 1.442695
  %v7045 = vpow.pop %v7044
  %v7046 = vmul.f32 %v7007, 1.442695
  %v7047 = vpow.pop %v7046
  %v7048 = vmul.f32 %v7008, 1.442695
  %v7049 = vpow.pop %v7048
  %v7050 = vmul.f32 %v7009, 1.442695
  %v7051 = vpow.pop %v7050
  %v7052 = vmul.f32 %v7010, 1.442695
  %v7053 = vpow.pop %v7052
  %v7054 = vmul.f32 %v7011, 1.442695
  %v7055 = vpow.pop %v7054
  %v7056 = vmul.f32 %v7012, 1.442695
  %v7057 = vpow.pop %v7056
  %v7058 = vmul.f32 %v7013, 1.442695
  %v7059 = vpow.pop %v7058
  %v7060 = vmul.f32 %v7014, 1.442695
  %v7061 = vpow.pop %v7060
  %v7062 = vmul.f32 %v7015, 1.442695
  %v7063 = vpow.pop %v7062
  %v7064 = vmul.f32 %v7016, 1.442695
  %v7065 = vpow.pop %v7064
  %v7066 = vmul.f32 %v7017, 1.442695
  %v7067 = vpow.pop %v7066
  %v7068 = vld [vmem:[%s10] sm:$0x77]
  %v7070 = vcombine.high %v7068, %v7068
  %vm7071 = vcmask 556032
  %v7072 = vsel %vm7071, %v7070, 0
  %vm7074 = vcmask 1043456
  %v7076 = vsel %vm7074, %v7067, 0
  %7078 = vmatprep.subr.mxu0 0.0
  %7079 = vmatpush1.msra.mxu0 %v7019
  %7080 = vmatprep.subr.mxu0 0.0
  %7081 = vmatpush1.msra.mxu0 %v7021
  %7082 = vmatprep.subr.mxu0 0.0
  %7083 = vmatpush1.msra.mxu0 %v7023
  %7084 = vmatprep.subr.mxu0 0.0
  %7085 = vmatpush1.msra.mxu0 %v7025
  %7086 = vmatprep.subr.mxu0 0.0
  %7087 = vmatpush1.msra.mxu0 %v7027
  %7088 = vmatprep.subr.mxu0 0.0
  %7089 = vmatpush1.msra.mxu0 %v7029
  %7090 = vmatprep.subr.mxu0 0.0
  %7091 = vmatpush1.msra.mxu0 %v7031
  %7092 = vmatprep.subr.mxu0 0.0
  %7093 = vmatpush1.msra.mxu0 %v7033
  %7094 = vmatprep.subr.mxu0 0.0
  %7095 = vmatpush1.msra.mxu0 %v7035
  %7096 = vmatprep.subr.mxu0 0.0
  %7097 = vmatpush1.msra.mxu0 %v7037
  %7098 = vmatprep.subr.mxu0 0.0
  %7099 = vmatpush1.msra.mxu0 %v7039
  %7100 = vmatprep.subr.mxu0 0.0
  %7101 = vmatpush1.msra.mxu0 %v7041
  %7102 = vmatprep.subr.mxu0 0.0
  %7103 = vmatpush1.msra.mxu0 %v7043
  %7104 = vmatprep.subr.mxu0 0.0
  %7105 = vmatpush1.msra.mxu0 %v7045
  %7106 = vmatprep.subr.mxu0 0.0
  %7107 = vmatpush1.msra.mxu0 %v7047
  %7108 = vmatprep.subr.mxu0 0.0
  %7109 = vmatpush1.msra.mxu0 %v7049
  %7110 = vmatprep.subr.mxu0 0.0
  %7111 = vmatpush1.msra.mxu0 %v7051
  %7112 = vmatprep.subr.mxu0 0.0
  %7113 = vmatpush1.msra.mxu0 %v7053
  %7114 = vmatprep.subr.mxu0 0.0
  %7115 = vmatpush1.msra.mxu0 %v7055
  %7116 = vmatprep.subr.mxu0 0.0
  %7117 = vmatpush1.msra.mxu0 %v7057
  %7118 = vmatprep.subr.mxu0 0.0
  %7119 = vmatpush1.msra.mxu0 %v7059
  %7120 = vmatprep.subr.mxu0 0.0
  %7121 = vmatpush1.msra.mxu0 %v7061
  %7122 = vmatprep.subr.mxu0 0.0
  %7123 = vmatpush1.msra.mxu0 %v7063
  %7124 = vmatprep.subr.mxu0 0.0
  %7125 = vmatpush1.msra.mxu0 %v7065
  %7126 = vmatprep.subr.mxu0 0.0
  %7127 = vmatpush1.msra.mxu0 %v7076
  %7128 = vmatprep.subr.mxu0 0.0
  %7129 = vmatpush1.msra.mxu0 0.0
  %7130 = vmatprep.subr.mxu0 0.0
  %7131 = vmatpush1.msra.mxu0 0.0
  %7132 = vmatprep.subr.mxu0 0.0
  %7133 = vmatpush1.msra.mxu0 0.0
  %7134 = vmatprep.subr.mxu0 0.0
  %7135 = vmatpush1.msra.mxu0 0.0
  %7136 = vmatprep.subr.mxu0 0.0
  %7137 = vmatpush1.msra.mxu0 0.0
  %7138 = vmatprep.subr.mxu0 0.0
  %7139 = vmatpush1.msra.mxu0 0.0
  %7140 = vmatprep.subr.mxu0 0.0
  %7141 = vmatpush1.msra.mxu0 0.0
  %7142 = vmatprep.mubr.f32.mxu0 %v7072
  %7143 = vmatmul.mubr.f32.gmra.mrb[0].mxu0 %v7068
  %v7144 = vpop.f32.mrb[0].mxu0
  %v7145 = vadd.f32 0.0, %v7144
  %v7146 = vpop.f32.mrb[0].mxu0
  %7147 = vdwg.mxu0
  %v7148 = vrcp.pop %v7145
  %v7149 = vmul.f32 1.0, %v7148
  %v7151 = vrot.slane %v7149, 7
  %v7153 = vmul.f32 %v7145, %v7151
  %v7154 = vrot.slane %v7149, 6
  %v7156 = vmul.f32 %v7145, %v7154
  %v7157 = vld [vmem:[#allocation5 + $0xc4] sm:$0xff]
  %v7158 = vld [vmem:[#allocation5 + $0xcc] sm:$0xff]
  %v7159 = vld [vmem:[#allocation5 + $0xd4] sm:$0xff]
  %v7160 = vld [vmem:[#allocation5 + $0xdc] sm:$0xff]
  %v7161 = vld [vmem:[#allocation5 + $0xe4] sm:$0xff]
  %v7162 = vld [vmem:[#allocation5 + $0xec] sm:$0xff]
  %v7163 = vld [vmem:[#allocation5 + $0xf4] sm:$0xff]
  %v7164 = vld [vmem:[#allocation5 + $0xfc] sm:$0xff]
  %v7165 = vld [vmem:[#allocation5 + $0x104] sm:$0xff]
  %v7166 = vld [vmem:[#allocation5 + $0x10c] sm:$0xff]
  %v7167 = vld [vmem:[#allocation5 + $0x114] sm:$0xff]
  %v7168 = vld [vmem:[#allocation5 + $0x11c] sm:$0xff]
  %v7169 = vld [vmem:[#allocation5 + $0x124] sm:$0xff]
  %v7170 = vld [vmem:[#allocation5 + $0x12c] sm:$0xff]
  %v7171 = vld [vmem:[#allocation5 + $0x134] sm:$0xff]
  %v7172 = vld [vmem:[#allocation5 + $0x13c] sm:$0xff]
  %v7173 = vld [vmem:[#allocation5 + $0x144] sm:$0xff]
  %v7174 = vld [vmem:[#allocation5 + $0x14c] sm:$0xff]
  %v7175 = vld [vmem:[#allocation5 + $0x154] sm:$0xff]
  %v7176 = vld [vmem:[#allocation5 + $0x15c] sm:$0xff]
  %v7177 = vld [vmem:[#allocation5 + $0x164] sm:$0xff]
  %v7178 = vld [vmem:[#allocation5 + $0x16c] sm:$0xff]
  %v7179 = vld [vmem:[#allocation5 + $0x174] sm:$0xff]
  %v7180 = vld [vmem:[#allocation5 + $0x17c] sm:$0xff]
  %v7181 = vld [vmem:[#allocation5 + $0x184] sm:$0xf]
  %v7182 = vadd.f32 %v7157, %v6790
  %v7183 = vadd.f32 %v7158, %v6795
  %v7184 = vadd.f32 %v7159, %v6800
  %v7185 = vadd.f32 %v7160, %v6805
  %v7186 = vadd.f32 %v7161, %v6810
  %v7187 = vadd.f32 %v7162, %v6815
  %v7188 = vadd.f32 %v7163, %v6820
  %v7189 = vadd.f32 %v7164, %v6825
  %v7190 = vadd.f32 %v7165, %v6830
  %v7191 = vadd.f32 %v7166, %v6835
  %v7192 = vadd.f32 %v7167, %v6840
  %v7193 = vadd.f32 %v7168, %v6845
  %v7194 = vadd.f32 %v7169, %v6850
  %v7195 = vadd.f32 %v7170, %v6855
  %v7196 = vadd.f32 %v7171, %v6860
  %v7197 = vadd.f32 %v7172, %v6865
  %v7198 = vadd.f32 %v7173, %v6870
  %v7199 = vadd.f32 %v7174, %v6875
  %v7200 = vadd.f32 %v7175, %v6880
  %v7201 = vadd.f32 %v7176, %v6885
  %v7202 = vadd.f32 %v7177, %v6890
  %v7203 = vadd.f32 %v7178, %v6895
  %v7204 = vadd.f32 %v7179, %v6900
  %v7205 = vadd.f32 %v7180, %v6905
  %v7206 = vadd.f32 %v7181, %v6910
  %v7207 = vsel %vm1320, %v7182, -inf
  %v7208 = vsel %vm1320, %v7183, -inf
  %v7209 = vsel %vm1320, %v7184, -inf
  %v7210 = vsel %vm1320, %v7185, -inf
  %v7211 = vsel %vm1320, %v7186, -inf
  %v7212 = vmax.f32 %v7207, %v7211
  %v7213 = vsel %vm1320, %v7187, -inf
  %v7214 = vmax.f32 %v7208, %v7213
  %v7215 = vsel %vm1320, %v7188, -inf
  %v7216 = vmax.f32 %v7209, %v7215
  %v7217 = vsel %vm1320, %v7189, -inf
  %v7218 = vmax.f32 %v7210, %v7217
  %v7219 = vsel %vm1320, %v7190, -inf
  %v7220 = vmax.f32 %v7212, %v7219
  %v7221 = vsel %vm1320, %v7191, -inf
  %v7222 = vmax.f32 %v7214, %v7221
  %v7223 = vsel %vm1320, %v7192, -inf
  %v7224 = vmax.f32 %v7216, %v7223
  %v7225 = vsel %vm1320, %v7193, -inf
  %v7226 = vmax.f32 %v7218, %v7225
  %v7227 = vsel %vm1320, %v7194, -inf
  %v7228 = vmax.f32 %v7220, %v7227
  %v7229 = vsel %vm1320, %v7195, -inf
  %v7230 = vmax.f32 %v7222, %v7229
  %v7231 = vsel %vm1320, %v7196, -inf
  %v7232 = vmax.f32 %v7224, %v7231
  %v7233 = vsel %vm1320, %v7197, -inf
  %v7234 = vmax.f32 %v7226, %v7233
  %v7235 = vsel %vm1320, %v7198, -inf
  %v7236 = vmax.f32 %v7228, %v7235
  %v7237 = vsel %vm1320, %v7199, -inf
  %v7238 = vmax.f32 %v7230, %v7237
  %v7239 = vsel %vm1320, %v7200, -inf
  %v7240 = vmax.f32 %v7232, %v7239
  %v7241 = vsel %vm1320, %v7201, -inf
  %v7242 = vmax.f32 %v7234, %v7241
  %v7243 = vsel %vm1320, %v7202, -inf
  %v7244 = vmax.f32 %v7236, %v7243
  %v7245 = vsel %vm1320, %v7203, -inf
  %v7246 = vmax.f32 %v7238, %v7245
  %v7247 = vsel %vm1320, %v7204, -inf
  %v7248 = vmax.f32 %v7240, %v7247
  %v7249 = vsel %vm1320, %v7205, -inf
  %v7250 = vmax.f32 %v7242, %v7249
  %v7251 = vsel %vm6981, %v7206, -inf
  %v7252 = vmax.f32 %v7244, %v7251
  %v7253 = vmax.f32 %v7252, %v7246
  %v7254 = vmax.f32 %v7248, %v7250
  %v7255 = vmax.f32 %v7253, %v7254
  %v7256 = vrot.slane %v7255, 4
  %v7257 = vmax.f32 %v7255, %v7256
  %v7258 = vrot.slane %v7257, 2
  %v7259 = vmax.f32 %v7257, %v7258
  %v7260 = vrot.slane %v7259, 1
  %v7261 = vmax.f32 %v7259, %v7260
  %v7262 = vsub.f32 %v7182, %v7261
  %v7263 = vsub.f32 %v7183, %v7261
  %v7264 = vsub.f32 %v7184, %v7261
  %v7265 = vsub.f32 %v7185, %v7261
  %v7266 = vsub.f32 %v7186, %v7261
  %v7267 = vsub.f32 %v7187, %v7261
  %v7268 = vsub.f32 %v7188, %v7261
  %v7269 = vsub.f32 %v7189, %v7261
  %v7270 = vsub.f32 %v7190, %v7261
  %v7271 = vsub.f32 %v7191, %v7261
  %v7272 = vsub.f32 %v7192, %v7261
  %v7273 = vsub.f32 %v7193, %v7261
  %v7274 = vsub.f32 %v7194, %v7261
  %v7275 = vsub.f32 %v7195, %v7261
  %v7276 = vsub.f32 %v7196, %v7261
  %v7277 = vsub.f32 %v7197, %v7261
  %v7278 = vsub.f32 %v7198, %v7261
  %v7279 = vsub.f32 %v7199, %v7261
  %v7280 = vsub.f32 %v7200, %v7261
  %v7281 = vsub.f32 %v7201, %v7261
  %v7282 = vsub.f32 %v7202, %v7261
  %v7283 = vsub.f32 %v7203, %v7261
  %v7284 = vsub.f32 %v7204, %v7261
  %v7285 = vsub.f32 %v7205, %v7261
  %v7286 = vsub.f32 %v7206, %v7261
  %v7287 = vmul.f32 %v7262, 1.442695
  %v7288 = vpow.pop %v7287
  %v7289 = vmul.f32 %v7263, 1.442695
  %v7290 = vpow.pop %v7289
  %v7291 = vmul.f32 %v7264, 1.442695
  %v7292 = vpow.pop %v7291
  %v7293 = vmul.f32 %v7265, 1.442695
  %v7294 = vpow.pop %v7293
  %v7295 = vmul.f32 %v7266, 1.442695
  %v7296 = vpow.pop %v7295
  %v7297 = vmul.f32 %v7267, 1.442695
  %v7298 = vpow.pop %v7297
  %v7299 = vmul.f32 %v7268, 1.442695
  %v7300 = vpow.pop %v7299
  %v7301 = vmul.f32 %v7269, 1.442695
  %v7302 = vpow.pop %v7301
  %v7303 = vmul.f32 %v7270, 1.442695
  %v7304 = vpow.pop %v7303
  %v7305 = vmul.f32 %v7271, 1.442695
  %v7306 = vpow.pop %v7305
  %v7307 = vmul.f32 %v7272, 1.442695
  %v7308 = vpow.pop %v7307
  %v7309 = vmul.f32 %v7273, 1.442695
  %v7310 = vpow.pop %v7309
  %v7311 = vmul.f32 %v7274, 1.442695
  %v7312 = vpow.pop %v7311
  %v7313 = vmul.f32 %v7275, 1.442695
  %v7314 = vpow.pop %v7313
  %v7315 = vmul.f32 %v7276, 1.442695
  %v7316 = vpow.pop %v7315
  %v7317 = vmul.f32 %v7277, 1.442695
  %v7318 = vpow.pop %v7317
  %v7319 = vmul.f32 %v7278, 1.442695
  %v7320 = vpow.pop %v7319
  %v7321 = vmul.f32 %v7279, 1.442695
  %v7322 = vpow.pop %v7321
  %v7323 = vmul.f32 %v7280, 1.442695
  %v7324 = vpow.pop %v7323
  %v7325 = vmul.f32 %v7281, 1.442695
  %v7326 = vpow.pop %v7325
  %v7327 = vmul.f32 %v7282, 1.442695
  %v7328 = vpow.pop %v7327
  %v7329 = vmul.f32 %v7283, 1.442695
  %v7330 = vpow.pop %v7329
  %v7331 = vmul.f32 %v7284, 1.442695
  %v7332 = vpow.pop %v7331
  %v7333 = vmul.f32 %v7285, 1.442695
  %v7334 = vpow.pop %v7333
  %v7335 = vmul.f32 %v7286, 1.442695
  %v7336 = vpow.pop %v7335
  %v7338 = vsel %vm7074, %v7336, 0
  %7340 = vmatprep.subr.mxu0 0.0
  %7341 = vmatpush1.msra.mxu0 %v7288
  %7342 = vmatprep.subr.mxu0 0.0
  %7343 = vmatpush1.msra.mxu0 %v7290
  %7344 = vmatprep.subr.mxu0 0.0
  %7345 = vmatpush1.msra.mxu0 %v7292
  %7346 = vmatprep.subr.mxu0 0.0
  %7347 = vmatpush1.msra.mxu0 %v7294
  %7348 = vmatprep.subr.mxu0 0.0
  %7349 = vmatpush1.msra.mxu0 %v7296
  %7350 = vmatprep.subr.mxu0 0.0
  %7351 = vmatpush1.msra.mxu0 %v7298
  %7352 = vmatprep.subr.mxu0 0.0
  %7353 = vmatpush1.msra.mxu0 %v7300
  %7354 = vmatprep.subr.mxu0 0.0
  %7355 = vmatpush1.msra.mxu0 %v7302
  %7356 = vmatprep.subr.mxu0 0.0
  %7357 = vmatpush1.msra.mxu0 %v7304
  %7358 = vmatprep.subr.mxu0 0.0
  %7359 = vmatpush1.msra.mxu0 %v7306
  %7360 = vmatprep.subr.mxu0 0.0
  %7361 = vmatpush1.msra.mxu0 %v7308
  %7362 = vmatprep.subr.mxu0 0.0
  %7363 = vmatpush1.msra.mxu0 %v7310
  %7364 = vmatprep.subr.mxu0 0.0
  %7365 = vmatpush1.msra.mxu0 %v7312
  %7366 = vmatprep.subr.mxu0 0.0
  %7367 = vmatpush1.msra.mxu0 %v7314
  %7368 = vmatprep.subr.mxu0 0.0
  %7369 = vmatpush1.msra.mxu0 %v7316
  %7370 = vmatprep.subr.mxu0 0.0
  %7371 = vmatpush1.msra.mxu0 %v7318
  %7372 = vmatprep.subr.mxu0 0.0
  %7373 = vmatpush1.msra.mxu0 %v7320
  %7374 = vmatprep.subr.mxu0 0.0
  %7375 = vmatpush1.msra.mxu0 %v7322
  %7376 = vmatprep.subr.mxu0 0.0
  %7377 = vmatpush1.msra.mxu0 %v7324
  %7378 = vmatprep.subr.mxu0 0.0
  %7379 = vmatpush1.msra.mxu0 %v7326
  %7380 = vmatprep.subr.mxu0 0.0
  %7381 = vmatpush1.msra.mxu0 %v7328
  %7382 = vmatprep.subr.mxu0 0.0
  %7383 = vmatpush1.msra.mxu0 %v7330
  %7384 = vmatprep.subr.mxu0 0.0
  %7385 = vmatpush1.msra.mxu0 %v7332
  %7386 = vmatprep.subr.mxu0 0.0
  %7387 = vmatpush1.msra.mxu0 %v7334
  %7388 = vmatprep.subr.mxu0 0.0
  %7389 = vmatpush1.msra.mxu0 %v7338
  %7390 = vmatprep.subr.mxu0 0.0
  %7391 = vmatpush1.msra.mxu0 0.0
  %7392 = vmatprep.subr.mxu0 0.0
  %7393 = vmatpush1.msra.mxu0 0.0
  %7394 = vmatprep.subr.mxu0 0.0
  %7395 = vmatpush1.msra.mxu0 0.0
  %7396 = vmatprep.subr.mxu0 0.0
  %7397 = vmatpush1.msra.mxu0 0.0
  %7398 = vmatprep.subr.mxu0 0.0
  %7399 = vmatpush1.msra.mxu0 0.0
  %7400 = vmatprep.subr.mxu0 0.0
  %7401 = vmatpush1.msra.mxu0 0.0
  %7402 = vmatprep.subr.mxu0 0.0
  %7403 = vmatpush1.msra.mxu0 0.0
  %7404 = vmatprep.mubr.f32.mxu0 %v7072
  %7405 = vmatmul.mubr.f32.gmra.mrb[0].mxu0 %v7068
  %v7406 = vpop.f32.mrb[0].mxu0
  %v7407 = vadd.f32 0.0, %v7406
  %v7408 = vpop.f32.mrb[0].mxu0
  %7409 = vdwg.mxu0
  %v7410 = vrcp.pop %v7407
  %v7411 = vmul.f32 1.0, %v7410
  %v7413 = vrot.slane %v7411, 7
  %v7415 = vmul.f32 %v7407, %v7413
  %v7416 = vrot.slane %v7411, 6
  %v7418 = vmul.f32 %v7407, %v7416
  %v7420 = vrot.slane %v7153, 1
  %vm7422 = vcmask 1040384
  %v7423 = vsel %vm7422, %v7420, %v7415
  %v7425 = vrot.slane %v7156, 2
  %v7428 = vrot.slane %v7418, 1
  %v7430 = vsel %vm7422, %v7425, %v7428
  %v7431 = vld [vmem:[%s11] sm:$0xff]
  %v7432 = vld [vmem:[%s11 + $0x8] sm:$0xff]
  %v7433 = vld [vmem:[%s11 + $0x10] sm:$0xff]
  %v7434 = vld [vmem:[%s11 + $0x18] sm:$0xff]
  %v7435 = vld [vmem:[%s12] sm:$0xff]
  %v7436 = vld [vmem:[%s12 + $0x8] sm:$0xff]
  %v7437 = vld [vmem:[%s12 + $0x10] sm:$0xff]
  %v7438 = vld [vmem:[%s12 + $0x18] sm:$0xff]
  %v7440 = vsel %vm1320, %v7430, 0
  %7442 = vmatprep.subr.mxu0 0.0
  %7443 = vmatpush1.msra.mxu0 %v7435
  %7444 = vmatprep.subr.mxu0 0.0
  %7445 = vmatpush1.msra.mxu0 %v7436
  %7446 = vmatprep.subr.mxu0 0.0
  %7447 = vmatpush1.msra.mxu0 %v7437
  %7448 = vmatprep.subr.mxu0 0.0
  %7449 = vmatpush1.msra.mxu0 %v7438
  %7450 = vmatprep.subr.mxu0 0.0
  %7451 = vmatpush1.msra.mxu0 0.0
  %7452 = vmatprep.subr.mxu0 0.0
  %7453 = vmatpush1.msra.mxu0 0.0
  %7454 = vmatprep.subr.mxu0 0.0
  %7455 = vmatpush1.msra.mxu0 0.0
  %7456 = vmatprep.subr.mxu0 0.0
  %7457 = vmatpush1.msra.mxu0 0.0
  %7458 = vmatprep.subr.mxu0 0.0
  %7459 = vmatpush1.msra.mxu0 0.0
  %7460 = vmatprep.subr.mxu0 0.0
  %7461 = vmatpush1.msra.mxu0 0.0
  %7462 = vmatprep.subr.mxu0 0.0
  %7463 = vmatpush1.msra.mxu0 0.0
  %7464 = vmatprep.subr.mxu0 0.0
  %7465 = vmatpush1.msra.mxu0 0.0
  %7466 = vmatprep.subr.mxu0 0.0
  %7467 = vmatpush1.msra.mxu0 0.0
  %7468 = vmatprep.subr.mxu0 0.0
  %7469 = vmatpush1.msra.mxu0 0.0
  %7470 = vmatprep.subr.mxu0 0.0
  %7471 = vmatpush1.msra.mxu0 0.0
  %7472 = vmatprep.subr.mxu0 0.0
  %7473 = vmatpush1.msra.mxu0 0.0
  %7474 = vmatprep.subr.mxu0 0.0
  %7475 = vmatpush1.msra.mxu0 0.0
  %7476 = vmatprep.subr.mxu0 0.0
  %7477 = vmatpush1.msra.mxu0 0.0
  %7478 = vmatprep.subr.mxu0 0.0
  %7479 = vmatpush1.msra.mxu0 0.0
  %7480 = vmatprep.subr.mxu0 0.0
  %7481 = vmatpush1.msra.mxu0 0.0
  %7482 = vmatprep.subr.mxu0 0.0
  %7483 = vmatpush1.msra.mxu0 0.0
  %7484 = vmatprep.subr.mxu0 0.0
  %7485 = vmatpush1.msra.mxu0 0.0
  %7486 = vmatprep.subr.mxu0 0.0
  %7487 = vmatpush1.msra.mxu0 0.0
  %7488 = vmatprep.subr.mxu0 0.0
  %7489 = vmatpush1.msra.mxu0 0.0
  %7490 = vmatprep.subr.mxu0 0.0
  %7491 = vmatpush1.msra.mxu0 0.0
  %7492 = vmatprep.subr.mxu0 0.0
  %7493 = vmatpush1.msra.mxu0 0.0
  %7494 = vmatprep.subr.mxu0 0.0
  %7495 = vmatpush1.msra.mxu0 0.0
  %7496 = vmatprep.subr.mxu0 0.0
  %7497 = vmatpush1.msra.mxu0 0.0
  %7498 = vmatprep.subr.mxu0 0.0
  %7499 = vmatpush1.msra.mxu0 0.0
  %7500 = vmatprep.subr.mxu0 0.0
  %7501 = vmatpush1.msra.mxu0 0.0
  %7502 = vmatprep.subr.mxu0 0.0
  %7503 = vmatpush1.msra.mxu0 0.0
  %7504 = vmatprep.subr.mxu0 0.0
  %7505 = vmatpush1.msra.mxu0 0.0
  %7506 = vmatprep.mubr.f32.mxu0 0.0
  %7507 = vmatmul.mubr.f32.gmra.mrb[0].mxu0 %v7440
  %v7508 = vpop.f32.mrb[0].mxu0
  %v7509 = vadd.f32 0.0, %v7508
  %v7510 = vpop.f32.mrb[0].mxu0
  %7511 = vdwg.mxu0
  %v7513 = vsel %vm1320, %v7423, 0
  %7515 = vmatprep.subr.mxu0 0.0
  %7516 = vmatpush1.msra.mxu0 %v7431
  %7517 = vmatprep.subr.mxu0 0.0
  %7518 = vmatpush1.msra.mxu0 %v7432
  %7519 = vmatprep.subr.mxu0 0.0
  %7520 = vmatpush1.msra.mxu0 %v7433
  %7521 = vmatprep.subr.mxu0 0.0
  %7522 = vmatpush1.msra.mxu0 %v7434
  %7523 = vmatprep.subr.mxu0 0.0
  %7524 = vmatpush1.msra.mxu0 0.0
  %7525 = vmatprep.subr.mxu0 0.0
  %7526 = vmatpush1.msra.mxu0 0.0
  %7527 = vmatprep.subr.mxu0 0.0
  %7528 = vmatpush1.msra.mxu0 0.0
  %7529 = vmatprep.subr.mxu0 0.0
  %7530 = vmatpush1.msra.mxu0 0.0
  %7531 = vmatprep.subr.mxu0 0.0
  %7532 = vmatpush1.msra.mxu0 0.0
  %7533 = vmatprep.subr.mxu0 0.0
  %7534 = vmatpush1.msra.mxu0 0.0
  %7535 = vmatprep.subr.mxu0 0.0
  %7536 = vmatpush1.msra.mxu0 0.0
  %7537 = vmatprep.subr.mxu0 0.0
  %7538 = vmatpush1.msra.mxu0 0.0
  %7539 = vmatprep.subr.mxu0 0.0
  %7540 = vmatpush1.msra.mxu0 0.0
  %7541 = vmatprep.subr.mxu0 0.0
  %7542 = vmatpush1.msra.mxu0 0.0
  %7543 = vmatprep.subr.mxu0 0.0
  %7544 = vmatpush1.msra.mxu0 0.0
  %7545 = vmatprep.subr.mxu0 0.0
  %7546 = vmatpush1.msra.mxu0 0.0
  %7547 = vmatprep.subr.mxu0 0.0
  %7548 = vmatpush1.msra.mxu0 0.0
  %7549 = vmatprep.subr.mxu0 0.0
  %7550 = vmatpush1.msra.mxu0 0.0
  %7551 = vmatprep.subr.mxu0 0.0
  %7552 = vmatpush1.msra.mxu0 0.0
  %7553 = vmatprep.subr.mxu0 0.0
  %7554 = vmatpush1.msra.mxu0 0.0
  %7555 = vmatprep.subr.mxu0 0.0
  %7556 = vmatpush1.msra.mxu0 0.0
  %7557 = vmatprep.subr.mxu0 0.0
  %7558 = vmatpush1.msra.mxu0 0.0
  %7559 = vmatprep.subr.mxu0 0.0
  %7560 = vmatpush1.msra.mxu0 0.0
  %7561 = vmatprep.subr.mxu0 0.0
  %7562 = vmatpush1.msra.mxu0 0.0
  %7563 = vmatprep.subr.mxu0 0.0
  %7564 = vmatpush1.msra.mxu0 0.0
  %7565 = vmatprep.subr.mxu0 0.0
  %7566 = vmatpush1.msra.mxu0 0.0
  %7567 = vmatprep.subr.mxu0 0.0
  %7568 = vmatpush1.msra.mxu0 0.0
  %7569 = vmatprep.subr.mxu0 0.0
  %7570 = vmatpush1.msra.mxu0 0.0
  %7571 = vmatprep.subr.mxu0 0.0
  %7572 = vmatpush1.msra.mxu0 0.0
  %7573 = vmatprep.subr.mxu0 0.0
  %7574 = vmatpush1.msra.mxu0 0.0
  %7575 = vmatprep.subr.mxu0 0.0
  %7576 = vmatpush1.msra.mxu0 0.0
  %7577 = vmatprep.subr.mxu0 0.0
  %7578 = vmatpush1.msra.mxu0 0.0
  %7579 = vmatprep.mubr.f32.mxu0 0.0
  %7580 = vmatmul.mubr.f32.gmra.mrb[0].mxu0 %v7513
  %v7581 = vpop.f32.mrb[0].mxu0
  %v7582 = vadd.f32 %v7509, %v7581
  %v7583 = vpop.f32.mrb[0].mxu0
  %7584 = vdwg.mxu0
  %v7585 = vld [vmem:[%s13] sm:$0x1]
  %v7587 = vlaneseq
  %v7588 = vshrl.u32 %v7587, 7
  %v7589 = vsub.s32 0, %v7588
  %v7590 = vrot.slane %v7585, %v7589
  %v7592 = vadd.f32 %v7582, %v7590
  %v7593 = vmax.f32 %v7592, 0.0
  %v7594 = vld [vmem:[%s14] sm:$0xff]
  %v7595 = vld [vmem:[%s14 + $0x8] sm:$0xff]
  %v7596 = vld [vmem:[%s14 + $0x10] sm:$0xff]
  %v7597 = vld [vmem:[%s14 + $0x18] sm:$0xff]
  %v7598 = vld [vmem:[%s14 + $0x20] sm:$0xff]
  %v7599 = vld [vmem:[%s14 + $0x28] sm:$0xff]
  %v7600 = vld [vmem:[%s14 + $0x30] sm:$0x3]
  %v7601 = vld [vmem:[%s15] sm:$0x1]
  %v7603 = vlaneseq
  %v7604 = vshrl.u32 %v7603, 7
  %v7605 = vsub.s32 0, %v7604
  %v7606 = vrot.slane %v7601, %v7605
  %vm7608 = vcmask 408576
  %v7610 = vsel %vm7608, %v7593, 0
  %vm7612 = vcmask 1041408
  %v7614 = vsel %vm7612, %v7600, 0
  %7616 = vmatprep.subr.mxu0 0.0
  %7617 = vmatpush1.msra.mxu0 %v7594
  %7618 = vmatprep.subr.mxu0 0.0
  %7619 = vmatpush1.msra.mxu0 %v7595
  %7620 = vmatprep.subr.mxu0 0.0
  %7621 = vmatpush1.msra.mxu0 %v7596
  %7622 = vmatprep.subr.mxu0 0.0
  %7623 = vmatpush1.msra.mxu0 %v7597
  %7624 = vmatprep.subr.mxu0 0.0
  %7625 = vmatpush1.msra.mxu0 %v7598
  %7626 = vmatprep.subr.mxu0 0.0
  %7627 = vmatpush1.msra.mxu0 %v7599
  %7628 = vmatprep.subr.mxu0 0.0
  %7629 = vmatpush1.msra.mxu0 %v7614
  %7630 = vmatprep.subr.mxu0 0.0
  %7631 = vmatpush1.msra.mxu0 0.0
  %7632 = vmatprep.subr.mxu0 0.0
  %7633 = vmatpush1.msra.mxu0 0.0
  %7634 = vmatprep.subr.mxu0 0.0
  %7635 = vmatpush1.msra.mxu0 0.0
  %7636 = vmatprep.subr.mxu0 0.0
  %7637 = vmatpush1.msra.mxu0 0.0
  %7638 = vmatprep.subr.mxu0 0.0
  %7639 = vmatpush1.msra.mxu0 0.0
  %7640 = vmatprep.subr.mxu0 0.0
  %7641 = vmatpush1.msra.mxu0 0.0
  %7642 = vmatprep.subr.mxu0 0.0
  %7643 = vmatpush1.msra.mxu0 0.0
  %7644 = vmatprep.subr.mxu0 0.0
  %7645 = vmatpush1.msra.mxu0 0.0
  %7646 = vmatprep.subr.mxu0 0.0
  %7647 = vmatpush1.msra.mxu0 0.0
  %7648 = vmatprep.subr.mxu0 0.0
  %7649 = vmatpush1.msra.mxu0 0.0
  %7650 = vmatprep.subr.mxu0 0.0
  %7651 = vmatpush1.msra.mxu0 0.0
  %7652 = vmatprep.subr.mxu0 0.0
  %7653 = vmatpush1.msra.mxu0 0.0
  %7654 = vmatprep.subr.mxu0 0.0
  %7655 = vmatpush1.msra.mxu0 0.0
  %7656 = vmatprep.subr.mxu0 0.0
  %7657 = vmatpush1.msra.mxu0 0.0
  %7658 = vmatprep.subr.mxu0 0.0
  %7659 = vmatpush1.msra.mxu0 0.0
  %7660 = vmatprep.subr.mxu0 0.0
  %7661 = vmatpush1.msra.mxu0 0.0
  %7662 = vmatprep.subr.mxu0 0.0
  %7663 = vmatpush1.msra.mxu0 0.0
  %7664 = vmatprep.subr.mxu0 0.0
  %7665 = vmatpush1.msra.mxu0 0.0
  %7666 = vmatprep.subr.mxu0 0.0
  %7667 = vmatpush1.msra.mxu0 0.0
  %7668 = vmatprep.subr.mxu0 0.0
  %7669 = vmatpush1.msra.mxu0 0.0
  %7670 = vmatprep.subr.mxu0 0.0
  %7671 = vmatpush1.msra.mxu0 0.0
  %7672 = vmatprep.subr.mxu0 0.0
  %7673 = vmatpush1.msra.mxu0 0.0
  %7674 = vmatprep.subr.mxu0 0.0
  %7675 = vmatpush1.msra.mxu0 0.0
  %7676 = vmatprep.subr.mxu0 0.0
  %7677 = vmatpush1.msra.mxu0 0.0
  %7678 = vmatprep.subr.mxu0 0.0
  %7679 = vmatpush1.msra.mxu0 0.0
  %7680 = vmatprep.mubr.f32.mxu0 0.0
  %7681 = vmatmul.mubr.f32.gmra.mrb[0].mxu0 %v7610
  %v7682 = vpop.f32.mrb[0].mxu0
  %v7683 = vadd.f32 %v7606, %v7682
  %v7684 = vpop.f32.mrb[0].mxu0
  %7685 = vdwg.mxu0
  %v7686 = vmax.f32 %v7683, 0.0
  %v7687 = vld [vmem:[%s16] sm:$0xff]
  %v7688 = vld [vmem:[%s16 + $0x8] sm:$0xff]
  %v7689 = vld [vmem:[%s16 + $0x10] sm:$0xff]
  %v7690 = vld [vmem:[%s16 + $0x18] sm:$0xff]
  %v7691 = vld [vmem:[%s16 + $0x20] sm:$0xff]
  %v7692 = vld [vmem:[%s16 + $0x28] sm:$0xff]
  %v7693 = vld [vmem:[%s16 + $0x30] sm:$0x3]
  %v7694 = vld [vmem:[%s17] sm:$0x1]
  %v7696 = vlaneseq
  %v7697 = vshrl.u32 %v7696, 7
  %v7698 = vsub.s32 0, %v7697
  %v7699 = vrot.slane %v7694, %v7698
  %v7702 = vsel %vm7608, %v7686, 0
  %v7705 = vsel %vm7612, %v7693, 0
  %7707 = vmatprep.subr.mxu0 0.0
  %7708 = vmatpush1.msra.mxu0 %v7687
  %7709 = vmatprep.subr.mxu0 0.0
  %7710 = vmatpush1.msra.mxu0 %v7688
  %7711 = vmatprep.subr.mxu0 0.0
  %7712 = vmatpush1.msra.mxu0 %v7689
  %7713 = vmatprep.subr.mxu0 0.0
  %7714 = vmatpush1.msra.mxu0 %v7690
  %7715 = vmatprep.subr.mxu0 0.0
  %7716 = vmatpush1.msra.mxu0 %v7691
  %7717 = vmatprep.subr.mxu0 0.0
  %7718 = vmatpush1.msra.mxu0 %v7692
  %7719 = vmatprep.subr.mxu0 0.0
  %7720 = vmatpush1.msra.mxu0 %v7705
  %7721 = vmatprep.subr.mxu0 0.0
  %7722 = vmatpush1.msra.mxu0 0.0
  %7723 = vmatprep.subr.mxu0 0.0
  %7724 = vmatpush1.msra.mxu0 0.0
  %7725 = vmatprep.subr.mxu0 0.0
  %7726 = vmatpush1.msra.mxu0 0.0
  %7727 = vmatprep.subr.mxu0 0.0
  %7728 = vmatpush1.msra.mxu0 0.0
  %7729 = vmatprep.subr.mxu0 0.0
  %7730 = vmatpush1.msra.mxu0 0.0
  %7731 = vmatprep.subr.mxu0 0.0
  %7732 = vmatpush1.msra.mxu0 0.0
  %7733 = vmatprep.subr.mxu0 0.0
  %7734 = vmatpush1.msra.mxu0 0.0
  %7735 = vmatprep.subr.mxu0 0.0
  %7736 = vmatpush1.msra.mxu0 0.0
  %7737 = vmatprep.subr.mxu0 0.0
  %7738 = vmatpush1.msra.mxu0 0.0
  %7739 = vmatprep.subr.mxu0 0.0
  %7740 = vmatpush1.msra.mxu0 0.0
  %7741 = vmatprep.subr.mxu0 0.0
  %7742 = vmatpush1.msra.mxu0 0.0
  %7743 = vmatprep.subr.mxu0 0.0
  %7744 = vmatpush1.msra.mxu0 0.0
  %7745 = vmatprep.subr.mxu0 0.0
  %7746 = vmatpush1.msra.mxu0 0.0
  %7747 = vmatprep.subr.mxu0 0.0
  %7748 = vmatpush1.msra.mxu0 0.0
  %7749 = vmatprep.subr.mxu0 0.0
  %7750 = vmatpush1.msra.mxu0 0.0
  %7751 = vmatprep.subr.mxu0 0.0
  %7752 = vmatpush1.msra.mxu0 0.0
  %7753 = vmatprep.subr.mxu0 0.0
  %7754 = vmatpush1.msra.mxu0 0.0
  %7755 = vmatprep.subr.mxu0 0.0
  %7756 = vmatpush1.msra.mxu0 0.0
  %7757 = vmatprep.subr.mxu0 0.0
  %7758 = vmatpush1.msra.mxu0 0.0
  %7759 = vmatprep.subr.mxu0 0.0
  %7760 = vmatpush1.msra.mxu0 0.0
  %7761 = vmatprep.subr.mxu0 0.0
  %7762 = vmatpush1.msra.mxu0 0.0
  %7763 = vmatprep.subr.mxu0 0.0
  %7764 = vmatpush1.msra.mxu0 0.0
  %7765 = vmatprep.subr.mxu0 0.0
  %7766 = vmatpush1.msra.mxu0 0.0
  %7767 = vmatprep.subr.mxu0 0.0
  %7768 = vmatpush1.msra.mxu0 0.0
  %7769 = vmatprep.subr.mxu0 0.0
  %7770 = vmatpush1.msra.mxu0 0.0
  %7771 = vmatprep.mubr.f32.mxu0 0.0
  %7772 = vmatmul.mubr.f32.gmra.mrb[0].mxu0 %v7702
  %v7773 = vpop.f32.mrb[0].mxu0
  %v7774 = vadd.f32 %v7699, %v7773
  %v7775 = vpop.f32.mrb[0].mxu0
  %7776 = vdwg.mxu0
  %v7777 = vmax.f32 %v7774, 0.0
  %v7778 = vld [vmem:[%s18] sm:$0xff]
  %v7779 = vld [vmem:[%s18 + $0x8] sm:$0xff]
  %v7780 = vld [vmem:[%s18 + $0x10] sm:$0xff]
  %v7781 = vld [vmem:[%s18 + $0x18] sm:$0xff]
  %v7782 = vld [vmem:[%s18 + $0x20] sm:$0xff]
  %v7783 = vld [vmem:[%s18 + $0x28] sm:$0xff]
  %v7784 = vld [vmem:[%s18 + $0x30] sm:$0x3]
  %v7785 = vld [vmem:[%s19] sm:$0x1]
  %v7787 = vlaneseq
  %v7788 = vshrl.u32 %v7787, 7
  %v7789 = vsub.s32 0, %v7788
  %v7790 = vrot.slane %v7785, %v7789
  %v7793 = vsel %vm7608, %v7777, 0
  %v7796 = vsel %vm7612, %v7784, 0
  %7798 = vmatprep.subr.mxu0 0.0
  %7799 = vmatpush1.msra.mxu0 %v7778
  %7800 = vmatprep.subr.mxu0 0.0
  %7801 = vmatpush1.msra.mxu0 %v7779
  %7802 = vmatprep.subr.mxu0 0.0
  %7803 = vmatpush1.msra.mxu0 %v7780
  %7804 = vmatprep.subr.mxu0 0.0
  %7805 = vmatpush1.msra.mxu0 %v7781
  %7806 = vmatprep.subr.mxu0 0.0
  %7807 = vmatpush1.msra.mxu0 %v7782
  %7808 = vmatprep.subr.mxu0 0.0
  %7809 = vmatpush1.msra.mxu0 %v7783
  %7810 = vmatprep.subr.mxu0 0.0
  %7811 = vmatpush1.msra.mxu0 %v7796
  %7812 = vmatprep.subr.mxu0 0.0
  %7813 = vmatpush1.msra.mxu0 0.0
  %7814 = vmatprep.subr.mxu0 0.0
  %7815 = vmatpush1.msra.mxu0 0.0
  %7816 = vmatprep.subr.mxu0 0.0
  %7817 = vmatpush1.msra.mxu0 0.0
  %7818 = vmatprep.subr.mxu0 0.0
  %7819 = vmatpush1.msra.mxu0 0.0
  %7820 = vmatprep.subr.mxu0 0.0
  %7821 = vmatpush1.msra.mxu0 0.0
  %7822 = vmatprep.subr.mxu0 0.0
  %7823 = vmatpush1.msra.mxu0 0.0
  %7824 = vmatprep.subr.mxu0 0.0
  %7825 = vmatpush1.msra.mxu0 0.0
  %7826 = vmatprep.subr.mxu0 0.0
  %7827 = vmatpush1.msra.mxu0 0.0
  %7828 = vmatprep.subr.mxu0 0.0
  %7829 = vmatpush1.msra.mxu0 0.0
  %7830 = vmatprep.subr.mxu0 0.0
  %7831 = vmatpush1.msra.mxu0 0.0
  %7832 = vmatprep.subr.mxu0 0.0
  %7833 = vmatpush1.msra.mxu0 0.0
  %7834 = vmatprep.subr.mxu0 0.0
  %7835 = vmatpush1.msra.mxu0 0.0
  %7836 = vmatprep.subr.mxu0 0.0
  %7837 = vmatpush1.msra.mxu0 0.0
  %7838 = vmatprep.subr.mxu0 0.0
  %7839 = vmatpush1.msra.mxu0 0.0
  %7840 = vmatprep.subr.mxu0 0.0
  %7841 = vmatpush1.msra.mxu0 0.0
  %7842 = vmatprep.subr.mxu0 0.0
  %7843 = vmatpush1.msra.mxu0 0.0
  %7844 = vmatprep.subr.mxu0 0.0
  %7845 = vmatpush1.msra.mxu0 0.0
  %7846 = vmatprep.subr.mxu0 0.0
  %7847 = vmatpush1.msra.mxu0 0.0
  %7848 = vmatprep.subr.mxu0 0.0
  %7849 = vmatpush1.msra.mxu0 0.0
  %7850 = vmatprep.subr.mxu0 0.0
  %7851 = vmatpush1.msra.mxu0 0.0
  %7852 = vmatprep.subr.mxu0 0.0
  %7853 = vmatpush1.msra.mxu0 0.0
  %7854 = vmatprep.subr.mxu0 0.0
  %7855 = vmatpush1.msra.mxu0 0.0
  %7856 = vmatprep.subr.mxu0 0.0
  %7857 = vmatpush1.msra.mxu0 0.0
  %7858 = vmatprep.subr.mxu0 0.0
  %7859 = vmatpush1.msra.mxu0 0.0
  %7860 = vmatprep.subr.mxu0 0.0
  %7861 = vmatpush1.msra.mxu0 0.0
  %7862 = vmatprep.mubr.f32.mxu0 0.0
  %7863 = vmatmul.mubr.f32.gmra.mrb[0].mxu0 %v7793
  %v7864 = vpop.f32.mrb[0].mxu0
  %v7865 = vadd.f32 %v7790, %v7864
  %v7866 = vpop.f32.mrb[0].mxu0
  %7867 = vdwg.mxu0
  %7868 = vst [vmem:[%s20] sm:$0x3] %v7865
  // Predicated region
  $region82: #{custom_net_forward.1} parent=0 // pred_check
    _
  $region83: #{custom_net_forward.1} parent=0 // pred_check_branch
    %7870 = sbr.rel (0) target = $region85
  $region84: #{custom_net_forward.1} parent=0 // pred_region
    _
  $region85: #{custom_net_forward.1} parent=0 // pred_fallthru
    _
  // Predicated region
  $region86: #{custom_net_forward.1} parent=0 // pred_check
    _
  $region87: #{custom_net_forward.1} parent=0 // pred_check_branch
    %7872 = sbr.rel (0) target = $region89
  $region88: #{custom_net_forward.1} parent=0 // pred_region
    _
  $region89: #{custom_net_forward.1} parent=0 // pred_fallthru
    _

</llo_original>
